<compile_context>
chip_gen: v6e
topology: v6e:2x2x1
jax: 0.10.0
libtpu: 0.0.40
codegen_flags: <defaults>
</compile_context>

<pallas_src>
import math
import numpy as np
import jax
import jax.numpy as jnp
from jax.experimental import pallas as pl
from jax.experimental.pallas import tpu as pltpu

# Pin every f32 matmul outside the kernel (reference + host weight folding) to
# full-f32 precision; the kernel pins its own dots explicitly.
jax.config.update("jax_default_matmul_precision", "highest")

# ---------------- configuration (small, consistent with the module) ----------------
NUM_LAYERS = 2
INPUT_DIM = 32                     # model dim D
HIDE_DIM = 32                      # attention total dim and FFN hidden dim
N_Q_HEADS = 4
N_KV_HEADS = 2
GROUP = N_Q_HEADS // N_KV_HEADS
HEAD_DIM = HIDE_DIM // N_Q_HEADS   # 8
DQ = N_Q_HEADS * HEAD_DIM          # 32
DK = N_KV_HEADS * HEAD_DIM         # 16
MAX_LEN = 16
BATCH = 2
SEQ = 8
START_POS = 0
THETA = 50000.0

ROWS = BATCH * SEQ                 # 16 token rows
AROWS = N_Q_HEADS * BATCH * SEQ    # 64 head-major attention rows
HP = jax.lax.Precision.HIGHEST

# ---- packed operand layout (every matmul block starts on a 128-lane boundary) ----
# weight slab w_pk[l] : (33, 640); row 32 is the bias row, same column layout.
#   [ Wqkv(192) @0 | pad | Wo(32) @256 | pad | W01(64) @384 | pad | W2(32) @512 | pad ]
# inside the 192-wide QKV block (all sub-blocks 32 wide):
#   [ Wq | Wk_rep | Wv_rep | WqR | WkR_rep | 0 ]
#   - anw (attention RMSNorm weight) and 1/sqrt(head_dim) folded into Wq/Wk/Wv,
#   - kv->q GQA replication folded into Wk/Wv ("_rep" = 4 q-head copies),
#   - WqR/WkR are pre-rotated RoPE partners, so in-kernel RoPE is a single
#     full-width mul-add (cos over q|k, ones over v; sin over qR|kR, zeros after).
OFF_QKV, QKV_W = 0, 6 * DQ                     # 0 .. 192
OFF_O, OFF_01, OFF_2, PACK_W = 256, 384, 512, 640
W_ROWS = INPUT_DIM + 1                         # 32 weight rows + 1 bias row

# aux slab (64, 512): [ mask(64) @0 | cos96 @128 | sin96 @256 | final-norm-w @384 ]
A_MASK, A_COS, A_SIN, A_ONW, AUX_W = 0, 128, 256, 384, 512
CS_W = 3 * DQ                                  # 96 cos/sin lanes (q | k | v-passthrough)


# ---------------- Pallas kernel: whole decoder, one invocation ----------------
def decoder_kernel(x_ref, w_ref, aux_ref, o_ref):
    x = x_ref[...]                                          # (16, 32) f32, rows = (b, s)
    mask = aux_ref[:, A_MASK:A_MASK + AROWS]                # (64, 64) additive bias
    cs_cos = aux_ref[0:ROWS, A_COS:A_COS + CS_W]            # (16, 96)
    cs_sin = aux_ref[0:ROWS, A_SIN:A_SIN + CS_W]            # (16, 96)
    onw = aux_ref[0:1, A_ONW:A_ONW + INPUT_DIM]             # (1, 32) final-norm weight

    def inv_rms(v):      # 1 / (sqrt(mean(v^2)) + 1e-6)  -- eps outside sqrt (module semantics)
        return 1.0 / (jnp.sqrt(jnp.mean(v * v, axis=-1, keepdims=True)) + 1e-6)

    def mm(a, b):        # pinned-precision MXU matmul, f32 accumulation
        return jnp.dot(a, b, precision=HP, preferred_element_type=jnp.float32)

    def head_major(a, n):   # (ROWS, n*HD) -> (n*ROWS, HD), row = group*ROWS + token
        return a.reshape(ROWS, n, HEAD_DIM).swapaxes(0, 1).reshape(n * ROWS, HEAD_DIM)

    for l in range(NUM_LAYERS):
        w = lambda off, wd: w_ref[l, 0:INPUT_DIM, off:off + wd]        # noqa: E731
        b = lambda off, wd: w_ref[l, INPUT_DIM:W_ROWS, off:off + wd]   # noqa: E731

        # ---- attention block (anw + 1/sqrt(head_dim) folded into the projection) ----
        h = x * inv_rms(x)
        proj = mm(h, w(OFF_QKV, QKV_W)) + b(OFF_QKV, QKV_W)            # (16, 192)
        # RoPE for q and k, plus v pass-through, in ONE full-width mul-add.
        qkv = proj[:, :CS_W] * cs_cos + proj[:, CS_W:QKV_W] * cs_sin   # (16, 96) = [q|k|v]
        hm = head_major(qkv, 3 * N_Q_HEADS)                            # (192, 8)
        qh = hm[0:AROWS]                                               # (64, 8)
        kh = hm[AROWS:2 * AROWS]
        vh = hm[2 * AROWS:3 * AROWS]

        s = jax.lax.dot_general(qh, kh, (((1,), (1,)), ((), ())),
                                precision=HP,
                                preferred_element_type=jnp.float32) + mask   # (64, 64)
        s = s - jnp.max(s, axis=-1, keepdims=True)
        p = jnp.exp(s)
        # exact normalization; switch to pl.reciprocal(..., approx=True) (EUP) once a
        # looser tolerance vs the f32 reference is acceptable.
        p = p / jnp.sum(p, axis=-1, keepdims=True)
        att = mm(p, vh)                                                # (64, 8)
        att = att.reshape(N_Q_HEADS, ROWS, HEAD_DIM).swapaxes(0, 1).reshape(ROWS, DQ)
        x = x + mm(att, w(OFF_O, INPUT_DIM)) + b(OFF_O, INPUT_DIM)

        # ---- SwiGLU FFN (w0/w1 fused; fnw folded into the fused weight) ----
        hf = x * inv_rms(x)
        g = mm(hf, w(OFF_01, 2 * HIDE_DIM)) + b(OFF_01, 2 * HIDE_DIM)
        g0, g1 = g[:, :HIDE_DIM], g[:, HIDE_DIM:]
        x = x + mm(g0 * g1 * jax.nn.sigmoid(g1), w(OFF_2, INPUT_DIM)) + b(OFF_2, INPUT_DIM)

    o_ref[...] = (onw * x * inv_rms(x)).astype(o_ref.dtype)


# ---------------- wrapper ----------------
def transformer_decoder_pallas(x, w_pk, aux):
    B, S, D = x.shape
    vmem = pltpu.MemorySpace.VMEM
    out = pl.pallas_call(
        decoder_kernel,
        out_shape=jax.ShapeDtypeStruct((B * S, D), jnp.float32),
        in_specs=[pl.BlockSpec(memory_space=vmem),
                  pl.BlockSpec(memory_space=vmem),
                  pl.BlockSpec(memory_space=vmem)],
        out_specs=pl.BlockSpec(memory_space=vmem),
        # TODO(synk): input_output_aliases={0: 0} would drop the separate 2 KB output
        # allocation, but donating x would invalidate it for the in-script reference.
    )(x.reshape(B * S, D), w_pk, aux)
    return out.reshape(B, S, D)


# ---------------- RoPE tables & operand packing (glue, plain JAX/numpy) ----------------
def precompute_rope(head_dim, end, theta=THETA):
    freqs = 1.0 / theta ** (jnp.arange(0, head_dim, 2)[: head_dim // 2].astype(jnp.float32) / head_dim)
    t = jnp.arange(end, dtype=jnp.float32)
    ang = jnp.outer(t, freqs)                          # (end, head_dim//2)
    return jnp.cos(ang), jnp.sin(ang)


def _rot_pairs(a):
    """RoPE rotation partner along the last axis: out[2i] = -a[2i+1], out[2i+1] = a[2i]."""
    a2 = a.reshape(*a.shape[:-1], -1, 2)
    return jnp.stack([-a2[..., 1], a2[..., 0]], axis=-1).reshape(a.shape)


def pack_operands(params, cos_half, sin_half):
    L, D = NUM_LAYERS, INPUT_DIM
    scale = 1.0 / math.sqrt(HEAD_DIM)
    anw = params["anw"][:, :, None]                    # (L, D, 1)
    fnw = params["fnw"][:, :, None]

    # attention-norm weight + score scale folded in; GQA kv->q replication folded in.
    wq = anw * params["qw"] * scale                    # (L, D, 32)
    bq = params["qb"] * scale                          # (L, 32)
    wk = jnp.tile(anw * params["kw"], (1, 1, GROUP))   # (L, D, 32), heads [kv0,kv1,kv0,kv1]
    bk = jnp.tile(params["kb"], (1, GROUP))
    wv = jnp.tile(anw * params["vw"], (1, 1, GROUP))
    bv = jnp.tile(params["vb"], (1, GROUP))
    wqr, bqr = _rot_pairs(wq), _rot_pairs(bq)          # pre-rotated RoPE partners (exact)
    wkr, bkr = _rot_pairs(wk), _rot_pairs(bk)
    zw = jnp.zeros((L, D, DQ), jnp.float32)            # zero partner block for the V lanes
    zb = jnp.zeros((L, DQ), jnp.float32)

    w01 = jnp.concatenate([fnw * params["w0"], fnw * params["w1"]], axis=-1)   # (L, D, 64)
    b01 = jnp.concatenate([params["b0"], params["b1"]], axis=-1)               # (L, 64)

    pw = lambda wd: jnp.zeros((L, D, wd), jnp.float32)  # noqa: E731
    pb = lambda wd: jnp.zeros((L, wd), jnp.float32)     # noqa: E731

    w_cols = jnp.concatenate(
        [wq, wk, wv, wqr, wkr, zw,                      # 192-wide fused QKV block @0
         pw(OFF_O - QKV_W), params["ow"],               # Wo @256
         pw(OFF_01 - OFF_O - INPUT_DIM), w01,           # W01 @384
         pw(OFF_2 - OFF_01 - 2 * HIDE_DIM), params["w2"],  # W2 @512
         pw(PACK_W - OFF_2 - INPUT_DIM)], axis=-1)      # (L, 32, 640)
    b_cols = jnp.concatenate(
        [bq, bk, bv, bqr, bkr, zb,
         pb(OFF_O - QKV_W), params["ob"],
         pb(OFF_01 - OFF_O - INPUT_DIM), b01,
         pb(OFF_2 - OFF_01 - 2 * HIDE_DIM), params["b2"],
         pb(PACK_W - OFF_2 - INPUT_DIM)], axis=-1)      # (L, 640)
    w_pk = jnp.concatenate([w_cols, b_cols[:, None, :]], axis=1)   # (L, 33, 640)

    # cos/sin per token row (positions repeat across the batch), replicated per head;
    # ones over the V lanes (pass-through), zeros over the matching sin partner lanes.
    cos_rep = jnp.repeat(cos_half, 2, axis=-1)          # (S, HEAD_DIM)
    sin_rep = jnp.repeat(sin_half, 2, axis=-1)
    cosq = jnp.tile(cos_rep, (BATCH, N_Q_HEADS))        # (16, 32)
    sinq = jnp.tile(sin_rep, (BATCH, N_Q_HEADS))
    cos96 = jnp.concatenate([cosq, cosq, jnp.ones((ROWS, DQ), jnp.float32)], axis=-1)
    sin96 = jnp.concatenate([sinq, sinq, jnp.zeros((ROWS, DQ), jnp.float32)], axis=-1)

    # block-diagonal (same head, same batch) + causal additive mask, head-major rows.
    r = np.arange(AROWS)
    valid = ((r[:, None] // SEQ) == (r[None, :] // SEQ)) & ((r[None, :] % SEQ) <= (r[:, None] % SEQ))
    mask = jnp.asarray(np.where(valid, 0.0, -1e30).astype(np.float32))

    aux = jnp.zeros((AROWS, AUX_W), jnp.float32)
    aux = aux.at[:, A_MASK:A_MASK + AROWS].set(mask)
    aux = aux.at[0:ROWS, A_COS:A_COS + CS_W].set(cos96)
    aux = aux.at[0:ROWS, A_SIN:A_SIN + CS_W].set(sin96)
    aux = aux.at[0, A_ONW:A_ONW + INPUT_DIM].set(params["onw"][0])
    return w_pk, aux


# ---------------- deterministic parameter init ----------------
def init_params(key):
    ks = jax.random.split(key, 16)
    n = lambda k, s, sc: (jax.random.normal(k, s, jnp.float32) * sc)  # noqa: E731
    L, D, F = NUM_LAYERS, INPUT_DIM, HIDE_DIM
    return {
        "anw": n(ks[0], (L, D), 1.0),
        "qw": n(ks[1], (L, D, DQ), 1.0 / math.sqrt(D)),
        "qb": n(ks[2], (L, DQ), 0.02),
        "kw": n(ks[3], (L, D, DK), 1.0 / math.sqrt(D)),
        "kb": n(ks[4], (L, DK), 0.02),
        "vw": n(ks[5], (L, D, DK), 1.0 / math.sqrt(D)),
        "vb": n(ks[6], (L, DK), 0.02),
        "ow": n(ks[7], (L, DQ, D), 1.0 / math.sqrt(DQ)),
        "ob": n(ks[8], (L, D), 0.02),
        "fnw": n(ks[9], (L, D), 1.0),
        "w0": n(ks[10], (L, D, F), 1.0 / math.sqrt(D)),
        "b0": n(ks[11], (L, F), 0.02),
        "w1": n(ks[12], (L, D, F), 1.0 / math.sqrt(D)),
        "b1": n(ks[13], (L, F), 0.02),
        "w2": n(ks[14], (L, F, D), 1.0 / math.sqrt(F)),
        "b2": n(ks[15], (L, D), 0.02),
        "onw": n(jax.random.fold_in(key, 99), (1, D), 1.0),
    }


# ---------------- pure-JAX reference (mirrors the PyTorch forward) ----------------
def ref_decoder(x, p, cos_half, sin_half):
    def rmsnorm(v, w):
        return w * v / (jnp.sqrt(jnp.mean(v * v, -1, keepdims=True)) + 1e-6)

    def rope(t):  # (B, S, H, HD), interleaved complex rotation as in apply_rotary_emb
        B, S, H, HDm = t.shape
        tp = t.reshape(B, S, H, HDm // 2, 2)
        te, to = tp[..., 0], tp[..., 1]
        c = cos_half[None, :, None, :]
        s = sin_half[None, :, None, :]
        return jnp.stack([te * c - to * s, te * s + to * c], axis=-1).reshape(B, S, H, HDm)

    mm = lambda a, b: jnp.matmul(a, b, precision=HP)  # noqa: E731
    B, S, D = x.shape
    mask = jnp.tril(jnp.ones((S, S), bool))
    for l in range(NUM_LAYERS):
        h = rmsnorm(x, p["anw"][l])
        q = mm(h, p["qw"][l]) + p["qb"][l]
        k = mm(h, p["kw"][l]) + p["kb"][l]
        v = mm(h, p["vw"][l]) + p["vb"][l]
        q = rope(q.reshape(B, S, N_Q_HEADS, HEAD_DIM)).transpose(0, 2, 1, 3)
        k = rope(k.reshape(B, S, N_KV_HEADS, HEAD_DIM)).transpose(0, 2, 1, 3)
        v = v.reshape(B, S, N_KV_HEADS, HEAD_DIM).transpose(0, 2, 1, 3)
        k = jnp.tile(k, (1, GROUP, 1, 1))
        v = jnp.tile(v, (1, GROUP, 1, 1))
        s = jnp.einsum("bhqd,bhkd->bhqk", q, k, precision=HP) / math.sqrt(HEAD_DIM)
        s = jnp.where(mask, s, -jnp.inf)
        pr = jax.nn.softmax(s, axis=-1)
        o = jnp.einsum("bhqk,bhkd->bhqd", pr, v, precision=HP).transpose(0, 2, 1, 3).reshape(B, S, -1)
        x = x + mm(o, p["ow"][l]) + p["ob"][l]
        hf = rmsnorm(x, p["fnw"][l])
        g0 = mm(hf, p["w0"][l]) + p["b0"][l]
        g1 = mm(hf, p["w1"][l]) + p["b1"][l]
        x = x + mm(g0 * jax.nn.silu(g1), p["w2"][l]) + p["b2"][l]
    return rmsnorm(x, p["onw"][0])


if __name__ == "__main__":
    key = jax.random.PRNGKey(0)
    kx, kp = jax.random.split(key)
    x = jax.random.normal(kx, (BATCH, SEQ, INPUT_DIM), jnp.float32)
    params = init_params(kp)

    cos_all, sin_all = precompute_rope(HEAD_DIM, MAX_LEN)
    cos_half = cos_all[START_POS:START_POS + SEQ]
    sin_half = sin_all[START_POS:START_POS + SEQ]

    w_pk, aux = pack_operands(params, cos_half, sin_half)

    out = transformer_decoder_pallas(x, w_pk, aux)
    out = jax.block_until_ready(out)

    ref = ref_decoder(x, params, cos_half, sin_half)
    assert out.shape == (BATCH, SEQ, INPUT_DIM)
    err = float(jnp.max(jnp.abs(out - ref)))
    assert jnp.allclose(out, ref, atol=2e-3, rtol=2e-3), f"max abs err {err}"
    print("KERNEL_OK")
</pallas_src>

<mosaic_0001>
module attributes {stable_mosaic.version = 11 : i64} {
  func.func @decoder_kernel(%arg0: memref<16x32xf32, #tpu.memory_space<vmem>>, %arg1: memref<2x33x640xf32, #tpu.memory_space<vmem>>, %arg2: memref<64x512xf32, #tpu.memory_space<vmem>>, %arg3: memref<16x32xf32, #tpu.memory_space<vmem>>) attributes {dimension_semantics = [], scalar_prefetch = 0 : i64, scratch_operands = 0 : i64, tpu.core_type = #tpu.core_type<tc>} {
    %c0 = arith.constant 0 : index
    %c0_0 = arith.constant 0 : index
    %0 = vector.load %arg0[%c0, %c0_0] : memref<16x32xf32, #tpu.memory_space<vmem>>, vector<16x32xf32>
    %c0_1 = arith.constant 0 : index
    %c0_2 = arith.constant 0 : index
    %1 = vector.load %arg2[%c0_1, %c0_2] : memref<64x512xf32, #tpu.memory_space<vmem>>, vector<64x64xf32>
    %c0_3 = arith.constant 0 : index
    %c128 = arith.constant 128 : index
    %2 = vector.load %arg2[%c0_3, %c128] : memref<64x512xf32, #tpu.memory_space<vmem>>, vector<16x96xf32>
    %c0_4 = arith.constant 0 : index
    %c256 = arith.constant 256 : index
    %3 = vector.load %arg2[%c0_4, %c256] : memref<64x512xf32, #tpu.memory_space<vmem>>, vector<16x96xf32>
    %c0_5 = arith.constant 0 : index
    %c384 = arith.constant 384 : index
    %4 = vector.load %arg2[%c0_5, %c384] : memref<64x512xf32, #tpu.memory_space<vmem>>, vector<1x32xf32>
    %5 = arith.mulf %0, %0 : vector<16x32xf32>
    %cst = arith.constant dense<0.000000e+00> : vector<16xf32>
    %6 = vector.multi_reduction <add>, %5, %cst [1] : vector<16x32xf32> to vector<16xf32>
    %7 = vector.shape_cast %6 : vector<16xf32> to vector<16x1xf32>
    %cst_6 = arith.constant 3.200000e+01 : f32
    %8 = vector.broadcast %cst_6 : f32 to vector<16x1xf32>
    %9 = arith.divf %7, %8 : vector<16x1xf32>
    %10 = math.sqrt %9 : vector<16x1xf32>
    %cst_7 = arith.constant 9.99999997E-7 : f32
    %11 = vector.broadcast %cst_7 : f32 to vector<16x1xf32>
    %12 = arith.addf %10, %11 : vector<16x1xf32>
    %cst_8 = arith.constant 1.000000e+00 : f32
    %13 = vector.broadcast %cst_8 : f32 to vector<16x1xf32>
    %14 = arith.divf %13, %12 : vector<16x1xf32>
    %15 = vector.broadcast %14 : vector<16x1xf32> to vector<16x32xf32>
    %16 = arith.mulf %0, %15 : vector<16x32xf32>
    %c0_9 = arith.constant 0 : index
    %c0_10 = arith.constant 0 : index
    %c0_11 = arith.constant 0 : index
    %17 = vector.load %arg1[%c0_9, %c0_10, %c0_11] : memref<2x33x640xf32, #tpu.memory_space<vmem>>, vector<1x32x192xf32>
    %18 = vector.shape_cast %17 : vector<1x32x192xf32> to vector<32x192xf32>
    %cst_12 = arith.constant dense<0.000000e+00> : vector<16x192xf32>
    %19 = tpu.matmul %16, %18, %cst_12 {dimension_numbers = #tpu.dot_dimension_numbers<[1], [0], [0], [1], [0, 0, 1, 1], [], []>, precision = #tpu.contract_precision<fp32>} : vector<16x32xf32>, vector<32x192xf32>, vector<16x192xf32> -> vector<16x192xf32>
    %c0_13 = arith.constant 0 : index
    %c32 = arith.constant 32 : index
    %c0_14 = arith.constant 0 : index
    %20 = vector.load %arg1[%c0_13, %c32, %c0_14] : memref<2x33x640xf32, #tpu.memory_space<vmem>>, vector<1x1x192xf32>
    %21 = vector.shape_cast %20 : vector<1x1x192xf32> to vector<1x192xf32>
    %22 = vector.broadcast %21 : vector<1x192xf32> to vector<16x192xf32>
    %23 = arith.addf %19, %22 : vector<16x192xf32>
    %24 = vector.extract_strided_slice %23 {offsets = [0, 0], sizes = [16, 96], strides = [1, 1]} : vector<16x192xf32> to vector<16x96xf32>
    %25 = arith.mulf %24, %2 : vector<16x96xf32>
    %26 = vector.extract_strided_slice %23 {offsets = [0, 96], sizes = [16, 96], strides = [1, 1]} : vector<16x192xf32> to vector<16x96xf32>
    %27 = arith.mulf %26, %3 : vector<16x96xf32>
    %28 = arith.addf %25, %27 : vector<16x96xf32>
    %29 = vector.shape_cast %28 : vector<16x96xf32> to vector<16x12x8xf32>
    %30 = tpu.transpose %29, [1, 0, 2] : vector<16x12x8xf32> -> vector<12x16x8xf32>
    %31 = vector.shape_cast %30 : vector<12x16x8xf32> to vector<192x8xf32>
    %32 = vector.extract_strided_slice %31 {offsets = [0, 0], sizes = [64, 8], strides = [1, 1]} : vector<192x8xf32> to vector<64x8xf32>
    %33 = vector.extract_strided_slice %31 {offsets = [64, 0], sizes = [64, 8], strides = [1, 1]} : vector<192x8xf32> to vector<64x8xf32>
    %34 = vector.extract_strided_slice %31 {offsets = [128, 0], sizes = [64, 8], strides = [1, 1]} : vector<192x8xf32> to vector<64x8xf32>
    %cst_15 = arith.constant dense<0.000000e+00> : vector<64x64xf32>
    %35 = tpu.matmul %32, %33, %cst_15 {dimension_numbers = #tpu.dot_dimension_numbers<[1], [1], [0], [0], [0, 0, 1, 0], [], []>, precision = #tpu.contract_precision<fp32>} : vector<64x8xf32>, vector<64x8xf32>, vector<64x64xf32> -> vector<64x64xf32>
    %36 = arith.addf %35, %1 : vector<64x64xf32>
    %cst_16 = arith.constant dense<0xFF800000> : vector<64xf32>
    %37 = vector.multi_reduction <maximumf>, %36, %cst_16 [1] : vector<64x64xf32> to vector<64xf32>
    %38 = vector.shape_cast %37 : vector<64xf32> to vector<64x1xf32>
    %39 = vector.broadcast %38 : vector<64x1xf32> to vector<64x64xf32>
    %40 = arith.subf %36, %39 : vector<64x64xf32>
    %41 = math.exp %40 : vector<64x64xf32>
    %cst_17 = arith.constant dense<0.000000e+00> : vector<64xf32>
    %42 = vector.multi_reduction <add>, %41, %cst_17 [1] : vector<64x64xf32> to vector<64xf32>
    %43 = vector.shape_cast %42 : vector<64xf32> to vector<64x1xf32>
    %44 = vector.broadcast %43 : vector<64x1xf32> to vector<64x64xf32>
    %45 = arith.divf %41, %44 : vector<64x64xf32>
    %cst_18 = arith.constant dense<0.000000e+00> : vector<64x8xf32>
    %46 = tpu.matmul %45, %34, %cst_18 {dimension_numbers = #tpu.dot_dimension_numbers<[1], [0], [0], [1], [0, 0, 1, 1], [], []>, precision = #tpu.contract_precision<fp32>} : vector<64x64xf32>, vector<64x8xf32>, vector<64x8xf32> -> vector<64x8xf32>
    %47 = vector.shape_cast %46 : vector<64x8xf32> to vector<4x16x8xf32>
    %48 = tpu.transpose %47, [1, 0, 2] : vector<4x16x8xf32> -> vector<16x4x8xf32>
    %49 = vector.shape_cast %48 : vector<16x4x8xf32> to vector<16x32xf32>
    %c0_19 = arith.constant 0 : index
    %c0_20 = arith.constant 0 : index
    %c256_21 = arith.constant 256 : index
    %50 = vector.load %arg1[%c0_19, %c0_20, %c256_21] : memref<2x33x640xf32, #tpu.memory_space<vmem>>, vector<1x32x32xf32>
    %51 = vector.shape_cast %50 : vector<1x32x32xf32> to vector<32x32xf32>
    %cst_22 = arith.constant dense<0.000000e+00> : vector<16x32xf32>
    %52 = tpu.matmul %49, %51, %cst_22 {dimension_numbers = #tpu.dot_dimension_numbers<[1], [0], [0], [1], [0, 0, 1, 1], [], []>, precision = #tpu.contract_precision<fp32>} : vector<16x32xf32>, vector<32x32xf32>, vector<16x32xf32> -> vector<16x32xf32>
    %53 = arith.addf %0, %52 : vector<16x32xf32>
    %c0_23 = arith.constant 0 : index
    %c32_24 = arith.constant 32 : index
    %c256_25 = arith.constant 256 : index
    %54 = vector.load %arg1[%c0_23, %c32_24, %c256_25] : memref<2x33x640xf32, #tpu.memory_space<vmem>>, vector<1x1x32xf32>
    %55 = vector.shape_cast %54 : vector<1x1x32xf32> to vector<1x32xf32>
    %56 = vector.broadcast %55 : vector<1x32xf32> to vector<16x32xf32>
    %57 = arith.addf %53, %56 : vector<16x32xf32>
    %58 = arith.mulf %57, %57 : vector<16x32xf32>
    %cst_26 = arith.constant dense<0.000000e+00> : vector<16xf32>
    %59 = vector.multi_reduction <add>, %58, %cst_26 [1] : vector<16x32xf32> to vector<16xf32>
    %60 = vector.shape_cast %59 : vector<16xf32> to vector<16x1xf32>
    %cst_27 = arith.constant 3.200000e+01 : f32
    %61 = vector.broadcast %cst_27 : f32 to vector<16x1xf32>
    %62 = arith.divf %60, %61 : vector<16x1xf32>
    %63 = math.sqrt %62 : vector<16x1xf32>
    %cst_28 = arith.constant 9.99999997E-7 : f32
    %64 = vector.broadcast %cst_28 : f32 to vector<16x1xf32>
    %65 = arith.addf %63, %64 : vector<16x1xf32>
    %cst_29 = arith.constant 1.000000e+00 : f32
    %66 = vector.broadcast %cst_29 : f32 to vector<16x1xf32>
    %67 = arith.divf %66, %65 : vector<16x1xf32>
    %68 = vector.broadcast %67 : vector<16x1xf32> to vector<16x32xf32>
    %69 = arith.mulf %57, %68 : vector<16x32xf32>
    %c0_30 = arith.constant 0 : index
    %c0_31 = arith.constant 0 : index
    %c384_32 = arith.constant 384 : index
    %70 = vector.load %arg1[%c0_30, %c0_31, %c384_32] : memref<2x33x640xf32, #tpu.memory_space<vmem>>, vector<1x32x64xf32>
    %71 = vector.shape_cast %70 : vector<1x32x64xf32> to vector<32x64xf32>
    %cst_33 = arith.constant dense<0.000000e+00> : vector<16x64xf32>
    %72 = tpu.matmul %69, %71, %cst_33 {dimension_numbers = #tpu.dot_dimension_numbers<[1], [0], [0], [1], [0, 0, 1, 1], [], []>, precision = #tpu.contract_precision<fp32>} : vector<16x32xf32>, vector<32x64xf32>, vector<16x64xf32> -> vector<16x64xf32>
    %c0_34 = arith.constant 0 : index
    %c32_35 = arith.constant 32 : index
    %c384_36 = arith.constant 384 : index
    %73 = vector.load %arg1[%c0_34, %c32_35, %c384_36] : memref<2x33x640xf32, #tpu.memory_space<vmem>>, vector<1x1x64xf32>
    %74 = vector.shape_cast %73 : vector<1x1x64xf32> to vector<1x64xf32>
    %75 = vector.broadcast %74 : vector<1x64xf32> to vector<16x64xf32>
    %76 = arith.addf %72, %75 : vector<16x64xf32>
    %77 = vector.extract_strided_slice %76 {offsets = [0, 0], sizes = [16, 32], strides = [1, 1]} : vector<16x64xf32> to vector<16x32xf32>
    %78 = vector.extract_strided_slice %76 {offsets = [0, 32], sizes = [16, 32], strides = [1, 1]} : vector<16x64xf32> to vector<16x32xf32>
    %79 = arith.mulf %77, %78 : vector<16x32xf32>
    %80 = arith.negf %78 : vector<16x32xf32>
    %81 = math.exp %80 : vector<16x32xf32>
    %cst_37 = arith.constant 1.000000e+00 : f32
    %82 = vector.broadcast %cst_37 : f32 to vector<16x32xf32>
    %83 = arith.addf %82, %81 : vector<16x32xf32>
    %84 = arith.divf %82, %83 : vector<16x32xf32>
    %85 = arith.mulf %79, %84 : vector<16x32xf32>
    %c0_38 = arith.constant 0 : index
    %c0_39 = arith.constant 0 : index
    %c512 = arith.constant 512 : index
    %86 = vector.load %arg1[%c0_38, %c0_39, %c512] : memref<2x33x640xf32, #tpu.memory_space<vmem>>, vector<1x32x32xf32>
    %87 = vector.shape_cast %86 : vector<1x32x32xf32> to vector<32x32xf32>
    %cst_40 = arith.constant dense<0.000000e+00> : vector<16x32xf32>
    %88 = tpu.matmul %85, %87, %cst_40 {dimension_numbers = #tpu.dot_dimension_numbers<[1], [0], [0], [1], [0, 0, 1, 1], [], []>, precision = #tpu.contract_precision<fp32>} : vector<16x32xf32>, vector<32x32xf32>, vector<16x32xf32> -> vector<16x32xf32>
    %89 = arith.addf %57, %88 : vector<16x32xf32>
    %c0_41 = arith.constant 0 : index
    %c32_42 = arith.constant 32 : index
    %c512_43 = arith.constant 512 : index
    %90 = vector.load %arg1[%c0_41, %c32_42, %c512_43] : memref<2x33x640xf32, #tpu.memory_space<vmem>>, vector<1x1x32xf32>
    %91 = vector.shape_cast %90 : vector<1x1x32xf32> to vector<1x32xf32>
    %92 = vector.broadcast %91 : vector<1x32xf32> to vector<16x32xf32>
    %93 = arith.addf %89, %92 : vector<16x32xf32>
    %94 = arith.mulf %93, %93 : vector<16x32xf32>
    %cst_44 = arith.constant dense<0.000000e+00> : vector<16xf32>
    %95 = vector.multi_reduction <add>, %94, %cst_44 [1] : vector<16x32xf32> to vector<16xf32>
    %96 = vector.shape_cast %95 : vector<16xf32> to vector<16x1xf32>
    %cst_45 = arith.constant 3.200000e+01 : f32
    %97 = vector.broadcast %cst_45 : f32 to vector<16x1xf32>
    %98 = arith.divf %96, %97 : vector<16x1xf32>
    %99 = math.sqrt %98 : vector<16x1xf32>
    %cst_46 = arith.constant 9.99999997E-7 : f32
    %100 = vector.broadcast %cst_46 : f32 to vector<16x1xf32>
    %101 = arith.addf %99, %100 : vector<16x1xf32>
    %cst_47 = arith.constant 1.000000e+00 : f32
    %102 = vector.broadcast %cst_47 : f32 to vector<16x1xf32>
    %103 = arith.divf %102, %101 : vector<16x1xf32>
    %104 = vector.broadcast %103 : vector<16x1xf32> to vector<16x32xf32>
    %105 = arith.mulf %93, %104 : vector<16x32xf32>
    %c1 = arith.constant 1 : index
    %c0_48 = arith.constant 0 : index
    %c0_49 = arith.constant 0 : index
    %106 = vector.load %arg1[%c1, %c0_48, %c0_49] : memref<2x33x640xf32, #tpu.memory_space<vmem>>, vector<1x32x192xf32>
    %107 = vector.shape_cast %106 : vector<1x32x192xf32> to vector<32x192xf32>
    %cst_50 = arith.constant dense<0.000000e+00> : vector<16x192xf32>
    %108 = tpu.matmul %105, %107, %cst_50 {dimension_numbers = #tpu.dot_dimension_numbers<[1], [0], [0], [1], [0, 0, 1, 1], [], []>, precision = #tpu.contract_precision<fp32>} : vector<16x32xf32>, vector<32x192xf32>, vector<16x192xf32> -> vector<16x192xf32>
    %c1_51 = arith.constant 1 : index
    %c32_52 = arith.constant 32 : index
    %c0_53 = arith.constant 0 : index
    %109 = vector.load %arg1[%c1_51, %c32_52, %c0_53] : memref<2x33x640xf32, #tpu.memory_space<vmem>>, vector<1x1x192xf32>
    %110 = vector.shape_cast %109 : vector<1x1x192xf32> to vector<1x192xf32>
    %111 = vector.broadcast %110 : vector<1x192xf32> to vector<16x192xf32>
    %112 = arith.addf %108, %111 : vector<16x192xf32>
    %113 = vector.extract_strided_slice %112 {offsets = [0, 0], sizes = [16, 96], strides = [1, 1]} : vector<16x192xf32> to vector<16x96xf32>
    %114 = arith.mulf %113, %2 : vector<16x96xf32>
    %115 = vector.extract_strided_slice %112 {offsets = [0, 96], sizes = [16, 96], strides = [1, 1]} : vector<16x192xf32> to vector<16x96xf32>
    %116 = arith.mulf %115, %3 : vector<16x96xf32>
    %117 = arith.addf %114, %116 : vector<16x96xf32>
    %118 = vector.shape_cast %117 : vector<16x96xf32> to vector<16x12x8xf32>
    %119 = tpu.transpose %118, [1, 0, 2] : vector<16x12x8xf32> -> vector<12x16x8xf32>
    %120 = vector.shape_cast %119 : vector<12x16x8xf32> to vector<192x8xf32>
    %121 = vector.extract_strided_slice %120 {offsets = [0, 0], sizes = [64, 8], strides = [1, 1]} : vector<192x8xf32> to vector<64x8xf32>
    %122 = vector.extract_strided_slice %120 {offsets = [64, 0], sizes = [64, 8], strides = [1, 1]} : vector<192x8xf32> to vector<64x8xf32>
    %123 = vector.extract_strided_slice %120 {offsets = [128, 0], sizes = [64, 8], strides = [1, 1]} : vector<192x8xf32> to vector<64x8xf32>
    %cst_54 = arith.constant dense<0.000000e+00> : vector<64x64xf32>
    %124 = tpu.matmul %121, %122, %cst_54 {dimension_numbers = #tpu.dot_dimension_numbers<[1], [1], [0], [0], [0, 0, 1, 0], [], []>, precision = #tpu.contract_precision<fp32>} : vector<64x8xf32>, vector<64x8xf32>, vector<64x64xf32> -> vector<64x64xf32>
    %125 = arith.addf %124, %1 : vector<64x64xf32>
    %cst_55 = arith.constant dense<0xFF800000> : vector<64xf32>
    %126 = vector.multi_reduction <maximumf>, %125, %cst_55 [1] : vector<64x64xf32> to vector<64xf32>
    %127 = vector.shape_cast %126 : vector<64xf32> to vector<64x1xf32>
    %128 = vector.broadcast %127 : vector<64x1xf32> to vector<64x64xf32>
    %129 = arith.subf %125, %128 : vector<64x64xf32>
    %130 = math.exp %129 : vector<64x64xf32>
    %cst_56 = arith.constant dense<0.000000e+00> : vector<64xf32>
    %131 = vector.multi_reduction <add>, %130, %cst_56 [1] : vector<64x64xf32> to vector<64xf32>
    %132 = vector.shape_cast %131 : vector<64xf32> to vector<64x1xf32>
    %133 = vector.broadcast %132 : vector<64x1xf32> to vector<64x64xf32>
    %134 = arith.divf %130, %133 : vector<64x64xf32>
    %cst_57 = arith.constant dense<0.000000e+00> : vector<64x8xf32>
    %135 = tpu.matmul %134, %123, %cst_57 {dimension_numbers = #tpu.dot_dimension_numbers<[1], [0], [0], [1], [0, 0, 1, 1], [], []>, precision = #tpu.contract_precision<fp32>} : vector<64x64xf32>, vector<64x8xf32>, vector<64x8xf32> -> vector<64x8xf32>
    %136 = vector.shape_cast %135 : vector<64x8xf32> to vector<4x16x8xf32>
    %137 = tpu.transpose %136, [1, 0, 2] : vector<4x16x8xf32> -> vector<16x4x8xf32>
    %138 = vector.shape_cast %137 : vector<16x4x8xf32> to vector<16x32xf32>
    %c1_58 = arith.constant 1 : index
    %c0_59 = arith.constant 0 : index
    %c256_60 = arith.constant 256 : index
    %139 = vector.load %arg1[%c1_58, %c0_59, %c256_60] : memref<2x33x640xf32, #tpu.memory_space<vmem>>, vector<1x32x32xf32>
    %140 = vector.shape_cast %139 : vector<1x32x32xf32> to vector<32x32xf32>
    %cst_61 = arith.constant dense<0.000000e+00> : vector<16x32xf32>
    %141 = tpu.matmul %138, %140, %cst_61 {dimension_numbers = #tpu.dot_dimension_numbers<[1], [0], [0], [1], [0, 0, 1, 1], [], []>, precision = #tpu.contract_precision<fp32>} : vector<16x32xf32>, vector<32x32xf32>, vector<16x32xf32> -> vector<16x32xf32>
    %142 = arith.addf %93, %141 : vector<16x32xf32>
    %c1_62 = arith.constant 1 : index
    %c32_63 = arith.constant 32 : index
    %c256_64 = arith.constant 256 : index
    %143 = vector.load %arg1[%c1_62, %c32_63, %c256_64] : memref<2x33x640xf32, #tpu.memory_space<vmem>>, vector<1x1x32xf32>
    %144 = vector.shape_cast %143 : vector<1x1x32xf32> to vector<1x32xf32>
    %145 = vector.broadcast %144 : vector<1x32xf32> to vector<16x32xf32>
    %146 = arith.addf %142, %145 : vector<16x32xf32>
    %147 = arith.mulf %146, %146 : vector<16x32xf32>
    %cst_65 = arith.constant dense<0.000000e+00> : vector<16xf32>
    %148 = vector.multi_reduction <add>, %147, %cst_65 [1] : vector<16x32xf32> to vector<16xf32>
    %149 = vector.shape_cast %148 : vector<16xf32> to vector<16x1xf32>
    %cst_66 = arith.constant 3.200000e+01 : f32
    %150 = vector.broadcast %cst_66 : f32 to vector<16x1xf32>
    %151 = arith.divf %149, %150 : vector<16x1xf32>
    %152 = math.sqrt %151 : vector<16x1xf32>
    %cst_67 = arith.constant 9.99999997E-7 : f32
    %153 = vector.broadcast %cst_67 : f32 to vector<16x1xf32>
    %154 = arith.addf %152, %153 : vector<16x1xf32>
    %cst_68 = arith.constant 1.000000e+00 : f32
    %155 = vector.broadcast %cst_68 : f32 to vector<16x1xf32>
    %156 = arith.divf %155, %154 : vector<16x1xf32>
    %157 = vector.broadcast %156 : vector<16x1xf32> to vector<16x32xf32>
    %158 = arith.mulf %146, %157 : vector<16x32xf32>
    %c1_69 = arith.constant 1 : index
    %c0_70 = arith.constant 0 : index
    %c384_71 = arith.constant 384 : index
    %159 = vector.load %arg1[%c1_69, %c0_70, %c384_71] : memref<2x33x640xf32, #tpu.memory_space<vmem>>, vector<1x32x64xf32>
    %160 = vector.shape_cast %159 : vector<1x32x64xf32> to vector<32x64xf32>
    %cst_72 = arith.constant dense<0.000000e+00> : vector<16x64xf32>
    %161 = tpu.matmul %158, %160, %cst_72 {dimension_numbers = #tpu.dot_dimension_numbers<[1], [0], [0], [1], [0, 0, 1, 1], [], []>, precision = #tpu.contract_precision<fp32>} : vector<16x32xf32>, vector<32x64xf32>, vector<16x64xf32> -> vector<16x64xf32>
    %c1_73 = arith.constant 1 : index
    %c32_74 = arith.constant 32 : index
    %c384_75 = arith.constant 384 : index
    %162 = vector.load %arg1[%c1_73, %c32_74, %c384_75] : memref<2x33x640xf32, #tpu.memory_space<vmem>>, vector<1x1x64xf32>
    %163 = vector.shape_cast %162 : vector<1x1x64xf32> to vector<1x64xf32>
    %164 = vector.broadcast %163 : vector<1x64xf32> to vector<16x64xf32>
    %165 = arith.addf %161, %164 : vector<16x64xf32>
    %166 = vector.extract_strided_slice %165 {offsets = [0, 0], sizes = [16, 32], strides = [1, 1]} : vector<16x64xf32> to vector<16x32xf32>
    %167 = vector.extract_strided_slice %165 {offsets = [0, 32], sizes = [16, 32], strides = [1, 1]} : vector<16x64xf32> to vector<16x32xf32>
    %168 = arith.mulf %166, %167 : vector<16x32xf32>
    %169 = arith.negf %167 : vector<16x32xf32>
    %170 = math.exp %169 : vector<16x32xf32>
    %cst_76 = arith.constant 1.000000e+00 : f32
    %171 = vector.broadcast %cst_76 : f32 to vector<16x32xf32>
    %172 = arith.addf %171, %170 : vector<16x32xf32>
    %173 = arith.divf %171, %172 : vector<16x32xf32>
    %174 = arith.mulf %168, %173 : vector<16x32xf32>
    %c1_77 = arith.constant 1 : index
    %c0_78 = arith.constant 0 : index
    %c512_79 = arith.constant 512 : index
    %175 = vector.load %arg1[%c1_77, %c0_78, %c512_79] : memref<2x33x640xf32, #tpu.memory_space<vmem>>, vector<1x32x32xf32>
    %176 = vector.shape_cast %175 : vector<1x32x32xf32> to vector<32x32xf32>
    %cst_80 = arith.constant dense<0.000000e+00> : vector<16x32xf32>
    %177 = tpu.matmul %174, %176, %cst_80 {dimension_numbers = #tpu.dot_dimension_numbers<[1], [0], [0], [1], [0, 0, 1, 1], [], []>, precision = #tpu.contract_precision<fp32>} : vector<16x32xf32>, vector<32x32xf32>, vector<16x32xf32> -> vector<16x32xf32>
    %178 = arith.addf %146, %177 : vector<16x32xf32>
    %c1_81 = arith.constant 1 : index
    %c32_82 = arith.constant 32 : index
    %c512_83 = arith.constant 512 : index
    %179 = vector.load %arg1[%c1_81, %c32_82, %c512_83] : memref<2x33x640xf32, #tpu.memory_space<vmem>>, vector<1x1x32xf32>
    %180 = vector.shape_cast %179 : vector<1x1x32xf32> to vector<1x32xf32>
    %181 = vector.broadcast %180 : vector<1x32xf32> to vector<16x32xf32>
    %182 = arith.addf %178, %181 : vector<16x32xf32>
    %183 = vector.broadcast %4 : vector<1x32xf32> to vector<16x32xf32>
    %184 = arith.mulf %183, %182 : vector<16x32xf32>
    %185 = arith.mulf %182, %182 : vector<16x32xf32>
    %cst_84 = arith.constant dense<0.000000e+00> : vector<16xf32>
    %186 = vector.multi_reduction <add>, %185, %cst_84 [1] : vector<16x32xf32> to vector<16xf32>
    %187 = vector.shape_cast %186 : vector<16xf32> to vector<16x1xf32>
    %cst_85 = arith.constant 3.200000e+01 : f32
    %188 = vector.broadcast %cst_85 : f32 to vector<16x1xf32>
    %189 = arith.divf %187, %188 : vector<16x1xf32>
    %190 = math.sqrt %189 : vector<16x1xf32>
    %cst_86 = arith.constant 9.99999997E-7 : f32
    %191 = vector.broadcast %cst_86 : f32 to vector<16x1xf32>
    %192 = arith.addf %190, %191 : vector<16x1xf32>
    %cst_87 = arith.constant 1.000000e+00 : f32
    %193 = vector.broadcast %cst_87 : f32 to vector<16x1xf32>
    %194 = arith.divf %193, %192 : vector<16x1xf32>
    %195 = vector.broadcast %194 : vector<16x1xf32> to vector<16x32xf32>
    %196 = arith.mulf %184, %195 : vector<16x32xf32>
    %c0_88 = arith.constant 0 : index
    %c0_89 = arith.constant 0 : index
    %197 = vector.load %arg3[%c0_88, %c0_89] : memref<16x32xf32, #tpu.memory_space<vmem>>, vector<16x32xf32>
    tpu.vector_store %arg3[%c0_88, %c0_89], %196 {strides = array<i32>} : memref<16x32xf32, #tpu.memory_space<vmem>>, vector<16x32xf32>,
    return
  }
}

</mosaic_0001>

<llo_original>
// kernel: tpu_custom_call.1
$region0: #{tpu_custom_call.1}
  #allocation0 [shape = 'u32[]', space=smem, size = 0x4, offset = 0x4, fixed_abs, tag = 'smem constant byte address 0x4 - core index']
  #allocation1 [shape = 'u32[144,128]{1,0:T(1,128)}', space=vmem, size = 0x12000, scoped, tag = 'internal scratch']
  %s0 = inlined_call_operand.vmem [shape: f32[16,32], index: 0, kind: input, shape index: {}]
  %s1 = inlined_call_operand.vmem [shape: f32[2,33,640], index: 1, kind: input, shape index: {}]
  %s2 = inlined_call_operand.vmem [shape: f32[64,512], index: 2, kind: input, shape index: {}]
  %s3 = inlined_call_operand.hbm [shape: f32[16,32], index: 3, kind: output, shape index: {}]
  %s4 = sld [smem:[#allocation0]]
  $region22: #{tpu_custom_call.1} parent=0
    _
  %s6 = ssub.s32 1, %s4
  %s7 = scalar_select 0, %s6, %s4
  $region1: #{tpu_custom_call.1} parent=0
    #allocation2 [shape = 'u8[8192]{0}', space=vmem, size = 0x2000, scoped, tag = 'output window, operand 0, single buffered']
    #allocation3 [shape = 's32[1]{0}', space=sflag, size = 0x4, scoped, tag = 'scoped memory for tpu_custom_call.1']
    %8 = vsyncpa [#allocation3], 0
    // Predicated region
    $region2: #{tpu_custom_call.1} parent=1 // pred_check
      _
    $region3: #{tpu_custom_call.1} parent=1 // pred_check_branch
      %10 = sbr.rel (0) target = $region5
    $region4: #{tpu_custom_call.1} parent=1 // pred_region
      _
    $region5: #{tpu_custom_call.1} parent=1 // pred_fallthru
      _
    // Predicated region
    $region6: #{tpu_custom_call.1} parent=1 // pred_check
      _
    $region7: #{tpu_custom_call.1} parent=1 // pred_check_branch
      %12 = sbr.rel (0) target = $region9
    $region8: #{tpu_custom_call.1} parent=1 // pred_region
      _
    $region9: #{tpu_custom_call.1} parent=1 // pred_fallthru
      _
    // Predicated region
    $region10: #{tpu_custom_call.1} parent=1 // pred_check
      _
    $region11: #{tpu_custom_call.1} parent=1 // pred_check_branch
      %14 = sbr.rel (0) target = $region13
    $region12: #{tpu_custom_call.1} parent=1 // pred_region
      _
    $region13: #{tpu_custom_call.1} parent=1 // pred_fallthru
      _
    %v15 = vld [vmem:[%s0] sm:$0xff]
    %v16 = vld [vmem:[%s0 + $0x8] sm:$0xff]
    %v17 = vld [vmem:[%s2] sm:$0xff]
    %v18 = vld [vmem:[%s2 + $0x20] sm:$0xff]
    %v19 = vld [vmem:[%s2 + $0x40] sm:$0xff]
    %v20 = vld [vmem:[%s2 + $0x60] sm:$0xff]
    %v21 = vld [vmem:[%s2 + $0x80] sm:$0xff]
    %v22 = vld [vmem:[%s2 + $0xa0] sm:$0xff]
    %v23 = vld [vmem:[%s2 + $0xc0] sm:$0xff]
    %v24 = vld [vmem:[%s2 + $0xe0] sm:$0xff]
    %v25 = vld [vmem:[%s2 + $0x8] sm:$0xff]
    %v26 = vld [vmem:[%s2 + $0x28] sm:$0xff]
    %v27 = vld [vmem:[%s2 + $0x10] sm:$0xff]
    %v28 = vld [vmem:[%s2 + $0x30] sm:$0xff]
    %v29 = vld [vmem:[%s2 + $0x18] ss:$0 sm:$0xff]
    %v30 = vmul.f32 %v15, %v15
    %v31 = vmul.f32 %v16, %v16
    %vm32 = vcmask 261120
    %v33 = vsel %vm32, %v30, 0.0
    %34 = vadd.xlane.f32.xlu0 %v33
    %v35 = vpop.xlane.xlu0 %34
    %v36 = vsel %vm32, %v31, 0.0
    %37 = vadd.xlane.f32.xlu0 %v36
    %v38 = vpop.xlane.xlu0 %37
    %v39 = vrcp.pop 32.0
    %v40 = vmul.f32 %v35, %v39
    %v41 = vmul.f32 %v38, %v39
    %v42 = vrsqrt.pop %v40
    %v43 = vmul.f32 %v40, %v42
    %vm44 = vcmp.eq.f32.partialorder %v40, inf
    %v45 = vsel %vm44, %v40, %v43
    %vm46 = vcmp.eq.f32.partialorder %v40, 0.0
    %v47 = vand.u32 %v40, 2147483648
    %v48 = vsel %vm46, %v47, %v45
    %v49 = vrsqrt.pop %v41
    %v50 = vmul.f32 %v41, %v49
    %vm51 = vcmp.eq.f32.partialorder %v41, inf
    %v52 = vsel %vm51, %v41, %v50
    %vm53 = vcmp.eq.f32.partialorder %v41, 0.0
    %v54 = vand.u32 %v41, 2147483648
    %v55 = vsel %vm53, %v54, %v52
    %v56 = vadd.f32 %v48, 1e-06
    %v57 = vadd.f32 %v55, 1e-06
    %v58 = vrcp.pop %v56
    %v59 = vmul.f32 1.0, %v58
    %v60 = vrcp.pop %v57
    %v61 = vmul.f32 1.0, %v60
    %v62 = vmul.f32 %v15, %v59
    %v63 = vmul.f32 %v16, %v61
    %v64 = vld [vmem:[%s1] sm:$0xff]
    %v65 = vld [vmem:[%s1 + $0x8] sm:$0xff]
    %v66 = vld [vmem:[%s1 + $0x28] sm:$0xff]
    %v67 = vld [vmem:[%s1 + $0x30] sm:$0xff]
    %v68 = vld [vmem:[%s1 + $0x50] sm:$0xff]
    %v69 = vld [vmem:[%s1 + $0x58] sm:$0xff]
    %v70 = vld [vmem:[%s1 + $0x78] sm:$0xff]
    %v71 = vld [vmem:[%s1 + $0x80] sm:$0xff]
    %s72 = scalar_lea.vmem %s1, 160
    %v73 = vld [vmem:[%s72] ss:$8 sm:$0x3]
    %v75 = vlaneseq
    %v76 = vshrl.u32 %v75, 7
    %v77 = vsub.s32 0, %v76
    %v78 = vrot.slane %v73, %v77
    %v79 = vlaneseq
    %v80 = vshrl.u32 %v79, 7
    %v81 = vsub.s32 1, %v80
    %v82 = vrot.slane %v73, %v81
    %v86 = vsel %vm32, %v62, 0
    %v89 = vsel %vm32, %v63, 0
    %91 = vmatprep.subr.mxu0 0.0
    %92 = vmatpush1.msra.mxu0 0.0
    %93 = vmatprep.subr.mxu0 0.0
    %94 = vmatpush1.msra.mxu0 0.0
    %95 = vmatprep.subr.mxu0 0.0
    %96 = vmatpush1.msra.mxu0 0.0
    %97 = vmatprep.subr.mxu0 0.0
    %98 = vmatpush1.msra.mxu0 0.0
    %99 = vmatprep.subr.mxu0 0.0
    %100 = vmatpush1.msra.mxu0 0.0
    %101 = vmatprep.subr.mxu0 0.0
    %102 = vmatpush1.msra.mxu0 0.0
    %103 = vmatprep.subr.mxu0 0.0
    %104 = vmatpush1.msra.mxu0 0.0
    %105 = vmatprep.subr.mxu0 0.0
    %106 = vmatpush1.msra.mxu0 0.0
    %107 = vmatprep.subr.mxu0 0.0
    %108 = vmatpush1.msra.mxu0 0.0
    %109 = vmatprep.subr.mxu0 0.0
    %110 = vmatpush1.msra.mxu0 0.0
    %111 = vmatprep.subr.mxu0 0.0
    %112 = vmatpush1.msra.mxu0 0.0
    %113 = vmatprep.subr.mxu0 0.0
    %114 = vmatpush1.msra.mxu0 0.0
    %v115 = vand.u32 %v71, 4294901760
    %116 = vmatprep.subr.mxu0 %v115
    %v117 = vand.u32 %v70, 4294901760
    %118 = vmatpush1.msra.mxu0 %v117
    %v119 = vand.u32 %v69, 4294901760
    %120 = vmatprep.subr.mxu0 %v119
    %v121 = vand.u32 %v68, 4294901760
    %122 = vmatpush1.msra.mxu0 %v121
    %v123 = vand.u32 %v67, 4294901760
    %124 = vmatprep.subr.mxu0 %v123
    %v125 = vand.u32 %v66, 4294901760
    %126 = vmatpush1.msra.mxu0 %v125
    %v127 = vand.u32 %v65, 4294901760
    %128 = vmatprep.subr.mxu0 %v127
    %v129 = vand.u32 %v64, 4294901760
    %130 = vmatpush1.msra.mxu0 %v129
    %131 = vmatprep.subr.mxu0 0.0
    %132 = vmatpush2.msra.mxu0 0.0
    %133 = vmatprep.subr.mxu0 0.0
    %134 = vmatpush2.msra.mxu0 0.0
    %135 = vmatprep.subr.mxu0 0.0
    %136 = vmatpush2.msra.mxu0 0.0
    %137 = vmatprep.subr.mxu0 0.0
    %138 = vmatpush2.msra.mxu0 0.0
    %139 = vmatprep.subr.mxu0 0.0
    %140 = vmatpush2.msra.mxu0 0.0
    %141 = vmatprep.subr.mxu0 0.0
    %142 = vmatpush2.msra.mxu0 0.0
    %143 = vmatprep.subr.mxu0 0.0
    %144 = vmatpush2.msra.mxu0 0.0
    %145 = vmatprep.subr.mxu0 0.0
    %146 = vmatpush2.msra.mxu0 0.0
    %147 = vmatprep.subr.mxu0 0.0
    %148 = vmatpush2.msra.mxu0 0.0
    %149 = vmatprep.subr.mxu0 0.0
    %150 = vmatpush2.msra.mxu0 0.0
    %151 = vmatprep.subr.mxu0 0.0
    %152 = vmatpush2.msra.mxu0 0.0
    %153 = vmatprep.subr.mxu0 0.0
    %154 = vmatpush2.msra.mxu0 0.0
    %155 = vmatprep.subr.mxu0 0.0
    %156 = vmatpush2.msra.mxu0 0.0
    %157 = vmatprep.subr.mxu0 0.0
    %158 = vmatpush2.msra.mxu0 0.0
    %159 = vmatprep.subr.mxu0 0.0
    %160 = vmatpush2.msra.mxu0 0.0
    %161 = vmatprep.subr.mxu0 0.0
    %162 = vmatpush2.msra.mxu0 0.0
    %163 = vmatprep.mubr.f32.mxu0 0.0
    %v164 = vand.u32 %v86, 4294901760
    %v165 = vsub.f32 %v86, %v164
    %v166 = vand.u32 %v165, 4294901760
    %v167 = vsub.f32 %v165, %v166
    %v168 = vand.u32 %v167, 4294901760
    %169 = vmatmul.mubr.f32.gmra.mxu0 %v168
    %v170 = vpop.f32.mrf.mxu0
    %v171 = vadd.f32 %v78, %v170
    %v172 = vpop.f32.mrf.mxu0
    %v173 = vadd.f32 %v82, %v172
    %174 = vmatprep.mubr.f32.mxu0 0.0
    %v175 = vand.u32 %v89, 4294901760
    %v176 = vsub.f32 %v89, %v175
    %v177 = vand.u32 %v176, 4294901760
    %v178 = vsub.f32 %v176, %v177
    %v179 = vand.u32 %v178, 4294901760
    %180 = vmatmul.mubr.f32.gmra.mxu0 %v179
    %v181 = vpop.f32.mrf.mxu0
    %v182 = vadd.f32 %v78, %v181
    %v183 = vpop.f32.mrf.mxu0
    %v184 = vadd.f32 %v82, %v183
    %185 = vdwg.mxu0
    %186 = vmatprep.subr.mxu0 0.0
    %187 = vmatpush1.msra.mxu0 0.0
    %188 = vmatprep.subr.mxu0 0.0
    %189 = vmatpush1.msra.mxu0 0.0
    %190 = vmatprep.subr.mxu0 0.0
    %191 = vmatpush1.msra.mxu0 0.0
    %192 = vmatprep.subr.mxu0 0.0
    %193 = vmatpush1.msra.mxu0 0.0
    %194 = vmatprep.subr.mxu0 0.0
    %195 = vmatpush1.msra.mxu0 0.0
    %196 = vmatprep.subr.mxu0 0.0
    %197 = vmatpush1.msra.mxu0 0.0
    %198 = vmatprep.subr.mxu0 0.0
    %199 = vmatpush1.msra.mxu0 0.0
    %200 = vmatprep.subr.mxu0 0.0
    %201 = vmatpush1.msra.mxu0 0.0
    %202 = vmatprep.subr.mxu0 0.0
    %203 = vmatpush1.msra.mxu0 0.0
    %204 = vmatprep.subr.mxu0 0.0
    %205 = vmatpush1.msra.mxu0 0.0
    %206 = vmatprep.subr.mxu0 0.0
    %207 = vmatpush1.msra.mxu0 0.0
    %208 = vmatprep.subr.mxu0 0.0
    %209 = vmatpush1.msra.mxu0 0.0
    %v210 = vand.u32 %v71, 4294901760
    %v211 = vsub.f32 %v71, %v210
    %v212 = vand.u32 %v211, 4294901760
    %v213 = vsub.f32 %v211, %v212
    %v214 = vand.u32 %v213, 4294901760
    %215 = vmatprep.subr.mxu0 %v214
    %v216 = vand.u32 %v70, 4294901760
    %v217 = vsub.f32 %v70, %v216
    %v218 = vand.u32 %v217, 4294901760
    %v219 = vsub.f32 %v217, %v218
    %v220 = vand.u32 %v219, 4294901760
    %221 = vmatpush1.msra.mxu0 %v220
    %v222 = vand.u32 %v69, 4294901760
    %v223 = vsub.f32 %v69, %v222
    %v224 = vand.u32 %v223, 4294901760
    %v225 = vsub.f32 %v223, %v224
    %v226 = vand.u32 %v225, 4294901760
    %227 = vmatprep.subr.mxu0 %v226
    %v228 = vand.u32 %v68, 4294901760
    %v229 = vsub.f32 %v68, %v228
    %v230 = vand.u32 %v229, 4294901760
    %v231 = vsub.f32 %v229, %v230
    %v232 = vand.u32 %v231, 4294901760
    %233 = vmatpush1.msra.mxu0 %v232
    %v234 = vand.u32 %v67, 4294901760
    %v235 = vsub.f32 %v67, %v234
    %v236 = vand.u32 %v235, 4294901760
    %v237 = vsub.f32 %v235, %v236
    %v238 = vand.u32 %v237, 4294901760
    %239 = vmatprep.subr.mxu0 %v238
    %v240 = vand.u32 %v66, 4294901760
    %v241 = vsub.f32 %v66, %v240
    %v242 = vand.u32 %v241, 4294901760
    %v243 = vsub.f32 %v241, %v242
    %v244 = vand.u32 %v243, 4294901760
    %245 = vmatpush1.msra.mxu0 %v244
    %v246 = vand.u32 %v65, 4294901760
    %v247 = vsub.f32 %v65, %v246
    %v248 = vand.u32 %v247, 4294901760
    %v249 = vsub.f32 %v247, %v248
    %v250 = vand.u32 %v249, 4294901760
    %251 = vmatprep.subr.mxu0 %v250
    %v252 = vand.u32 %v64, 4294901760
    %v253 = vsub.f32 %v64, %v252
    %v254 = vand.u32 %v253, 4294901760
    %v255 = vsub.f32 %v253, %v254
    %v256 = vand.u32 %v255, 4294901760
    %257 = vmatpush1.msra.mxu0 %v256
    %258 = vmatprep.subr.mxu0 0.0
    %259 = vmatpush2.msra.mxu0 0.0
    %260 = vmatprep.subr.mxu0 0.0
    %261 = vmatpush2.msra.mxu0 0.0
    %262 = vmatprep.subr.mxu0 0.0
    %263 = vmatpush2.msra.mxu0 0.0
    %264 = vmatprep.subr.mxu0 0.0
    %265 = vmatpush2.msra.mxu0 0.0
    %266 = vmatprep.subr.mxu0 0.0
    %267 = vmatpush2.msra.mxu0 0.0
    %268 = vmatprep.subr.mxu0 0.0
    %269 = vmatpush2.msra.mxu0 0.0
    %270 = vmatprep.subr.mxu0 0.0
    %271 = vmatpush2.msra.mxu0 0.0
    %272 = vmatprep.subr.mxu0 0.0
    %273 = vmatpush2.msra.mxu0 0.0
    %274 = vmatprep.subr.mxu0 0.0
    %275 = vmatpush2.msra.mxu0 0.0
    %276 = vmatprep.subr.mxu0 0.0
    %277 = vmatpush2.msra.mxu0 0.0
    %278 = vmatprep.subr.mxu0 0.0
    %279 = vmatpush2.msra.mxu0 0.0
    %280 = vmatprep.subr.mxu0 0.0
    %281 = vmatpush2.msra.mxu0 0.0
    %282 = vmatprep.subr.mxu0 0.0
    %283 = vmatpush2.msra.mxu0 0.0
    %284 = vmatprep.subr.mxu0 0.0
    %285 = vmatpush2.msra.mxu0 0.0
    %286 = vmatprep.subr.mxu0 0.0
    %287 = vmatpush2.msra.mxu0 0.0
    %288 = vmatprep.subr.mxu0 0.0
    %289 = vmatpush2.msra.mxu0 0.0
    %290 = vmatprep.mubr.f32.mxu0 0.0
    %v291 = vand.u32 %v86, 4294901760
    %292 = vmatmul.mubr.f32.gmra.mxu0 %v291
    %v293 = vpop.f32.mrf.mxu0
    %v294 = vadd.f32 %v171, %v293
    %v295 = vpop.f32.mrf.mxu0
    %v296 = vadd.f32 %v173, %v295
    %297 = vmatprep.mubr.f32.mxu0 0.0
    %v298 = vand.u32 %v89, 4294901760
    %299 = vmatmul.mubr.f32.gmra.mxu0 %v298
    %v300 = vpop.f32.mrf.mxu0
    %v301 = vadd.f32 %v182, %v300
    %v302 = vpop.f32.mrf.mxu0
    %v303 = vadd.f32 %v184, %v302
    %304 = vdwg.mxu0
    %305 = vmatprep.subr.mxu0 0.0
    %306 = vmatpush1.msra.mxu0 0.0
    %307 = vmatprep.subr.mxu0 0.0
    %308 = vmatpush1.msra.mxu0 0.0
    %309 = vmatprep.subr.mxu0 0.0
    %310 = vmatpush1.msra.mxu0 0.0
    %311 = vmatprep.subr.mxu0 0.0
    %312 = vmatpush1.msra.mxu0 0.0
    %313 = vmatprep.subr.mxu0 0.0
    %314 = vmatpush1.msra.mxu0 0.0
    %315 = vmatprep.subr.mxu0 0.0
    %316 = vmatpush1.msra.mxu0 0.0
    %317 = vmatprep.subr.mxu0 0.0
    %318 = vmatpush1.msra.mxu0 0.0
    %319 = vmatprep.subr.mxu0 0.0
    %320 = vmatpush1.msra.mxu0 0.0
    %321 = vmatprep.subr.mxu0 0.0
    %322 = vmatpush1.msra.mxu0 0.0
    %323 = vmatprep.subr.mxu0 0.0
    %324 = vmatpush1.msra.mxu0 0.0
    %325 = vmatprep.subr.mxu0 0.0
    %326 = vmatpush1.msra.mxu0 0.0
    %327 = vmatprep.subr.mxu0 0.0
    %328 = vmatpush1.msra.mxu0 0.0
    %v329 = vand.u32 %v71, 4294901760
    %v330 = vsub.f32 %v71, %v329
    %331 = vmatprep.subr.mxu0 %v330
    %v332 = vand.u32 %v70, 4294901760
    %v333 = vsub.f32 %v70, %v332
    %334 = vmatpush1.msra.mxu0 %v333
    %v335 = vand.u32 %v69, 4294901760
    %v336 = vsub.f32 %v69, %v335
    %337 = vmatprep.subr.mxu0 %v336
    %v338 = vand.u32 %v68, 4294901760
    %v339 = vsub.f32 %v68, %v338
    %340 = vmatpush1.msra.mxu0 %v339
    %v341 = vand.u32 %v67, 4294901760
    %v342 = vsub.f32 %v67, %v341
    %343 = vmatprep.subr.mxu0 %v342
    %v344 = vand.u32 %v66, 4294901760
    %v345 = vsub.f32 %v66, %v344
    %346 = vmatpush1.msra.mxu0 %v345
    %v347 = vand.u32 %v65, 4294901760
    %v348 = vsub.f32 %v65, %v347
    %349 = vmatprep.subr.mxu0 %v348
    %v350 = vand.u32 %v64, 4294901760
    %v351 = vsub.f32 %v64, %v350
    %352 = vmatpush1.msra.mxu0 %v351
    %353 = vmatprep.subr.mxu0 0.0
    %354 = vmatpush2.msra.mxu0 0.0
    %355 = vmatprep.subr.mxu0 0.0
    %356 = vmatpush2.msra.mxu0 0.0
    %357 = vmatprep.subr.mxu0 0.0
    %358 = vmatpush2.msra.mxu0 0.0
    %359 = vmatprep.subr.mxu0 0.0
    %360 = vmatpush2.msra.mxu0 0.0
    %361 = vmatprep.subr.mxu0 0.0
    %362 = vmatpush2.msra.mxu0 0.0
    %363 = vmatprep.subr.mxu0 0.0
    %364 = vmatpush2.msra.mxu0 0.0
    %365 = vmatprep.subr.mxu0 0.0
    %366 = vmatpush2.msra.mxu0 0.0
    %367 = vmatprep.subr.mxu0 0.0
    %368 = vmatpush2.msra.mxu0 0.0
    %369 = vmatprep.subr.mxu0 0.0
    %370 = vmatpush2.msra.mxu0 0.0
    %371 = vmatprep.subr.mxu0 0.0
    %372 = vmatpush2.msra.mxu0 0.0
    %373 = vmatprep.subr.mxu0 0.0
    %374 = vmatpush2.msra.mxu0 0.0
    %375 = vmatprep.subr.mxu0 0.0
    %376 = vmatpush2.msra.mxu0 0.0
    %377 = vmatprep.subr.mxu0 0.0
    %378 = vmatpush2.msra.mxu0 0.0
    %379 = vmatprep.subr.mxu0 0.0
    %380 = vmatpush2.msra.mxu0 0.0
    %381 = vmatprep.subr.mxu0 0.0
    %382 = vmatpush2.msra.mxu0 0.0
    %383 = vmatprep.subr.mxu0 0.0
    %384 = vmatpush2.msra.mxu0 0.0
    %385 = vmatprep.mubr.f32.mxu0 0.0
    %v386 = vand.u32 %v86, 4294901760
    %v387 = vsub.f32 %v86, %v386
    %388 = vmatmul.mubr.f32.gmra.mxu0 %v387
    %v389 = vpop.f32.mrf.mxu0
    %v390 = vadd.f32 %v294, %v389
    %v391 = vpop.f32.mrf.mxu0
    %v392 = vadd.f32 %v296, %v391
    %393 = vmatprep.mubr.f32.mxu0 0.0
    %v394 = vand.u32 %v89, 4294901760
    %v395 = vsub.f32 %v89, %v394
    %396 = vmatmul.mubr.f32.gmra.mxu0 %v395
    %v397 = vpop.f32.mrf.mxu0
    %v398 = vadd.f32 %v301, %v397
    %v399 = vpop.f32.mrf.mxu0
    %v400 = vadd.f32 %v303, %v399
    %401 = vdwg.mxu0
    %402 = vmatprep.subr.mxu0 0.0
    %403 = vmatpush1.msra.mxu0 0.0
    %404 = vmatprep.subr.mxu0 0.0
    %405 = vmatpush1.msra.mxu0 0.0
    %406 = vmatprep.subr.mxu0 0.0
    %407 = vmatpush1.msra.mxu0 0.0
    %408 = vmatprep.subr.mxu0 0.0
    %409 = vmatpush1.msra.mxu0 0.0
    %410 = vmatprep.subr.mxu0 0.0
    %411 = vmatpush1.msra.mxu0 0.0
    %412 = vmatprep.subr.mxu0 0.0
    %413 = vmatpush1.msra.mxu0 0.0
    %414 = vmatprep.subr.mxu0 0.0
    %415 = vmatpush1.msra.mxu0 0.0
    %416 = vmatprep.subr.mxu0 0.0
    %417 = vmatpush1.msra.mxu0 0.0
    %418 = vmatprep.subr.mxu0 0.0
    %419 = vmatpush1.msra.mxu0 0.0
    %420 = vmatprep.subr.mxu0 0.0
    %421 = vmatpush1.msra.mxu0 0.0
    %422 = vmatprep.subr.mxu0 0.0
    %423 = vmatpush1.msra.mxu0 0.0
    %424 = vmatprep.subr.mxu0 0.0
    %425 = vmatpush1.msra.mxu0 0.0
    %v426 = vand.u32 %v71, 4294901760
    %427 = vmatprep.subr.mxu0 %v426
    %v428 = vand.u32 %v70, 4294901760
    %429 = vmatpush1.msra.mxu0 %v428
    %v430 = vand.u32 %v69, 4294901760
    %431 = vmatprep.subr.mxu0 %v430
    %v432 = vand.u32 %v68, 4294901760
    %433 = vmatpush1.msra.mxu0 %v432
    %v434 = vand.u32 %v67, 4294901760
    %435 = vmatprep.subr.mxu0 %v434
    %v436 = vand.u32 %v66, 4294901760
    %437 = vmatpush1.msra.mxu0 %v436
    %v438 = vand.u32 %v65, 4294901760
    %439 = vmatprep.subr.mxu0 %v438
    %v440 = vand.u32 %v64, 4294901760
    %441 = vmatpush1.msra.mxu0 %v440
    %442 = vmatprep.subr.mxu0 0.0
    %443 = vmatpush2.msra.mxu0 0.0
    %444 = vmatprep.subr.mxu0 0.0
    %445 = vmatpush2.msra.mxu0 0.0
    %446 = vmatprep.subr.mxu0 0.0
    %447 = vmatpush2.msra.mxu0 0.0
    %448 = vmatprep.subr.mxu0 0.0
    %449 = vmatpush2.msra.mxu0 0.0
    %450 = vmatprep.subr.mxu0 0.0
    %451 = vmatpush2.msra.mxu0 0.0
    %452 = vmatprep.subr.mxu0 0.0
    %453 = vmatpush2.msra.mxu0 0.0
    %454 = vmatprep.subr.mxu0 0.0
    %455 = vmatpush2.msra.mxu0 0.0
    %456 = vmatprep.subr.mxu0 0.0
    %457 = vmatpush2.msra.mxu0 0.0
    %458 = vmatprep.subr.mxu0 0.0
    %459 = vmatpush2.msra.mxu0 0.0
    %460 = vmatprep.subr.mxu0 0.0
    %461 = vmatpush2.msra.mxu0 0.0
    %462 = vmatprep.subr.mxu0 0.0
    %463 = vmatpush2.msra.mxu0 0.0
    %464 = vmatprep.subr.mxu0 0.0
    %465 = vmatpush2.msra.mxu0 0.0
    %466 = vmatprep.subr.mxu0 0.0
    %467 = vmatpush2.msra.mxu0 0.0
    %468 = vmatprep.subr.mxu0 0.0
    %469 = vmatpush2.msra.mxu0 0.0
    %470 = vmatprep.subr.mxu0 0.0
    %471 = vmatpush2.msra.mxu0 0.0
    %472 = vmatprep.subr.mxu0 0.0
    %473 = vmatpush2.msra.mxu0 0.0
    %474 = vmatprep.mubr.f32.mxu0 0.0
    %v475 = vand.u32 %v86, 4294901760
    %v476 = vsub.f32 %v86, %v475
    %v477 = vand.u32 %v476, 4294901760
    %478 = vmatmul.mubr.f32.gmra.mxu0 %v477
    %v479 = vpop.f32.mrf.mxu0
    %v480 = vadd.f32 %v390, %v479
    %v481 = vpop.f32.mrf.mxu0
    %v482 = vadd.f32 %v392, %v481
    %483 = vmatprep.mubr.f32.mxu0 0.0
    %v484 = vand.u32 %v89, 4294901760
    %v485 = vsub.f32 %v89, %v484
    %v486 = vand.u32 %v485, 4294901760
    %487 = vmatmul.mubr.f32.gmra.mxu0 %v486
    %v488 = vpop.f32.mrf.mxu0
    %v489 = vadd.f32 %v398, %v488
    %v490 = vpop.f32.mrf.mxu0
    %v491 = vadd.f32 %v400, %v490
    %492 = vdwg.mxu0
    %493 = vmatprep.subr.mxu0 0.0
    %494 = vmatpush1.msra.mxu0 0.0
    %495 = vmatprep.subr.mxu0 0.0
    %496 = vmatpush1.msra.mxu0 0.0
    %497 = vmatprep.subr.mxu0 0.0
    %498 = vmatpush1.msra.mxu0 0.0
    %499 = vmatprep.subr.mxu0 0.0
    %500 = vmatpush1.msra.mxu0 0.0
    %501 = vmatprep.subr.mxu0 0.0
    %502 = vmatpush1.msra.mxu0 0.0
    %503 = vmatprep.subr.mxu0 0.0
    %504 = vmatpush1.msra.mxu0 0.0
    %505 = vmatprep.subr.mxu0 0.0
    %506 = vmatpush1.msra.mxu0 0.0
    %507 = vmatprep.subr.mxu0 0.0
    %508 = vmatpush1.msra.mxu0 0.0
    %509 = vmatprep.subr.mxu0 0.0
    %510 = vmatpush1.msra.mxu0 0.0
    %511 = vmatprep.subr.mxu0 0.0
    %512 = vmatpush1.msra.mxu0 0.0
    %513 = vmatprep.subr.mxu0 0.0
    %514 = vmatpush1.msra.mxu0 0.0
    %515 = vmatprep.subr.mxu0 0.0
    %516 = vmatpush1.msra.mxu0 0.0
    %v517 = vand.u32 %v71, 4294901760
    %v518 = vsub.f32 %v71, %v517
    %v519 = vand.u32 %v518, 4294901760
    %520 = vmatprep.subr.mxu0 %v519
    %v521 = vand.u32 %v70, 4294901760
    %v522 = vsub.f32 %v70, %v521
    %v523 = vand.u32 %v522, 4294901760
    %524 = vmatpush1.msra.mxu0 %v523
    %v525 = vand.u32 %v69, 4294901760
    %v526 = vsub.f32 %v69, %v525
    %v527 = vand.u32 %v526, 4294901760
    %528 = vmatprep.subr.mxu0 %v527
    %v529 = vand.u32 %v68, 4294901760
    %v530 = vsub.f32 %v68, %v529
    %v531 = vand.u32 %v530, 4294901760
    %532 = vmatpush1.msra.mxu0 %v531
    %v533 = vand.u32 %v67, 4294901760
    %v534 = vsub.f32 %v67, %v533
    %v535 = vand.u32 %v534, 4294901760
    %536 = vmatprep.subr.mxu0 %v535
    %v537 = vand.u32 %v66, 4294901760
    %v538 = vsub.f32 %v66, %v537
    %v539 = vand.u32 %v538, 4294901760
    %540 = vmatpush1.msra.mxu0 %v539
    %v541 = vand.u32 %v65, 4294901760
    %v542 = vsub.f32 %v65, %v541
    %v543 = vand.u32 %v542, 4294901760
    %544 = vmatprep.subr.mxu0 %v543
    %v545 = vand.u32 %v64, 4294901760
    %v546 = vsub.f32 %v64, %v545
    %v547 = vand.u32 %v546, 4294901760
    %548 = vmatpush1.msra.mxu0 %v547
    %549 = vmatprep.subr.mxu0 0.0
    %550 = vmatpush2.msra.mxu0 0.0
    %551 = vmatprep.subr.mxu0 0.0
    %552 = vmatpush2.msra.mxu0 0.0
    %553 = vmatprep.subr.mxu0 0.0
    %554 = vmatpush2.msra.mxu0 0.0
    %555 = vmatprep.subr.mxu0 0.0
    %556 = vmatpush2.msra.mxu0 0.0
    %557 = vmatprep.subr.mxu0 0.0
    %558 = vmatpush2.msra.mxu0 0.0
    %559 = vmatprep.subr.mxu0 0.0
    %560 = vmatpush2.msra.mxu0 0.0
    %561 = vmatprep.subr.mxu0 0.0
    %562 = vmatpush2.msra.mxu0 0.0
    %563 = vmatprep.subr.mxu0 0.0
    %564 = vmatpush2.msra.mxu0 0.0
    %565 = vmatprep.subr.mxu0 0.0
    %566 = vmatpush2.msra.mxu0 0.0
    %567 = vmatprep.subr.mxu0 0.0
    %568 = vmatpush2.msra.mxu0 0.0
    %569 = vmatprep.subr.mxu0 0.0
    %570 = vmatpush2.msra.mxu0 0.0
    %571 = vmatprep.subr.mxu0 0.0
    %572 = vmatpush2.msra.mxu0 0.0
    %573 = vmatprep.subr.mxu0 0.0
    %574 = vmatpush2.msra.mxu0 0.0
    %575 = vmatprep.subr.mxu0 0.0
    %576 = vmatpush2.msra.mxu0 0.0
    %577 = vmatprep.subr.mxu0 0.0
    %578 = vmatpush2.msra.mxu0 0.0
    %579 = vmatprep.subr.mxu0 0.0
    %580 = vmatpush2.msra.mxu0 0.0
    %581 = vmatprep.mubr.f32.mxu0 0.0
    %v582 = vand.u32 %v86, 4294901760
    %583 = vmatmul.mubr.f32.gmra.mxu0 %v582
    %v584 = vpop.f32.mrf.mxu0
    %v585 = vadd.f32 %v480, %v584
    %v586 = vpop.f32.mrf.mxu0
    %v587 = vadd.f32 %v482, %v586
    %588 = vmatprep.mubr.f32.mxu0 0.0
    %v589 = vand.u32 %v89, 4294901760
    %590 = vmatmul.mubr.f32.gmra.mxu0 %v589
    %v591 = vpop.f32.mrf.mxu0
    %v592 = vadd.f32 %v489, %v591
    %v593 = vpop.f32.mrf.mxu0
    %v594 = vadd.f32 %v491, %v593
    %595 = vdwg.mxu0
    %596 = vmatprep.subr.mxu0 0.0
    %597 = vmatpush1.msra.mxu0 0.0
    %598 = vmatprep.subr.mxu0 0.0
    %599 = vmatpush1.msra.mxu0 0.0
    %600 = vmatprep.subr.mxu0 0.0
    %601 = vmatpush1.msra.mxu0 0.0
    %602 = vmatprep.subr.mxu0 0.0
    %603 = vmatpush1.msra.mxu0 0.0
    %604 = vmatprep.subr.mxu0 0.0
    %605 = vmatpush1.msra.mxu0 0.0
    %606 = vmatprep.subr.mxu0 0.0
    %607 = vmatpush1.msra.mxu0 0.0
    %608 = vmatprep.subr.mxu0 0.0
    %609 = vmatpush1.msra.mxu0 0.0
    %610 = vmatprep.subr.mxu0 0.0
    %611 = vmatpush1.msra.mxu0 0.0
    %612 = vmatprep.subr.mxu0 0.0
    %613 = vmatpush1.msra.mxu0 0.0
    %614 = vmatprep.subr.mxu0 0.0
    %615 = vmatpush1.msra.mxu0 0.0
    %616 = vmatprep.subr.mxu0 0.0
    %617 = vmatpush1.msra.mxu0 0.0
    %618 = vmatprep.subr.mxu0 0.0
    %619 = vmatpush1.msra.mxu0 0.0
    %v620 = vand.u32 %v71, 4294901760
    %621 = vmatprep.subr.mxu0 %v620
    %v622 = vand.u32 %v70, 4294901760
    %623 = vmatpush1.msra.mxu0 %v622
    %v624 = vand.u32 %v69, 4294901760
    %625 = vmatprep.subr.mxu0 %v624
    %v626 = vand.u32 %v68, 4294901760
    %627 = vmatpush1.msra.mxu0 %v626
    %v628 = vand.u32 %v67, 4294901760
    %629 = vmatprep.subr.mxu0 %v628
    %v630 = vand.u32 %v66, 4294901760
    %631 = vmatpush1.msra.mxu0 %v630
    %v632 = vand.u32 %v65, 4294901760
    %633 = vmatprep.subr.mxu0 %v632
    %v634 = vand.u32 %v64, 4294901760
    %635 = vmatpush1.msra.mxu0 %v634
    %636 = vmatprep.subr.mxu0 0.0
    %637 = vmatpush2.msra.mxu0 0.0
    %638 = vmatprep.subr.mxu0 0.0
    %639 = vmatpush2.msra.mxu0 0.0
    %640 = vmatprep.subr.mxu0 0.0
    %641 = vmatpush2.msra.mxu0 0.0
    %642 = vmatprep.subr.mxu0 0.0
    %643 = vmatpush2.msra.mxu0 0.0
    %644 = vmatprep.subr.mxu0 0.0
    %645 = vmatpush2.msra.mxu0 0.0
    %646 = vmatprep.subr.mxu0 0.0
    %647 = vmatpush2.msra.mxu0 0.0
    %648 = vmatprep.subr.mxu0 0.0
    %649 = vmatpush2.msra.mxu0 0.0
    %650 = vmatprep.subr.mxu0 0.0
    %651 = vmatpush2.msra.mxu0 0.0
    %652 = vmatprep.subr.mxu0 0.0
    %653 = vmatpush2.msra.mxu0 0.0
    %654 = vmatprep.subr.mxu0 0.0
    %655 = vmatpush2.msra.mxu0 0.0
    %656 = vmatprep.subr.mxu0 0.0
    %657 = vmatpush2.msra.mxu0 0.0
    %658 = vmatprep.subr.mxu0 0.0
    %659 = vmatpush2.msra.mxu0 0.0
    %660 = vmatprep.subr.mxu0 0.0
    %661 = vmatpush2.msra.mxu0 0.0
    %662 = vmatprep.subr.mxu0 0.0
    %663 = vmatpush2.msra.mxu0 0.0
    %664 = vmatprep.subr.mxu0 0.0
    %665 = vmatpush2.msra.mxu0 0.0
    %666 = vmatprep.subr.mxu0 0.0
    %667 = vmatpush2.msra.mxu0 0.0
    %668 = vmatprep.mubr.f32.mxu0 0.0
    %v669 = vand.u32 %v86, 4294901760
    %670 = vmatmul.mubr.f32.gmra.mxu0 %v669
    %v671 = vpop.f32.mrf.mxu0
    %v672 = vadd.f32 %v585, %v671
    %v673 = vpop.f32.mrf.mxu0
    %v674 = vadd.f32 %v587, %v673
    %675 = vmatprep.mubr.f32.mxu0 0.0
    %v676 = vand.u32 %v89, 4294901760
    %677 = vmatmul.mubr.f32.gmra.mxu0 %v676
    %v678 = vpop.f32.mrf.mxu0
    %v679 = vadd.f32 %v592, %v678
    %v680 = vpop.f32.mrf.mxu0
    %v681 = vadd.f32 %v594, %v680
    %682 = vdwg.mxu0
    %v683 = vmul.f32 %v672, %v25
    %v684 = vmul.f32 %v679, %v26
    %687 = vrot.lane.b32.xlu0 %v27, 96
    %v688 = vpop.permute.xlu0 %687
    %689 = vrot.lane.b32.xlu0 %v28, 96
    %v690 = vpop.permute.xlu0 %689
    %v693 = vmul.f32 %v672, %v688
    %v694 = vmul.f32 %v674, %v688
    %v695 = vmul.f32 %v679, %v690
    %v696 = vmul.f32 %v681, %v690
    %701 = vrot.lane.b32.xlu0 %v693, 32
    %v702 = vpop.permute.xlu0 %701
    %703 = vrot.lane.b32.xlu0 %v694, 32
    %v704 = vpop.permute.xlu0 %703
    %705 = vrot.lane.b32.xlu0 %v695, 32
    %v706 = vpop.permute.xlu0 %705
    %707 = vrot.lane.b32.xlu0 %v696, 32
    %v708 = vpop.permute.xlu0 %707
    %v709 = vsel %vm32, %v702, %v704
    %v710 = vsel %vm32, %v706, %v708
    %v713 = vadd.f32 %v683, %v709
    %v714 = vadd.f32 %v684, %v710
    %717 = vrot.lane.b32.xlu0 %v713, 120
    %v718 = vpop.permute.xlu0 %717
    %719 = vrot.lane.b32.xlu0 %v714, 120
    %v720 = vpop.permute.xlu0 %719
    %723 = vrot.lane.b32.xlu0 %v713, 112
    %v724 = vpop.permute.xlu0 %723
    %725 = vrot.lane.b32.xlu0 %v714, 112
    %v726 = vpop.permute.xlu0 %725
    %729 = vrot.lane.b32.xlu0 %v713, 104
    %v730 = vpop.permute.xlu0 %729
    %731 = vrot.lane.b32.xlu0 %v714, 104
    %v732 = vpop.permute.xlu0 %731
    %735 = vrot.lane.b32.xlu0 %v713, 96
    %v736 = vpop.permute.xlu0 %735
    %737 = vrot.lane.b32.xlu0 %v714, 96
    %v738 = vpop.permute.xlu0 %737
    %741 = vrot.lane.b32.xlu0 %v713, 88
    %v742 = vpop.permute.xlu0 %741
    %743 = vrot.lane.b32.xlu0 %v714, 88
    %v744 = vpop.permute.xlu0 %743
    %747 = vrot.lane.b32.xlu0 %v713, 80
    %v748 = vpop.permute.xlu0 %747
    %749 = vrot.lane.b32.xlu0 %v714, 80
    %v750 = vpop.permute.xlu0 %749
    %753 = vrot.lane.b32.xlu0 %v713, 72
    %v754 = vpop.permute.xlu0 %753
    %755 = vrot.lane.b32.xlu0 %v714, 72
    %v756 = vpop.permute.xlu0 %755
    %759 = vrot.lane.b32.xlu0 %v713, 64
    %v760 = vpop.permute.xlu0 %759
    %761 = vrot.lane.b32.xlu0 %v714, 64
    %v762 = vpop.permute.xlu0 %761
    %765 = vrot.lane.b32.xlu0 %v713, 56
    %v766 = vpop.permute.xlu0 %765
    %767 = vrot.lane.b32.xlu0 %v714, 56
    %v768 = vpop.permute.xlu0 %767
    %771 = vrot.lane.b32.xlu0 %v713, 48
    %v772 = vpop.permute.xlu0 %771
    %773 = vrot.lane.b32.xlu0 %v714, 48
    %v774 = vpop.permute.xlu0 %773
    %777 = vrot.lane.b32.xlu0 %v713, 40
    %v778 = vpop.permute.xlu0 %777
    %779 = vrot.lane.b32.xlu0 %v714, 40
    %v780 = vpop.permute.xlu0 %779
    %v783 = vcombine.low %v713, %v724
    %v784 = vcombine.high %v713, %v724
    %v786 = vunpack.c.l.s4 1983009808
    %v787 = vunpack.c.0.s8 %v786
    %v788 = vlaneseq
    %v789 = vshrl.u32 %v788, 7
    %v790 = vsub.s32 %v787, %v789
    %v791 = vrot.slane %v783, %v790
    %v793 = vunpack.c.l.s4 1983009808
    %v794 = vunpack.c.0.s8 %v793
    %v795 = vlaneseq
    %v796 = vshrl.u32 %v795, 7
    %v797 = vsub.s32 %v794, %v796
    %v798 = vrot.slane %v784, %v797
    %v799 = vcombine.low %v718, %v730
    %v800 = vcombine.high %v718, %v730
    %v802 = vunpack.c.l.s4 1983009808
    %v803 = vunpack.c.0.s8 %v802
    %v804 = vlaneseq
    %v805 = vshrl.u32 %v804, 7
    %v806 = vsub.s32 %v803, %v805
    %v807 = vrot.slane %v799, %v806
    %v809 = vunpack.c.l.s4 1983009808
    %v810 = vunpack.c.0.s8 %v809
    %v811 = vlaneseq
    %v812 = vshrl.u32 %v811, 7
    %v813 = vsub.s32 %v810, %v812
    %v814 = vrot.slane %v800, %v813
    %v815 = vcombine.low %v736, %v748
    %v816 = vcombine.high %v736, %v748
    %v818 = vunpack.c.l.s4 1983009808
    %v819 = vunpack.c.0.s8 %v818
    %v820 = vlaneseq
    %v821 = vshrl.u32 %v820, 7
    %v822 = vsub.s32 %v819, %v821
    %v823 = vrot.slane %v815, %v822
    %v825 = vunpack.c.l.s4 1983009808
    %v826 = vunpack.c.0.s8 %v825
    %v827 = vlaneseq
    %v828 = vshrl.u32 %v827, 7
    %v829 = vsub.s32 %v826, %v828
    %v830 = vrot.slane %v816, %v829
    %v831 = vcombine.low %v742, %v754
    %v832 = vcombine.high %v742, %v754
    %v834 = vunpack.c.l.s4 1983009808
    %v835 = vunpack.c.0.s8 %v834
    %v836 = vlaneseq
    %v837 = vshrl.u32 %v836, 7
    %v838 = vsub.s32 %v835, %v837
    %v839 = vrot.slane %v831, %v838
    %v841 = vunpack.c.l.s4 1983009808
    %v842 = vunpack.c.0.s8 %v841
    %v843 = vlaneseq
    %v844 = vshrl.u32 %v843, 7
    %v845 = vsub.s32 %v842, %v844
    %v846 = vrot.slane %v832, %v845
    %v847 = vcombine.low %v791, %v807
    %v848 = vcombine.high %v791, %v807
    %v850 = vunpack.c.l.s4 1934713408
    %v851 = vunpack.c.0.s8 %v850
    %v852 = vlaneseq
    %v853 = vshrl.u32 %v852, 7
    %v854 = vsub.s32 %v851, %v853
    %v855 = vrot.slane %v847, %v854
    %v857 = vunpack.c.l.s4 1934713408
    %v858 = vunpack.c.0.s8 %v857
    %v859 = vlaneseq
    %v860 = vshrl.u32 %v859, 7
    %v861 = vsub.s32 %v858, %v860
    %v862 = vrot.slane %v848, %v861
    %v863 = vcombine.low %v798, %v814
    %v864 = vcombine.high %v798, %v814
    %v866 = vunpack.c.l.s4 1934713408
    %v867 = vunpack.c.0.s8 %v866
    %v868 = vlaneseq
    %v869 = vshrl.u32 %v868, 7
    %v870 = vsub.s32 %v867, %v869
    %v871 = vrot.slane %v863, %v870
    %v873 = vunpack.c.l.s4 1934713408
    %v874 = vunpack.c.0.s8 %v873
    %v875 = vlaneseq
    %v876 = vshrl.u32 %v875, 7
    %v877 = vsub.s32 %v874, %v876
    %v878 = vrot.slane %v864, %v877
    %v879 = vcombine.low %v823, %v839
    %v880 = vcombine.high %v823, %v839
    %v882 = vunpack.c.l.s4 1934713408
    %v883 = vunpack.c.0.s8 %v882
    %v884 = vlaneseq
    %v885 = vshrl.u32 %v884, 7
    %v886 = vsub.s32 %v883, %v885
    %v887 = vrot.slane %v879, %v886
    %v889 = vunpack.c.l.s4 1934713408
    %v890 = vunpack.c.0.s8 %v889
    %v891 = vlaneseq
    %v892 = vshrl.u32 %v891, 7
    %v893 = vsub.s32 %v890, %v892
    %v894 = vrot.slane %v880, %v893
    %v895 = vcombine.low %v830, %v846
    %v896 = vcombine.high %v830, %v846
    %v898 = vunpack.c.l.s4 1934713408
    %v899 = vunpack.c.0.s8 %v898
    %v900 = vlaneseq
    %v901 = vshrl.u32 %v900, 7
    %v902 = vsub.s32 %v899, %v901
    %v903 = vrot.slane %v895, %v902
    %v905 = vunpack.c.l.s4 1934713408
    %v906 = vunpack.c.0.s8 %v905
    %v907 = vlaneseq
    %v908 = vshrl.u32 %v907, 7
    %v909 = vsub.s32 %v906, %v908
    %v910 = vrot.slane %v896, %v909
    %v911 = vcombine.low %v855, %v887
    %v912 = vcombine.high %v855, %v887
    %v913 = vcombine.low %v862, %v894
    %v914 = vcombine.high %v862, %v894
    %v915 = vcombine.low %v871, %v903
    %v916 = vcombine.high %v871, %v903
    %v917 = vcombine.low %v878, %v910
    %v918 = vcombine.high %v878, %v910
    %v919 = vcombine.low %v760, %v772
    %v920 = vcombine.high %v760, %v772
    %v922 = vunpack.c.l.s4 1983009808
    %v923 = vunpack.c.0.s8 %v922
    %v924 = vlaneseq
    %v925 = vshrl.u32 %v924, 7
    %v926 = vsub.s32 %v923, %v925
    %v927 = vrot.slane %v919, %v926
    %v929 = vunpack.c.l.s4 1983009808
    %v930 = vunpack.c.0.s8 %v929
    %v931 = vlaneseq
    %v932 = vshrl.u32 %v931, 7
    %v933 = vsub.s32 %v930, %v932
    %v934 = vrot.slane %v920, %v933
    %v935 = vcombine.low %v766, %v778
    %v936 = vcombine.high %v766, %v778
    %v938 = vunpack.c.l.s4 1983009808
    %v939 = vunpack.c.0.s8 %v938
    %v940 = vlaneseq
    %v941 = vshrl.u32 %v940, 7
    %v942 = vsub.s32 %v939, %v941
    %v943 = vrot.slane %v935, %v942
    %v945 = vunpack.c.l.s4 1983009808
    %v946 = vunpack.c.0.s8 %v945
    %v947 = vlaneseq
    %v948 = vshrl.u32 %v947, 7
    %v949 = vsub.s32 %v946, %v948
    %v950 = vrot.slane %v936, %v949
    %v951 = vcombine.low %v927, %v943
    %v952 = vcombine.high %v927, %v943
    %v954 = vunpack.c.l.s4 1934713408
    %v955 = vunpack.c.0.s8 %v954
    %v956 = vlaneseq
    %v957 = vshrl.u32 %v956, 7
    %v958 = vsub.s32 %v955, %v957
    %v959 = vrot.slane %v951, %v958
    %v961 = vunpack.c.l.s4 1934713408
    %v962 = vunpack.c.0.s8 %v961
    %v963 = vlaneseq
    %v964 = vshrl.u32 %v963, 7
    %v965 = vsub.s32 %v962, %v964
    %v966 = vrot.slane %v952, %v965
    %v967 = vcombine.low %v934, %v950
    %v968 = vcombine.high %v934, %v950
    %v970 = vunpack.c.l.s4 1934713408
    %v971 = vunpack.c.0.s8 %v970
    %v972 = vlaneseq
    %v973 = vshrl.u32 %v972, 7
    %v974 = vsub.s32 %v971, %v973
    %v975 = vrot.slane %v967, %v974
    %v977 = vunpack.c.l.s4 1934713408
    %v978 = vunpack.c.0.s8 %v977
    %v979 = vlaneseq
    %v980 = vshrl.u32 %v979, 7
    %v981 = vsub.s32 %v978, %v980
    %v982 = vrot.slane %v968, %v981
    %v983 = vcombine.high %v959, 0.0
    %v984 = vcombine.high %v966, 0.0
    %v985 = vcombine.high %v975, 0.0
    %v986 = vcombine.high %v982, 0.0
    %v987 = vcombine.low %v714, %v726
    %v988 = vcombine.high %v714, %v726
    %v990 = vunpack.c.l.s4 1983009808
    %v991 = vunpack.c.0.s8 %v990
    %v992 = vlaneseq
    %v993 = vshrl.u32 %v992, 7
    %v994 = vsub.s32 %v991, %v993
    %v995 = vrot.slane %v987, %v994
    %v997 = vunpack.c.l.s4 1983009808
    %v998 = vunpack.c.0.s8 %v997
    %v999 = vlaneseq
    %v1000 = vshrl.u32 %v999, 7
    %v1001 = vsub.s32 %v998, %v1000
    %v1002 = vrot.slane %v988, %v1001
    %v1003 = vcombine.low %v720, %v732
    %v1004 = vcombine.high %v720, %v732
    %v1006 = vunpack.c.l.s4 1983009808
    %v1007 = vunpack.c.0.s8 %v1006
    %v1008 = vlaneseq
    %v1009 = vshrl.u32 %v1008, 7
    %v1010 = vsub.s32 %v1007, %v1009
    %v1011 = vrot.slane %v1003, %v1010
    %v1013 = vunpack.c.l.s4 1983009808
    %v1014 = vunpack.c.0.s8 %v1013
    %v1015 = vlaneseq
    %v1016 = vshrl.u32 %v1015, 7
    %v1017 = vsub.s32 %v1014, %v1016
    %v1018 = vrot.slane %v1004, %v1017
    %v1019 = vcombine.low %v738, %v750
    %v1020 = vcombine.high %v738, %v750
    %v1022 = vunpack.c.l.s4 1983009808
    %v1023 = vunpack.c.0.s8 %v1022
    %v1024 = vlaneseq
    %v1025 = vshrl.u32 %v1024, 7
    %v1026 = vsub.s32 %v1023, %v1025
    %v1027 = vrot.slane %v1019, %v1026
    %v1029 = vunpack.c.l.s4 1983009808
    %v1030 = vunpack.c.0.s8 %v1029
    %v1031 = vlaneseq
    %v1032 = vshrl.u32 %v1031, 7
    %v1033 = vsub.s32 %v1030, %v1032
    %v1034 = vrot.slane %v1020, %v1033
    %v1035 = vcombine.low %v744, %v756
    %v1036 = vcombine.high %v744, %v756
    %v1038 = vunpack.c.l.s4 1983009808
    %v1039 = vunpack.c.0.s8 %v1038
    %v1040 = vlaneseq
    %v1041 = vshrl.u32 %v1040, 7
    %v1042 = vsub.s32 %v1039, %v1041
    %v1043 = vrot.slane %v1035, %v1042
    %v1045 = vunpack.c.l.s4 1983009808
    %v1046 = vunpack.c.0.s8 %v1045
    %v1047 = vlaneseq
    %v1048 = vshrl.u32 %v1047, 7
    %v1049 = vsub.s32 %v1046, %v1048
    %v1050 = vrot.slane %v1036, %v1049
    %v1051 = vcombine.low %v995, %v1011
    %v1052 = vcombine.high %v995, %v1011
    %v1054 = vunpack.c.l.s4 1934713408
    %v1055 = vunpack.c.0.s8 %v1054
    %v1056 = vlaneseq
    %v1057 = vshrl.u32 %v1056, 7
    %v1058 = vsub.s32 %v1055, %v1057
    %v1059 = vrot.slane %v1051, %v1058
    %v1061 = vunpack.c.l.s4 1934713408
    %v1062 = vunpack.c.0.s8 %v1061
    %v1063 = vlaneseq
    %v1064 = vshrl.u32 %v1063, 7
    %v1065 = vsub.s32 %v1062, %v1064
    %v1066 = vrot.slane %v1052, %v1065
    %v1067 = vcombine.low %v1002, %v1018
    %v1068 = vcombine.high %v1002, %v1018
    %v1070 = vunpack.c.l.s4 1934713408
    %v1071 = vunpack.c.0.s8 %v1070
    %v1072 = vlaneseq
    %v1073 = vshrl.u32 %v1072, 7
    %v1074 = vsub.s32 %v1071, %v1073
    %v1075 = vrot.slane %v1067, %v1074
    %v1077 = vunpack.c.l.s4 1934713408
    %v1078 = vunpack.c.0.s8 %v1077
    %v1079 = vlaneseq
    %v1080 = vshrl.u32 %v1079, 7
    %v1081 = vsub.s32 %v1078, %v1080
    %v1082 = vrot.slane %v1068, %v1081
    %v1083 = vcombine.low %v1027, %v1043
    %v1084 = vcombine.high %v1027, %v1043
    %v1086 = vunpack.c.l.s4 1934713408
    %v1087 = vunpack.c.0.s8 %v1086
    %v1088 = vlaneseq
    %v1089 = vshrl.u32 %v1088, 7
    %v1090 = vsub.s32 %v1087, %v1089
    %v1091 = vrot.slane %v1083, %v1090
    %v1093 = vunpack.c.l.s4 1934713408
    %v1094 = vunpack.c.0.s8 %v1093
    %v1095 = vlaneseq
    %v1096 = vshrl.u32 %v1095, 7
    %v1097 = vsub.s32 %v1094, %v1096
    %v1098 = vrot.slane %v1084, %v1097
    %v1099 = vcombine.low %v1034, %v1050
    %v1100 = vcombine.high %v1034, %v1050
    %v1102 = vunpack.c.l.s4 1934713408
    %v1103 = vunpack.c.0.s8 %v1102
    %v1104 = vlaneseq
    %v1105 = vshrl.u32 %v1104, 7
    %v1106 = vsub.s32 %v1103, %v1105
    %v1107 = vrot.slane %v1099, %v1106
    %v1109 = vunpack.c.l.s4 1934713408
    %v1110 = vunpack.c.0.s8 %v1109
    %v1111 = vlaneseq
    %v1112 = vshrl.u32 %v1111, 7
    %v1113 = vsub.s32 %v1110, %v1112
    %v1114 = vrot.slane %v1100, %v1113
    %v1115 = vcombine.low %v1059, %v1091
    %v1116 = vcombine.high %v1059, %v1091
    %v1117 = vcombine.low %v1066, %v1098
    %v1118 = vcombine.high %v1066, %v1098
    %v1119 = vcombine.low %v1075, %v1107
    %v1120 = vcombine.high %v1075, %v1107
    %v1121 = vcombine.low %v1082, %v1114
    %v1122 = vcombine.high %v1082, %v1114
    %v1123 = vcombine.low %v762, %v774
    %v1124 = vcombine.high %v762, %v774
    %v1126 = vunpack.c.l.s4 1983009808
    %v1127 = vunpack.c.0.s8 %v1126
    %v1128 = vlaneseq
    %v1129 = vshrl.u32 %v1128, 7
    %v1130 = vsub.s32 %v1127, %v1129
    %v1131 = vrot.slane %v1123, %v1130
    %v1133 = vunpack.c.l.s4 1983009808
    %v1134 = vunpack.c.0.s8 %v1133
    %v1135 = vlaneseq
    %v1136 = vshrl.u32 %v1135, 7
    %v1137 = vsub.s32 %v1134, %v1136
    %v1138 = vrot.slane %v1124, %v1137
    %v1139 = vcombine.low %v768, %v780
    %v1140 = vcombine.high %v768, %v780
    %v1142 = vunpack.c.l.s4 1983009808
    %v1143 = vunpack.c.0.s8 %v1142
    %v1144 = vlaneseq
    %v1145 = vshrl.u32 %v1144, 7
    %v1146 = vsub.s32 %v1143, %v1145
    %v1147 = vrot.slane %v1139, %v1146
    %v1149 = vunpack.c.l.s4 1983009808
    %v1150 = vunpack.c.0.s8 %v1149
    %v1151 = vlaneseq
    %v1152 = vshrl.u32 %v1151, 7
    %v1153 = vsub.s32 %v1150, %v1152
    %v1154 = vrot.slane %v1140, %v1153
    %v1155 = vcombine.low %v1131, %v1147
    %v1156 = vcombine.high %v1131, %v1147
    %v1158 = vunpack.c.l.s4 1934713408
    %v1159 = vunpack.c.0.s8 %v1158
    %v1160 = vlaneseq
    %v1161 = vshrl.u32 %v1160, 7
    %v1162 = vsub.s32 %v1159, %v1161
    %v1163 = vrot.slane %v1155, %v1162
    %v1165 = vunpack.c.l.s4 1934713408
    %v1166 = vunpack.c.0.s8 %v1165
    %v1167 = vlaneseq
    %v1168 = vshrl.u32 %v1167, 7
    %v1169 = vsub.s32 %v1166, %v1168
    %v1170 = vrot.slane %v1156, %v1169
    %v1171 = vcombine.low %v1138, %v1154
    %v1172 = vcombine.high %v1138, %v1154
    %v1174 = vunpack.c.l.s4 1934713408
    %v1175 = vunpack.c.0.s8 %v1174
    %v1176 = vlaneseq
    %v1177 = vshrl.u32 %v1176, 7
    %v1178 = vsub.s32 %v1175, %v1177
    %v1179 = vrot.slane %v1171, %v1178
    %v1181 = vunpack.c.l.s4 1934713408
    %v1182 = vunpack.c.0.s8 %v1181
    %v1183 = vlaneseq
    %v1184 = vshrl.u32 %v1183, 7
    %v1185 = vsub.s32 %v1182, %v1184
    %v1186 = vrot.slane %v1172, %v1185
    %v1187 = vcombine.high %v1163, 0.0
    %v1188 = vcombine.high %v1170, 0.0
    %v1189 = vcombine.high %v1179, 0.0
    %v1190 = vcombine.high %v1186, 0.0
    %v1191 = vcombine.low %v911, %v913
    %v1192 = vcombine.high %v911, %v913
    %v1194 = vunpack.c.l.s4 1983009808
    %v1195 = vunpack.c.0.s8 %v1194
    %v1196 = vlaneseq
    %v1197 = vshrl.u32 %v1196, 7
    %v1198 = vsub.s32 %v1195, %v1197
    %v1199 = vrot.slane %v1191, %v1198
    %v1201 = vunpack.c.l.s4 1983009808
    %v1202 = vunpack.c.0.s8 %v1201
    %v1203 = vlaneseq
    %v1204 = vshrl.u32 %v1203, 7
    %v1205 = vsub.s32 %v1202, %v1204
    %v1206 = vrot.slane %v1192, %v1205
    %v1207 = vcombine.low %v912, %v914
    %v1208 = vcombine.high %v912, %v914
    %v1210 = vunpack.c.l.s4 1983009808
    %v1211 = vunpack.c.0.s8 %v1210
    %v1212 = vlaneseq
    %v1213 = vshrl.u32 %v1212, 7
    %v1214 = vsub.s32 %v1211, %v1213
    %v1215 = vrot.slane %v1207, %v1214
    %v1217 = vunpack.c.l.s4 1983009808
    %v1218 = vunpack.c.0.s8 %v1217
    %v1219 = vlaneseq
    %v1220 = vshrl.u32 %v1219, 7
    %v1221 = vsub.s32 %v1218, %v1220
    %v1222 = vrot.slane %v1208, %v1221
    %v1223 = vcombine.low %v915, %v917
    %v1224 = vcombine.high %v915, %v917
    %v1226 = vunpack.c.l.s4 1983009808
    %v1227 = vunpack.c.0.s8 %v1226
    %v1228 = vlaneseq
    %v1229 = vshrl.u32 %v1228, 7
    %v1230 = vsub.s32 %v1227, %v1229
    %v1231 = vrot.slane %v1223, %v1230
    %v1233 = vunpack.c.l.s4 1983009808
    %v1234 = vunpack.c.0.s8 %v1233
    %v1235 = vlaneseq
    %v1236 = vshrl.u32 %v1235, 7
    %v1237 = vsub.s32 %v1234, %v1236
    %v1238 = vrot.slane %v1224, %v1237
    %v1239 = vcombine.low %v916, %v918
    %v1240 = vcombine.high %v916, %v918
    %v1242 = vunpack.c.l.s4 1983009808
    %v1243 = vunpack.c.0.s8 %v1242
    %v1244 = vlaneseq
    %v1245 = vshrl.u32 %v1244, 7
    %v1246 = vsub.s32 %v1243, %v1245
    %v1247 = vrot.slane %v1239, %v1246
    %v1249 = vunpack.c.l.s4 1983009808
    %v1250 = vunpack.c.0.s8 %v1249
    %v1251 = vlaneseq
    %v1252 = vshrl.u32 %v1251, 7
    %v1253 = vsub.s32 %v1250, %v1252
    %v1254 = vrot.slane %v1240, %v1253
    %v1255 = vcombine.low %v1199, %v1215
    %v1256 = vcombine.high %v1199, %v1215
    %v1258 = vunpack.c.l.s4 1934713408
    %v1259 = vunpack.c.0.s8 %v1258
    %v1260 = vlaneseq
    %v1261 = vshrl.u32 %v1260, 7
    %v1262 = vsub.s32 %v1259, %v1261
    %v1263 = vrot.slane %v1255, %v1262
    %v1265 = vunpack.c.l.s4 1934713408
    %v1266 = vunpack.c.0.s8 %v1265
    %v1267 = vlaneseq
    %v1268 = vshrl.u32 %v1267, 7
    %v1269 = vsub.s32 %v1266, %v1268
    %v1270 = vrot.slane %v1256, %v1269
    %v1271 = vcombine.low %v1206, %v1222
    %v1272 = vcombine.high %v1206, %v1222
    %v1274 = vunpack.c.l.s4 1934713408
    %v1275 = vunpack.c.0.s8 %v1274
    %v1276 = vlaneseq
    %v1277 = vshrl.u32 %v1276, 7
    %v1278 = vsub.s32 %v1275, %v1277
    %v1279 = vrot.slane %v1271, %v1278
    %v1281 = vunpack.c.l.s4 1934713408
    %v1282 = vunpack.c.0.s8 %v1281
    %v1283 = vlaneseq
    %v1284 = vshrl.u32 %v1283, 7
    %v1285 = vsub.s32 %v1282, %v1284
    %v1286 = vrot.slane %v1272, %v1285
    %v1287 = vcombine.low %v1231, %v1247
    %v1288 = vcombine.high %v1231, %v1247
    %v1290 = vunpack.c.l.s4 1934713408
    %v1291 = vunpack.c.0.s8 %v1290
    %v1292 = vlaneseq
    %v1293 = vshrl.u32 %v1292, 7
    %v1294 = vsub.s32 %v1291, %v1293
    %v1295 = vrot.slane %v1287, %v1294
    %v1297 = vunpack.c.l.s4 1934713408
    %v1298 = vunpack.c.0.s8 %v1297
    %v1299 = vlaneseq
    %v1300 = vshrl.u32 %v1299, 7
    %v1301 = vsub.s32 %v1298, %v1300
    %v1302 = vrot.slane %v1288, %v1301
    %v1303 = vcombine.low %v1238, %v1254
    %v1304 = vcombine.high %v1238, %v1254
    %v1306 = vunpack.c.l.s4 1934713408
    %v1307 = vunpack.c.0.s8 %v1306
    %v1308 = vlaneseq
    %v1309 = vshrl.u32 %v1308, 7
    %v1310 = vsub.s32 %v1307, %v1309
    %v1311 = vrot.slane %v1303, %v1310
    %v1313 = vunpack.c.l.s4 1934713408
    %v1314 = vunpack.c.0.s8 %v1313
    %v1315 = vlaneseq
    %v1316 = vshrl.u32 %v1315, 7
    %v1317 = vsub.s32 %v1314, %v1316
    %v1318 = vrot.slane %v1304, %v1317
    %v1319 = vcombine.low %v1263, %v1295
    %v1320 = vcombine.high %v1263, %v1295
    %v1321 = vcombine.low %v1270, %v1302
    %v1322 = vcombine.high %v1270, %v1302
    %v1323 = vcombine.low %v1279, %v1311
    %v1324 = vcombine.high %v1279, %v1311
    %v1325 = vcombine.low %v1286, %v1318
    %v1326 = vcombine.high %v1286, %v1318
    %v1327 = vcombine.low %v1115, %v1117
    %v1328 = vcombine.high %v1115, %v1117
    %v1330 = vunpack.c.l.s4 1983009808
    %v1331 = vunpack.c.0.s8 %v1330
    %v1332 = vlaneseq
    %v1333 = vshrl.u32 %v1332, 7
    %v1334 = vsub.s32 %v1331, %v1333
    %v1335 = vrot.slane %v1327, %v1334
    %v1337 = vunpack.c.l.s4 1983009808
    %v1338 = vunpack.c.0.s8 %v1337
    %v1339 = vlaneseq
    %v1340 = vshrl.u32 %v1339, 7
    %v1341 = vsub.s32 %v1338, %v1340
    %v1342 = vrot.slane %v1328, %v1341
    %v1343 = vcombine.low %v1116, %v1118
    %v1344 = vcombine.high %v1116, %v1118
    %v1346 = vunpack.c.l.s4 1983009808
    %v1347 = vunpack.c.0.s8 %v1346
    %v1348 = vlaneseq
    %v1349 = vshrl.u32 %v1348, 7
    %v1350 = vsub.s32 %v1347, %v1349
    %v1351 = vrot.slane %v1343, %v1350
    %v1353 = vunpack.c.l.s4 1983009808
    %v1354 = vunpack.c.0.s8 %v1353
    %v1355 = vlaneseq
    %v1356 = vshrl.u32 %v1355, 7
    %v1357 = vsub.s32 %v1354, %v1356
    %v1358 = vrot.slane %v1344, %v1357
    %v1359 = vcombine.low %v1119, %v1121
    %v1360 = vcombine.high %v1119, %v1121
    %v1362 = vunpack.c.l.s4 1983009808
    %v1363 = vunpack.c.0.s8 %v1362
    %v1364 = vlaneseq
    %v1365 = vshrl.u32 %v1364, 7
    %v1366 = vsub.s32 %v1363, %v1365
    %v1367 = vrot.slane %v1359, %v1366
    %v1369 = vunpack.c.l.s4 1983009808
    %v1370 = vunpack.c.0.s8 %v1369
    %v1371 = vlaneseq
    %v1372 = vshrl.u32 %v1371, 7
    %v1373 = vsub.s32 %v1370, %v1372
    %v1374 = vrot.slane %v1360, %v1373
    %v1375 = vcombine.low %v1120, %v1122
    %v1376 = vcombine.high %v1120, %v1122
    %v1378 = vunpack.c.l.s4 1983009808
    %v1379 = vunpack.c.0.s8 %v1378
    %v1380 = vlaneseq
    %v1381 = vshrl.u32 %v1380, 7
    %v1382 = vsub.s32 %v1379, %v1381
    %v1383 = vrot.slane %v1375, %v1382
    %v1385 = vunpack.c.l.s4 1983009808
    %v1386 = vunpack.c.0.s8 %v1385
    %v1387 = vlaneseq
    %v1388 = vshrl.u32 %v1387, 7
    %v1389 = vsub.s32 %v1386, %v1388
    %v1390 = vrot.slane %v1376, %v1389
    %v1391 = vcombine.low %v1335, %v1351
    %v1392 = vcombine.high %v1335, %v1351
    %v1394 = vunpack.c.l.s4 1934713408
    %v1395 = vunpack.c.0.s8 %v1394
    %v1396 = vlaneseq
    %v1397 = vshrl.u32 %v1396, 7
    %v1398 = vsub.s32 %v1395, %v1397
    %v1399 = vrot.slane %v1391, %v1398
    %v1401 = vunpack.c.l.s4 1934713408
    %v1402 = vunpack.c.0.s8 %v1401
    %v1403 = vlaneseq
    %v1404 = vshrl.u32 %v1403, 7
    %v1405 = vsub.s32 %v1402, %v1404
    %v1406 = vrot.slane %v1392, %v1405
    %v1407 = vcombine.low %v1342, %v1358
    %v1408 = vcombine.high %v1342, %v1358
    %v1410 = vunpack.c.l.s4 1934713408
    %v1411 = vunpack.c.0.s8 %v1410
    %v1412 = vlaneseq
    %v1413 = vshrl.u32 %v1412, 7
    %v1414 = vsub.s32 %v1411, %v1413
    %v1415 = vrot.slane %v1407, %v1414
    %v1417 = vunpack.c.l.s4 1934713408
    %v1418 = vunpack.c.0.s8 %v1417
    %v1419 = vlaneseq
    %v1420 = vshrl.u32 %v1419, 7
    %v1421 = vsub.s32 %v1418, %v1420
    %v1422 = vrot.slane %v1408, %v1421
    %v1423 = vcombine.low %v1367, %v1383
    %v1424 = vcombine.high %v1367, %v1383
    %v1426 = vunpack.c.l.s4 1934713408
    %v1427 = vunpack.c.0.s8 %v1426
    %v1428 = vlaneseq
    %v1429 = vshrl.u32 %v1428, 7
    %v1430 = vsub.s32 %v1427, %v1429
    %v1431 = vrot.slane %v1423, %v1430
    %v1433 = vunpack.c.l.s4 1934713408
    %v1434 = vunpack.c.0.s8 %v1433
    %v1435 = vlaneseq
    %v1436 = vshrl.u32 %v1435, 7
    %v1437 = vsub.s32 %v1434, %v1436
    %v1438 = vrot.slane %v1424, %v1437
    %v1439 = vcombine.low %v1374, %v1390
    %v1440 = vcombine.high %v1374, %v1390
    %v1442 = vunpack.c.l.s4 1934713408
    %v1443 = vunpack.c.0.s8 %v1442
    %v1444 = vlaneseq
    %v1445 = vshrl.u32 %v1444, 7
    %v1446 = vsub.s32 %v1443, %v1445
    %v1447 = vrot.slane %v1439, %v1446
    %v1449 = vunpack.c.l.s4 1934713408
    %v1450 = vunpack.c.0.s8 %v1449
    %v1451 = vlaneseq
    %v1452 = vshrl.u32 %v1451, 7
    %v1453 = vsub.s32 %v1450, %v1452
    %v1454 = vrot.slane %v1440, %v1453
    %v1455 = vcombine.low %v1399, %v1431
    %v1456 = vcombine.high %v1399, %v1431
    %v1457 = vcombine.low %v1406, %v1438
    %v1458 = vcombine.high %v1406, %v1438
    %v1459 = vcombine.low %v1415, %v1447
    %v1460 = vcombine.high %v1415, %v1447
    %v1461 = vcombine.low %v1422, %v1454
    %v1462 = vcombine.high %v1422, %v1454
    %v1463 = vcombine.low %v959, %v966
    %v1465 = vunpack.c.l.s4 1983009808
    %v1466 = vunpack.c.0.s8 %v1465
    %v1467 = vlaneseq
    %v1468 = vshrl.u32 %v1467, 7
    %v1469 = vsub.s32 %v1466, %v1468
    %v1470 = vrot.slane %v1463, %v1469
    %v1471 = vcombine.low %v983, %v984
    %v1473 = vunpack.c.l.s4 1983009808
    %v1474 = vunpack.c.0.s8 %v1473
    %v1475 = vlaneseq
    %v1476 = vshrl.u32 %v1475, 7
    %v1477 = vsub.s32 %v1474, %v1476
    %v1478 = vrot.slane %v1471, %v1477
    %v1479 = vcombine.low %v975, %v982
    %v1481 = vunpack.c.l.s4 1983009808
    %v1482 = vunpack.c.0.s8 %v1481
    %v1483 = vlaneseq
    %v1484 = vshrl.u32 %v1483, 7
    %v1485 = vsub.s32 %v1482, %v1484
    %v1486 = vrot.slane %v1479, %v1485
    %v1487 = vcombine.low %v985, %v986
    %v1489 = vunpack.c.l.s4 1983009808
    %v1490 = vunpack.c.0.s8 %v1489
    %v1491 = vlaneseq
    %v1492 = vshrl.u32 %v1491, 7
    %v1493 = vsub.s32 %v1490, %v1492
    %v1494 = vrot.slane %v1487, %v1493
    %v1495 = vcombine.low %v1470, %v1478
    %v1496 = vcombine.high %v1470, %v1478
    %v1498 = vunpack.c.l.s4 1934713408
    %v1499 = vunpack.c.0.s8 %v1498
    %v1500 = vlaneseq
    %v1501 = vshrl.u32 %v1500, 7
    %v1502 = vsub.s32 %v1499, %v1501
    %v1503 = vrot.slane %v1495, %v1502
    %v1505 = vunpack.c.l.s4 1934713408
    %v1506 = vunpack.c.0.s8 %v1505
    %v1507 = vlaneseq
    %v1508 = vshrl.u32 %v1507, 7
    %v1509 = vsub.s32 %v1506, %v1508
    %v1510 = vrot.slane %v1496, %v1509
    %v1511 = vcombine.low %v1486, %v1494
    %v1512 = vcombine.high %v1486, %v1494
    %v1514 = vunpack.c.l.s4 1934713408
    %v1515 = vunpack.c.0.s8 %v1514
    %v1516 = vlaneseq
    %v1517 = vshrl.u32 %v1516, 7
    %v1518 = vsub.s32 %v1515, %v1517
    %v1519 = vrot.slane %v1511, %v1518
    %v1521 = vunpack.c.l.s4 1934713408
    %v1522 = vunpack.c.0.s8 %v1521
    %v1523 = vlaneseq
    %v1524 = vshrl.u32 %v1523, 7
    %v1525 = vsub.s32 %v1522, %v1524
    %v1526 = vrot.slane %v1512, %v1525
    %v1527 = vcombine.low %v1503, %v1519
    %v1528 = vcombine.high %v1503, %v1519
    %v1529 = vcombine.low %v1510, %v1526
    %v1530 = vcombine.high %v1510, %v1526
    %v1531 = vcombine.low %v1163, %v1170
    %v1533 = vunpack.c.l.s4 1983009808
    %v1534 = vunpack.c.0.s8 %v1533
    %v1535 = vlaneseq
    %v1536 = vshrl.u32 %v1535, 7
    %v1537 = vsub.s32 %v1534, %v1536
    %v1538 = vrot.slane %v1531, %v1537
    %v1539 = vcombine.low %v1187, %v1188
    %v1541 = vunpack.c.l.s4 1983009808
    %v1542 = vunpack.c.0.s8 %v1541
    %v1543 = vlaneseq
    %v1544 = vshrl.u32 %v1543, 7
    %v1545 = vsub.s32 %v1542, %v1544
    %v1546 = vrot.slane %v1539, %v1545
    %v1547 = vcombine.low %v1179, %v1186
    %v1549 = vunpack.c.l.s4 1983009808
    %v1550 = vunpack.c.0.s8 %v1549
    %v1551 = vlaneseq
    %v1552 = vshrl.u32 %v1551, 7
    %v1553 = vsub.s32 %v1550, %v1552
    %v1554 = vrot.slane %v1547, %v1553
    %v1555 = vcombine.low %v1189, %v1190
    %v1557 = vunpack.c.l.s4 1983009808
    %v1558 = vunpack.c.0.s8 %v1557
    %v1559 = vlaneseq
    %v1560 = vshrl.u32 %v1559, 7
    %v1561 = vsub.s32 %v1558, %v1560
    %v1562 = vrot.slane %v1555, %v1561
    %v1563 = vcombine.low %v1538, %v1546
    %v1564 = vcombine.high %v1538, %v1546
    %v1566 = vunpack.c.l.s4 1934713408
    %v1567 = vunpack.c.0.s8 %v1566
    %v1568 = vlaneseq
    %v1569 = vshrl.u32 %v1568, 7
    %v1570 = vsub.s32 %v1567, %v1569
    %v1571 = vrot.slane %v1563, %v1570
    %v1573 = vunpack.c.l.s4 1934713408
    %v1574 = vunpack.c.0.s8 %v1573
    %v1575 = vlaneseq
    %v1576 = vshrl.u32 %v1575, 7
    %v1577 = vsub.s32 %v1574, %v1576
    %v1578 = vrot.slane %v1564, %v1577
    %v1579 = vcombine.low %v1554, %v1562
    %v1580 = vcombine.high %v1554, %v1562
    %v1582 = vunpack.c.l.s4 1934713408
    %v1583 = vunpack.c.0.s8 %v1582
    %v1584 = vlaneseq
    %v1585 = vshrl.u32 %v1584, 7
    %v1586 = vsub.s32 %v1583, %v1585
    %v1587 = vrot.slane %v1579, %v1586
    %v1589 = vunpack.c.l.s4 1934713408
    %v1590 = vunpack.c.0.s8 %v1589
    %v1591 = vlaneseq
    %v1592 = vshrl.u32 %v1591, 7
    %v1593 = vsub.s32 %v1590, %v1592
    %v1594 = vrot.slane %v1580, %v1593
    %v1595 = vcombine.low %v1571, %v1587
    %v1596 = vcombine.high %v1571, %v1587
    %v1597 = vcombine.low %v1578, %v1594
    %v1598 = vcombine.high %v1578, %v1594
    %vm1599 = vcmask 64512
    %v1601 = vsel %vm1599, %v1319, 0
    %v1604 = vsel %vm1599, %v1455, 0
    %v1607 = vsel %vm1599, %v1320, 0
    %v1610 = vsel %vm1599, %v1456, 0
    %v1613 = vsel %vm1599, %v1321, 0
    %v1616 = vsel %vm1599, %v1457, 0
    %v1619 = vsel %vm1599, %v1322, 0
    %v1622 = vsel %vm1599, %v1458, 0
    %v1625 = vsel %vm1599, %v1323, 0
    %v1628 = vsel %vm1599, %v1459, 0
    %v1631 = vsel %vm1599, %v1324, 0
    %v1634 = vsel %vm1599, %v1460, 0
    %v1637 = vsel %vm1599, %v1325, 0
    %v1640 = vsel %vm1599, %v1461, 0
    %v1643 = vsel %vm1599, %v1326, 0
    %v1646 = vsel %vm1599, %v1462, 0
    %1648 = vmatprep.subr.mxu0 0.0
    %1649 = vmatpush1.xpose.msra.mxu0 0.0
    %1650 = vmatprep.subr.mxu0 0.0
    %1651 = vmatpush1.xpose.msra.mxu0 0.0
    %1652 = vmatprep.subr.mxu0 0.0
    %1653 = vmatpush1.xpose.msra.mxu0 0.0
    %1654 = vmatprep.subr.mxu0 0.0
    %1655 = vmatpush1.xpose.msra.mxu0 0.0
    %1656 = vmatprep.subr.mxu0 0.0
    %1657 = vmatpush1.xpose.msra.mxu0 0.0
    %1658 = vmatprep.subr.mxu0 0.0
    %1659 = vmatpush1.xpose.msra.mxu0 0.0
    %1660 = vmatprep.subr.mxu0 0.0
    %1661 = vmatpush1.xpose.msra.mxu0 0.0
    %1662 = vmatprep.subr.mxu0 0.0
    %1663 = vmatpush1.xpose.msra.mxu0 0.0
    %1664 = vmatprep.subr.mxu0 0.0
    %v1665 = vand.u32 %v1646, 4294901760
    %1666 = vmatpush1.xpose.msra.mxu0 %v1665
    %1667 = vmatprep.subr.mxu0 0.0
    %v1668 = vand.u32 %v1643, 4294901760
    %1669 = vmatpush1.xpose.msra.mxu0 %v1668
    %1670 = vmatprep.subr.mxu0 0.0
    %v1671 = vand.u32 %v1640, 4294901760
    %1672 = vmatpush1.xpose.msra.mxu0 %v1671
    %1673 = vmatprep.subr.mxu0 0.0
    %v1674 = vand.u32 %v1637, 4294901760
    %1675 = vmatpush1.xpose.msra.mxu0 %v1674
    %1676 = vmatprep.subr.mxu0 0.0
    %v1677 = vand.u32 %v1634, 4294901760
    %1678 = vmatpush1.xpose.msra.mxu0 %v1677
    %1679 = vmatprep.subr.mxu0 0.0
    %v1680 = vand.u32 %v1631, 4294901760
    %1681 = vmatpush1.xpose.msra.mxu0 %v1680
    %1682 = vmatprep.subr.mxu0 0.0
    %v1683 = vand.u32 %v1628, 4294901760
    %1684 = vmatpush1.xpose.msra.mxu0 %v1683
    %1685 = vmatprep.subr.mxu0 0.0
    %v1686 = vand.u32 %v1625, 4294901760
    %1687 = vmatpush1.xpose.msra.mxu0 %v1686
    %1688 = vmatprep.subr.mxu0 0.0
    %1689 = vmatpush2.xpose.msra.mxu0 0.0
    %1690 = vmatprep.subr.mxu0 0.0
    %1691 = vmatpush2.xpose.msra.mxu0 0.0
    %1692 = vmatprep.subr.mxu0 0.0
    %1693 = vmatpush2.xpose.msra.mxu0 0.0
    %1694 = vmatprep.subr.mxu0 0.0
    %1695 = vmatpush2.xpose.msra.mxu0 0.0
    %1696 = vmatprep.subr.mxu0 0.0
    %1697 = vmatpush2.xpose.msra.mxu0 0.0
    %1698 = vmatprep.subr.mxu0 0.0
    %1699 = vmatpush2.xpose.msra.mxu0 0.0
    %1700 = vmatprep.subr.mxu0 0.0
    %1701 = vmatpush2.xpose.msra.mxu0 0.0
    %1702 = vmatprep.subr.mxu0 0.0
    %1703 = vmatpush2.xpose.msra.mxu0 0.0
    %1704 = vmatprep.subr.mxu0 0.0
    %1705 = vmatpush2.xpose.msra.mxu0 0.0
    %1706 = vmatprep.subr.mxu0 0.0
    %1707 = vmatpush2.xpose.msra.mxu0 0.0
    %1708 = vmatprep.subr.mxu0 0.0
    %1709 = vmatpush2.xpose.msra.mxu0 0.0
    %1710 = vmatprep.subr.mxu0 0.0
    %1711 = vmatpush2.xpose.msra.mxu0 0.0
    %1712 = vmatprep.subr.mxu0 0.0
    %1713 = vmatpush2.xpose.msra.mxu0 0.0
    %1714 = vmatprep.subr.mxu0 0.0
    %1715 = vmatpush2.xpose.msra.mxu0 0.0
    %1716 = vmatprep.subr.mxu0 0.0
    %1717 = vmatpush2.xpose.msra.mxu0 0.0
    %1718 = vmatprep.subr.mxu0 0.0
    %1719 = vmatpush2.xpose.msra.mxu0 0.0
    %1720 = vmatprep.mubr.f32.mxu0 0.0
    %v1721 = vand.u32 %v1601, 4294901760
    %v1722 = vsub.f32 %v1601, %v1721
    %v1723 = vand.u32 %v1722, 4294901760
    %v1724 = vsub.f32 %v1722, %v1723
    %v1725 = vand.u32 %v1724, 4294901760
    %1726 = vmatmul.mubr.f32.gmra.mxu0 %v1725
    %v1727 = vpop.f32.mrf.mxu0
    %v1728 = vadd.f32 %v17, %v1727
    %v1729 = vpop.f32.mrf.mxu0
    %1730 = vmatprep.mubr.f32.mxu0 0.0
    %v1731 = vand.u32 %v1604, 4294901760
    %v1732 = vsub.f32 %v1604, %v1731
    %v1733 = vand.u32 %v1732, 4294901760
    %v1734 = vsub.f32 %v1732, %v1733
    %v1735 = vand.u32 %v1734, 4294901760
    %1736 = vmatmul.mubr.f32.gmra.mxu0 %v1735
    %v1737 = vpop.f32.mrf.mxu0
    %v1738 = vadd.f32 %v18, %v1737
    %v1739 = vpop.f32.mrf.mxu0
    %1740 = vmatprep.mubr.f32.mxu0 0.0
    %v1741 = vand.u32 %v1607, 4294901760
    %v1742 = vsub.f32 %v1607, %v1741
    %v1743 = vand.u32 %v1742, 4294901760
    %v1744 = vsub.f32 %v1742, %v1743
    %v1745 = vand.u32 %v1744, 4294901760
    %1746 = vmatmul.mubr.f32.gmra.mxu0 %v1745
    %v1747 = vpop.f32.mrf.mxu0
    %v1748 = vadd.f32 %v19, %v1747
    %v1749 = vpop.f32.mrf.mxu0
    %1750 = vmatprep.mubr.f32.mxu0 0.0
    %v1751 = vand.u32 %v1610, 4294901760
    %v1752 = vsub.f32 %v1610, %v1751
    %v1753 = vand.u32 %v1752, 4294901760
    %v1754 = vsub.f32 %v1752, %v1753
    %v1755 = vand.u32 %v1754, 4294901760
    %1756 = vmatmul.mubr.f32.gmra.mxu0 %v1755
    %v1757 = vpop.f32.mrf.mxu0
    %v1758 = vadd.f32 %v20, %v1757
    %v1759 = vpop.f32.mrf.mxu0
    %1760 = vmatprep.mubr.f32.mxu0 0.0
    %v1761 = vand.u32 %v1613, 4294901760
    %v1762 = vsub.f32 %v1613, %v1761
    %v1763 = vand.u32 %v1762, 4294901760
    %v1764 = vsub.f32 %v1762, %v1763
    %v1765 = vand.u32 %v1764, 4294901760
    %1766 = vmatmul.mubr.f32.gmra.mxu0 %v1765
    %v1767 = vpop.f32.mrf.mxu0
    %v1768 = vadd.f32 %v21, %v1767
    %v1769 = vpop.f32.mrf.mxu0
    %1770 = vmatprep.mubr.f32.mxu0 0.0
    %v1771 = vand.u32 %v1616, 4294901760
    %v1772 = vsub.f32 %v1616, %v1771
    %v1773 = vand.u32 %v1772, 4294901760
    %v1774 = vsub.f32 %v1772, %v1773
    %v1775 = vand.u32 %v1774, 4294901760
    %1776 = vmatmul.mubr.f32.gmra.mxu0 %v1775
    %v1777 = vpop.f32.mrf.mxu0
    %v1778 = vadd.f32 %v22, %v1777
    %v1779 = vpop.f32.mrf.mxu0
    %1780 = vmatprep.mubr.f32.mxu0 0.0
    %v1781 = vand.u32 %v1619, 4294901760
    %v1782 = vsub.f32 %v1619, %v1781
    %v1783 = vand.u32 %v1782, 4294901760
    %v1784 = vsub.f32 %v1782, %v1783
    %v1785 = vand.u32 %v1784, 4294901760
    %1786 = vmatmul.mubr.f32.gmra.mxu0 %v1785
    %v1787 = vpop.f32.mrf.mxu0
    %v1788 = vadd.f32 %v23, %v1787
    %v1789 = vpop.f32.mrf.mxu0
    %1790 = vmatprep.mubr.f32.mxu0 0.0
    %v1791 = vand.u32 %v1622, 4294901760
    %v1792 = vsub.f32 %v1622, %v1791
    %v1793 = vand.u32 %v1792, 4294901760
    %v1794 = vsub.f32 %v1792, %v1793
    %v1795 = vand.u32 %v1794, 4294901760
    %1796 = vmatmul.mubr.f32.gmra.mxu0 %v1795
    %v1797 = vpop.f32.mrf.mxu0
    %v1798 = vadd.f32 %v24, %v1797
    %v1799 = vpop.f32.mrf.mxu0
    %1800 = vdwg.mxu0
    %1801 = vmatprep.subr.mxu0 0.0
    %1802 = vmatpush1.xpose.msra.mxu0 0.0
    %1803 = vmatprep.subr.mxu0 0.0
    %1804 = vmatpush1.xpose.msra.mxu0 0.0
    %1805 = vmatprep.subr.mxu0 0.0
    %1806 = vmatpush1.xpose.msra.mxu0 0.0
    %1807 = vmatprep.subr.mxu0 0.0
    %1808 = vmatpush1.xpose.msra.mxu0 0.0
    %1809 = vmatprep.subr.mxu0 0.0
    %1810 = vmatpush1.xpose.msra.mxu0 0.0
    %1811 = vmatprep.subr.mxu0 0.0
    %1812 = vmatpush1.xpose.msra.mxu0 0.0
    %1813 = vmatprep.subr.mxu0 0.0
    %1814 = vmatpush1.xpose.msra.mxu0 0.0
    %1815 = vmatprep.subr.mxu0 0.0
    %1816 = vmatpush1.xpose.msra.mxu0 0.0
    %1817 = vmatprep.subr.mxu0 0.0
    %v1818 = vand.u32 %v1646, 4294901760
    %v1819 = vsub.f32 %v1646, %v1818
    %v1820 = vand.u32 %v1819, 4294901760
    %v1821 = vsub.f32 %v1819, %v1820
    %v1822 = vand.u32 %v1821, 4294901760
    %1823 = vmatpush1.xpose.msra.mxu0 %v1822
    %1824 = vmatprep.subr.mxu0 0.0
    %v1825 = vand.u32 %v1643, 4294901760
    %v1826 = vsub.f32 %v1643, %v1825
    %v1827 = vand.u32 %v1826, 4294901760
    %v1828 = vsub.f32 %v1826, %v1827
    %v1829 = vand.u32 %v1828, 4294901760
    %1830 = vmatpush1.xpose.msra.mxu0 %v1829
    %1831 = vmatprep.subr.mxu0 0.0
    %v1832 = vand.u32 %v1640, 4294901760
    %v1833 = vsub.f32 %v1640, %v1832
    %v1834 = vand.u32 %v1833, 4294901760
    %v1835 = vsub.f32 %v1833, %v1834
    %v1836 = vand.u32 %v1835, 4294901760
    %1837 = vmatpush1.xpose.msra.mxu0 %v1836
    %1838 = vmatprep.subr.mxu0 0.0
    %v1839 = vand.u32 %v1637, 4294901760
    %v1840 = vsub.f32 %v1637, %v1839
    %v1841 = vand.u32 %v1840, 4294901760
    %v1842 = vsub.f32 %v1840, %v1841
    %v1843 = vand.u32 %v1842, 4294901760
    %1844 = vmatpush1.xpose.msra.mxu0 %v1843
    %1845 = vmatprep.subr.mxu0 0.0
    %v1846 = vand.u32 %v1634, 4294901760
    %v1847 = vsub.f32 %v1634, %v1846
    %v1848 = vand.u32 %v1847, 4294901760
    %v1849 = vsub.f32 %v1847, %v1848
    %v1850 = vand.u32 %v1849, 4294901760
    %1851 = vmatpush1.xpose.msra.mxu0 %v1850
    %1852 = vmatprep.subr.mxu0 0.0
    %v1853 = vand.u32 %v1631, 4294901760
    %v1854 = vsub.f32 %v1631, %v1853
    %v1855 = vand.u32 %v1854, 4294901760
    %v1856 = vsub.f32 %v1854, %v1855
    %v1857 = vand.u32 %v1856, 4294901760
    %1858 = vmatpush1.xpose.msra.mxu0 %v1857
    %1859 = vmatprep.subr.mxu0 0.0
    %v1860 = vand.u32 %v1628, 4294901760
    %v1861 = vsub.f32 %v1628, %v1860
    %v1862 = vand.u32 %v1861, 4294901760
    %v1863 = vsub.f32 %v1861, %v1862
    %v1864 = vand.u32 %v1863, 4294901760
    %1865 = vmatpush1.xpose.msra.mxu0 %v1864
    %1866 = vmatprep.subr.mxu0 0.0
    %v1867 = vand.u32 %v1625, 4294901760
    %v1868 = vsub.f32 %v1625, %v1867
    %v1869 = vand.u32 %v1868, 4294901760
    %v1870 = vsub.f32 %v1868, %v1869
    %v1871 = vand.u32 %v1870, 4294901760
    %1872 = vmatpush1.xpose.msra.mxu0 %v1871
    %1873 = vmatprep.subr.mxu0 0.0
    %1874 = vmatpush2.xpose.msra.mxu0 0.0
    %1875 = vmatprep.subr.mxu0 0.0
    %1876 = vmatpush2.xpose.msra.mxu0 0.0
    %1877 = vmatprep.subr.mxu0 0.0
    %1878 = vmatpush2.xpose.msra.mxu0 0.0
    %1879 = vmatprep.subr.mxu0 0.0
    %1880 = vmatpush2.xpose.msra.mxu0 0.0
    %1881 = vmatprep.subr.mxu0 0.0
    %1882 = vmatpush2.xpose.msra.mxu0 0.0
    %1883 = vmatprep.subr.mxu0 0.0
    %1884 = vmatpush2.xpose.msra.mxu0 0.0
    %1885 = vmatprep.subr.mxu0 0.0
    %1886 = vmatpush2.xpose.msra.mxu0 0.0
    %1887 = vmatprep.subr.mxu0 0.0
    %1888 = vmatpush2.xpose.msra.mxu0 0.0
    %1889 = vmatprep.subr.mxu0 0.0
    %1890 = vmatpush2.xpose.msra.mxu0 0.0
    %1891 = vmatprep.subr.mxu0 0.0
    %1892 = vmatpush2.xpose.msra.mxu0 0.0
    %1893 = vmatprep.subr.mxu0 0.0
    %1894 = vmatpush2.xpose.msra.mxu0 0.0
    %1895 = vmatprep.subr.mxu0 0.0
    %1896 = vmatpush2.xpose.msra.mxu0 0.0
    %1897 = vmatprep.subr.mxu0 0.0
    %1898 = vmatpush2.xpose.msra.mxu0 0.0
    %1899 = vmatprep.subr.mxu0 0.0
    %1900 = vmatpush2.xpose.msra.mxu0 0.0
    %1901 = vmatprep.subr.mxu0 0.0
    %1902 = vmatpush2.xpose.msra.mxu0 0.0
    %1903 = vmatprep.subr.mxu0 0.0
    %1904 = vmatpush2.xpose.msra.mxu0 0.0
    %1905 = vmatprep.mubr.f32.mxu0 0.0
    %v1906 = vand.u32 %v1601, 4294901760
    %1907 = vmatmul.mubr.f32.gmra.mxu0 %v1906
    %v1908 = vpop.f32.mrf.mxu0
    %v1909 = vadd.f32 %v1728, %v1908
    %v1910 = vpop.f32.mrf.mxu0
    %1911 = vmatprep.mubr.f32.mxu0 0.0
    %v1912 = vand.u32 %v1604, 4294901760
    %1913 = vmatmul.mubr.f32.gmra.mxu0 %v1912
    %v1914 = vpop.f32.mrf.mxu0
    %v1915 = vadd.f32 %v1738, %v1914
    %v1916 = vpop.f32.mrf.mxu0
    %1917 = vmatprep.mubr.f32.mxu0 0.0
    %v1918 = vand.u32 %v1607, 4294901760
    %1919 = vmatmul.mubr.f32.gmra.mxu0 %v1918
    %v1920 = vpop.f32.mrf.mxu0
    %v1921 = vadd.f32 %v1748, %v1920
    %v1922 = vpop.f32.mrf.mxu0
    %1923 = vmatprep.mubr.f32.mxu0 0.0
    %v1924 = vand.u32 %v1610, 4294901760
    %1925 = vmatmul.mubr.f32.gmra.mxu0 %v1924
    %v1926 = vpop.f32.mrf.mxu0
    %v1927 = vadd.f32 %v1758, %v1926
    %v1928 = vpop.f32.mrf.mxu0
    %1929 = vmatprep.mubr.f32.mxu0 0.0
    %v1930 = vand.u32 %v1613, 4294901760
    %1931 = vmatmul.mubr.f32.gmra.mxu0 %v1930
    %v1932 = vpop.f32.mrf.mxu0
    %v1933 = vadd.f32 %v1768, %v1932
    %v1934 = vpop.f32.mrf.mxu0
    %1935 = vmatprep.mubr.f32.mxu0 0.0
    %v1936 = vand.u32 %v1616, 4294901760
    %1937 = vmatmul.mubr.f32.gmra.mxu0 %v1936
    %v1938 = vpop.f32.mrf.mxu0
    %v1939 = vadd.f32 %v1778, %v1938
    %v1940 = vpop.f32.mrf.mxu0
    %1941 = vmatprep.mubr.f32.mxu0 0.0
    %v1942 = vand.u32 %v1619, 4294901760
    %1943 = vmatmul.mubr.f32.gmra.mxu0 %v1942
    %v1944 = vpop.f32.mrf.mxu0
    %v1945 = vadd.f32 %v1788, %v1944
    %v1946 = vpop.f32.mrf.mxu0
    %1947 = vmatprep.mubr.f32.mxu0 0.0
    %v1948 = vand.u32 %v1622, 4294901760
    %1949 = vmatmul.mubr.f32.gmra.mxu0 %v1948
    %v1950 = vpop.f32.mrf.mxu0
    %v1951 = vadd.f32 %v1798, %v1950
    %v1952 = vpop.f32.mrf.mxu0
    %1953 = vdwg.mxu0
    %1954 = vmatprep.subr.mxu0 0.0
    %1955 = vmatpush1.xpose.msra.mxu0 0.0
    %1956 = vmatprep.subr.mxu0 0.0
    %1957 = vmatpush1.xpose.msra.mxu0 0.0
    %1958 = vmatprep.subr.mxu0 0.0
    %1959 = vmatpush1.xpose.msra.mxu0 0.0
    %1960 = vmatprep.subr.mxu0 0.0
    %1961 = vmatpush1.xpose.msra.mxu0 0.0
    %1962 = vmatprep.subr.mxu0 0.0
    %1963 = vmatpush1.xpose.msra.mxu0 0.0
    %1964 = vmatprep.subr.mxu0 0.0
    %1965 = vmatpush1.xpose.msra.mxu0 0.0
    %1966 = vmatprep.subr.mxu0 0.0
    %1967 = vmatpush1.xpose.msra.mxu0 0.0
    %1968 = vmatprep.subr.mxu0 0.0
    %1969 = vmatpush1.xpose.msra.mxu0 0.0
    %1970 = vmatprep.subr.mxu0 0.0
    %v1971 = vand.u32 %v1646, 4294901760
    %v1972 = vsub.f32 %v1646, %v1971
    %1973 = vmatpush1.xpose.msra.mxu0 %v1972
    %1974 = vmatprep.subr.mxu0 0.0
    %v1975 = vand.u32 %v1643, 4294901760
    %v1976 = vsub.f32 %v1643, %v1975
    %1977 = vmatpush1.xpose.msra.mxu0 %v1976
    %1978 = vmatprep.subr.mxu0 0.0
    %v1979 = vand.u32 %v1640, 4294901760
    %v1980 = vsub.f32 %v1640, %v1979
    %1981 = vmatpush1.xpose.msra.mxu0 %v1980
    %1982 = vmatprep.subr.mxu0 0.0
    %v1983 = vand.u32 %v1637, 4294901760
    %v1984 = vsub.f32 %v1637, %v1983
    %1985 = vmatpush1.xpose.msra.mxu0 %v1984
    %1986 = vmatprep.subr.mxu0 0.0
    %v1987 = vand.u32 %v1634, 4294901760
    %v1988 = vsub.f32 %v1634, %v1987
    %1989 = vmatpush1.xpose.msra.mxu0 %v1988
    %1990 = vmatprep.subr.mxu0 0.0
    %v1991 = vand.u32 %v1631, 4294901760
    %v1992 = vsub.f32 %v1631, %v1991
    %1993 = vmatpush1.xpose.msra.mxu0 %v1992
    %1994 = vmatprep.subr.mxu0 0.0
    %v1995 = vand.u32 %v1628, 4294901760
    %v1996 = vsub.f32 %v1628, %v1995
    %1997 = vmatpush1.xpose.msra.mxu0 %v1996
    %1998 = vmatprep.subr.mxu0 0.0
    %v1999 = vand.u32 %v1625, 4294901760
    %v2000 = vsub.f32 %v1625, %v1999
    %2001 = vmatpush1.xpose.msra.mxu0 %v2000
    %2002 = vmatprep.subr.mxu0 0.0
    %2003 = vmatpush2.xpose.msra.mxu0 0.0
    %2004 = vmatprep.subr.mxu0 0.0
    %2005 = vmatpush2.xpose.msra.mxu0 0.0
    %2006 = vmatprep.subr.mxu0 0.0
    %2007 = vmatpush2.xpose.msra.mxu0 0.0
    %2008 = vmatprep.subr.mxu0 0.0
    %2009 = vmatpush2.xpose.msra.mxu0 0.0
    %2010 = vmatprep.subr.mxu0 0.0
    %2011 = vmatpush2.xpose.msra.mxu0 0.0
    %2012 = vmatprep.subr.mxu0 0.0
    %2013 = vmatpush2.xpose.msra.mxu0 0.0
    %2014 = vmatprep.subr.mxu0 0.0
    %2015 = vmatpush2.xpose.msra.mxu0 0.0
    %2016 = vmatprep.subr.mxu0 0.0
    %2017 = vmatpush2.xpose.msra.mxu0 0.0
    %2018 = vmatprep.subr.mxu0 0.0
    %2019 = vmatpush2.xpose.msra.mxu0 0.0
    %2020 = vmatprep.subr.mxu0 0.0
    %2021 = vmatpush2.xpose.msra.mxu0 0.0
    %2022 = vmatprep.subr.mxu0 0.0
    %2023 = vmatpush2.xpose.msra.mxu0 0.0
    %2024 = vmatprep.subr.mxu0 0.0
    %2025 = vmatpush2.xpose.msra.mxu0 0.0
    %2026 = vmatprep.subr.mxu0 0.0
    %2027 = vmatpush2.xpose.msra.mxu0 0.0
    %2028 = vmatprep.subr.mxu0 0.0
    %2029 = vmatpush2.xpose.msra.mxu0 0.0
    %2030 = vmatprep.subr.mxu0 0.0
    %2031 = vmatpush2.xpose.msra.mxu0 0.0
    %2032 = vmatprep.subr.mxu0 0.0
    %2033 = vmatpush2.xpose.msra.mxu0 0.0
    %2034 = vmatprep.mubr.f32.mxu0 0.0
    %v2035 = vand.u32 %v1601, 4294901760
    %v2036 = vsub.f32 %v1601, %v2035
    %2037 = vmatmul.mubr.f32.gmra.mxu0 %v2036
    %v2038 = vpop.f32.mrf.mxu0
    %v2039 = vadd.f32 %v1909, %v2038
    %v2040 = vpop.f32.mrf.mxu0
    %2041 = vmatprep.mubr.f32.mxu0 0.0
    %v2042 = vand.u32 %v1604, 4294901760
    %v2043 = vsub.f32 %v1604, %v2042
    %2044 = vmatmul.mubr.f32.gmra.mxu0 %v2043
    %v2045 = vpop.f32.mrf.mxu0
    %v2046 = vadd.f32 %v1915, %v2045
    %v2047 = vpop.f32.mrf.mxu0
    %2048 = vmatprep.mubr.f32.mxu0 0.0
    %v2049 = vand.u32 %v1607, 4294901760
    %v2050 = vsub.f32 %v1607, %v2049
    %2051 = vmatmul.mubr.f32.gmra.mxu0 %v2050
    %v2052 = vpop.f32.mrf.mxu0
    %v2053 = vadd.f32 %v1921, %v2052
    %v2054 = vpop.f32.mrf.mxu0
    %2055 = vmatprep.mubr.f32.mxu0 0.0
    %v2056 = vand.u32 %v1610, 4294901760
    %v2057 = vsub.f32 %v1610, %v2056
    %2058 = vmatmul.mubr.f32.gmra.mxu0 %v2057
    %v2059 = vpop.f32.mrf.mxu0
    %v2060 = vadd.f32 %v1927, %v2059
    %v2061 = vpop.f32.mrf.mxu0
    %2062 = vmatprep.mubr.f32.mxu0 0.0
    %v2063 = vand.u32 %v1613, 4294901760
    %v2064 = vsub.f32 %v1613, %v2063
    %2065 = vmatmul.mubr.f32.gmra.mxu0 %v2064
    %v2066 = vpop.f32.mrf.mxu0
    %v2067 = vadd.f32 %v1933, %v2066
    %v2068 = vpop.f32.mrf.mxu0
    %2069 = vmatprep.mubr.f32.mxu0 0.0
    %v2070 = vand.u32 %v1616, 4294901760
    %v2071 = vsub.f32 %v1616, %v2070
    %2072 = vmatmul.mubr.f32.gmra.mxu0 %v2071
    %v2073 = vpop.f32.mrf.mxu0
    %v2074 = vadd.f32 %v1939, %v2073
    %v2075 = vpop.f32.mrf.mxu0
    %2076 = vmatprep.mubr.f32.mxu0 0.0
    %v2077 = vand.u32 %v1619, 4294901760
    %v2078 = vsub.f32 %v1619, %v2077
    %2079 = vmatmul.mubr.f32.gmra.mxu0 %v2078
    %v2080 = vpop.f32.mrf.mxu0
    %v2081 = vadd.f32 %v1945, %v2080
    %v2082 = vpop.f32.mrf.mxu0
    %2083 = vmatprep.mubr.f32.mxu0 0.0
    %v2084 = vand.u32 %v1622, 4294901760
    %v2085 = vsub.f32 %v1622, %v2084
    %2086 = vmatmul.mubr.f32.gmra.mxu0 %v2085
    %v2087 = vpop.f32.mrf.mxu0
    %v2088 = vadd.f32 %v1951, %v2087
    %v2089 = vpop.f32.mrf.mxu0
    %2090 = vdwg.mxu0
    %2091 = vmatprep.subr.mxu0 0.0
    %2092 = vmatpush1.xpose.msra.mxu0 0.0
    %2093 = vmatprep.subr.mxu0 0.0
    %2094 = vmatpush1.xpose.msra.mxu0 0.0
    %2095 = vmatprep.subr.mxu0 0.0
    %2096 = vmatpush1.xpose.msra.mxu0 0.0
    %2097 = vmatprep.subr.mxu0 0.0
    %2098 = vmatpush1.xpose.msra.mxu0 0.0
    %2099 = vmatprep.subr.mxu0 0.0
    %2100 = vmatpush1.xpose.msra.mxu0 0.0
    %2101 = vmatprep.subr.mxu0 0.0
    %2102 = vmatpush1.xpose.msra.mxu0 0.0
    %2103 = vmatprep.subr.mxu0 0.0
    %2104 = vmatpush1.xpose.msra.mxu0 0.0
    %2105 = vmatprep.subr.mxu0 0.0
    %2106 = vmatpush1.xpose.msra.mxu0 0.0
    %2107 = vmatprep.subr.mxu0 0.0
    %v2108 = vand.u32 %v1646, 4294901760
    %2109 = vmatpush1.xpose.msra.mxu0 %v2108
    %2110 = vmatprep.subr.mxu0 0.0
    %v2111 = vand.u32 %v1643, 4294901760
    %2112 = vmatpush1.xpose.msra.mxu0 %v2111
    %2113 = vmatprep.subr.mxu0 0.0
    %v2114 = vand.u32 %v1640, 4294901760
    %2115 = vmatpush1.xpose.msra.mxu0 %v2114
    %2116 = vmatprep.subr.mxu0 0.0
    %v2117 = vand.u32 %v1637, 4294901760
    %2118 = vmatpush1.xpose.msra.mxu0 %v2117
    %2119 = vmatprep.subr.mxu0 0.0
    %v2120 = vand.u32 %v1634, 4294901760
    %2121 = vmatpush1.xpose.msra.mxu0 %v2120
    %2122 = vmatprep.subr.mxu0 0.0
    %v2123 = vand.u32 %v1631, 4294901760
    %2124 = vmatpush1.xpose.msra.mxu0 %v2123
    %2125 = vmatprep.subr.mxu0 0.0
    %v2126 = vand.u32 %v1628, 4294901760
    %2127 = vmatpush1.xpose.msra.mxu0 %v2126
    %2128 = vmatprep.subr.mxu0 0.0
    %v2129 = vand.u32 %v1625, 4294901760
    %2130 = vmatpush1.xpose.msra.mxu0 %v2129
    %2131 = vmatprep.subr.mxu0 0.0
    %2132 = vmatpush2.xpose.msra.mxu0 0.0
    %2133 = vmatprep.subr.mxu0 0.0
    %2134 = vmatpush2.xpose.msra.mxu0 0.0
    %2135 = vmatprep.subr.mxu0 0.0
    %2136 = vmatpush2.xpose.msra.mxu0 0.0
    %2137 = vmatprep.subr.mxu0 0.0
    %2138 = vmatpush2.xpose.msra.mxu0 0.0
    %2139 = vmatprep.subr.mxu0 0.0
    %2140 = vmatpush2.xpose.msra.mxu0 0.0
    %2141 = vmatprep.subr.mxu0 0.0
    %2142 = vmatpush2.xpose.msra.mxu0 0.0
    %2143 = vmatprep.subr.mxu0 0.0
    %2144 = vmatpush2.xpose.msra.mxu0 0.0
    %2145 = vmatprep.subr.mxu0 0.0
    %2146 = vmatpush2.xpose.msra.mxu0 0.0
    %2147 = vmatprep.subr.mxu0 0.0
    %2148 = vmatpush2.xpose.msra.mxu0 0.0
    %2149 = vmatprep.subr.mxu0 0.0
    %2150 = vmatpush2.xpose.msra.mxu0 0.0
    %2151 = vmatprep.subr.mxu0 0.0
    %2152 = vmatpush2.xpose.msra.mxu0 0.0
    %2153 = vmatprep.subr.mxu0 0.0
    %2154 = vmatpush2.xpose.msra.mxu0 0.0
    %2155 = vmatprep.subr.mxu0 0.0
    %2156 = vmatpush2.xpose.msra.mxu0 0.0
    %2157 = vmatprep.subr.mxu0 0.0
    %2158 = vmatpush2.xpose.msra.mxu0 0.0
    %2159 = vmatprep.subr.mxu0 0.0
    %2160 = vmatpush2.xpose.msra.mxu0 0.0
    %2161 = vmatprep.subr.mxu0 0.0
    %2162 = vmatpush2.xpose.msra.mxu0 0.0
    %2163 = vmatprep.mubr.f32.mxu0 0.0
    %v2164 = vand.u32 %v1601, 4294901760
    %v2165 = vsub.f32 %v1601, %v2164
    %v2166 = vand.u32 %v2165, 4294901760
    %2167 = vmatmul.mubr.f32.gmra.mxu0 %v2166
    %v2168 = vpop.f32.mrf.mxu0
    %v2169 = vadd.f32 %v2039, %v2168
    %v2170 = vpop.f32.mrf.mxu0
    %2171 = vmatprep.mubr.f32.mxu0 0.0
    %v2172 = vand.u32 %v1604, 4294901760
    %v2173 = vsub.f32 %v1604, %v2172
    %v2174 = vand.u32 %v2173, 4294901760
    %2175 = vmatmul.mubr.f32.gmra.mxu0 %v2174
    %v2176 = vpop.f32.mrf.mxu0
    %v2177 = vadd.f32 %v2046, %v2176
    %v2178 = vpop.f32.mrf.mxu0
    %2179 = vmatprep.mubr.f32.mxu0 0.0
    %v2180 = vand.u32 %v1607, 4294901760
    %v2181 = vsub.f32 %v1607, %v2180
    %v2182 = vand.u32 %v2181, 4294901760
    %2183 = vmatmul.mubr.f32.gmra.mxu0 %v2182
    %v2184 = vpop.f32.mrf.mxu0
    %v2185 = vadd.f32 %v2053, %v2184
    %v2186 = vpop.f32.mrf.mxu0
    %2187 = vmatprep.mubr.f32.mxu0 0.0
    %v2188 = vand.u32 %v1610, 4294901760
    %v2189 = vsub.f32 %v1610, %v2188
    %v2190 = vand.u32 %v2189, 4294901760
    %2191 = vmatmul.mubr.f32.gmra.mxu0 %v2190
    %v2192 = vpop.f32.mrf.mxu0
    %v2193 = vadd.f32 %v2060, %v2192
    %v2194 = vpop.f32.mrf.mxu0
    %2195 = vmatprep.mubr.f32.mxu0 0.0
    %v2196 = vand.u32 %v1613, 4294901760
    %v2197 = vsub.f32 %v1613, %v2196
    %v2198 = vand.u32 %v2197, 4294901760
    %2199 = vmatmul.mubr.f32.gmra.mxu0 %v2198
    %v2200 = vpop.f32.mrf.mxu0
    %v2201 = vadd.f32 %v2067, %v2200
    %v2202 = vpop.f32.mrf.mxu0
    %2203 = vmatprep.mubr.f32.mxu0 0.0
    %v2204 = vand.u32 %v1616, 4294901760
    %v2205 = vsub.f32 %v1616, %v2204
    %v2206 = vand.u32 %v2205, 4294901760
    %2207 = vmatmul.mubr.f32.gmra.mxu0 %v2206
    %v2208 = vpop.f32.mrf.mxu0
    %v2209 = vadd.f32 %v2074, %v2208
    %v2210 = vpop.f32.mrf.mxu0
    %2211 = vmatprep.mubr.f32.mxu0 0.0
    %v2212 = vand.u32 %v1619, 4294901760
    %v2213 = vsub.f32 %v1619, %v2212
    %v2214 = vand.u32 %v2213, 4294901760
    %2215 = vmatmul.mubr.f32.gmra.mxu0 %v2214
    %v2216 = vpop.f32.mrf.mxu0
    %v2217 = vadd.f32 %v2081, %v2216
    %v2218 = vpop.f32.mrf.mxu0
    %2219 = vmatprep.mubr.f32.mxu0 0.0
    %v2220 = vand.u32 %v1622, 4294901760
    %v2221 = vsub.f32 %v1622, %v2220
    %v2222 = vand.u32 %v2221, 4294901760
    %2223 = vmatmul.mubr.f32.gmra.mxu0 %v2222
    %v2224 = vpop.f32.mrf.mxu0
    %v2225 = vadd.f32 %v2088, %v2224
    %v2226 = vpop.f32.mrf.mxu0
    %2227 = vdwg.mxu0
    %2228 = vmatprep.subr.mxu0 0.0
    %2229 = vmatpush1.xpose.msra.mxu0 0.0
    %2230 = vmatprep.subr.mxu0 0.0
    %2231 = vmatpush1.xpose.msra.mxu0 0.0
    %2232 = vmatprep.subr.mxu0 0.0
    %2233 = vmatpush1.xpose.msra.mxu0 0.0
    %2234 = vmatprep.subr.mxu0 0.0
    %2235 = vmatpush1.xpose.msra.mxu0 0.0
    %2236 = vmatprep.subr.mxu0 0.0
    %2237 = vmatpush1.xpose.msra.mxu0 0.0
    %2238 = vmatprep.subr.mxu0 0.0
    %2239 = vmatpush1.xpose.msra.mxu0 0.0
    %2240 = vmatprep.subr.mxu0 0.0
    %2241 = vmatpush1.xpose.msra.mxu0 0.0
    %2242 = vmatprep.subr.mxu0 0.0
    %2243 = vmatpush1.xpose.msra.mxu0 0.0
    %2244 = vmatprep.subr.mxu0 0.0
    %v2245 = vand.u32 %v1646, 4294901760
    %v2246 = vsub.f32 %v1646, %v2245
    %v2247 = vand.u32 %v2246, 4294901760
    %2248 = vmatpush1.xpose.msra.mxu0 %v2247
    %2249 = vmatprep.subr.mxu0 0.0
    %v2250 = vand.u32 %v1643, 4294901760
    %v2251 = vsub.f32 %v1643, %v2250
    %v2252 = vand.u32 %v2251, 4294901760
    %2253 = vmatpush1.xpose.msra.mxu0 %v2252
    %2254 = vmatprep.subr.mxu0 0.0
    %v2255 = vand.u32 %v1640, 4294901760
    %v2256 = vsub.f32 %v1640, %v2255
    %v2257 = vand.u32 %v2256, 4294901760
    %2258 = vmatpush1.xpose.msra.mxu0 %v2257
    %2259 = vmatprep.subr.mxu0 0.0
    %v2260 = vand.u32 %v1637, 4294901760
    %v2261 = vsub.f32 %v1637, %v2260
    %v2262 = vand.u32 %v2261, 4294901760
    %2263 = vmatpush1.xpose.msra.mxu0 %v2262
    %2264 = vmatprep.subr.mxu0 0.0
    %v2265 = vand.u32 %v1634, 4294901760
    %v2266 = vsub.f32 %v1634, %v2265
    %v2267 = vand.u32 %v2266, 4294901760
    %2268 = vmatpush1.xpose.msra.mxu0 %v2267
    %2269 = vmatprep.subr.mxu0 0.0
    %v2270 = vand.u32 %v1631, 4294901760
    %v2271 = vsub.f32 %v1631, %v2270
    %v2272 = vand.u32 %v2271, 4294901760
    %2273 = vmatpush1.xpose.msra.mxu0 %v2272
    %2274 = vmatprep.subr.mxu0 0.0
    %v2275 = vand.u32 %v1628, 4294901760
    %v2276 = vsub.f32 %v1628, %v2275
    %v2277 = vand.u32 %v2276, 4294901760
    %2278 = vmatpush1.xpose.msra.mxu0 %v2277
    %2279 = vmatprep.subr.mxu0 0.0
    %v2280 = vand.u32 %v1625, 4294901760
    %v2281 = vsub.f32 %v1625, %v2280
    %v2282 = vand.u32 %v2281, 4294901760
    %2283 = vmatpush1.xpose.msra.mxu0 %v2282
    %2284 = vmatprep.subr.mxu0 0.0
    %2285 = vmatpush2.xpose.msra.mxu0 0.0
    %2286 = vmatprep.subr.mxu0 0.0
    %2287 = vmatpush2.xpose.msra.mxu0 0.0
    %2288 = vmatprep.subr.mxu0 0.0
    %2289 = vmatpush2.xpose.msra.mxu0 0.0
    %2290 = vmatprep.subr.mxu0 0.0
    %2291 = vmatpush2.xpose.msra.mxu0 0.0
    %2292 = vmatprep.subr.mxu0 0.0
    %2293 = vmatpush2.xpose.msra.mxu0 0.0
    %2294 = vmatprep.subr.mxu0 0.0
    %2295 = vmatpush2.xpose.msra.mxu0 0.0
    %2296 = vmatprep.subr.mxu0 0.0
    %2297 = vmatpush2.xpose.msra.mxu0 0.0
    %2298 = vmatprep.subr.mxu0 0.0
    %2299 = vmatpush2.xpose.msra.mxu0 0.0
    %2300 = vmatprep.subr.mxu0 0.0
    %2301 = vmatpush2.xpose.msra.mxu0 0.0
    %2302 = vmatprep.subr.mxu0 0.0
    %2303 = vmatpush2.xpose.msra.mxu0 0.0
    %2304 = vmatprep.subr.mxu0 0.0
    %2305 = vmatpush2.xpose.msra.mxu0 0.0
    %2306 = vmatprep.subr.mxu0 0.0
    %2307 = vmatpush2.xpose.msra.mxu0 0.0
    %2308 = vmatprep.subr.mxu0 0.0
    %2309 = vmatpush2.xpose.msra.mxu0 0.0
    %2310 = vmatprep.subr.mxu0 0.0
    %2311 = vmatpush2.xpose.msra.mxu0 0.0
    %2312 = vmatprep.subr.mxu0 0.0
    %2313 = vmatpush2.xpose.msra.mxu0 0.0
    %2314 = vmatprep.subr.mxu0 0.0
    %2315 = vmatpush2.xpose.msra.mxu0 0.0
    %2316 = vmatprep.mubr.f32.mxu0 0.0
    %v2317 = vand.u32 %v1601, 4294901760
    %2318 = vmatmul.mubr.f32.gmra.mxu0 %v2317
    %v2319 = vpop.f32.mrf.mxu0
    %v2320 = vadd.f32 %v2169, %v2319
    %v2321 = vpop.f32.mrf.mxu0
    %2322 = vmatprep.mubr.f32.mxu0 0.0
    %v2323 = vand.u32 %v1604, 4294901760
    %2324 = vmatmul.mubr.f32.gmra.mxu0 %v2323
    %v2325 = vpop.f32.mrf.mxu0
    %v2326 = vadd.f32 %v2177, %v2325
    %v2327 = vpop.f32.mrf.mxu0
    %2328 = vmatprep.mubr.f32.mxu0 0.0
    %v2329 = vand.u32 %v1607, 4294901760
    %2330 = vmatmul.mubr.f32.gmra.mxu0 %v2329
    %v2331 = vpop.f32.mrf.mxu0
    %v2332 = vadd.f32 %v2185, %v2331
    %v2333 = vpop.f32.mrf.mxu0
    %2334 = vmatprep.mubr.f32.mxu0 0.0
    %v2335 = vand.u32 %v1610, 4294901760
    %2336 = vmatmul.mubr.f32.gmra.mxu0 %v2335
    %v2337 = vpop.f32.mrf.mxu0
    %v2338 = vadd.f32 %v2193, %v2337
    %v2339 = vpop.f32.mrf.mxu0
    %2340 = vmatprep.mubr.f32.mxu0 0.0
    %v2341 = vand.u32 %v1613, 4294901760
    %2342 = vmatmul.mubr.f32.gmra.mxu0 %v2341
    %v2343 = vpop.f32.mrf.mxu0
    %v2344 = vadd.f32 %v2201, %v2343
    %v2345 = vpop.f32.mrf.mxu0
    %2346 = vmatprep.mubr.f32.mxu0 0.0
    %v2347 = vand.u32 %v1616, 4294901760
    %2348 = vmatmul.mubr.f32.gmra.mxu0 %v2347
    %v2349 = vpop.f32.mrf.mxu0
    %v2350 = vadd.f32 %v2209, %v2349
    %v2351 = vpop.f32.mrf.mxu0
    %2352 = vmatprep.mubr.f32.mxu0 0.0
    %v2353 = vand.u32 %v1619, 4294901760
    %2354 = vmatmul.mubr.f32.gmra.mxu0 %v2353
    %v2355 = vpop.f32.mrf.mxu0
    %v2356 = vadd.f32 %v2217, %v2355
    %v2357 = vpop.f32.mrf.mxu0
    %2358 = vmatprep.mubr.f32.mxu0 0.0
    %v2359 = vand.u32 %v1622, 4294901760
    %2360 = vmatmul.mubr.f32.gmra.mxu0 %v2359
    %v2361 = vpop.f32.mrf.mxu0
    %v2362 = vadd.f32 %v2225, %v2361
    %v2363 = vpop.f32.mrf.mxu0
    %2364 = vdwg.mxu0
    %2365 = vmatprep.subr.mxu0 0.0
    %2366 = vmatpush1.xpose.msra.mxu0 0.0
    %2367 = vmatprep.subr.mxu0 0.0
    %2368 = vmatpush1.xpose.msra.mxu0 0.0
    %2369 = vmatprep.subr.mxu0 0.0
    %2370 = vmatpush1.xpose.msra.mxu0 0.0
    %2371 = vmatprep.subr.mxu0 0.0
    %2372 = vmatpush1.xpose.msra.mxu0 0.0
    %2373 = vmatprep.subr.mxu0 0.0
    %2374 = vmatpush1.xpose.msra.mxu0 0.0
    %2375 = vmatprep.subr.mxu0 0.0
    %2376 = vmatpush1.xpose.msra.mxu0 0.0
    %2377 = vmatprep.subr.mxu0 0.0
    %2378 = vmatpush1.xpose.msra.mxu0 0.0
    %2379 = vmatprep.subr.mxu0 0.0
    %2380 = vmatpush1.xpose.msra.mxu0 0.0
    %2381 = vmatprep.subr.mxu0 0.0
    %v2382 = vand.u32 %v1646, 4294901760
    %2383 = vmatpush1.xpose.msra.mxu0 %v2382
    %2384 = vmatprep.subr.mxu0 0.0
    %v2385 = vand.u32 %v1643, 4294901760
    %2386 = vmatpush1.xpose.msra.mxu0 %v2385
    %2387 = vmatprep.subr.mxu0 0.0
    %v2388 = vand.u32 %v1640, 4294901760
    %2389 = vmatpush1.xpose.msra.mxu0 %v2388
    %2390 = vmatprep.subr.mxu0 0.0
    %v2391 = vand.u32 %v1637, 4294901760
    %2392 = vmatpush1.xpose.msra.mxu0 %v2391
    %2393 = vmatprep.subr.mxu0 0.0
    %v2394 = vand.u32 %v1634, 4294901760
    %2395 = vmatpush1.xpose.msra.mxu0 %v2394
    %2396 = vmatprep.subr.mxu0 0.0
    %v2397 = vand.u32 %v1631, 4294901760
    %2398 = vmatpush1.xpose.msra.mxu0 %v2397
    %2399 = vmatprep.subr.mxu0 0.0
    %v2400 = vand.u32 %v1628, 4294901760
    %2401 = vmatpush1.xpose.msra.mxu0 %v2400
    %2402 = vmatprep.subr.mxu0 0.0
    %v2403 = vand.u32 %v1625, 4294901760
    %2404 = vmatpush1.xpose.msra.mxu0 %v2403
    %2405 = vmatprep.subr.mxu0 0.0
    %2406 = vmatpush2.xpose.msra.mxu0 0.0
    %2407 = vmatprep.subr.mxu0 0.0
    %2408 = vmatpush2.xpose.msra.mxu0 0.0
    %2409 = vmatprep.subr.mxu0 0.0
    %2410 = vmatpush2.xpose.msra.mxu0 0.0
    %2411 = vmatprep.subr.mxu0 0.0
    %2412 = vmatpush2.xpose.msra.mxu0 0.0
    %2413 = vmatprep.subr.mxu0 0.0
    %2414 = vmatpush2.xpose.msra.mxu0 0.0
    %2415 = vmatprep.subr.mxu0 0.0
    %2416 = vmatpush2.xpose.msra.mxu0 0.0
    %2417 = vmatprep.subr.mxu0 0.0
    %2418 = vmatpush2.xpose.msra.mxu0 0.0
    %2419 = vmatprep.subr.mxu0 0.0
    %2420 = vmatpush2.xpose.msra.mxu0 0.0
    %2421 = vmatprep.subr.mxu0 0.0
    %2422 = vmatpush2.xpose.msra.mxu0 0.0
    %2423 = vmatprep.subr.mxu0 0.0
    %2424 = vmatpush2.xpose.msra.mxu0 0.0
    %2425 = vmatprep.subr.mxu0 0.0
    %2426 = vmatpush2.xpose.msra.mxu0 0.0
    %2427 = vmatprep.subr.mxu0 0.0
    %2428 = vmatpush2.xpose.msra.mxu0 0.0
    %2429 = vmatprep.subr.mxu0 0.0
    %2430 = vmatpush2.xpose.msra.mxu0 0.0
    %2431 = vmatprep.subr.mxu0 0.0
    %2432 = vmatpush2.xpose.msra.mxu0 0.0
    %2433 = vmatprep.subr.mxu0 0.0
    %2434 = vmatpush2.xpose.msra.mxu0 0.0
    %2435 = vmatprep.subr.mxu0 0.0
    %2436 = vmatpush2.xpose.msra.mxu0 0.0
    %2437 = vmatprep.mubr.f32.mxu0 0.0
    %v2438 = vand.u32 %v1601, 4294901760
    %2439 = vmatmul.mubr.f32.gmra.mxu0 %v2438
    %v2440 = vpop.f32.mrf.mxu0
    %v2441 = vadd.f32 %v2320, %v2440
    %v2442 = vpop.f32.mrf.mxu0
    %2443 = vmatprep.mubr.f32.mxu0 0.0
    %v2444 = vand.u32 %v1604, 4294901760
    %2445 = vmatmul.mubr.f32.gmra.mxu0 %v2444
    %v2446 = vpop.f32.mrf.mxu0
    %v2447 = vadd.f32 %v2326, %v2446
    %v2448 = vpop.f32.mrf.mxu0
    %2449 = vmatprep.mubr.f32.mxu0 0.0
    %v2450 = vand.u32 %v1607, 4294901760
    %2451 = vmatmul.mubr.f32.gmra.mxu0 %v2450
    %v2452 = vpop.f32.mrf.mxu0
    %v2453 = vadd.f32 %v2332, %v2452
    %v2454 = vpop.f32.mrf.mxu0
    %2455 = vmatprep.mubr.f32.mxu0 0.0
    %v2456 = vand.u32 %v1610, 4294901760
    %2457 = vmatmul.mubr.f32.gmra.mxu0 %v2456
    %v2458 = vpop.f32.mrf.mxu0
    %v2459 = vadd.f32 %v2338, %v2458
    %v2460 = vpop.f32.mrf.mxu0
    %2461 = vmatprep.mubr.f32.mxu0 0.0
    %v2462 = vand.u32 %v1613, 4294901760
    %2463 = vmatmul.mubr.f32.gmra.mxu0 %v2462
    %v2464 = vpop.f32.mrf.mxu0
    %v2465 = vadd.f32 %v2344, %v2464
    %v2466 = vpop.f32.mrf.mxu0
    %2467 = vmatprep.mubr.f32.mxu0 0.0
    %v2468 = vand.u32 %v1616, 4294901760
    %2469 = vmatmul.mubr.f32.gmra.mxu0 %v2468
    %v2470 = vpop.f32.mrf.mxu0
    %v2471 = vadd.f32 %v2350, %v2470
    %v2472 = vpop.f32.mrf.mxu0
    %2473 = vmatprep.mubr.f32.mxu0 0.0
    %v2474 = vand.u32 %v1619, 4294901760
    %2475 = vmatmul.mubr.f32.gmra.mxu0 %v2474
    %v2476 = vpop.f32.mrf.mxu0
    %v2477 = vadd.f32 %v2356, %v2476
    %v2478 = vpop.f32.mrf.mxu0
    %2479 = vmatprep.mubr.f32.mxu0 0.0
    %v2480 = vand.u32 %v1622, 4294901760
    %2481 = vmatmul.mubr.f32.gmra.mxu0 %v2480
    %v2482 = vpop.f32.mrf.mxu0
    %v2483 = vadd.f32 %v2362, %v2482
    %v2484 = vpop.f32.mrf.mxu0
    %2485 = vdwg.mxu0
    %vm2486 = vcmask 523264
    %v2487 = vsel %vm2486, %v2441, -inf
    %2488 = vmax.xlane.f32.xlu0 %v2487
    %v2489 = vpop.xlane.xlu0 %2488
    %v2490 = vsel %vm2486, %v2447, -inf
    %2491 = vmax.xlane.f32.xlu0 %v2490
    %v2492 = vpop.xlane.xlu0 %2491
    %v2493 = vsel %vm2486, %v2453, -inf
    %2494 = vmax.xlane.f32.xlu0 %v2493
    %v2495 = vpop.xlane.xlu0 %2494
    %v2496 = vsel %vm2486, %v2459, -inf
    %2497 = vmax.xlane.f32.xlu0 %v2496
    %v2498 = vpop.xlane.xlu0 %2497
    %v2499 = vsel %vm2486, %v2465, -inf
    %2500 = vmax.xlane.f32.xlu0 %v2499
    %v2501 = vpop.xlane.xlu0 %2500
    %v2502 = vsel %vm2486, %v2471, -inf
    %2503 = vmax.xlane.f32.xlu0 %v2502
    %v2504 = vpop.xlane.xlu0 %2503
    %v2505 = vsel %vm2486, %v2477, -inf
    %2506 = vmax.xlane.f32.xlu0 %v2505
    %v2507 = vpop.xlane.xlu0 %2506
    %v2508 = vsel %vm2486, %v2483, -inf
    %2509 = vmax.xlane.f32.xlu0 %v2508
    %v2510 = vpop.xlane.xlu0 %2509
    %v2511 = vsub.f32 %v2441, %v2489
    %v2512 = vsub.f32 %v2447, %v2492
    %v2513 = vsub.f32 %v2453, %v2495
    %v2514 = vsub.f32 %v2459, %v2498
    %v2515 = vsub.f32 %v2465, %v2501
    %v2516 = vsub.f32 %v2471, %v2504
    %v2517 = vsub.f32 %v2477, %v2507
    %v2518 = vsub.f32 %v2483, %v2510
    %v2519 = vmul.f32 %v2511, 1.442695
    %v2520 = vpow.pop %v2519
    %v2521 = vmul.f32 %v2512, 1.442695
    %v2522 = vpow.pop %v2521
    %v2523 = vmul.f32 %v2513, 1.442695
    %v2524 = vpow.pop %v2523
    %v2525 = vmul.f32 %v2514, 1.442695
    %v2526 = vpow.pop %v2525
    %v2527 = vmul.f32 %v2515, 1.442695
    %v2528 = vpow.pop %v2527
    %v2529 = vmul.f32 %v2516, 1.442695
    %v2530 = vpow.pop %v2529
    %v2531 = vmul.f32 %v2517, 1.442695
    %v2532 = vpow.pop %v2531
    %v2533 = vmul.f32 %v2518, 1.442695
    %v2534 = vpow.pop %v2533
    %v2535 = vsel %vm2486, %v2520, 0.0
    %2536 = vadd.xlane.f32.xlu0 %v2535
    %v2537 = vpop.xlane.xlu0 %2536
    %v2538 = vsel %vm2486, %v2522, 0.0
    %2539 = vadd.xlane.f32.xlu0 %v2538
    %v2540 = vpop.xlane.xlu0 %2539
    %v2541 = vsel %vm2486, %v2524, 0.0
    %2542 = vadd.xlane.f32.xlu0 %v2541
    %v2543 = vpop.xlane.xlu0 %2542
    %v2544 = vsel %vm2486, %v2526, 0.0
    %2545 = vadd.xlane.f32.xlu0 %v2544
    %v2546 = vpop.xlane.xlu0 %2545
    %v2547 = vsel %vm2486, %v2528, 0.0
    %2548 = vadd.xlane.f32.xlu0 %v2547
    %v2549 = vpop.xlane.xlu0 %2548
    %v2550 = vsel %vm2486, %v2530, 0.0
    %2551 = vadd.xlane.f32.xlu0 %v2550
    %v2552 = vpop.xlane.xlu0 %2551
    %v2553 = vsel %vm2486, %v2532, 0.0
    %2554 = vadd.xlane.f32.xlu0 %v2553
    %v2555 = vpop.xlane.xlu0 %2554
    %v2556 = vsel %vm2486, %v2534, 0.0
    %2557 = vadd.xlane.f32.xlu0 %v2556
    %v2558 = vpop.xlane.xlu0 %2557
    %v2559 = vrcp.pop %v2537
    %v2560 = vmul.f32 %v2520, %v2559
    %v2561 = vrcp.pop %v2540
    %v2562 = vmul.f32 %v2522, %v2561
    %v2563 = vrcp.pop %v2543
    %v2564 = vmul.f32 %v2524, %v2563
    %v2565 = vrcp.pop %v2546
    %v2566 = vmul.f32 %v2526, %v2565
    %v2567 = vrcp.pop %v2549
    %v2568 = vmul.f32 %v2528, %v2567
    %v2569 = vrcp.pop %v2552
    %v2570 = vmul.f32 %v2530, %v2569
    %v2571 = vrcp.pop %v2555
    %v2572 = vmul.f32 %v2532, %v2571
    %v2573 = vrcp.pop %v2558
    %v2574 = vmul.f32 %v2534, %v2573
    %v2576 = vsel %vm2486, %v2560, 0
    %v2579 = vsel %vm2486, %v2562, 0
    %v2582 = vsel %vm2486, %v2564, 0
    %v2585 = vsel %vm2486, %v2566, 0
    %v2588 = vsel %vm2486, %v2568, 0
    %v2591 = vsel %vm2486, %v2570, 0
    %v2594 = vsel %vm2486, %v2572, 0
    %v2597 = vsel %vm2486, %v2574, 0
    %2599 = vmatprep.subr.mxu0 0.0
    %2600 = vmatpush1.msra.mxu0 0.0
    %2601 = vmatprep.subr.mxu0 0.0
    %2602 = vmatpush1.msra.mxu0 0.0
    %2603 = vmatprep.subr.mxu0 0.0
    %2604 = vmatpush1.msra.mxu0 0.0
    %2605 = vmatprep.subr.mxu0 0.0
    %2606 = vmatpush1.msra.mxu0 0.0
    %2607 = vmatprep.subr.mxu0 0.0
    %2608 = vmatpush1.msra.mxu0 0.0
    %2609 = vmatprep.subr.mxu0 0.0
    %2610 = vmatpush1.msra.mxu0 0.0
    %2611 = vmatprep.subr.mxu0 0.0
    %2612 = vmatpush1.msra.mxu0 0.0
    %2613 = vmatprep.subr.mxu0 0.0
    %2614 = vmatpush1.msra.mxu0 0.0
    %2615 = vmatprep.subr.mxu0 0.0
    %v2616 = vand.u32 %v1598, 4294901760
    %2617 = vmatpush1.msra.mxu0 %v2616
    %2618 = vmatprep.subr.mxu0 0.0
    %v2619 = vand.u32 %v1530, 4294901760
    %2620 = vmatpush1.msra.mxu0 %v2619
    %2621 = vmatprep.subr.mxu0 0.0
    %v2622 = vand.u32 %v1597, 4294901760
    %2623 = vmatpush1.msra.mxu0 %v2622
    %2624 = vmatprep.subr.mxu0 0.0
    %v2625 = vand.u32 %v1529, 4294901760
    %2626 = vmatpush1.msra.mxu0 %v2625
    %2627 = vmatprep.subr.mxu0 0.0
    %v2628 = vand.u32 %v1596, 4294901760
    %2629 = vmatpush1.msra.mxu0 %v2628
    %2630 = vmatprep.subr.mxu0 0.0
    %v2631 = vand.u32 %v1528, 4294901760
    %2632 = vmatpush1.msra.mxu0 %v2631
    %2633 = vmatprep.subr.mxu0 0.0
    %v2634 = vand.u32 %v1595, 4294901760
    %2635 = vmatpush1.msra.mxu0 %v2634
    %2636 = vmatprep.subr.mxu0 0.0
    %v2637 = vand.u32 %v1527, 4294901760
    %2638 = vmatpush1.msra.mxu0 %v2637
    %2639 = vmatprep.subr.mxu0 0.0
    %2640 = vmatpush2.msra.mxu0 0.0
    %2641 = vmatprep.subr.mxu0 0.0
    %2642 = vmatpush2.msra.mxu0 0.0
    %2643 = vmatprep.subr.mxu0 0.0
    %2644 = vmatpush2.msra.mxu0 0.0
    %2645 = vmatprep.subr.mxu0 0.0
    %2646 = vmatpush2.msra.mxu0 0.0
    %2647 = vmatprep.subr.mxu0 0.0
    %2648 = vmatpush2.msra.mxu0 0.0
    %2649 = vmatprep.subr.mxu0 0.0
    %2650 = vmatpush2.msra.mxu0 0.0
    %2651 = vmatprep.subr.mxu0 0.0
    %2652 = vmatpush2.msra.mxu0 0.0
    %2653 = vmatprep.subr.mxu0 0.0
    %2654 = vmatpush2.msra.mxu0 0.0
    %2655 = vmatprep.subr.mxu0 0.0
    %2656 = vmatpush2.msra.mxu0 0.0
    %2657 = vmatprep.subr.mxu0 0.0
    %2658 = vmatpush2.msra.mxu0 0.0
    %2659 = vmatprep.subr.mxu0 0.0
    %2660 = vmatpush2.msra.mxu0 0.0
    %2661 = vmatprep.subr.mxu0 0.0
    %2662 = vmatpush2.msra.mxu0 0.0
    %2663 = vmatprep.subr.mxu0 0.0
    %2664 = vmatpush2.msra.mxu0 0.0
    %2665 = vmatprep.subr.mxu0 0.0
    %2666 = vmatpush2.msra.mxu0 0.0
    %2667 = vmatprep.subr.mxu0 0.0
    %2668 = vmatpush2.msra.mxu0 0.0
    %2669 = vmatprep.subr.mxu0 0.0
    %2670 = vmatpush2.msra.mxu0 0.0
    %2671 = vmatprep.mubr.f32.mxu0 0.0
    %v2672 = vand.u32 %v2576, 4294901760
    %v2673 = vsub.f32 %v2576, %v2672
    %v2674 = vand.u32 %v2673, 4294901760
    %v2675 = vsub.f32 %v2673, %v2674
    %v2676 = vand.u32 %v2675, 4294901760
    %2677 = vmatmul.mubr.f32.gmra.mxu0 %v2676
    %v2678 = vpop.f32.mrf.mxu0
    %v2679 = vadd.f32 0.0, %v2678
    %v2680 = vpop.f32.mrf.mxu0
    %2681 = vmatprep.mubr.f32.mxu0 0.0
    %v2682 = vand.u32 %v2579, 4294901760
    %v2683 = vsub.f32 %v2579, %v2682
    %v2684 = vand.u32 %v2683, 4294901760
    %v2685 = vsub.f32 %v2683, %v2684
    %v2686 = vand.u32 %v2685, 4294901760
    %2687 = vmatmul.mubr.f32.gmra.mxu0 %v2686
    %v2688 = vpop.f32.mrf.mxu0
    %v2689 = vadd.f32 0.0, %v2688
    %v2690 = vpop.f32.mrf.mxu0
    %2691 = vmatprep.mubr.f32.mxu0 0.0
    %v2692 = vand.u32 %v2582, 4294901760
    %v2693 = vsub.f32 %v2582, %v2692
    %v2694 = vand.u32 %v2693, 4294901760
    %v2695 = vsub.f32 %v2693, %v2694
    %v2696 = vand.u32 %v2695, 4294901760
    %2697 = vmatmul.mubr.f32.gmra.mxu0 %v2696
    %v2698 = vpop.f32.mrf.mxu0
    %v2699 = vadd.f32 0.0, %v2698
    %v2700 = vpop.f32.mrf.mxu0
    %2701 = vmatprep.mubr.f32.mxu0 0.0
    %v2702 = vand.u32 %v2585, 4294901760
    %v2703 = vsub.f32 %v2585, %v2702
    %v2704 = vand.u32 %v2703, 4294901760
    %v2705 = vsub.f32 %v2703, %v2704
    %v2706 = vand.u32 %v2705, 4294901760
    %2707 = vmatmul.mubr.f32.gmra.mxu0 %v2706
    %v2708 = vpop.f32.mrf.mxu0
    %v2709 = vadd.f32 0.0, %v2708
    %v2710 = vpop.f32.mrf.mxu0
    %2711 = vmatprep.mubr.f32.mxu0 0.0
    %v2712 = vand.u32 %v2588, 4294901760
    %v2713 = vsub.f32 %v2588, %v2712
    %v2714 = vand.u32 %v2713, 4294901760
    %v2715 = vsub.f32 %v2713, %v2714
    %v2716 = vand.u32 %v2715, 4294901760
    %2717 = vmatmul.mubr.f32.gmra.mxu0 %v2716
    %v2718 = vpop.f32.mrf.mxu0
    %v2719 = vadd.f32 0.0, %v2718
    %v2720 = vpop.f32.mrf.mxu0
    %2721 = vmatprep.mubr.f32.mxu0 0.0
    %v2722 = vand.u32 %v2591, 4294901760
    %v2723 = vsub.f32 %v2591, %v2722
    %v2724 = vand.u32 %v2723, 4294901760
    %v2725 = vsub.f32 %v2723, %v2724
    %v2726 = vand.u32 %v2725, 4294901760
    %2727 = vmatmul.mubr.f32.gmra.mxu0 %v2726
    %v2728 = vpop.f32.mrf.mxu0
    %v2729 = vadd.f32 0.0, %v2728
    %v2730 = vpop.f32.mrf.mxu0
    %2731 = vmatprep.mubr.f32.mxu0 0.0
    %v2732 = vand.u32 %v2594, 4294901760
    %v2733 = vsub.f32 %v2594, %v2732
    %v2734 = vand.u32 %v2733, 4294901760
    %v2735 = vsub.f32 %v2733, %v2734
    %v2736 = vand.u32 %v2735, 4294901760
    %2737 = vmatmul.mubr.f32.gmra.mxu0 %v2736
    %v2738 = vpop.f32.mrf.mxu0
    %v2739 = vadd.f32 0.0, %v2738
    %v2740 = vpop.f32.mrf.mxu0
    %2741 = vmatprep.mubr.f32.mxu0 0.0
    %v2742 = vand.u32 %v2597, 4294901760
    %v2743 = vsub.f32 %v2597, %v2742
    %v2744 = vand.u32 %v2743, 4294901760
    %v2745 = vsub.f32 %v2743, %v2744
    %v2746 = vand.u32 %v2745, 4294901760
    %2747 = vmatmul.mubr.f32.gmra.mxu0 %v2746
    %v2748 = vpop.f32.mrf.mxu0
    %v2749 = vadd.f32 0.0, %v2748
    %v2750 = vpop.f32.mrf.mxu0
    %2751 = vdwg.mxu0
    %2752 = vmatprep.subr.mxu0 0.0
    %2753 = vmatpush1.msra.mxu0 0.0
    %2754 = vmatprep.subr.mxu0 0.0
    %2755 = vmatpush1.msra.mxu0 0.0
    %2756 = vmatprep.subr.mxu0 0.0
    %2757 = vmatpush1.msra.mxu0 0.0
    %2758 = vmatprep.subr.mxu0 0.0
    %2759 = vmatpush1.msra.mxu0 0.0
    %2760 = vmatprep.subr.mxu0 0.0
    %2761 = vmatpush1.msra.mxu0 0.0
    %2762 = vmatprep.subr.mxu0 0.0
    %2763 = vmatpush1.msra.mxu0 0.0
    %2764 = vmatprep.subr.mxu0 0.0
    %2765 = vmatpush1.msra.mxu0 0.0
    %2766 = vmatprep.subr.mxu0 0.0
    %2767 = vmatpush1.msra.mxu0 0.0
    %2768 = vmatprep.subr.mxu0 0.0
    %v2769 = vand.u32 %v1598, 4294901760
    %v2770 = vsub.f32 %v1598, %v2769
    %v2771 = vand.u32 %v2770, 4294901760
    %v2772 = vsub.f32 %v2770, %v2771
    %v2773 = vand.u32 %v2772, 4294901760
    %2774 = vmatpush1.msra.mxu0 %v2773
    %2775 = vmatprep.subr.mxu0 0.0
    %v2776 = vand.u32 %v1530, 4294901760
    %v2777 = vsub.f32 %v1530, %v2776
    %v2778 = vand.u32 %v2777, 4294901760
    %v2779 = vsub.f32 %v2777, %v2778
    %v2780 = vand.u32 %v2779, 4294901760
    %2781 = vmatpush1.msra.mxu0 %v2780
    %2782 = vmatprep.subr.mxu0 0.0
    %v2783 = vand.u32 %v1597, 4294901760
    %v2784 = vsub.f32 %v1597, %v2783
    %v2785 = vand.u32 %v2784, 4294901760
    %v2786 = vsub.f32 %v2784, %v2785
    %v2787 = vand.u32 %v2786, 4294901760
    %2788 = vmatpush1.msra.mxu0 %v2787
    %2789 = vmatprep.subr.mxu0 0.0
    %v2790 = vand.u32 %v1529, 4294901760
    %v2791 = vsub.f32 %v1529, %v2790
    %v2792 = vand.u32 %v2791, 4294901760
    %v2793 = vsub.f32 %v2791, %v2792
    %v2794 = vand.u32 %v2793, 4294901760
    %2795 = vmatpush1.msra.mxu0 %v2794
    %2796 = vmatprep.subr.mxu0 0.0
    %v2797 = vand.u32 %v1596, 4294901760
    %v2798 = vsub.f32 %v1596, %v2797
    %v2799 = vand.u32 %v2798, 4294901760
    %v2800 = vsub.f32 %v2798, %v2799
    %v2801 = vand.u32 %v2800, 4294901760
    %2802 = vmatpush1.msra.mxu0 %v2801
    %2803 = vmatprep.subr.mxu0 0.0
    %v2804 = vand.u32 %v1528, 4294901760
    %v2805 = vsub.f32 %v1528, %v2804
    %v2806 = vand.u32 %v2805, 4294901760
    %v2807 = vsub.f32 %v2805, %v2806
    %v2808 = vand.u32 %v2807, 4294901760
    %2809 = vmatpush1.msra.mxu0 %v2808
    %2810 = vmatprep.subr.mxu0 0.0
    %v2811 = vand.u32 %v1595, 4294901760
    %v2812 = vsub.f32 %v1595, %v2811
    %v2813 = vand.u32 %v2812, 4294901760
    %v2814 = vsub.f32 %v2812, %v2813
    %v2815 = vand.u32 %v2814, 4294901760
    %2816 = vmatpush1.msra.mxu0 %v2815
    %2817 = vmatprep.subr.mxu0 0.0
    %v2818 = vand.u32 %v1527, 4294901760
    %v2819 = vsub.f32 %v1527, %v2818
    %v2820 = vand.u32 %v2819, 4294901760
    %v2821 = vsub.f32 %v2819, %v2820
    %v2822 = vand.u32 %v2821, 4294901760
    %2823 = vmatpush1.msra.mxu0 %v2822
    %2824 = vmatprep.subr.mxu0 0.0
    %2825 = vmatpush2.msra.mxu0 0.0
    %2826 = vmatprep.subr.mxu0 0.0
    %2827 = vmatpush2.msra.mxu0 0.0
    %2828 = vmatprep.subr.mxu0 0.0
    %2829 = vmatpush2.msra.mxu0 0.0
    %2830 = vmatprep.subr.mxu0 0.0
    %2831 = vmatpush2.msra.mxu0 0.0
    %2832 = vmatprep.subr.mxu0 0.0
    %2833 = vmatpush2.msra.mxu0 0.0
    %2834 = vmatprep.subr.mxu0 0.0
    %2835 = vmatpush2.msra.mxu0 0.0
    %2836 = vmatprep.subr.mxu0 0.0
    %2837 = vmatpush2.msra.mxu0 0.0
    %2838 = vmatprep.subr.mxu0 0.0
    %2839 = vmatpush2.msra.mxu0 0.0
    %2840 = vmatprep.subr.mxu0 0.0
    %2841 = vmatpush2.msra.mxu0 0.0
    %2842 = vmatprep.subr.mxu0 0.0
    %2843 = vmatpush2.msra.mxu0 0.0
    %2844 = vmatprep.subr.mxu0 0.0
    %2845 = vmatpush2.msra.mxu0 0.0
    %2846 = vmatprep.subr.mxu0 0.0
    %2847 = vmatpush2.msra.mxu0 0.0
    %2848 = vmatprep.subr.mxu0 0.0
    %2849 = vmatpush2.msra.mxu0 0.0
    %2850 = vmatprep.subr.mxu0 0.0
    %2851 = vmatpush2.msra.mxu0 0.0
    %2852 = vmatprep.subr.mxu0 0.0
    %2853 = vmatpush2.msra.mxu0 0.0
    %2854 = vmatprep.subr.mxu0 0.0
    %2855 = vmatpush2.msra.mxu0 0.0
    %2856 = vmatprep.mubr.f32.mxu0 0.0
    %v2857 = vand.u32 %v2576, 4294901760
    %2858 = vmatmul.mubr.f32.gmra.mxu0 %v2857
    %v2859 = vpop.f32.mrf.mxu0
    %v2860 = vadd.f32 %v2679, %v2859
    %v2861 = vpop.f32.mrf.mxu0
    %2862 = vmatprep.mubr.f32.mxu0 0.0
    %v2863 = vand.u32 %v2579, 4294901760
    %2864 = vmatmul.mubr.f32.gmra.mxu0 %v2863
    %v2865 = vpop.f32.mrf.mxu0
    %v2866 = vadd.f32 %v2689, %v2865
    %v2867 = vpop.f32.mrf.mxu0
    %2868 = vmatprep.mubr.f32.mxu0 0.0
    %v2869 = vand.u32 %v2582, 4294901760
    %2870 = vmatmul.mubr.f32.gmra.mxu0 %v2869
    %v2871 = vpop.f32.mrf.mxu0
    %v2872 = vadd.f32 %v2699, %v2871
    %v2873 = vpop.f32.mrf.mxu0
    %2874 = vmatprep.mubr.f32.mxu0 0.0
    %v2875 = vand.u32 %v2585, 4294901760
    %2876 = vmatmul.mubr.f32.gmra.mxu0 %v2875
    %v2877 = vpop.f32.mrf.mxu0
    %v2878 = vadd.f32 %v2709, %v2877
    %v2879 = vpop.f32.mrf.mxu0
    %2880 = vmatprep.mubr.f32.mxu0 0.0
    %v2881 = vand.u32 %v2588, 4294901760
    %2882 = vmatmul.mubr.f32.gmra.mxu0 %v2881
    %v2883 = vpop.f32.mrf.mxu0
    %v2884 = vadd.f32 %v2719, %v2883
    %v2885 = vpop.f32.mrf.mxu0
    %2886 = vmatprep.mubr.f32.mxu0 0.0
    %v2887 = vand.u32 %v2591, 4294901760
    %2888 = vmatmul.mubr.f32.gmra.mxu0 %v2887
    %v2889 = vpop.f32.mrf.mxu0
    %v2890 = vadd.f32 %v2729, %v2889
    %v2891 = vpop.f32.mrf.mxu0
    %2892 = vmatprep.mubr.f32.mxu0 0.0
    %v2893 = vand.u32 %v2594, 4294901760
    %2894 = vmatmul.mubr.f32.gmra.mxu0 %v2893
    %v2895 = vpop.f32.mrf.mxu0
    %v2896 = vadd.f32 %v2739, %v2895
    %v2897 = vpop.f32.mrf.mxu0
    %2898 = vmatprep.mubr.f32.mxu0 0.0
    %v2899 = vand.u32 %v2597, 4294901760
    %2900 = vmatmul.mubr.f32.gmra.mxu0 %v2899
    %v2901 = vpop.f32.mrf.mxu0
    %v2902 = vadd.f32 %v2749, %v2901
    %v2903 = vpop.f32.mrf.mxu0
    %2904 = vdwg.mxu0
    %2905 = vmatprep.subr.mxu0 0.0
    %2906 = vmatpush1.msra.mxu0 0.0
    %2907 = vmatprep.subr.mxu0 0.0
    %2908 = vmatpush1.msra.mxu0 0.0
    %2909 = vmatprep.subr.mxu0 0.0
    %2910 = vmatpush1.msra.mxu0 0.0
    %2911 = vmatprep.subr.mxu0 0.0
    %2912 = vmatpush1.msra.mxu0 0.0
    %2913 = vmatprep.subr.mxu0 0.0
    %2914 = vmatpush1.msra.mxu0 0.0
    %2915 = vmatprep.subr.mxu0 0.0
    %2916 = vmatpush1.msra.mxu0 0.0
    %2917 = vmatprep.subr.mxu0 0.0
    %2918 = vmatpush1.msra.mxu0 0.0
    %2919 = vmatprep.subr.mxu0 0.0
    %2920 = vmatpush1.msra.mxu0 0.0
    %2921 = vmatprep.subr.mxu0 0.0
    %v2922 = vand.u32 %v1598, 4294901760
    %v2923 = vsub.f32 %v1598, %v2922
    %2924 = vmatpush1.msra.mxu0 %v2923
    %2925 = vmatprep.subr.mxu0 0.0
    %v2926 = vand.u32 %v1530, 4294901760
    %v2927 = vsub.f32 %v1530, %v2926
    %2928 = vmatpush1.msra.mxu0 %v2927
    %2929 = vmatprep.subr.mxu0 0.0
    %v2930 = vand.u32 %v1597, 4294901760
    %v2931 = vsub.f32 %v1597, %v2930
    %2932 = vmatpush1.msra.mxu0 %v2931
    %2933 = vmatprep.subr.mxu0 0.0
    %v2934 = vand.u32 %v1529, 4294901760
    %v2935 = vsub.f32 %v1529, %v2934
    %2936 = vmatpush1.msra.mxu0 %v2935
    %2937 = vmatprep.subr.mxu0 0.0
    %v2938 = vand.u32 %v1596, 4294901760
    %v2939 = vsub.f32 %v1596, %v2938
    %2940 = vmatpush1.msra.mxu0 %v2939
    %2941 = vmatprep.subr.mxu0 0.0
    %v2942 = vand.u32 %v1528, 4294901760
    %v2943 = vsub.f32 %v1528, %v2942
    %2944 = vmatpush1.msra.mxu0 %v2943
    %2945 = vmatprep.subr.mxu0 0.0
    %v2946 = vand.u32 %v1595, 4294901760
    %v2947 = vsub.f32 %v1595, %v2946
    %2948 = vmatpush1.msra.mxu0 %v2947
    %2949 = vmatprep.subr.mxu0 0.0
    %v2950 = vand.u32 %v1527, 4294901760
    %v2951 = vsub.f32 %v1527, %v2950
    %2952 = vmatpush1.msra.mxu0 %v2951
    %2953 = vmatprep.subr.mxu0 0.0
    %2954 = vmatpush2.msra.mxu0 0.0
    %2955 = vmatprep.subr.mxu0 0.0
    %2956 = vmatpush2.msra.mxu0 0.0
    %2957 = vmatprep.subr.mxu0 0.0
    %2958 = vmatpush2.msra.mxu0 0.0
    %2959 = vmatprep.subr.mxu0 0.0
    %2960 = vmatpush2.msra.mxu0 0.0
    %2961 = vmatprep.subr.mxu0 0.0
    %2962 = vmatpush2.msra.mxu0 0.0
    %2963 = vmatprep.subr.mxu0 0.0
    %2964 = vmatpush2.msra.mxu0 0.0
    %2965 = vmatprep.subr.mxu0 0.0
    %2966 = vmatpush2.msra.mxu0 0.0
    %2967 = vmatprep.subr.mxu0 0.0
    %2968 = vmatpush2.msra.mxu0 0.0
    %2969 = vmatprep.subr.mxu0 0.0
    %2970 = vmatpush2.msra.mxu0 0.0
    %2971 = vmatprep.subr.mxu0 0.0
    %2972 = vmatpush2.msra.mxu0 0.0
    %2973 = vmatprep.subr.mxu0 0.0
    %2974 = vmatpush2.msra.mxu0 0.0
    %2975 = vmatprep.subr.mxu0 0.0
    %2976 = vmatpush2.msra.mxu0 0.0
    %2977 = vmatprep.subr.mxu0 0.0
    %2978 = vmatpush2.msra.mxu0 0.0
    %2979 = vmatprep.subr.mxu0 0.0
    %2980 = vmatpush2.msra.mxu0 0.0
    %2981 = vmatprep.subr.mxu0 0.0
    %2982 = vmatpush2.msra.mxu0 0.0
    %2983 = vmatprep.subr.mxu0 0.0
    %2984 = vmatpush2.msra.mxu0 0.0
    %2985 = vmatprep.mubr.f32.mxu0 0.0
    %v2986 = vand.u32 %v2576, 4294901760
    %v2987 = vsub.f32 %v2576, %v2986
    %2988 = vmatmul.mubr.f32.gmra.mxu0 %v2987
    %v2989 = vpop.f32.mrf.mxu0
    %v2990 = vadd.f32 %v2860, %v2989
    %v2991 = vpop.f32.mrf.mxu0
    %2992 = vmatprep.mubr.f32.mxu0 0.0
    %v2993 = vand.u32 %v2579, 4294901760
    %v2994 = vsub.f32 %v2579, %v2993
    %2995 = vmatmul.mubr.f32.gmra.mxu0 %v2994
    %v2996 = vpop.f32.mrf.mxu0
    %v2997 = vadd.f32 %v2866, %v2996
    %v2998 = vpop.f32.mrf.mxu0
    %2999 = vmatprep.mubr.f32.mxu0 0.0
    %v3000 = vand.u32 %v2582, 4294901760
    %v3001 = vsub.f32 %v2582, %v3000
    %3002 = vmatmul.mubr.f32.gmra.mxu0 %v3001
    %v3003 = vpop.f32.mrf.mxu0
    %v3004 = vadd.f32 %v2872, %v3003
    %v3005 = vpop.f32.mrf.mxu0
    %3006 = vmatprep.mubr.f32.mxu0 0.0
    %v3007 = vand.u32 %v2585, 4294901760
    %v3008 = vsub.f32 %v2585, %v3007
    %3009 = vmatmul.mubr.f32.gmra.mxu0 %v3008
    %v3010 = vpop.f32.mrf.mxu0
    %v3011 = vadd.f32 %v2878, %v3010
    %v3012 = vpop.f32.mrf.mxu0
    %3013 = vmatprep.mubr.f32.mxu0 0.0
    %v3014 = vand.u32 %v2588, 4294901760
    %v3015 = vsub.f32 %v2588, %v3014
    %3016 = vmatmul.mubr.f32.gmra.mxu0 %v3015
    %v3017 = vpop.f32.mrf.mxu0
    %v3018 = vadd.f32 %v2884, %v3017
    %v3019 = vpop.f32.mrf.mxu0
    %3020 = vmatprep.mubr.f32.mxu0 0.0
    %v3021 = vand.u32 %v2591, 4294901760
    %v3022 = vsub.f32 %v2591, %v3021
    %3023 = vmatmul.mubr.f32.gmra.mxu0 %v3022
    %v3024 = vpop.f32.mrf.mxu0
    %v3025 = vadd.f32 %v2890, %v3024
    %v3026 = vpop.f32.mrf.mxu0
    %3027 = vmatprep.mubr.f32.mxu0 0.0
    %v3028 = vand.u32 %v2594, 4294901760
    %v3029 = vsub.f32 %v2594, %v3028
    %3030 = vmatmul.mubr.f32.gmra.mxu0 %v3029
    %v3031 = vpop.f32.mrf.mxu0
    %v3032 = vadd.f32 %v2896, %v3031
    %v3033 = vpop.f32.mrf.mxu0
    %3034 = vmatprep.mubr.f32.mxu0 0.0
    %v3035 = vand.u32 %v2597, 4294901760
    %v3036 = vsub.f32 %v2597, %v3035
    %3037 = vmatmul.mubr.f32.gmra.mxu0 %v3036
    %v3038 = vpop.f32.mrf.mxu0
    %v3039 = vadd.f32 %v2902, %v3038
    %v3040 = vpop.f32.mrf.mxu0
    %3041 = vdwg.mxu0
    %3042 = vmatprep.subr.mxu0 0.0
    %3043 = vmatpush1.msra.mxu0 0.0
    %3044 = vmatprep.subr.mxu0 0.0
    %3045 = vmatpush1.msra.mxu0 0.0
    %3046 = vmatprep.subr.mxu0 0.0
    %3047 = vmatpush1.msra.mxu0 0.0
    %3048 = vmatprep.subr.mxu0 0.0
    %3049 = vmatpush1.msra.mxu0 0.0
    %3050 = vmatprep.subr.mxu0 0.0
    %3051 = vmatpush1.msra.mxu0 0.0
    %3052 = vmatprep.subr.mxu0 0.0
    %3053 = vmatpush1.msra.mxu0 0.0
    %3054 = vmatprep.subr.mxu0 0.0
    %3055 = vmatpush1.msra.mxu0 0.0
    %3056 = vmatprep.subr.mxu0 0.0
    %3057 = vmatpush1.msra.mxu0 0.0
    %3058 = vmatprep.subr.mxu0 0.0
    %v3059 = vand.u32 %v1598, 4294901760
    %3060 = vmatpush1.msra.mxu0 %v3059
    %3061 = vmatprep.subr.mxu0 0.0
    %v3062 = vand.u32 %v1530, 4294901760
    %3063 = vmatpush1.msra.mxu0 %v3062
    %3064 = vmatprep.subr.mxu0 0.0
    %v3065 = vand.u32 %v1597, 4294901760
    %3066 = vmatpush1.msra.mxu0 %v3065
    %3067 = vmatprep.subr.mxu0 0.0
    %v3068 = vand.u32 %v1529, 4294901760
    %3069 = vmatpush1.msra.mxu0 %v3068
    %3070 = vmatprep.subr.mxu0 0.0
    %v3071 = vand.u32 %v1596, 4294901760
    %3072 = vmatpush1.msra.mxu0 %v3071
    %3073 = vmatprep.subr.mxu0 0.0
    %v3074 = vand.u32 %v1528, 4294901760
    %3075 = vmatpush1.msra.mxu0 %v3074
    %3076 = vmatprep.subr.mxu0 0.0
    %v3077 = vand.u32 %v1595, 4294901760
    %3078 = vmatpush1.msra.mxu0 %v3077
    %3079 = vmatprep.subr.mxu0 0.0
    %v3080 = vand.u32 %v1527, 4294901760
    %3081 = vmatpush1.msra.mxu0 %v3080
    %3082 = vmatprep.subr.mxu0 0.0
    %3083 = vmatpush2.msra.mxu0 0.0
    %3084 = vmatprep.subr.mxu0 0.0
    %3085 = vmatpush2.msra.mxu0 0.0
    %3086 = vmatprep.subr.mxu0 0.0
    %3087 = vmatpush2.msra.mxu0 0.0
    %3088 = vmatprep.subr.mxu0 0.0
    %3089 = vmatpush2.msra.mxu0 0.0
    %3090 = vmatprep.subr.mxu0 0.0
    %3091 = vmatpush2.msra.mxu0 0.0
    %3092 = vmatprep.subr.mxu0 0.0
    %3093 = vmatpush2.msra.mxu0 0.0
    %3094 = vmatprep.subr.mxu0 0.0
    %3095 = vmatpush2.msra.mxu0 0.0
    %3096 = vmatprep.subr.mxu0 0.0
    %3097 = vmatpush2.msra.mxu0 0.0
    %3098 = vmatprep.subr.mxu0 0.0
    %3099 = vmatpush2.msra.mxu0 0.0
    %3100 = vmatprep.subr.mxu0 0.0
    %3101 = vmatpush2.msra.mxu0 0.0
    %3102 = vmatprep.subr.mxu0 0.0
    %3103 = vmatpush2.msra.mxu0 0.0
    %3104 = vmatprep.subr.mxu0 0.0
    %3105 = vmatpush2.msra.mxu0 0.0
    %3106 = vmatprep.subr.mxu0 0.0
    %3107 = vmatpush2.msra.mxu0 0.0
    %3108 = vmatprep.subr.mxu0 0.0
    %3109 = vmatpush2.msra.mxu0 0.0
    %3110 = vmatprep.subr.mxu0 0.0
    %3111 = vmatpush2.msra.mxu0 0.0
    %3112 = vmatprep.subr.mxu0 0.0
    %3113 = vmatpush2.msra.mxu0 0.0
    %3114 = vmatprep.mubr.f32.mxu0 0.0
    %v3115 = vand.u32 %v2576, 4294901760
    %v3116 = vsub.f32 %v2576, %v3115
    %v3117 = vand.u32 %v3116, 4294901760
    %3118 = vmatmul.mubr.f32.gmra.mxu0 %v3117
    %v3119 = vpop.f32.mrf.mxu0
    %v3120 = vadd.f32 %v2990, %v3119
    %v3121 = vpop.f32.mrf.mxu0
    %3122 = vmatprep.mubr.f32.mxu0 0.0
    %v3123 = vand.u32 %v2579, 4294901760
    %v3124 = vsub.f32 %v2579, %v3123
    %v3125 = vand.u32 %v3124, 4294901760
    %3126 = vmatmul.mubr.f32.gmra.mxu0 %v3125
    %v3127 = vpop.f32.mrf.mxu0
    %v3128 = vadd.f32 %v2997, %v3127
    %v3129 = vpop.f32.mrf.mxu0
    %3130 = vmatprep.mubr.f32.mxu0 0.0
    %v3131 = vand.u32 %v2582, 4294901760
    %v3132 = vsub.f32 %v2582, %v3131
    %v3133 = vand.u32 %v3132, 4294901760
    %3134 = vmatmul.mubr.f32.gmra.mxu0 %v3133
    %v3135 = vpop.f32.mrf.mxu0
    %v3136 = vadd.f32 %v3004, %v3135
    %v3137 = vpop.f32.mrf.mxu0
    %3138 = vmatprep.mubr.f32.mxu0 0.0
    %v3139 = vand.u32 %v2585, 4294901760
    %v3140 = vsub.f32 %v2585, %v3139
    %v3141 = vand.u32 %v3140, 4294901760
    %3142 = vmatmul.mubr.f32.gmra.mxu0 %v3141
    %v3143 = vpop.f32.mrf.mxu0
    %v3144 = vadd.f32 %v3011, %v3143
    %v3145 = vpop.f32.mrf.mxu0
    %3146 = vmatprep.mubr.f32.mxu0 0.0
    %v3147 = vand.u32 %v2588, 4294901760
    %v3148 = vsub.f32 %v2588, %v3147
    %v3149 = vand.u32 %v3148, 4294901760
    %3150 = vmatmul.mubr.f32.gmra.mxu0 %v3149
    %v3151 = vpop.f32.mrf.mxu0
    %v3152 = vadd.f32 %v3018, %v3151
    %v3153 = vpop.f32.mrf.mxu0
    %3154 = vmatprep.mubr.f32.mxu0 0.0
    %v3155 = vand.u32 %v2591, 4294901760
    %v3156 = vsub.f32 %v2591, %v3155
    %v3157 = vand.u32 %v3156, 4294901760
    %3158 = vmatmul.mubr.f32.gmra.mxu0 %v3157
    %v3159 = vpop.f32.mrf.mxu0
    %v3160 = vadd.f32 %v3025, %v3159
    %v3161 = vpop.f32.mrf.mxu0
    %3162 = vmatprep.mubr.f32.mxu0 0.0
    %v3163 = vand.u32 %v2594, 4294901760
    %v3164 = vsub.f32 %v2594, %v3163
    %v3165 = vand.u32 %v3164, 4294901760
    %3166 = vmatmul.mubr.f32.gmra.mxu0 %v3165
    %v3167 = vpop.f32.mrf.mxu0
    %v3168 = vadd.f32 %v3032, %v3167
    %v3169 = vpop.f32.mrf.mxu0
    %3170 = vmatprep.mubr.f32.mxu0 0.0
    %v3171 = vand.u32 %v2597, 4294901760
    %v3172 = vsub.f32 %v2597, %v3171
    %v3173 = vand.u32 %v3172, 4294901760
    %3174 = vmatmul.mubr.f32.gmra.mxu0 %v3173
    %v3175 = vpop.f32.mrf.mxu0
    %v3176 = vadd.f32 %v3039, %v3175
    %v3177 = vpop.f32.mrf.mxu0
    %3178 = vdwg.mxu0
    %3179 = vmatprep.subr.mxu0 0.0
    %3180 = vmatpush1.msra.mxu0 0.0
    %3181 = vmatprep.subr.mxu0 0.0
    %3182 = vmatpush1.msra.mxu0 0.0
    %3183 = vmatprep.subr.mxu0 0.0
    %3184 = vmatpush1.msra.mxu0 0.0
    %3185 = vmatprep.subr.mxu0 0.0
    %3186 = vmatpush1.msra.mxu0 0.0
    %3187 = vmatprep.subr.mxu0 0.0
    %3188 = vmatpush1.msra.mxu0 0.0
    %3189 = vmatprep.subr.mxu0 0.0
    %3190 = vmatpush1.msra.mxu0 0.0
    %3191 = vmatprep.subr.mxu0 0.0
    %3192 = vmatpush1.msra.mxu0 0.0
    %3193 = vmatprep.subr.mxu0 0.0
    %3194 = vmatpush1.msra.mxu0 0.0
    %3195 = vmatprep.subr.mxu0 0.0
    %v3196 = vand.u32 %v1598, 4294901760
    %v3197 = vsub.f32 %v1598, %v3196
    %v3198 = vand.u32 %v3197, 4294901760
    %3199 = vmatpush1.msra.mxu0 %v3198
    %3200 = vmatprep.subr.mxu0 0.0
    %v3201 = vand.u32 %v1530, 4294901760
    %v3202 = vsub.f32 %v1530, %v3201
    %v3203 = vand.u32 %v3202, 4294901760
    %3204 = vmatpush1.msra.mxu0 %v3203
    %3205 = vmatprep.subr.mxu0 0.0
    %v3206 = vand.u32 %v1597, 4294901760
    %v3207 = vsub.f32 %v1597, %v3206
    %v3208 = vand.u32 %v3207, 4294901760
    %3209 = vmatpush1.msra.mxu0 %v3208
    %3210 = vmatprep.subr.mxu0 0.0
    %v3211 = vand.u32 %v1529, 4294901760
    %v3212 = vsub.f32 %v1529, %v3211
    %v3213 = vand.u32 %v3212, 4294901760
    %3214 = vmatpush1.msra.mxu0 %v3213
    %3215 = vmatprep.subr.mxu0 0.0
    %v3216 = vand.u32 %v1596, 4294901760
    %v3217 = vsub.f32 %v1596, %v3216
    %v3218 = vand.u32 %v3217, 4294901760
    %3219 = vmatpush1.msra.mxu0 %v3218
    %3220 = vmatprep.subr.mxu0 0.0
    %v3221 = vand.u32 %v1528, 4294901760
    %v3222 = vsub.f32 %v1528, %v3221
    %v3223 = vand.u32 %v3222, 4294901760
    %3224 = vmatpush1.msra.mxu0 %v3223
    %3225 = vmatprep.subr.mxu0 0.0
    %v3226 = vand.u32 %v1595, 4294901760
    %v3227 = vsub.f32 %v1595, %v3226
    %v3228 = vand.u32 %v3227, 4294901760
    %3229 = vmatpush1.msra.mxu0 %v3228
    %3230 = vmatprep.subr.mxu0 0.0
    %v3231 = vand.u32 %v1527, 4294901760
    %v3232 = vsub.f32 %v1527, %v3231
    %v3233 = vand.u32 %v3232, 4294901760
    %3234 = vmatpush1.msra.mxu0 %v3233
    %3235 = vmatprep.subr.mxu0 0.0
    %3236 = vmatpush2.msra.mxu0 0.0
    %3237 = vmatprep.subr.mxu0 0.0
    %3238 = vmatpush2.msra.mxu0 0.0
    %3239 = vmatprep.subr.mxu0 0.0
    %3240 = vmatpush2.msra.mxu0 0.0
    %3241 = vmatprep.subr.mxu0 0.0
    %3242 = vmatpush2.msra.mxu0 0.0
    %3243 = vmatprep.subr.mxu0 0.0
    %3244 = vmatpush2.msra.mxu0 0.0
    %3245 = vmatprep.subr.mxu0 0.0
    %3246 = vmatpush2.msra.mxu0 0.0
    %3247 = vmatprep.subr.mxu0 0.0
    %3248 = vmatpush2.msra.mxu0 0.0
    %3249 = vmatprep.subr.mxu0 0.0
    %3250 = vmatpush2.msra.mxu0 0.0
    %3251 = vmatprep.subr.mxu0 0.0
    %3252 = vmatpush2.msra.mxu0 0.0
    %3253 = vmatprep.subr.mxu0 0.0
    %3254 = vmatpush2.msra.mxu0 0.0
    %3255 = vmatprep.subr.mxu0 0.0
    %3256 = vmatpush2.msra.mxu0 0.0
    %3257 = vmatprep.subr.mxu0 0.0
    %3258 = vmatpush2.msra.mxu0 0.0
    %3259 = vmatprep.subr.mxu0 0.0
    %3260 = vmatpush2.msra.mxu0 0.0
    %3261 = vmatprep.subr.mxu0 0.0
    %3262 = vmatpush2.msra.mxu0 0.0
    %3263 = vmatprep.subr.mxu0 0.0
    %3264 = vmatpush2.msra.mxu0 0.0
    %3265 = vmatprep.subr.mxu0 0.0
    %3266 = vmatpush2.msra.mxu0 0.0
    %3267 = vmatprep.mubr.f32.mxu0 0.0
    %v3268 = vand.u32 %v2576, 4294901760
    %3269 = vmatmul.mubr.f32.gmra.mxu0 %v3268
    %v3270 = vpop.f32.mrf.mxu0
    %v3271 = vadd.f32 %v3120, %v3270
    %v3272 = vpop.f32.mrf.mxu0
    %3273 = vmatprep.mubr.f32.mxu0 0.0
    %v3274 = vand.u32 %v2579, 4294901760
    %3275 = vmatmul.mubr.f32.gmra.mxu0 %v3274
    %v3276 = vpop.f32.mrf.mxu0
    %v3277 = vadd.f32 %v3128, %v3276
    %v3278 = vpop.f32.mrf.mxu0
    %3279 = vmatprep.mubr.f32.mxu0 0.0
    %v3280 = vand.u32 %v2582, 4294901760
    %3281 = vmatmul.mubr.f32.gmra.mxu0 %v3280
    %v3282 = vpop.f32.mrf.mxu0
    %v3283 = vadd.f32 %v3136, %v3282
    %v3284 = vpop.f32.mrf.mxu0
    %3285 = vmatprep.mubr.f32.mxu0 0.0
    %v3286 = vand.u32 %v2585, 4294901760
    %3287 = vmatmul.mubr.f32.gmra.mxu0 %v3286
    %v3288 = vpop.f32.mrf.mxu0
    %v3289 = vadd.f32 %v3144, %v3288
    %v3290 = vpop.f32.mrf.mxu0
    %3291 = vmatprep.mubr.f32.mxu0 0.0
    %v3292 = vand.u32 %v2588, 4294901760
    %3293 = vmatmul.mubr.f32.gmra.mxu0 %v3292
    %v3294 = vpop.f32.mrf.mxu0
    %v3295 = vadd.f32 %v3152, %v3294
    %v3296 = vpop.f32.mrf.mxu0
    %3297 = vmatprep.mubr.f32.mxu0 0.0
    %v3298 = vand.u32 %v2591, 4294901760
    %3299 = vmatmul.mubr.f32.gmra.mxu0 %v3298
    %v3300 = vpop.f32.mrf.mxu0
    %v3301 = vadd.f32 %v3160, %v3300
    %v3302 = vpop.f32.mrf.mxu0
    %3303 = vmatprep.mubr.f32.mxu0 0.0
    %v3304 = vand.u32 %v2594, 4294901760
    %3305 = vmatmul.mubr.f32.gmra.mxu0 %v3304
    %v3306 = vpop.f32.mrf.mxu0
    %v3307 = vadd.f32 %v3168, %v3306
    %v3308 = vpop.f32.mrf.mxu0
    %3309 = vmatprep.mubr.f32.mxu0 0.0
    %v3310 = vand.u32 %v2597, 4294901760
    %3311 = vmatmul.mubr.f32.gmra.mxu0 %v3310
    %v3312 = vpop.f32.mrf.mxu0
    %v3313 = vadd.f32 %v3176, %v3312
    %v3314 = vpop.f32.mrf.mxu0
    %3315 = vdwg.mxu0
    %3316 = vmatprep.subr.mxu0 0.0
    %3317 = vmatpush1.msra.mxu0 0.0
    %3318 = vmatprep.subr.mxu0 0.0
    %3319 = vmatpush1.msra.mxu0 0.0
    %3320 = vmatprep.subr.mxu0 0.0
    %3321 = vmatpush1.msra.mxu0 0.0
    %3322 = vmatprep.subr.mxu0 0.0
    %3323 = vmatpush1.msra.mxu0 0.0
    %3324 = vmatprep.subr.mxu0 0.0
    %3325 = vmatpush1.msra.mxu0 0.0
    %3326 = vmatprep.subr.mxu0 0.0
    %3327 = vmatpush1.msra.mxu0 0.0
    %3328 = vmatprep.subr.mxu0 0.0
    %3329 = vmatpush1.msra.mxu0 0.0
    %3330 = vmatprep.subr.mxu0 0.0
    %3331 = vmatpush1.msra.mxu0 0.0
    %3332 = vmatprep.subr.mxu0 0.0
    %v3333 = vand.u32 %v1598, 4294901760
    %3334 = vmatpush1.msra.mxu0 %v3333
    %3335 = vmatprep.subr.mxu0 0.0
    %v3336 = vand.u32 %v1530, 4294901760
    %3337 = vmatpush1.msra.mxu0 %v3336
    %3338 = vmatprep.subr.mxu0 0.0
    %v3339 = vand.u32 %v1597, 4294901760
    %3340 = vmatpush1.msra.mxu0 %v3339
    %3341 = vmatprep.subr.mxu0 0.0
    %v3342 = vand.u32 %v1529, 4294901760
    %3343 = vmatpush1.msra.mxu0 %v3342
    %3344 = vmatprep.subr.mxu0 0.0
    %v3345 = vand.u32 %v1596, 4294901760
    %3346 = vmatpush1.msra.mxu0 %v3345
    %3347 = vmatprep.subr.mxu0 0.0
    %v3348 = vand.u32 %v1528, 4294901760
    %3349 = vmatpush1.msra.mxu0 %v3348
    %3350 = vmatprep.subr.mxu0 0.0
    %v3351 = vand.u32 %v1595, 4294901760
    %3352 = vmatpush1.msra.mxu0 %v3351
    %3353 = vmatprep.subr.mxu0 0.0
    %v3354 = vand.u32 %v1527, 4294901760
    %3355 = vmatpush1.msra.mxu0 %v3354
    %3356 = vmatprep.subr.mxu0 0.0
    %3357 = vmatpush2.msra.mxu0 0.0
    %3358 = vmatprep.subr.mxu0 0.0
    %3359 = vmatpush2.msra.mxu0 0.0
    %3360 = vmatprep.subr.mxu0 0.0
    %3361 = vmatpush2.msra.mxu0 0.0
    %3362 = vmatprep.subr.mxu0 0.0
    %3363 = vmatpush2.msra.mxu0 0.0
    %3364 = vmatprep.subr.mxu0 0.0
    %3365 = vmatpush2.msra.mxu0 0.0
    %3366 = vmatprep.subr.mxu0 0.0
    %3367 = vmatpush2.msra.mxu0 0.0
    %3368 = vmatprep.subr.mxu0 0.0
    %3369 = vmatpush2.msra.mxu0 0.0
    %3370 = vmatprep.subr.mxu0 0.0
    %3371 = vmatpush2.msra.mxu0 0.0
    %3372 = vmatprep.subr.mxu0 0.0
    %3373 = vmatpush2.msra.mxu0 0.0
    %3374 = vmatprep.subr.mxu0 0.0
    %3375 = vmatpush2.msra.mxu0 0.0
    %3376 = vmatprep.subr.mxu0 0.0
    %3377 = vmatpush2.msra.mxu0 0.0
    %3378 = vmatprep.subr.mxu0 0.0
    %3379 = vmatpush2.msra.mxu0 0.0
    %3380 = vmatprep.subr.mxu0 0.0
    %3381 = vmatpush2.msra.mxu0 0.0
    %3382 = vmatprep.subr.mxu0 0.0
    %3383 = vmatpush2.msra.mxu0 0.0
    %3384 = vmatprep.subr.mxu0 0.0
    %3385 = vmatpush2.msra.mxu0 0.0
    %3386 = vmatprep.subr.mxu0 0.0
    %3387 = vmatpush2.msra.mxu0 0.0
    %3388 = vmatprep.mubr.f32.mxu0 0.0
    %v3389 = vand.u32 %v2576, 4294901760
    %3390 = vmatmul.mubr.f32.gmra.mxu0 %v3389
    %v3391 = vpop.f32.mrf.mxu0
    %v3392 = vadd.f32 %v3271, %v3391
    %v3393 = vpop.f32.mrf.mxu0
    %3394 = vmatprep.mubr.f32.mxu0 0.0
    %v3395 = vand.u32 %v2579, 4294901760
    %3396 = vmatmul.mubr.f32.gmra.mxu0 %v3395
    %v3397 = vpop.f32.mrf.mxu0
    %v3398 = vadd.f32 %v3277, %v3397
    %v3399 = vpop.f32.mrf.mxu0
    %3400 = vmatprep.mubr.f32.mxu0 0.0
    %v3401 = vand.u32 %v2582, 4294901760
    %3402 = vmatmul.mubr.f32.gmra.mxu0 %v3401
    %v3403 = vpop.f32.mrf.mxu0
    %v3404 = vadd.f32 %v3283, %v3403
    %v3405 = vpop.f32.mrf.mxu0
    %3406 = vmatprep.mubr.f32.mxu0 0.0
    %v3407 = vand.u32 %v2585, 4294901760
    %3408 = vmatmul.mubr.f32.gmra.mxu0 %v3407
    %v3409 = vpop.f32.mrf.mxu0
    %v3410 = vadd.f32 %v3289, %v3409
    %v3411 = vpop.f32.mrf.mxu0
    %3412 = vmatprep.mubr.f32.mxu0 0.0
    %v3413 = vand.u32 %v2588, 4294901760
    %3414 = vmatmul.mubr.f32.gmra.mxu0 %v3413
    %v3415 = vpop.f32.mrf.mxu0
    %v3416 = vadd.f32 %v3295, %v3415
    %v3417 = vpop.f32.mrf.mxu0
    %3418 = vmatprep.mubr.f32.mxu0 0.0
    %v3419 = vand.u32 %v2591, 4294901760
    %3420 = vmatmul.mubr.f32.gmra.mxu0 %v3419
    %v3421 = vpop.f32.mrf.mxu0
    %v3422 = vadd.f32 %v3301, %v3421
    %v3423 = vpop.f32.mrf.mxu0
    %3424 = vmatprep.mubr.f32.mxu0 0.0
    %v3425 = vand.u32 %v2594, 4294901760
    %3426 = vmatmul.mubr.f32.gmra.mxu0 %v3425
    %v3427 = vpop.f32.mrf.mxu0
    %v3428 = vadd.f32 %v3307, %v3427
    %v3429 = vpop.f32.mrf.mxu0
    %3430 = vmatprep.mubr.f32.mxu0 0.0
    %v3431 = vand.u32 %v2597, 4294901760
    %3432 = vmatmul.mubr.f32.gmra.mxu0 %v3431
    %v3433 = vpop.f32.mrf.mxu0
    %v3434 = vadd.f32 %v3313, %v3433
    %v3435 = vpop.f32.mrf.mxu0
    %3436 = vdwg.mxu0
    %v3437 = vcombine.low %v3392, %v3416
    %v3438 = vcombine.high %v3392, %v3416
    %v3440 = vunpack.c.l.s4 1983009808
    %v3441 = vunpack.c.0.s8 %v3440
    %v3442 = vlaneseq
    %v3443 = vshrl.u32 %v3442, 7
    %v3444 = vsub.s32 %v3441, %v3443
    %v3445 = vrot.slane %v3437, %v3444
    %v3447 = vunpack.c.l.s4 1983009808
    %v3448 = vunpack.c.0.s8 %v3447
    %v3449 = vlaneseq
    %v3450 = vshrl.u32 %v3449, 7
    %v3451 = vsub.s32 %v3448, %v3450
    %v3452 = vrot.slane %v3438, %v3451
    %v3453 = vcombine.low %v3404, %v3428
    %v3454 = vcombine.high %v3404, %v3428
    %v3456 = vunpack.c.l.s4 1983009808
    %v3457 = vunpack.c.0.s8 %v3456
    %v3458 = vlaneseq
    %v3459 = vshrl.u32 %v3458, 7
    %v3460 = vsub.s32 %v3457, %v3459
    %v3461 = vrot.slane %v3453, %v3460
    %v3463 = vunpack.c.l.s4 1983009808
    %v3464 = vunpack.c.0.s8 %v3463
    %v3465 = vlaneseq
    %v3466 = vshrl.u32 %v3465, 7
    %v3467 = vsub.s32 %v3464, %v3466
    %v3468 = vrot.slane %v3454, %v3467
    %v3469 = vcombine.low %v3445, %v3461
    %v3470 = vcombine.high %v3445, %v3461
    %v3472 = vunpack.c.l.s4 1934713408
    %v3473 = vunpack.c.0.s8 %v3472
    %v3474 = vlaneseq
    %v3475 = vshrl.u32 %v3474, 7
    %v3476 = vsub.s32 %v3473, %v3475
    %v3477 = vrot.slane %v3469, %v3476
    %v3479 = vunpack.c.l.s4 1934713408
    %v3480 = vunpack.c.0.s8 %v3479
    %v3481 = vlaneseq
    %v3482 = vshrl.u32 %v3481, 7
    %v3483 = vsub.s32 %v3480, %v3482
    %v3484 = vrot.slane %v3470, %v3483
    %v3485 = vcombine.low %v3452, %v3468
    %v3486 = vcombine.high %v3452, %v3468
    %v3488 = vunpack.c.l.s4 1934713408
    %v3489 = vunpack.c.0.s8 %v3488
    %v3490 = vlaneseq
    %v3491 = vshrl.u32 %v3490, 7
    %v3492 = vsub.s32 %v3489, %v3491
    %v3493 = vrot.slane %v3485, %v3492
    %v3495 = vunpack.c.l.s4 1934713408
    %v3496 = vunpack.c.0.s8 %v3495
    %v3497 = vlaneseq
    %v3498 = vshrl.u32 %v3497, 7
    %v3499 = vsub.s32 %v3496, %v3498
    %v3500 = vrot.slane %v3486, %v3499
    %v3501 = vcombine.high %v3477, 0.0
    %v3502 = vcombine.high %v3484, 0.0
    %v3503 = vcombine.high %v3493, 0.0
    %v3504 = vcombine.high %v3500, 0.0
    %v3505 = vcombine.low %v3398, %v3422
    %v3506 = vcombine.high %v3398, %v3422
    %v3508 = vunpack.c.l.s4 1983009808
    %v3509 = vunpack.c.0.s8 %v3508
    %v3510 = vlaneseq
    %v3511 = vshrl.u32 %v3510, 7
    %v3512 = vsub.s32 %v3509, %v3511
    %v3513 = vrot.slane %v3505, %v3512
    %v3515 = vunpack.c.l.s4 1983009808
    %v3516 = vunpack.c.0.s8 %v3515
    %v3517 = vlaneseq
    %v3518 = vshrl.u32 %v3517, 7
    %v3519 = vsub.s32 %v3516, %v3518
    %v3520 = vrot.slane %v3506, %v3519
    %v3521 = vcombine.low %v3410, %v3434
    %v3522 = vcombine.high %v3410, %v3434
    %v3524 = vunpack.c.l.s4 1983009808
    %v3525 = vunpack.c.0.s8 %v3524
    %v3526 = vlaneseq
    %v3527 = vshrl.u32 %v3526, 7
    %v3528 = vsub.s32 %v3525, %v3527
    %v3529 = vrot.slane %v3521, %v3528
    %v3531 = vunpack.c.l.s4 1983009808
    %v3532 = vunpack.c.0.s8 %v3531
    %v3533 = vlaneseq
    %v3534 = vshrl.u32 %v3533, 7
    %v3535 = vsub.s32 %v3532, %v3534
    %v3536 = vrot.slane %v3522, %v3535
    %v3537 = vcombine.low %v3513, %v3529
    %v3538 = vcombine.high %v3513, %v3529
    %v3540 = vunpack.c.l.s4 1934713408
    %v3541 = vunpack.c.0.s8 %v3540
    %v3542 = vlaneseq
    %v3543 = vshrl.u32 %v3542, 7
    %v3544 = vsub.s32 %v3541, %v3543
    %v3545 = vrot.slane %v3537, %v3544
    %v3547 = vunpack.c.l.s4 1934713408
    %v3548 = vunpack.c.0.s8 %v3547
    %v3549 = vlaneseq
    %v3550 = vshrl.u32 %v3549, 7
    %v3551 = vsub.s32 %v3548, %v3550
    %v3552 = vrot.slane %v3538, %v3551
    %v3553 = vcombine.low %v3520, %v3536
    %v3554 = vcombine.high %v3520, %v3536
    %v3556 = vunpack.c.l.s4 1934713408
    %v3557 = vunpack.c.0.s8 %v3556
    %v3558 = vlaneseq
    %v3559 = vshrl.u32 %v3558, 7
    %v3560 = vsub.s32 %v3557, %v3559
    %v3561 = vrot.slane %v3553, %v3560
    %v3563 = vunpack.c.l.s4 1934713408
    %v3564 = vunpack.c.0.s8 %v3563
    %v3565 = vlaneseq
    %v3566 = vshrl.u32 %v3565, 7
    %v3567 = vsub.s32 %v3564, %v3566
    %v3568 = vrot.slane %v3554, %v3567
    %v3569 = vcombine.high %v3545, 0.0
    %v3570 = vcombine.high %v3552, 0.0
    %v3571 = vcombine.high %v3561, 0.0
    %v3572 = vcombine.high %v3568, 0.0
    %v3573 = vcombine.low %v3477, %v3484
    %v3575 = vunpack.c.l.s4 1983009808
    %v3576 = vunpack.c.0.s8 %v3575
    %v3577 = vlaneseq
    %v3578 = vshrl.u32 %v3577, 7
    %v3579 = vsub.s32 %v3576, %v3578
    %v3580 = vrot.slane %v3573, %v3579
    %v3581 = vcombine.low %v3501, %v3502
    %v3583 = vunpack.c.l.s4 1983009808
    %v3584 = vunpack.c.0.s8 %v3583
    %v3585 = vlaneseq
    %v3586 = vshrl.u32 %v3585, 7
    %v3587 = vsub.s32 %v3584, %v3586
    %v3588 = vrot.slane %v3581, %v3587
    %v3589 = vcombine.low %v3493, %v3500
    %v3591 = vunpack.c.l.s4 1983009808
    %v3592 = vunpack.c.0.s8 %v3591
    %v3593 = vlaneseq
    %v3594 = vshrl.u32 %v3593, 7
    %v3595 = vsub.s32 %v3592, %v3594
    %v3596 = vrot.slane %v3589, %v3595
    %v3597 = vcombine.low %v3503, %v3504
    %v3599 = vunpack.c.l.s4 1983009808
    %v3600 = vunpack.c.0.s8 %v3599
    %v3601 = vlaneseq
    %v3602 = vshrl.u32 %v3601, 7
    %v3603 = vsub.s32 %v3600, %v3602
    %v3604 = vrot.slane %v3597, %v3603
    %v3605 = vcombine.low %v3580, %v3588
    %v3606 = vcombine.high %v3580, %v3588
    %v3608 = vunpack.c.l.s4 1934713408
    %v3609 = vunpack.c.0.s8 %v3608
    %v3610 = vlaneseq
    %v3611 = vshrl.u32 %v3610, 7
    %v3612 = vsub.s32 %v3609, %v3611
    %v3613 = vrot.slane %v3605, %v3612
    %v3615 = vunpack.c.l.s4 1934713408
    %v3616 = vunpack.c.0.s8 %v3615
    %v3617 = vlaneseq
    %v3618 = vshrl.u32 %v3617, 7
    %v3619 = vsub.s32 %v3616, %v3618
    %v3620 = vrot.slane %v3606, %v3619
    %v3621 = vcombine.low %v3596, %v3604
    %v3622 = vcombine.high %v3596, %v3604
    %v3624 = vunpack.c.l.s4 1934713408
    %v3625 = vunpack.c.0.s8 %v3624
    %v3626 = vlaneseq
    %v3627 = vshrl.u32 %v3626, 7
    %v3628 = vsub.s32 %v3625, %v3627
    %v3629 = vrot.slane %v3621, %v3628
    %v3631 = vunpack.c.l.s4 1934713408
    %v3632 = vunpack.c.0.s8 %v3631
    %v3633 = vlaneseq
    %v3634 = vshrl.u32 %v3633, 7
    %v3635 = vsub.s32 %v3632, %v3634
    %v3636 = vrot.slane %v3622, %v3635
    %v3637 = vcombine.low %v3613, %v3629
    %v3638 = vcombine.high %v3613, %v3629
    %v3639 = vcombine.low %v3620, %v3636
    %v3640 = vcombine.high %v3620, %v3636
    %v3641 = vcombine.low %v3545, %v3552
    %v3643 = vunpack.c.l.s4 1983009808
    %v3644 = vunpack.c.0.s8 %v3643
    %v3645 = vlaneseq
    %v3646 = vshrl.u32 %v3645, 7
    %v3647 = vsub.s32 %v3644, %v3646
    %v3648 = vrot.slane %v3641, %v3647
    %v3649 = vcombine.low %v3569, %v3570
    %v3651 = vunpack.c.l.s4 1983009808
    %v3652 = vunpack.c.0.s8 %v3651
    %v3653 = vlaneseq
    %v3654 = vshrl.u32 %v3653, 7
    %v3655 = vsub.s32 %v3652, %v3654
    %v3656 = vrot.slane %v3649, %v3655
    %v3657 = vcombine.low %v3561, %v3568
    %v3659 = vunpack.c.l.s4 1983009808
    %v3660 = vunpack.c.0.s8 %v3659
    %v3661 = vlaneseq
    %v3662 = vshrl.u32 %v3661, 7
    %v3663 = vsub.s32 %v3660, %v3662
    %v3664 = vrot.slane %v3657, %v3663
    %v3665 = vcombine.low %v3571, %v3572
    %v3667 = vunpack.c.l.s4 1983009808
    %v3668 = vunpack.c.0.s8 %v3667
    %v3669 = vlaneseq
    %v3670 = vshrl.u32 %v3669, 7
    %v3671 = vsub.s32 %v3668, %v3670
    %v3672 = vrot.slane %v3665, %v3671
    %v3673 = vcombine.low %v3648, %v3656
    %v3674 = vcombine.high %v3648, %v3656
    %v3676 = vunpack.c.l.s4 1934713408
    %v3677 = vunpack.c.0.s8 %v3676
    %v3678 = vlaneseq
    %v3679 = vshrl.u32 %v3678, 7
    %v3680 = vsub.s32 %v3677, %v3679
    %v3681 = vrot.slane %v3673, %v3680
    %v3683 = vunpack.c.l.s4 1934713408
    %v3684 = vunpack.c.0.s8 %v3683
    %v3685 = vlaneseq
    %v3686 = vshrl.u32 %v3685, 7
    %v3687 = vsub.s32 %v3684, %v3686
    %v3688 = vrot.slane %v3674, %v3687
    %v3689 = vcombine.low %v3664, %v3672
    %v3690 = vcombine.high %v3664, %v3672
    %v3692 = vunpack.c.l.s4 1934713408
    %v3693 = vunpack.c.0.s8 %v3692
    %v3694 = vlaneseq
    %v3695 = vshrl.u32 %v3694, 7
    %v3696 = vsub.s32 %v3693, %v3695
    %v3697 = vrot.slane %v3689, %v3696
    %v3699 = vunpack.c.l.s4 1934713408
    %v3700 = vunpack.c.0.s8 %v3699
    %v3701 = vlaneseq
    %v3702 = vshrl.u32 %v3701, 7
    %v3703 = vsub.s32 %v3700, %v3702
    %v3704 = vrot.slane %v3690, %v3703
    %v3705 = vcombine.low %v3681, %v3697
    %v3706 = vcombine.high %v3681, %v3697
    %v3707 = vcombine.low %v3688, %v3704
    %v3708 = vcombine.high %v3688, %v3704
    %3711 = vrot.lane.b32.xlu0 %v3638, 8
    %v3712 = vpop.permute.xlu0 %3711
    %3713 = vrot.lane.b32.xlu0 %v3706, 8
    %v3714 = vpop.permute.xlu0 %3713
    %3719 = vrot.lane.b32.xlu0 %v3639, 16
    %v3720 = vpop.permute.xlu0 %3719
    %3721 = vrot.lane.b32.xlu0 %v3707, 16
    %v3722 = vpop.permute.xlu0 %3721
    %3727 = vrot.lane.b32.xlu0 %v3640, 24
    %v3728 = vpop.permute.xlu0 %3727
    %3729 = vrot.lane.b32.xlu0 %v3708, 24
    %v3730 = vpop.permute.xlu0 %3729
    %v3733 = vsel %vm1599, %v3637, %v3712
    %v3734 = vsel %vm1599, %v3705, %v3714
    %vm3735 = vcmask 130048
    %v3736 = vsel %vm3735, %v3733, %v3720
    %v3737 = vsel %vm3735, %v3734, %v3722
    %vm3738 = vcmask 195584
    %v3739 = vsel %vm3738, %v3736, %v3728
    %v3740 = vsel %vm3738, %v3737, %v3730
    %v3741 = vld [vmem:[%s1 + $0x10] sm:$0xff]
    %v3742 = vld [vmem:[%s1 + $0x38] sm:$0xff]
    %v3743 = vld [vmem:[%s1 + $0x60] sm:$0xff]
    %v3744 = vld [vmem:[%s1 + $0x88] sm:$0xff]
    %v3746 = vsel %vm32, %v3739, 0
    %v3749 = vsel %vm32, %v3740, 0
    %3751 = vmatprep.subr.mxu0 0.0
    %3752 = vmatpush1.msra.mxu0 0.0
    %3753 = vmatprep.subr.mxu0 0.0
    %3754 = vmatpush1.msra.mxu0 0.0
    %3755 = vmatprep.subr.mxu0 0.0
    %3756 = vmatpush1.msra.mxu0 0.0
    %3757 = vmatprep.subr.mxu0 0.0
    %3758 = vmatpush1.msra.mxu0 0.0
    %3759 = vmatprep.subr.mxu0 0.0
    %3760 = vmatpush1.msra.mxu0 0.0
    %3761 = vmatprep.subr.mxu0 0.0
    %3762 = vmatpush1.msra.mxu0 0.0
    %3763 = vmatprep.subr.mxu0 0.0
    %3764 = vmatpush1.msra.mxu0 0.0
    %3765 = vmatprep.subr.mxu0 0.0
    %3766 = vmatpush1.msra.mxu0 0.0
    %3767 = vmatprep.subr.mxu0 0.0
    %3768 = vmatpush1.msra.mxu0 0.0
    %3769 = vmatprep.subr.mxu0 0.0
    %3770 = vmatpush1.msra.mxu0 0.0
    %3771 = vmatprep.subr.mxu0 0.0
    %3772 = vmatpush1.msra.mxu0 0.0
    %3773 = vmatprep.subr.mxu0 0.0
    %3774 = vmatpush1.msra.mxu0 0.0
    %3775 = vmatprep.subr.mxu0 0.0
    %v3776 = vand.u32 %v3744, 4294901760
    %3777 = vmatpush1.msra.mxu0 %v3776
    %3778 = vmatprep.subr.mxu0 0.0
    %v3779 = vand.u32 %v3743, 4294901760
    %3780 = vmatpush1.msra.mxu0 %v3779
    %3781 = vmatprep.subr.mxu0 0.0
    %v3782 = vand.u32 %v3742, 4294901760
    %3783 = vmatpush1.msra.mxu0 %v3782
    %3784 = vmatprep.subr.mxu0 0.0
    %v3785 = vand.u32 %v3741, 4294901760
    %3786 = vmatpush1.msra.mxu0 %v3785
    %3787 = vmatprep.subr.mxu0 0.0
    %3788 = vmatpush2.msra.mxu0 0.0
    %3789 = vmatprep.subr.mxu0 0.0
    %3790 = vmatpush2.msra.mxu0 0.0
    %3791 = vmatprep.subr.mxu0 0.0
    %3792 = vmatpush2.msra.mxu0 0.0
    %3793 = vmatprep.subr.mxu0 0.0
    %3794 = vmatpush2.msra.mxu0 0.0
    %3795 = vmatprep.subr.mxu0 0.0
    %3796 = vmatpush2.msra.mxu0 0.0
    %3797 = vmatprep.subr.mxu0 0.0
    %3798 = vmatpush2.msra.mxu0 0.0
    %3799 = vmatprep.subr.mxu0 0.0
    %3800 = vmatpush2.msra.mxu0 0.0
    %3801 = vmatprep.subr.mxu0 0.0
    %3802 = vmatpush2.msra.mxu0 0.0
    %3803 = vmatprep.subr.mxu0 0.0
    %3804 = vmatpush2.msra.mxu0 0.0
    %3805 = vmatprep.subr.mxu0 0.0
    %3806 = vmatpush2.msra.mxu0 0.0
    %3807 = vmatprep.subr.mxu0 0.0
    %3808 = vmatpush2.msra.mxu0 0.0
    %3809 = vmatprep.subr.mxu0 0.0
    %3810 = vmatpush2.msra.mxu0 0.0
    %3811 = vmatprep.subr.mxu0 0.0
    %3812 = vmatpush2.msra.mxu0 0.0
    %3813 = vmatprep.subr.mxu0 0.0
    %3814 = vmatpush2.msra.mxu0 0.0
    %3815 = vmatprep.subr.mxu0 0.0
    %3816 = vmatpush2.msra.mxu0 0.0
    %3817 = vmatprep.subr.mxu0 0.0
    %3818 = vmatpush2.msra.mxu0 0.0
    %3819 = vmatprep.mubr.f32.mxu0 0.0
    %v3820 = vand.u32 %v3746, 4294901760
    %v3821 = vsub.f32 %v3746, %v3820
    %v3822 = vand.u32 %v3821, 4294901760
    %v3823 = vsub.f32 %v3821, %v3822
    %v3824 = vand.u32 %v3823, 4294901760
    %3825 = vmatmul.mubr.f32.gmra.mxu0 %v3824
    %v3826 = vpop.f32.mrf.mxu0
    %v3827 = vadd.f32 0.0, %v3826
    %v3828 = vpop.f32.mrf.mxu0
    %3829 = vmatprep.mubr.f32.mxu0 0.0
    %v3830 = vand.u32 %v3749, 4294901760
    %v3831 = vsub.f32 %v3749, %v3830
    %v3832 = vand.u32 %v3831, 4294901760
    %v3833 = vsub.f32 %v3831, %v3832
    %v3834 = vand.u32 %v3833, 4294901760
    %3835 = vmatmul.mubr.f32.gmra.mxu0 %v3834
    %v3836 = vpop.f32.mrf.mxu0
    %v3837 = vadd.f32 0.0, %v3836
    %v3838 = vpop.f32.mrf.mxu0
    %3839 = vdwg.mxu0
    %3840 = vmatprep.subr.mxu0 0.0
    %3841 = vmatpush1.msra.mxu0 0.0
    %3842 = vmatprep.subr.mxu0 0.0
    %3843 = vmatpush1.msra.mxu0 0.0
    %3844 = vmatprep.subr.mxu0 0.0
    %3845 = vmatpush1.msra.mxu0 0.0
    %3846 = vmatprep.subr.mxu0 0.0
    %3847 = vmatpush1.msra.mxu0 0.0
    %3848 = vmatprep.subr.mxu0 0.0
    %3849 = vmatpush1.msra.mxu0 0.0
    %3850 = vmatprep.subr.mxu0 0.0
    %3851 = vmatpush1.msra.mxu0 0.0
    %3852 = vmatprep.subr.mxu0 0.0
    %3853 = vmatpush1.msra.mxu0 0.0
    %3854 = vmatprep.subr.mxu0 0.0
    %3855 = vmatpush1.msra.mxu0 0.0
    %3856 = vmatprep.subr.mxu0 0.0
    %3857 = vmatpush1.msra.mxu0 0.0
    %3858 = vmatprep.subr.mxu0 0.0
    %3859 = vmatpush1.msra.mxu0 0.0
    %3860 = vmatprep.subr.mxu0 0.0
    %3861 = vmatpush1.msra.mxu0 0.0
    %3862 = vmatprep.subr.mxu0 0.0
    %3863 = vmatpush1.msra.mxu0 0.0
    %3864 = vmatprep.subr.mxu0 0.0
    %v3865 = vand.u32 %v3744, 4294901760
    %v3866 = vsub.f32 %v3744, %v3865
    %v3867 = vand.u32 %v3866, 4294901760
    %v3868 = vsub.f32 %v3866, %v3867
    %v3869 = vand.u32 %v3868, 4294901760
    %3870 = vmatpush1.msra.mxu0 %v3869
    %3871 = vmatprep.subr.mxu0 0.0
    %v3872 = vand.u32 %v3743, 4294901760
    %v3873 = vsub.f32 %v3743, %v3872
    %v3874 = vand.u32 %v3873, 4294901760
    %v3875 = vsub.f32 %v3873, %v3874
    %v3876 = vand.u32 %v3875, 4294901760
    %3877 = vmatpush1.msra.mxu0 %v3876
    %3878 = vmatprep.subr.mxu0 0.0
    %v3879 = vand.u32 %v3742, 4294901760
    %v3880 = vsub.f32 %v3742, %v3879
    %v3881 = vand.u32 %v3880, 4294901760
    %v3882 = vsub.f32 %v3880, %v3881
    %v3883 = vand.u32 %v3882, 4294901760
    %3884 = vmatpush1.msra.mxu0 %v3883
    %3885 = vmatprep.subr.mxu0 0.0
    %v3886 = vand.u32 %v3741, 4294901760
    %v3887 = vsub.f32 %v3741, %v3886
    %v3888 = vand.u32 %v3887, 4294901760
    %v3889 = vsub.f32 %v3887, %v3888
    %v3890 = vand.u32 %v3889, 4294901760
    %3891 = vmatpush1.msra.mxu0 %v3890
    %3892 = vmatprep.subr.mxu0 0.0
    %3893 = vmatpush2.msra.mxu0 0.0
    %3894 = vmatprep.subr.mxu0 0.0
    %3895 = vmatpush2.msra.mxu0 0.0
    %3896 = vmatprep.subr.mxu0 0.0
    %3897 = vmatpush2.msra.mxu0 0.0
    %3898 = vmatprep.subr.mxu0 0.0
    %3899 = vmatpush2.msra.mxu0 0.0
    %3900 = vmatprep.subr.mxu0 0.0
    %3901 = vmatpush2.msra.mxu0 0.0
    %3902 = vmatprep.subr.mxu0 0.0
    %3903 = vmatpush2.msra.mxu0 0.0
    %3904 = vmatprep.subr.mxu0 0.0
    %3905 = vmatpush2.msra.mxu0 0.0
    %3906 = vmatprep.subr.mxu0 0.0
    %3907 = vmatpush2.msra.mxu0 0.0
    %3908 = vmatprep.subr.mxu0 0.0
    %3909 = vmatpush2.msra.mxu0 0.0
    %3910 = vmatprep.subr.mxu0 0.0
    %3911 = vmatpush2.msra.mxu0 0.0
    %3912 = vmatprep.subr.mxu0 0.0
    %3913 = vmatpush2.msra.mxu0 0.0
    %3914 = vmatprep.subr.mxu0 0.0
    %3915 = vmatpush2.msra.mxu0 0.0
    %3916 = vmatprep.subr.mxu0 0.0
    %3917 = vmatpush2.msra.mxu0 0.0
    %3918 = vmatprep.subr.mxu0 0.0
    %3919 = vmatpush2.msra.mxu0 0.0
    %3920 = vmatprep.subr.mxu0 0.0
    %3921 = vmatpush2.msra.mxu0 0.0
    %3922 = vmatprep.subr.mxu0 0.0
    %3923 = vmatpush2.msra.mxu0 0.0
    %3924 = vmatprep.mubr.f32.mxu0 0.0
    %v3925 = vand.u32 %v3746, 4294901760
    %3926 = vmatmul.mubr.f32.gmra.mxu0 %v3925
    %v3927 = vpop.f32.mrf.mxu0
    %v3928 = vadd.f32 %v3827, %v3927
    %v3929 = vpop.f32.mrf.mxu0
    %3930 = vmatprep.mubr.f32.mxu0 0.0
    %v3931 = vand.u32 %v3749, 4294901760
    %3932 = vmatmul.mubr.f32.gmra.mxu0 %v3931
    %v3933 = vpop.f32.mrf.mxu0
    %v3934 = vadd.f32 %v3837, %v3933
    %v3935 = vpop.f32.mrf.mxu0
    %3936 = vdwg.mxu0
    %3937 = vmatprep.subr.mxu0 0.0
    %3938 = vmatpush1.msra.mxu0 0.0
    %3939 = vmatprep.subr.mxu0 0.0
    %3940 = vmatpush1.msra.mxu0 0.0
    %3941 = vmatprep.subr.mxu0 0.0
    %3942 = vmatpush1.msra.mxu0 0.0
    %3943 = vmatprep.subr.mxu0 0.0
    %3944 = vmatpush1.msra.mxu0 0.0
    %3945 = vmatprep.subr.mxu0 0.0
    %3946 = vmatpush1.msra.mxu0 0.0
    %3947 = vmatprep.subr.mxu0 0.0
    %3948 = vmatpush1.msra.mxu0 0.0
    %3949 = vmatprep.subr.mxu0 0.0
    %3950 = vmatpush1.msra.mxu0 0.0
    %3951 = vmatprep.subr.mxu0 0.0
    %3952 = vmatpush1.msra.mxu0 0.0
    %3953 = vmatprep.subr.mxu0 0.0
    %3954 = vmatpush1.msra.mxu0 0.0
    %3955 = vmatprep.subr.mxu0 0.0
    %3956 = vmatpush1.msra.mxu0 0.0
    %3957 = vmatprep.subr.mxu0 0.0
    %3958 = vmatpush1.msra.mxu0 0.0
    %3959 = vmatprep.subr.mxu0 0.0
    %3960 = vmatpush1.msra.mxu0 0.0
    %3961 = vmatprep.subr.mxu0 0.0
    %v3962 = vand.u32 %v3744, 4294901760
    %v3963 = vsub.f32 %v3744, %v3962
    %3964 = vmatpush1.msra.mxu0 %v3963
    %3965 = vmatprep.subr.mxu0 0.0
    %v3966 = vand.u32 %v3743, 4294901760
    %v3967 = vsub.f32 %v3743, %v3966
    %3968 = vmatpush1.msra.mxu0 %v3967
    %3969 = vmatprep.subr.mxu0 0.0
    %v3970 = vand.u32 %v3742, 4294901760
    %v3971 = vsub.f32 %v3742, %v3970
    %3972 = vmatpush1.msra.mxu0 %v3971
    %3973 = vmatprep.subr.mxu0 0.0
    %v3974 = vand.u32 %v3741, 4294901760
    %v3975 = vsub.f32 %v3741, %v3974
    %3976 = vmatpush1.msra.mxu0 %v3975
    %3977 = vmatprep.subr.mxu0 0.0
    %3978 = vmatpush2.msra.mxu0 0.0
    %3979 = vmatprep.subr.mxu0 0.0
    %3980 = vmatpush2.msra.mxu0 0.0
    %3981 = vmatprep.subr.mxu0 0.0
    %3982 = vmatpush2.msra.mxu0 0.0
    %3983 = vmatprep.subr.mxu0 0.0
    %3984 = vmatpush2.msra.mxu0 0.0
    %3985 = vmatprep.subr.mxu0 0.0
    %3986 = vmatpush2.msra.mxu0 0.0
    %3987 = vmatprep.subr.mxu0 0.0
    %3988 = vmatpush2.msra.mxu0 0.0
    %3989 = vmatprep.subr.mxu0 0.0
    %3990 = vmatpush2.msra.mxu0 0.0
    %3991 = vmatprep.subr.mxu0 0.0
    %3992 = vmatpush2.msra.mxu0 0.0
    %3993 = vmatprep.subr.mxu0 0.0
    %3994 = vmatpush2.msra.mxu0 0.0
    %3995 = vmatprep.subr.mxu0 0.0
    %3996 = vmatpush2.msra.mxu0 0.0
    %3997 = vmatprep.subr.mxu0 0.0
    %3998 = vmatpush2.msra.mxu0 0.0
    %3999 = vmatprep.subr.mxu0 0.0
    %4000 = vmatpush2.msra.mxu0 0.0
    %4001 = vmatprep.subr.mxu0 0.0
    %4002 = vmatpush2.msra.mxu0 0.0
    %4003 = vmatprep.subr.mxu0 0.0
    %4004 = vmatpush2.msra.mxu0 0.0
    %4005 = vmatprep.subr.mxu0 0.0
    %4006 = vmatpush2.msra.mxu0 0.0
    %4007 = vmatprep.subr.mxu0 0.0
    %4008 = vmatpush2.msra.mxu0 0.0
    %4009 = vmatprep.mubr.f32.mxu0 0.0
    %v4010 = vand.u32 %v3746, 4294901760
    %v4011 = vsub.f32 %v3746, %v4010
    %4012 = vmatmul.mubr.f32.gmra.mxu0 %v4011
    %v4013 = vpop.f32.mrf.mxu0
    %v4014 = vadd.f32 %v3928, %v4013
    %v4015 = vpop.f32.mrf.mxu0
    %4016 = vmatprep.mubr.f32.mxu0 0.0
    %v4017 = vand.u32 %v3749, 4294901760
    %v4018 = vsub.f32 %v3749, %v4017
    %4019 = vmatmul.mubr.f32.gmra.mxu0 %v4018
    %v4020 = vpop.f32.mrf.mxu0
    %v4021 = vadd.f32 %v3934, %v4020
    %v4022 = vpop.f32.mrf.mxu0
    %4023 = vdwg.mxu0
    %4024 = vmatprep.subr.mxu0 0.0
    %4025 = vmatpush1.msra.mxu0 0.0
    %4026 = vmatprep.subr.mxu0 0.0
    %4027 = vmatpush1.msra.mxu0 0.0
    %4028 = vmatprep.subr.mxu0 0.0
    %4029 = vmatpush1.msra.mxu0 0.0
    %4030 = vmatprep.subr.mxu0 0.0
    %4031 = vmatpush1.msra.mxu0 0.0
    %4032 = vmatprep.subr.mxu0 0.0
    %4033 = vmatpush1.msra.mxu0 0.0
    %4034 = vmatprep.subr.mxu0 0.0
    %4035 = vmatpush1.msra.mxu0 0.0
    %4036 = vmatprep.subr.mxu0 0.0
    %4037 = vmatpush1.msra.mxu0 0.0
    %4038 = vmatprep.subr.mxu0 0.0
    %4039 = vmatpush1.msra.mxu0 0.0
    %4040 = vmatprep.subr.mxu0 0.0
    %4041 = vmatpush1.msra.mxu0 0.0
    %4042 = vmatprep.subr.mxu0 0.0
    %4043 = vmatpush1.msra.mxu0 0.0
    %4044 = vmatprep.subr.mxu0 0.0
    %4045 = vmatpush1.msra.mxu0 0.0
    %4046 = vmatprep.subr.mxu0 0.0
    %4047 = vmatpush1.msra.mxu0 0.0
    %4048 = vmatprep.subr.mxu0 0.0
    %v4049 = vand.u32 %v3744, 4294901760
    %4050 = vmatpush1.msra.mxu0 %v4049
    %4051 = vmatprep.subr.mxu0 0.0
    %v4052 = vand.u32 %v3743, 4294901760
    %4053 = vmatpush1.msra.mxu0 %v4052
    %4054 = vmatprep.subr.mxu0 0.0
    %v4055 = vand.u32 %v3742, 4294901760
    %4056 = vmatpush1.msra.mxu0 %v4055
    %4057 = vmatprep.subr.mxu0 0.0
    %v4058 = vand.u32 %v3741, 4294901760
    %4059 = vmatpush1.msra.mxu0 %v4058
    %4060 = vmatprep.subr.mxu0 0.0
    %4061 = vmatpush2.msra.mxu0 0.0
    %4062 = vmatprep.subr.mxu0 0.0
    %4063 = vmatpush2.msra.mxu0 0.0
    %4064 = vmatprep.subr.mxu0 0.0
    %4065 = vmatpush2.msra.mxu0 0.0
    %4066 = vmatprep.subr.mxu0 0.0
    %4067 = vmatpush2.msra.mxu0 0.0
    %4068 = vmatprep.subr.mxu0 0.0
    %4069 = vmatpush2.msra.mxu0 0.0
    %4070 = vmatprep.subr.mxu0 0.0
    %4071 = vmatpush2.msra.mxu0 0.0
    %4072 = vmatprep.subr.mxu0 0.0
    %4073 = vmatpush2.msra.mxu0 0.0
    %4074 = vmatprep.subr.mxu0 0.0
    %4075 = vmatpush2.msra.mxu0 0.0
    %4076 = vmatprep.subr.mxu0 0.0
    %4077 = vmatpush2.msra.mxu0 0.0
    %4078 = vmatprep.subr.mxu0 0.0
    %4079 = vmatpush2.msra.mxu0 0.0
    %4080 = vmatprep.subr.mxu0 0.0
    %4081 = vmatpush2.msra.mxu0 0.0
    %4082 = vmatprep.subr.mxu0 0.0
    %4083 = vmatpush2.msra.mxu0 0.0
    %4084 = vmatprep.subr.mxu0 0.0
    %4085 = vmatpush2.msra.mxu0 0.0
    %4086 = vmatprep.subr.mxu0 0.0
    %4087 = vmatpush2.msra.mxu0 0.0
    %4088 = vmatprep.subr.mxu0 0.0
    %4089 = vmatpush2.msra.mxu0 0.0
    %4090 = vmatprep.subr.mxu0 0.0
    %4091 = vmatpush2.msra.mxu0 0.0
    %4092 = vmatprep.mubr.f32.mxu0 0.0
    %v4093 = vand.u32 %v3746, 4294901760
    %v4094 = vsub.f32 %v3746, %v4093
    %v4095 = vand.u32 %v4094, 4294901760
    %4096 = vmatmul.mubr.f32.gmra.mxu0 %v4095
    %v4097 = vpop.f32.mrf.mxu0
    %v4098 = vadd.f32 %v4014, %v4097
    %v4099 = vpop.f32.mrf.mxu0
    %4100 = vmatprep.mubr.f32.mxu0 0.0
    %v4101 = vand.u32 %v3749, 4294901760
    %v4102 = vsub.f32 %v3749, %v4101
    %v4103 = vand.u32 %v4102, 4294901760
    %4104 = vmatmul.mubr.f32.gmra.mxu0 %v4103
    %v4105 = vpop.f32.mrf.mxu0
    %v4106 = vadd.f32 %v4021, %v4105
    %v4107 = vpop.f32.mrf.mxu0
    %4108 = vdwg.mxu0
    %4109 = vmatprep.subr.mxu0 0.0
    %4110 = vmatpush1.msra.mxu0 0.0
    %4111 = vmatprep.subr.mxu0 0.0
    %4112 = vmatpush1.msra.mxu0 0.0
    %4113 = vmatprep.subr.mxu0 0.0
    %4114 = vmatpush1.msra.mxu0 0.0
    %4115 = vmatprep.subr.mxu0 0.0
    %4116 = vmatpush1.msra.mxu0 0.0
    %4117 = vmatprep.subr.mxu0 0.0
    %4118 = vmatpush1.msra.mxu0 0.0
    %4119 = vmatprep.subr.mxu0 0.0
    %4120 = vmatpush1.msra.mxu0 0.0
    %4121 = vmatprep.subr.mxu0 0.0
    %4122 = vmatpush1.msra.mxu0 0.0
    %4123 = vmatprep.subr.mxu0 0.0
    %4124 = vmatpush1.msra.mxu0 0.0
    %4125 = vmatprep.subr.mxu0 0.0
    %4126 = vmatpush1.msra.mxu0 0.0
    %4127 = vmatprep.subr.mxu0 0.0
    %4128 = vmatpush1.msra.mxu0 0.0
    %4129 = vmatprep.subr.mxu0 0.0
    %4130 = vmatpush1.msra.mxu0 0.0
    %4131 = vmatprep.subr.mxu0 0.0
    %4132 = vmatpush1.msra.mxu0 0.0
    %4133 = vmatprep.subr.mxu0 0.0
    %v4134 = vand.u32 %v3744, 4294901760
    %v4135 = vsub.f32 %v3744, %v4134
    %v4136 = vand.u32 %v4135, 4294901760
    %4137 = vmatpush1.msra.mxu0 %v4136
    %4138 = vmatprep.subr.mxu0 0.0
    %v4139 = vand.u32 %v3743, 4294901760
    %v4140 = vsub.f32 %v3743, %v4139
    %v4141 = vand.u32 %v4140, 4294901760
    %4142 = vmatpush1.msra.mxu0 %v4141
    %4143 = vmatprep.subr.mxu0 0.0
    %v4144 = vand.u32 %v3742, 4294901760
    %v4145 = vsub.f32 %v3742, %v4144
    %v4146 = vand.u32 %v4145, 4294901760
    %4147 = vmatpush1.msra.mxu0 %v4146
    %4148 = vmatprep.subr.mxu0 0.0
    %v4149 = vand.u32 %v3741, 4294901760
    %v4150 = vsub.f32 %v3741, %v4149
    %v4151 = vand.u32 %v4150, 4294901760
    %4152 = vmatpush1.msra.mxu0 %v4151
    %4153 = vmatprep.subr.mxu0 0.0
    %4154 = vmatpush2.msra.mxu0 0.0
    %4155 = vmatprep.subr.mxu0 0.0
    %4156 = vmatpush2.msra.mxu0 0.0
    %4157 = vmatprep.subr.mxu0 0.0
    %4158 = vmatpush2.msra.mxu0 0.0
    %4159 = vmatprep.subr.mxu0 0.0
    %4160 = vmatpush2.msra.mxu0 0.0
    %4161 = vmatprep.subr.mxu0 0.0
    %4162 = vmatpush2.msra.mxu0 0.0
    %4163 = vmatprep.subr.mxu0 0.0
    %4164 = vmatpush2.msra.mxu0 0.0
    %4165 = vmatprep.subr.mxu0 0.0
    %4166 = vmatpush2.msra.mxu0 0.0
    %4167 = vmatprep.subr.mxu0 0.0
    %4168 = vmatpush2.msra.mxu0 0.0
    %4169 = vmatprep.subr.mxu0 0.0
    %4170 = vmatpush2.msra.mxu0 0.0
    %4171 = vmatprep.subr.mxu0 0.0
    %4172 = vmatpush2.msra.mxu0 0.0
    %4173 = vmatprep.subr.mxu0 0.0
    %4174 = vmatpush2.msra.mxu0 0.0
    %4175 = vmatprep.subr.mxu0 0.0
    %4176 = vmatpush2.msra.mxu0 0.0
    %4177 = vmatprep.subr.mxu0 0.0
    %4178 = vmatpush2.msra.mxu0 0.0
    %4179 = vmatprep.subr.mxu0 0.0
    %4180 = vmatpush2.msra.mxu0 0.0
    %4181 = vmatprep.subr.mxu0 0.0
    %4182 = vmatpush2.msra.mxu0 0.0
    %4183 = vmatprep.subr.mxu0 0.0
    %4184 = vmatpush2.msra.mxu0 0.0
    %4185 = vmatprep.mubr.f32.mxu0 0.0
    %v4186 = vand.u32 %v3746, 4294901760
    %4187 = vmatmul.mubr.f32.gmra.mxu0 %v4186
    %v4188 = vpop.f32.mrf.mxu0
    %v4189 = vadd.f32 %v4098, %v4188
    %v4190 = vpop.f32.mrf.mxu0
    %4191 = vmatprep.mubr.f32.mxu0 0.0
    %v4192 = vand.u32 %v3749, 4294901760
    %4193 = vmatmul.mubr.f32.gmra.mxu0 %v4192
    %v4194 = vpop.f32.mrf.mxu0
    %v4195 = vadd.f32 %v4106, %v4194
    %v4196 = vpop.f32.mrf.mxu0
    %4197 = vdwg.mxu0
    %4198 = vmatprep.subr.mxu0 0.0
    %4199 = vmatpush1.msra.mxu0 0.0
    %4200 = vmatprep.subr.mxu0 0.0
    %4201 = vmatpush1.msra.mxu0 0.0
    %4202 = vmatprep.subr.mxu0 0.0
    %4203 = vmatpush1.msra.mxu0 0.0
    %4204 = vmatprep.subr.mxu0 0.0
    %4205 = vmatpush1.msra.mxu0 0.0
    %4206 = vmatprep.subr.mxu0 0.0
    %4207 = vmatpush1.msra.mxu0 0.0
    %4208 = vmatprep.subr.mxu0 0.0
    %4209 = vmatpush1.msra.mxu0 0.0
    %4210 = vmatprep.subr.mxu0 0.0
    %4211 = vmatpush1.msra.mxu0 0.0
    %4212 = vmatprep.subr.mxu0 0.0
    %4213 = vmatpush1.msra.mxu0 0.0
    %4214 = vmatprep.subr.mxu0 0.0
    %4215 = vmatpush1.msra.mxu0 0.0
    %4216 = vmatprep.subr.mxu0 0.0
    %4217 = vmatpush1.msra.mxu0 0.0
    %4218 = vmatprep.subr.mxu0 0.0
    %4219 = vmatpush1.msra.mxu0 0.0
    %4220 = vmatprep.subr.mxu0 0.0
    %4221 = vmatpush1.msra.mxu0 0.0
    %4222 = vmatprep.subr.mxu0 0.0
    %v4223 = vand.u32 %v3744, 4294901760
    %4224 = vmatpush1.msra.mxu0 %v4223
    %4225 = vmatprep.subr.mxu0 0.0
    %v4226 = vand.u32 %v3743, 4294901760
    %4227 = vmatpush1.msra.mxu0 %v4226
    %4228 = vmatprep.subr.mxu0 0.0
    %v4229 = vand.u32 %v3742, 4294901760
    %4230 = vmatpush1.msra.mxu0 %v4229
    %4231 = vmatprep.subr.mxu0 0.0
    %v4232 = vand.u32 %v3741, 4294901760
    %4233 = vmatpush1.msra.mxu0 %v4232
    %4234 = vmatprep.subr.mxu0 0.0
    %4235 = vmatpush2.msra.mxu0 0.0
    %4236 = vmatprep.subr.mxu0 0.0
    %4237 = vmatpush2.msra.mxu0 0.0
    %4238 = vmatprep.subr.mxu0 0.0
    %4239 = vmatpush2.msra.mxu0 0.0
    %4240 = vmatprep.subr.mxu0 0.0
    %4241 = vmatpush2.msra.mxu0 0.0
    %4242 = vmatprep.subr.mxu0 0.0
    %4243 = vmatpush2.msra.mxu0 0.0
    %4244 = vmatprep.subr.mxu0 0.0
    %4245 = vmatpush2.msra.mxu0 0.0
    %4246 = vmatprep.subr.mxu0 0.0
    %4247 = vmatpush2.msra.mxu0 0.0
    %4248 = vmatprep.subr.mxu0 0.0
    %4249 = vmatpush2.msra.mxu0 0.0
    %4250 = vmatprep.subr.mxu0 0.0
    %4251 = vmatpush2.msra.mxu0 0.0
    %4252 = vmatprep.subr.mxu0 0.0
    %4253 = vmatpush2.msra.mxu0 0.0
    %4254 = vmatprep.subr.mxu0 0.0
    %4255 = vmatpush2.msra.mxu0 0.0
    %4256 = vmatprep.subr.mxu0 0.0
    %4257 = vmatpush2.msra.mxu0 0.0
    %4258 = vmatprep.subr.mxu0 0.0
    %4259 = vmatpush2.msra.mxu0 0.0
    %4260 = vmatprep.subr.mxu0 0.0
    %4261 = vmatpush2.msra.mxu0 0.0
    %4262 = vmatprep.subr.mxu0 0.0
    %4263 = vmatpush2.msra.mxu0 0.0
    %4264 = vmatprep.subr.mxu0 0.0
    %4265 = vmatpush2.msra.mxu0 0.0
    %4266 = vmatprep.mubr.f32.mxu0 0.0
    %v4267 = vand.u32 %v3746, 4294901760
    %4268 = vmatmul.mubr.f32.gmra.mxu0 %v4267
    %v4269 = vpop.f32.mrf.mxu0
    %v4270 = vadd.f32 %v4189, %v4269
    %v4271 = vpop.f32.mrf.mxu0
    %4272 = vmatprep.mubr.f32.mxu0 0.0
    %v4273 = vand.u32 %v3749, 4294901760
    %4274 = vmatmul.mubr.f32.gmra.mxu0 %v4273
    %v4275 = vpop.f32.mrf.mxu0
    %v4276 = vadd.f32 %v4195, %v4275
    %v4277 = vpop.f32.mrf.mxu0
    %4278 = vdwg.mxu0
    %v4279 = vadd.f32 %v15, %v4270
    %v4280 = vadd.f32 %v16, %v4276
    %v4281 = vld [vmem:[%s1 + $0xb0] ss:$0 sm:$0xff]
    %v4282 = vadd.f32 %v4279, %v4281
    %v4283 = vadd.f32 %v4280, %v4281
    %v4284 = vmul.f32 %v4282, %v4282
    %v4285 = vmul.f32 %v4283, %v4283
    %v4286 = vsel %vm32, %v4284, 0.0
    %4287 = vadd.xlane.f32.xlu0 %v4286
    %v4288 = vpop.xlane.xlu0 %4287
    %v4289 = vsel %vm32, %v4285, 0.0
    %4290 = vadd.xlane.f32.xlu0 %v4289
    %v4291 = vpop.xlane.xlu0 %4290
    %v4292 = vmul.f32 %v4288, %v39
    %v4293 = vmul.f32 %v4291, %v39
    %v4294 = vrsqrt.pop %v4292
    %v4295 = vmul.f32 %v4292, %v4294
    %vm4296 = vcmp.eq.f32.partialorder %v4292, inf
    %v4297 = vsel %vm4296, %v4292, %v4295
    %vm4298 = vcmp.eq.f32.partialorder %v4292, 0.0
    %v4299 = vand.u32 %v4292, 2147483648
    %v4300 = vsel %vm4298, %v4299, %v4297
    %v4301 = vrsqrt.pop %v4293
    %v4302 = vmul.f32 %v4293, %v4301
    %vm4303 = vcmp.eq.f32.partialorder %v4293, inf
    %v4304 = vsel %vm4303, %v4293, %v4302
    %vm4305 = vcmp.eq.f32.partialorder %v4293, 0.0
    %v4306 = vand.u32 %v4293, 2147483648
    %v4307 = vsel %vm4305, %v4306, %v4304
    %v4308 = vadd.f32 %v4300, 1e-06
    %v4309 = vadd.f32 %v4307, 1e-06
    %v4310 = vrcp.pop %v4308
    %v4311 = vmul.f32 1.0, %v4310
    %v4312 = vrcp.pop %v4309
    %v4313 = vmul.f32 1.0, %v4312
    %v4314 = vmul.f32 %v4282, %v4311
    %v4315 = vmul.f32 %v4283, %v4313
    %v4316 = vld [vmem:[%s1 + $0x18] sm:$0xff]
    %v4317 = vld [vmem:[%s1 + $0x40] sm:$0xff]
    %v4318 = vld [vmem:[%s1 + $0x68] sm:$0xff]
    %v4319 = vld [vmem:[%s1 + $0x90] sm:$0xff]
    %v4320 = vld [vmem:[%s1 + $0xb8] ss:$0 sm:$0xff]
    %v4322 = vsel %vm32, %v4314, 0
    %v4325 = vsel %vm32, %v4315, 0
    %4327 = vmatprep.subr.mxu0 0.0
    %4328 = vmatpush1.msra.mxu0 0.0
    %4329 = vmatprep.subr.mxu0 0.0
    %4330 = vmatpush1.msra.mxu0 0.0
    %4331 = vmatprep.subr.mxu0 0.0
    %4332 = vmatpush1.msra.mxu0 0.0
    %4333 = vmatprep.subr.mxu0 0.0
    %4334 = vmatpush1.msra.mxu0 0.0
    %4335 = vmatprep.subr.mxu0 0.0
    %4336 = vmatpush1.msra.mxu0 0.0
    %4337 = vmatprep.subr.mxu0 0.0
    %4338 = vmatpush1.msra.mxu0 0.0
    %4339 = vmatprep.subr.mxu0 0.0
    %4340 = vmatpush1.msra.mxu0 0.0
    %4341 = vmatprep.subr.mxu0 0.0
    %4342 = vmatpush1.msra.mxu0 0.0
    %4343 = vmatprep.subr.mxu0 0.0
    %4344 = vmatpush1.msra.mxu0 0.0
    %4345 = vmatprep.subr.mxu0 0.0
    %4346 = vmatpush1.msra.mxu0 0.0
    %4347 = vmatprep.subr.mxu0 0.0
    %4348 = vmatpush1.msra.mxu0 0.0
    %4349 = vmatprep.subr.mxu0 0.0
    %4350 = vmatpush1.msra.mxu0 0.0
    %4351 = vmatprep.subr.mxu0 0.0
    %v4352 = vand.u32 %v4319, 4294901760
    %4353 = vmatpush1.msra.mxu0 %v4352
    %4354 = vmatprep.subr.mxu0 0.0
    %v4355 = vand.u32 %v4318, 4294901760
    %4356 = vmatpush1.msra.mxu0 %v4355
    %4357 = vmatprep.subr.mxu0 0.0
    %v4358 = vand.u32 %v4317, 4294901760
    %4359 = vmatpush1.msra.mxu0 %v4358
    %4360 = vmatprep.subr.mxu0 0.0
    %v4361 = vand.u32 %v4316, 4294901760
    %4362 = vmatpush1.msra.mxu0 %v4361
    %4363 = vmatprep.subr.mxu0 0.0
    %4364 = vmatpush2.msra.mxu0 0.0
    %4365 = vmatprep.subr.mxu0 0.0
    %4366 = vmatpush2.msra.mxu0 0.0
    %4367 = vmatprep.subr.mxu0 0.0
    %4368 = vmatpush2.msra.mxu0 0.0
    %4369 = vmatprep.subr.mxu0 0.0
    %4370 = vmatpush2.msra.mxu0 0.0
    %4371 = vmatprep.subr.mxu0 0.0
    %4372 = vmatpush2.msra.mxu0 0.0
    %4373 = vmatprep.subr.mxu0 0.0
    %4374 = vmatpush2.msra.mxu0 0.0
    %4375 = vmatprep.subr.mxu0 0.0
    %4376 = vmatpush2.msra.mxu0 0.0
    %4377 = vmatprep.subr.mxu0 0.0
    %4378 = vmatpush2.msra.mxu0 0.0
    %4379 = vmatprep.subr.mxu0 0.0
    %4380 = vmatpush2.msra.mxu0 0.0
    %4381 = vmatprep.subr.mxu0 0.0
    %4382 = vmatpush2.msra.mxu0 0.0
    %4383 = vmatprep.subr.mxu0 0.0
    %4384 = vmatpush2.msra.mxu0 0.0
    %4385 = vmatprep.subr.mxu0 0.0
    %4386 = vmatpush2.msra.mxu0 0.0
    %4387 = vmatprep.subr.mxu0 0.0
    %4388 = vmatpush2.msra.mxu0 0.0
    %4389 = vmatprep.subr.mxu0 0.0
    %4390 = vmatpush2.msra.mxu0 0.0
    %4391 = vmatprep.subr.mxu0 0.0
    %4392 = vmatpush2.msra.mxu0 0.0
    %4393 = vmatprep.subr.mxu0 0.0
    %4394 = vmatpush2.msra.mxu0 0.0
    %4395 = vmatprep.mubr.f32.mxu0 0.0
    %v4396 = vand.u32 %v4322, 4294901760
    %v4397 = vsub.f32 %v4322, %v4396
    %v4398 = vand.u32 %v4397, 4294901760
    %v4399 = vsub.f32 %v4397, %v4398
    %v4400 = vand.u32 %v4399, 4294901760
    %4401 = vmatmul.mubr.f32.gmra.mxu0 %v4400
    %v4402 = vpop.f32.mrf.mxu0
    %v4403 = vadd.f32 %v4320, %v4402
    %v4404 = vpop.f32.mrf.mxu0
    %4405 = vmatprep.mubr.f32.mxu0 0.0
    %v4406 = vand.u32 %v4325, 4294901760
    %v4407 = vsub.f32 %v4325, %v4406
    %v4408 = vand.u32 %v4407, 4294901760
    %v4409 = vsub.f32 %v4407, %v4408
    %v4410 = vand.u32 %v4409, 4294901760
    %4411 = vmatmul.mubr.f32.gmra.mxu0 %v4410
    %v4412 = vpop.f32.mrf.mxu0
    %v4413 = vadd.f32 %v4320, %v4412
    %v4414 = vpop.f32.mrf.mxu0
    %4415 = vdwg.mxu0
    %4416 = vmatprep.subr.mxu0 0.0
    %4417 = vmatpush1.msra.mxu0 0.0
    %4418 = vmatprep.subr.mxu0 0.0
    %4419 = vmatpush1.msra.mxu0 0.0
    %4420 = vmatprep.subr.mxu0 0.0
    %4421 = vmatpush1.msra.mxu0 0.0
    %4422 = vmatprep.subr.mxu0 0.0
    %4423 = vmatpush1.msra.mxu0 0.0
    %4424 = vmatprep.subr.mxu0 0.0
    %4425 = vmatpush1.msra.mxu0 0.0
    %4426 = vmatprep.subr.mxu0 0.0
    %4427 = vmatpush1.msra.mxu0 0.0
    %4428 = vmatprep.subr.mxu0 0.0
    %4429 = vmatpush1.msra.mxu0 0.0
    %4430 = vmatprep.subr.mxu0 0.0
    %4431 = vmatpush1.msra.mxu0 0.0
    %4432 = vmatprep.subr.mxu0 0.0
    %4433 = vmatpush1.msra.mxu0 0.0
    %4434 = vmatprep.subr.mxu0 0.0
    %4435 = vmatpush1.msra.mxu0 0.0
    %4436 = vmatprep.subr.mxu0 0.0
    %4437 = vmatpush1.msra.mxu0 0.0
    %4438 = vmatprep.subr.mxu0 0.0
    %4439 = vmatpush1.msra.mxu0 0.0
    %4440 = vmatprep.subr.mxu0 0.0
    %v4441 = vand.u32 %v4319, 4294901760
    %v4442 = vsub.f32 %v4319, %v4441
    %v4443 = vand.u32 %v4442, 4294901760
    %v4444 = vsub.f32 %v4442, %v4443
    %v4445 = vand.u32 %v4444, 4294901760
    %4446 = vmatpush1.msra.mxu0 %v4445
    %4447 = vmatprep.subr.mxu0 0.0
    %v4448 = vand.u32 %v4318, 4294901760
    %v4449 = vsub.f32 %v4318, %v4448
    %v4450 = vand.u32 %v4449, 4294901760
    %v4451 = vsub.f32 %v4449, %v4450
    %v4452 = vand.u32 %v4451, 4294901760
    %4453 = vmatpush1.msra.mxu0 %v4452
    %4454 = vmatprep.subr.mxu0 0.0
    %v4455 = vand.u32 %v4317, 4294901760
    %v4456 = vsub.f32 %v4317, %v4455
    %v4457 = vand.u32 %v4456, 4294901760
    %v4458 = vsub.f32 %v4456, %v4457
    %v4459 = vand.u32 %v4458, 4294901760
    %4460 = vmatpush1.msra.mxu0 %v4459
    %4461 = vmatprep.subr.mxu0 0.0
    %v4462 = vand.u32 %v4316, 4294901760
    %v4463 = vsub.f32 %v4316, %v4462
    %v4464 = vand.u32 %v4463, 4294901760
    %v4465 = vsub.f32 %v4463, %v4464
    %v4466 = vand.u32 %v4465, 4294901760
    %4467 = vmatpush1.msra.mxu0 %v4466
    %4468 = vmatprep.subr.mxu0 0.0
    %4469 = vmatpush2.msra.mxu0 0.0
    %4470 = vmatprep.subr.mxu0 0.0
    %4471 = vmatpush2.msra.mxu0 0.0
    %4472 = vmatprep.subr.mxu0 0.0
    %4473 = vmatpush2.msra.mxu0 0.0
    %4474 = vmatprep.subr.mxu0 0.0
    %4475 = vmatpush2.msra.mxu0 0.0
    %4476 = vmatprep.subr.mxu0 0.0
    %4477 = vmatpush2.msra.mxu0 0.0
    %4478 = vmatprep.subr.mxu0 0.0
    %4479 = vmatpush2.msra.mxu0 0.0
    %4480 = vmatprep.subr.mxu0 0.0
    %4481 = vmatpush2.msra.mxu0 0.0
    %4482 = vmatprep.subr.mxu0 0.0
    %4483 = vmatpush2.msra.mxu0 0.0
    %4484 = vmatprep.subr.mxu0 0.0
    %4485 = vmatpush2.msra.mxu0 0.0
    %4486 = vmatprep.subr.mxu0 0.0
    %4487 = vmatpush2.msra.mxu0 0.0
    %4488 = vmatprep.subr.mxu0 0.0
    %4489 = vmatpush2.msra.mxu0 0.0
    %4490 = vmatprep.subr.mxu0 0.0
    %4491 = vmatpush2.msra.mxu0 0.0
    %4492 = vmatprep.subr.mxu0 0.0
    %4493 = vmatpush2.msra.mxu0 0.0
    %4494 = vmatprep.subr.mxu0 0.0
    %4495 = vmatpush2.msra.mxu0 0.0
    %4496 = vmatprep.subr.mxu0 0.0
    %4497 = vmatpush2.msra.mxu0 0.0
    %4498 = vmatprep.subr.mxu0 0.0
    %4499 = vmatpush2.msra.mxu0 0.0
    %4500 = vmatprep.mubr.f32.mxu0 0.0
    %v4501 = vand.u32 %v4322, 4294901760
    %4502 = vmatmul.mubr.f32.gmra.mxu0 %v4501
    %v4503 = vpop.f32.mrf.mxu0
    %v4504 = vadd.f32 %v4403, %v4503
    %v4505 = vpop.f32.mrf.mxu0
    %4506 = vmatprep.mubr.f32.mxu0 0.0
    %v4507 = vand.u32 %v4325, 4294901760
    %4508 = vmatmul.mubr.f32.gmra.mxu0 %v4507
    %v4509 = vpop.f32.mrf.mxu0
    %v4510 = vadd.f32 %v4413, %v4509
    %v4511 = vpop.f32.mrf.mxu0
    %4512 = vdwg.mxu0
    %4513 = vmatprep.subr.mxu0 0.0
    %4514 = vmatpush1.msra.mxu0 0.0
    %4515 = vmatprep.subr.mxu0 0.0
    %4516 = vmatpush1.msra.mxu0 0.0
    %4517 = vmatprep.subr.mxu0 0.0
    %4518 = vmatpush1.msra.mxu0 0.0
    %4519 = vmatprep.subr.mxu0 0.0
    %4520 = vmatpush1.msra.mxu0 0.0
    %4521 = vmatprep.subr.mxu0 0.0
    %4522 = vmatpush1.msra.mxu0 0.0
    %4523 = vmatprep.subr.mxu0 0.0
    %4524 = vmatpush1.msra.mxu0 0.0
    %4525 = vmatprep.subr.mxu0 0.0
    %4526 = vmatpush1.msra.mxu0 0.0
    %4527 = vmatprep.subr.mxu0 0.0
    %4528 = vmatpush1.msra.mxu0 0.0
    %4529 = vmatprep.subr.mxu0 0.0
    %4530 = vmatpush1.msra.mxu0 0.0
    %4531 = vmatprep.subr.mxu0 0.0
    %4532 = vmatpush1.msra.mxu0 0.0
    %4533 = vmatprep.subr.mxu0 0.0
    %4534 = vmatpush1.msra.mxu0 0.0
    %4535 = vmatprep.subr.mxu0 0.0
    %4536 = vmatpush1.msra.mxu0 0.0
    %4537 = vmatprep.subr.mxu0 0.0
    %v4538 = vand.u32 %v4319, 4294901760
    %v4539 = vsub.f32 %v4319, %v4538
    %4540 = vmatpush1.msra.mxu0 %v4539
    %4541 = vmatprep.subr.mxu0 0.0
    %v4542 = vand.u32 %v4318, 4294901760
    %v4543 = vsub.f32 %v4318, %v4542
    %4544 = vmatpush1.msra.mxu0 %v4543
    %4545 = vmatprep.subr.mxu0 0.0
    %v4546 = vand.u32 %v4317, 4294901760
    %v4547 = vsub.f32 %v4317, %v4546
    %4548 = vmatpush1.msra.mxu0 %v4547
    %4549 = vmatprep.subr.mxu0 0.0
    %v4550 = vand.u32 %v4316, 4294901760
    %v4551 = vsub.f32 %v4316, %v4550
    %4552 = vmatpush1.msra.mxu0 %v4551
    %4553 = vmatprep.subr.mxu0 0.0
    %4554 = vmatpush2.msra.mxu0 0.0
    %4555 = vmatprep.subr.mxu0 0.0
    %4556 = vmatpush2.msra.mxu0 0.0
    %4557 = vmatprep.subr.mxu0 0.0
    %4558 = vmatpush2.msra.mxu0 0.0
    %4559 = vmatprep.subr.mxu0 0.0
    %4560 = vmatpush2.msra.mxu0 0.0
    %4561 = vmatprep.subr.mxu0 0.0
    %4562 = vmatpush2.msra.mxu0 0.0
    %4563 = vmatprep.subr.mxu0 0.0
    %4564 = vmatpush2.msra.mxu0 0.0
    %4565 = vmatprep.subr.mxu0 0.0
    %4566 = vmatpush2.msra.mxu0 0.0
    %4567 = vmatprep.subr.mxu0 0.0
    %4568 = vmatpush2.msra.mxu0 0.0
    %4569 = vmatprep.subr.mxu0 0.0
    %4570 = vmatpush2.msra.mxu0 0.0
    %4571 = vmatprep.subr.mxu0 0.0
    %4572 = vmatpush2.msra.mxu0 0.0
    %4573 = vmatprep.subr.mxu0 0.0
    %4574 = vmatpush2.msra.mxu0 0.0
    %4575 = vmatprep.subr.mxu0 0.0
    %4576 = vmatpush2.msra.mxu0 0.0
    %4577 = vmatprep.subr.mxu0 0.0
    %4578 = vmatpush2.msra.mxu0 0.0
    %4579 = vmatprep.subr.mxu0 0.0
    %4580 = vmatpush2.msra.mxu0 0.0
    %4581 = vmatprep.subr.mxu0 0.0
    %4582 = vmatpush2.msra.mxu0 0.0
    %4583 = vmatprep.subr.mxu0 0.0
    %4584 = vmatpush2.msra.mxu0 0.0
    %4585 = vmatprep.mubr.f32.mxu0 0.0
    %v4586 = vand.u32 %v4322, 4294901760
    %v4587 = vsub.f32 %v4322, %v4586
    %4588 = vmatmul.mubr.f32.gmra.mxu0 %v4587
    %v4589 = vpop.f32.mrf.mxu0
    %v4590 = vadd.f32 %v4504, %v4589
    %v4591 = vpop.f32.mrf.mxu0
    %4592 = vmatprep.mubr.f32.mxu0 0.0
    %v4593 = vand.u32 %v4325, 4294901760
    %v4594 = vsub.f32 %v4325, %v4593
    %4595 = vmatmul.mubr.f32.gmra.mxu0 %v4594
    %v4596 = vpop.f32.mrf.mxu0
    %v4597 = vadd.f32 %v4510, %v4596
    %v4598 = vpop.f32.mrf.mxu0
    %4599 = vdwg.mxu0
    %4600 = vmatprep.subr.mxu0 0.0
    %4601 = vmatpush1.msra.mxu0 0.0
    %4602 = vmatprep.subr.mxu0 0.0
    %4603 = vmatpush1.msra.mxu0 0.0
    %4604 = vmatprep.subr.mxu0 0.0
    %4605 = vmatpush1.msra.mxu0 0.0
    %4606 = vmatprep.subr.mxu0 0.0
    %4607 = vmatpush1.msra.mxu0 0.0
    %4608 = vmatprep.subr.mxu0 0.0
    %4609 = vmatpush1.msra.mxu0 0.0
    %4610 = vmatprep.subr.mxu0 0.0
    %4611 = vmatpush1.msra.mxu0 0.0
    %4612 = vmatprep.subr.mxu0 0.0
    %4613 = vmatpush1.msra.mxu0 0.0
    %4614 = vmatprep.subr.mxu0 0.0
    %4615 = vmatpush1.msra.mxu0 0.0
    %4616 = vmatprep.subr.mxu0 0.0
    %4617 = vmatpush1.msra.mxu0 0.0
    %4618 = vmatprep.subr.mxu0 0.0
    %4619 = vmatpush1.msra.mxu0 0.0
    %4620 = vmatprep.subr.mxu0 0.0
    %4621 = vmatpush1.msra.mxu0 0.0
    %4622 = vmatprep.subr.mxu0 0.0
    %4623 = vmatpush1.msra.mxu0 0.0
    %4624 = vmatprep.subr.mxu0 0.0
    %v4625 = vand.u32 %v4319, 4294901760
    %4626 = vmatpush1.msra.mxu0 %v4625
    %4627 = vmatprep.subr.mxu0 0.0
    %v4628 = vand.u32 %v4318, 4294901760
    %4629 = vmatpush1.msra.mxu0 %v4628
    %4630 = vmatprep.subr.mxu0 0.0
    %v4631 = vand.u32 %v4317, 4294901760
    %4632 = vmatpush1.msra.mxu0 %v4631
    %4633 = vmatprep.subr.mxu0 0.0
    %v4634 = vand.u32 %v4316, 4294901760
    %4635 = vmatpush1.msra.mxu0 %v4634
    %4636 = vmatprep.subr.mxu0 0.0
    %4637 = vmatpush2.msra.mxu0 0.0
    %4638 = vmatprep.subr.mxu0 0.0
    %4639 = vmatpush2.msra.mxu0 0.0
    %4640 = vmatprep.subr.mxu0 0.0
    %4641 = vmatpush2.msra.mxu0 0.0
    %4642 = vmatprep.subr.mxu0 0.0
    %4643 = vmatpush2.msra.mxu0 0.0
    %4644 = vmatprep.subr.mxu0 0.0
    %4645 = vmatpush2.msra.mxu0 0.0
    %4646 = vmatprep.subr.mxu0 0.0
    %4647 = vmatpush2.msra.mxu0 0.0
    %4648 = vmatprep.subr.mxu0 0.0
    %4649 = vmatpush2.msra.mxu0 0.0
    %4650 = vmatprep.subr.mxu0 0.0
    %4651 = vmatpush2.msra.mxu0 0.0
    %4652 = vmatprep.subr.mxu0 0.0
    %4653 = vmatpush2.msra.mxu0 0.0
    %4654 = vmatprep.subr.mxu0 0.0
    %4655 = vmatpush2.msra.mxu0 0.0
    %4656 = vmatprep.subr.mxu0 0.0
    %4657 = vmatpush2.msra.mxu0 0.0
    %4658 = vmatprep.subr.mxu0 0.0
    %4659 = vmatpush2.msra.mxu0 0.0
    %4660 = vmatprep.subr.mxu0 0.0
    %4661 = vmatpush2.msra.mxu0 0.0
    %4662 = vmatprep.subr.mxu0 0.0
    %4663 = vmatpush2.msra.mxu0 0.0
    %4664 = vmatprep.subr.mxu0 0.0
    %4665 = vmatpush2.msra.mxu0 0.0
    %4666 = vmatprep.subr.mxu0 0.0
    %4667 = vmatpush2.msra.mxu0 0.0
    %4668 = vmatprep.mubr.f32.mxu0 0.0
    %v4669 = vand.u32 %v4322, 4294901760
    %v4670 = vsub.f32 %v4322, %v4669
    %v4671 = vand.u32 %v4670, 4294901760
    %4672 = vmatmul.mubr.f32.gmra.mxu0 %v4671
    %v4673 = vpop.f32.mrf.mxu0
    %v4674 = vadd.f32 %v4590, %v4673
    %v4675 = vpop.f32.mrf.mxu0
    %4676 = vmatprep.mubr.f32.mxu0 0.0
    %v4677 = vand.u32 %v4325, 4294901760
    %v4678 = vsub.f32 %v4325, %v4677
    %v4679 = vand.u32 %v4678, 4294901760
    %4680 = vmatmul.mubr.f32.gmra.mxu0 %v4679
    %v4681 = vpop.f32.mrf.mxu0
    %v4682 = vadd.f32 %v4597, %v4681
    %v4683 = vpop.f32.mrf.mxu0
    %4684 = vdwg.mxu0
    %4685 = vmatprep.subr.mxu0 0.0
    %4686 = vmatpush1.msra.mxu0 0.0
    %4687 = vmatprep.subr.mxu0 0.0
    %4688 = vmatpush1.msra.mxu0 0.0
    %4689 = vmatprep.subr.mxu0 0.0
    %4690 = vmatpush1.msra.mxu0 0.0
    %4691 = vmatprep.subr.mxu0 0.0
    %4692 = vmatpush1.msra.mxu0 0.0
    %4693 = vmatprep.subr.mxu0 0.0
    %4694 = vmatpush1.msra.mxu0 0.0
    %4695 = vmatprep.subr.mxu0 0.0
    %4696 = vmatpush1.msra.mxu0 0.0
    %4697 = vmatprep.subr.mxu0 0.0
    %4698 = vmatpush1.msra.mxu0 0.0
    %4699 = vmatprep.subr.mxu0 0.0
    %4700 = vmatpush1.msra.mxu0 0.0
    %4701 = vmatprep.subr.mxu0 0.0
    %4702 = vmatpush1.msra.mxu0 0.0
    %4703 = vmatprep.subr.mxu0 0.0
    %4704 = vmatpush1.msra.mxu0 0.0
    %4705 = vmatprep.subr.mxu0 0.0
    %4706 = vmatpush1.msra.mxu0 0.0
    %4707 = vmatprep.subr.mxu0 0.0
    %4708 = vmatpush1.msra.mxu0 0.0
    %4709 = vmatprep.subr.mxu0 0.0
    %v4710 = vand.u32 %v4319, 4294901760
    %v4711 = vsub.f32 %v4319, %v4710
    %v4712 = vand.u32 %v4711, 4294901760
    %4713 = vmatpush1.msra.mxu0 %v4712
    %4714 = vmatprep.subr.mxu0 0.0
    %v4715 = vand.u32 %v4318, 4294901760
    %v4716 = vsub.f32 %v4318, %v4715
    %v4717 = vand.u32 %v4716, 4294901760
    %4718 = vmatpush1.msra.mxu0 %v4717
    %4719 = vmatprep.subr.mxu0 0.0
    %v4720 = vand.u32 %v4317, 4294901760
    %v4721 = vsub.f32 %v4317, %v4720
    %v4722 = vand.u32 %v4721, 4294901760
    %4723 = vmatpush1.msra.mxu0 %v4722
    %4724 = vmatprep.subr.mxu0 0.0
    %v4725 = vand.u32 %v4316, 4294901760
    %v4726 = vsub.f32 %v4316, %v4725
    %v4727 = vand.u32 %v4726, 4294901760
    %4728 = vmatpush1.msra.mxu0 %v4727
    %4729 = vmatprep.subr.mxu0 0.0
    %4730 = vmatpush2.msra.mxu0 0.0
    %4731 = vmatprep.subr.mxu0 0.0
    %4732 = vmatpush2.msra.mxu0 0.0
    %4733 = vmatprep.subr.mxu0 0.0
    %4734 = vmatpush2.msra.mxu0 0.0
    %4735 = vmatprep.subr.mxu0 0.0
    %4736 = vmatpush2.msra.mxu0 0.0
    %4737 = vmatprep.subr.mxu0 0.0
    %4738 = vmatpush2.msra.mxu0 0.0
    %4739 = vmatprep.subr.mxu0 0.0
    %4740 = vmatpush2.msra.mxu0 0.0
    %4741 = vmatprep.subr.mxu0 0.0
    %4742 = vmatpush2.msra.mxu0 0.0
    %4743 = vmatprep.subr.mxu0 0.0
    %4744 = vmatpush2.msra.mxu0 0.0
    %4745 = vmatprep.subr.mxu0 0.0
    %4746 = vmatpush2.msra.mxu0 0.0
    %4747 = vmatprep.subr.mxu0 0.0
    %4748 = vmatpush2.msra.mxu0 0.0
    %4749 = vmatprep.subr.mxu0 0.0
    %4750 = vmatpush2.msra.mxu0 0.0
    %4751 = vmatprep.subr.mxu0 0.0
    %4752 = vmatpush2.msra.mxu0 0.0
    %4753 = vmatprep.subr.mxu0 0.0
    %4754 = vmatpush2.msra.mxu0 0.0
    %4755 = vmatprep.subr.mxu0 0.0
    %4756 = vmatpush2.msra.mxu0 0.0
    %4757 = vmatprep.subr.mxu0 0.0
    %4758 = vmatpush2.msra.mxu0 0.0
    %4759 = vmatprep.subr.mxu0 0.0
    %4760 = vmatpush2.msra.mxu0 0.0
    %4761 = vmatprep.mubr.f32.mxu0 0.0
    %v4762 = vand.u32 %v4322, 4294901760
    %4763 = vmatmul.mubr.f32.gmra.mxu0 %v4762
    %v4764 = vpop.f32.mrf.mxu0
    %v4765 = vadd.f32 %v4674, %v4764
    %v4766 = vpop.f32.mrf.mxu0
    %4767 = vmatprep.mubr.f32.mxu0 0.0
    %v4768 = vand.u32 %v4325, 4294901760
    %4769 = vmatmul.mubr.f32.gmra.mxu0 %v4768
    %v4770 = vpop.f32.mrf.mxu0
    %v4771 = vadd.f32 %v4682, %v4770
    %v4772 = vpop.f32.mrf.mxu0
    %4773 = vdwg.mxu0
    %4774 = vmatprep.subr.mxu0 0.0
    %4775 = vmatpush1.msra.mxu0 0.0
    %4776 = vmatprep.subr.mxu0 0.0
    %4777 = vmatpush1.msra.mxu0 0.0
    %4778 = vmatprep.subr.mxu0 0.0
    %4779 = vmatpush1.msra.mxu0 0.0
    %4780 = vmatprep.subr.mxu0 0.0
    %4781 = vmatpush1.msra.mxu0 0.0
    %4782 = vmatprep.subr.mxu0 0.0
    %4783 = vmatpush1.msra.mxu0 0.0
    %4784 = vmatprep.subr.mxu0 0.0
    %4785 = vmatpush1.msra.mxu0 0.0
    %4786 = vmatprep.subr.mxu0 0.0
    %4787 = vmatpush1.msra.mxu0 0.0
    %4788 = vmatprep.subr.mxu0 0.0
    %4789 = vmatpush1.msra.mxu0 0.0
    %4790 = vmatprep.subr.mxu0 0.0
    %4791 = vmatpush1.msra.mxu0 0.0
    %4792 = vmatprep.subr.mxu0 0.0
    %4793 = vmatpush1.msra.mxu0 0.0
    %4794 = vmatprep.subr.mxu0 0.0
    %4795 = vmatpush1.msra.mxu0 0.0
    %4796 = vmatprep.subr.mxu0 0.0
    %4797 = vmatpush1.msra.mxu0 0.0
    %4798 = vmatprep.subr.mxu0 0.0
    %v4799 = vand.u32 %v4319, 4294901760
    %4800 = vmatpush1.msra.mxu0 %v4799
    %4801 = vmatprep.subr.mxu0 0.0
    %v4802 = vand.u32 %v4318, 4294901760
    %4803 = vmatpush1.msra.mxu0 %v4802
    %4804 = vmatprep.subr.mxu0 0.0
    %v4805 = vand.u32 %v4317, 4294901760
    %4806 = vmatpush1.msra.mxu0 %v4805
    %4807 = vmatprep.subr.mxu0 0.0
    %v4808 = vand.u32 %v4316, 4294901760
    %4809 = vmatpush1.msra.mxu0 %v4808
    %4810 = vmatprep.subr.mxu0 0.0
    %4811 = vmatpush2.msra.mxu0 0.0
    %4812 = vmatprep.subr.mxu0 0.0
    %4813 = vmatpush2.msra.mxu0 0.0
    %4814 = vmatprep.subr.mxu0 0.0
    %4815 = vmatpush2.msra.mxu0 0.0
    %4816 = vmatprep.subr.mxu0 0.0
    %4817 = vmatpush2.msra.mxu0 0.0
    %4818 = vmatprep.subr.mxu0 0.0
    %4819 = vmatpush2.msra.mxu0 0.0
    %4820 = vmatprep.subr.mxu0 0.0
    %4821 = vmatpush2.msra.mxu0 0.0
    %4822 = vmatprep.subr.mxu0 0.0
    %4823 = vmatpush2.msra.mxu0 0.0
    %4824 = vmatprep.subr.mxu0 0.0
    %4825 = vmatpush2.msra.mxu0 0.0
    %4826 = vmatprep.subr.mxu0 0.0
    %4827 = vmatpush2.msra.mxu0 0.0
    %4828 = vmatprep.subr.mxu0 0.0
    %4829 = vmatpush2.msra.mxu0 0.0
    %4830 = vmatprep.subr.mxu0 0.0
    %4831 = vmatpush2.msra.mxu0 0.0
    %4832 = vmatprep.subr.mxu0 0.0
    %4833 = vmatpush2.msra.mxu0 0.0
    %4834 = vmatprep.subr.mxu0 0.0
    %4835 = vmatpush2.msra.mxu0 0.0
    %4836 = vmatprep.subr.mxu0 0.0
    %4837 = vmatpush2.msra.mxu0 0.0
    %4838 = vmatprep.subr.mxu0 0.0
    %4839 = vmatpush2.msra.mxu0 0.0
    %4840 = vmatprep.subr.mxu0 0.0
    %4841 = vmatpush2.msra.mxu0 0.0
    %4842 = vmatprep.mubr.f32.mxu0 0.0
    %v4843 = vand.u32 %v4322, 4294901760
    %4844 = vmatmul.mubr.f32.gmra.mxu0 %v4843
    %v4845 = vpop.f32.mrf.mxu0
    %v4846 = vadd.f32 %v4765, %v4845
    %v4847 = vpop.f32.mrf.mxu0
    %4848 = vmatprep.mubr.f32.mxu0 0.0
    %v4849 = vand.u32 %v4325, 4294901760
    %4850 = vmatmul.mubr.f32.gmra.mxu0 %v4849
    %v4851 = vpop.f32.mrf.mxu0
    %v4852 = vadd.f32 %v4771, %v4851
    %v4853 = vpop.f32.mrf.mxu0
    %4854 = vdwg.mxu0
    %4857 = vrot.lane.b32.xlu0 %v4846, 96
    %v4858 = vpop.permute.xlu0 %4857
    %4859 = vrot.lane.b32.xlu0 %v4852, 96
    %v4860 = vpop.permute.xlu0 %4859
    %v4863 = vmul.f32 %v4846, %v4858
    %v4864 = vmul.f32 %v4852, %v4860
    %v4865 = vxor.u32 %v4846, 2147483648
    %v4866 = vxor.u32 %v4852, 2147483648
    %v4867 = vmul.f32 %v4865, 1.442695
    %v4868 = vpow.pop %v4867
    %v4869 = vmul.f32 %v4866, 1.442695
    %v4870 = vpow.pop %v4869
    %v4871 = vadd.f32 %v4868, 1.0
    %v4872 = vadd.f32 %v4870, 1.0
    %v4873 = vrcp.pop %v4871
    %v4874 = vmul.f32 1.0, %v4873
    %v4875 = vrcp.pop %v4872
    %v4876 = vmul.f32 1.0, %v4875
    %4879 = vrot.lane.b32.xlu0 %v4874, 96
    %v4880 = vpop.permute.xlu0 %4879
    %4881 = vrot.lane.b32.xlu0 %v4876, 96
    %v4882 = vpop.permute.xlu0 %4881
    %v4885 = vmul.f32 %v4863, %v4880
    %v4886 = vmul.f32 %v4864, %v4882
    %v4887 = vld [vmem:[%s1 + $0x20] sm:$0xff]
    %v4888 = vld [vmem:[%s1 + $0x48] sm:$0xff]
    %v4889 = vld [vmem:[%s1 + $0x70] sm:$0xff]
    %v4890 = vld [vmem:[%s1 + $0x98] sm:$0xff]
    %v4892 = vsel %vm32, %v4885, 0
    %v4895 = vsel %vm32, %v4886, 0
    %4897 = vmatprep.subr.mxu0 0.0
    %4898 = vmatpush1.msra.mxu0 0.0
    %4899 = vmatprep.subr.mxu0 0.0
    %4900 = vmatpush1.msra.mxu0 0.0
    %4901 = vmatprep.subr.mxu0 0.0
    %4902 = vmatpush1.msra.mxu0 0.0
    %4903 = vmatprep.subr.mxu0 0.0
    %4904 = vmatpush1.msra.mxu0 0.0
    %4905 = vmatprep.subr.mxu0 0.0
    %4906 = vmatpush1.msra.mxu0 0.0
    %4907 = vmatprep.subr.mxu0 0.0
    %4908 = vmatpush1.msra.mxu0 0.0
    %4909 = vmatprep.subr.mxu0 0.0
    %4910 = vmatpush1.msra.mxu0 0.0
    %4911 = vmatprep.subr.mxu0 0.0
    %4912 = vmatpush1.msra.mxu0 0.0
    %4913 = vmatprep.subr.mxu0 0.0
    %4914 = vmatpush1.msra.mxu0 0.0
    %4915 = vmatprep.subr.mxu0 0.0
    %4916 = vmatpush1.msra.mxu0 0.0
    %4917 = vmatprep.subr.mxu0 0.0
    %4918 = vmatpush1.msra.mxu0 0.0
    %4919 = vmatprep.subr.mxu0 0.0
    %4920 = vmatpush1.msra.mxu0 0.0
    %4921 = vmatprep.subr.mxu0 0.0
    %v4922 = vand.u32 %v4890, 4294901760
    %4923 = vmatpush1.msra.mxu0 %v4922
    %4924 = vmatprep.subr.mxu0 0.0
    %v4925 = vand.u32 %v4889, 4294901760
    %4926 = vmatpush1.msra.mxu0 %v4925
    %4927 = vmatprep.subr.mxu0 0.0
    %v4928 = vand.u32 %v4888, 4294901760
    %4929 = vmatpush1.msra.mxu0 %v4928
    %4930 = vmatprep.subr.mxu0 0.0
    %v4931 = vand.u32 %v4887, 4294901760
    %4932 = vmatpush1.msra.mxu0 %v4931
    %4933 = vmatprep.subr.mxu0 0.0
    %4934 = vmatpush2.msra.mxu0 0.0
    %4935 = vmatprep.subr.mxu0 0.0
    %4936 = vmatpush2.msra.mxu0 0.0
    %4937 = vmatprep.subr.mxu0 0.0
    %4938 = vmatpush2.msra.mxu0 0.0
    %4939 = vmatprep.subr.mxu0 0.0
    %4940 = vmatpush2.msra.mxu0 0.0
    %4941 = vmatprep.subr.mxu0 0.0
    %4942 = vmatpush2.msra.mxu0 0.0
    %4943 = vmatprep.subr.mxu0 0.0
    %4944 = vmatpush2.msra.mxu0 0.0
    %4945 = vmatprep.subr.mxu0 0.0
    %4946 = vmatpush2.msra.mxu0 0.0
    %4947 = vmatprep.subr.mxu0 0.0
    %4948 = vmatpush2.msra.mxu0 0.0
    %4949 = vmatprep.subr.mxu0 0.0
    %4950 = vmatpush2.msra.mxu0 0.0
    %4951 = vmatprep.subr.mxu0 0.0
    %4952 = vmatpush2.msra.mxu0 0.0
    %4953 = vmatprep.subr.mxu0 0.0
    %4954 = vmatpush2.msra.mxu0 0.0
    %4955 = vmatprep.subr.mxu0 0.0
    %4956 = vmatpush2.msra.mxu0 0.0
    %4957 = vmatprep.subr.mxu0 0.0
    %4958 = vmatpush2.msra.mxu0 0.0
    %4959 = vmatprep.subr.mxu0 0.0
    %4960 = vmatpush2.msra.mxu0 0.0
    %4961 = vmatprep.subr.mxu0 0.0
    %4962 = vmatpush2.msra.mxu0 0.0
    %4963 = vmatprep.subr.mxu0 0.0
    %4964 = vmatpush2.msra.mxu0 0.0
    %4965 = vmatprep.mubr.f32.mxu0 0.0
    %v4966 = vand.u32 %v4892, 4294901760
    %v4967 = vsub.f32 %v4892, %v4966
    %v4968 = vand.u32 %v4967, 4294901760
    %v4969 = vsub.f32 %v4967, %v4968
    %v4970 = vand.u32 %v4969, 4294901760
    %4971 = vmatmul.mubr.f32.gmra.mxu0 %v4970
    %v4972 = vpop.f32.mrf.mxu0
    %v4973 = vadd.f32 0.0, %v4972
    %v4974 = vpop.f32.mrf.mxu0
    %4975 = vmatprep.mubr.f32.mxu0 0.0
    %v4976 = vand.u32 %v4895, 4294901760
    %v4977 = vsub.f32 %v4895, %v4976
    %v4978 = vand.u32 %v4977, 4294901760
    %v4979 = vsub.f32 %v4977, %v4978
    %v4980 = vand.u32 %v4979, 4294901760
    %4981 = vmatmul.mubr.f32.gmra.mxu0 %v4980
    %v4982 = vpop.f32.mrf.mxu0
    %v4983 = vadd.f32 0.0, %v4982
    %v4984 = vpop.f32.mrf.mxu0
    %4985 = vdwg.mxu0
    %4986 = vmatprep.subr.mxu0 0.0
    %4987 = vmatpush1.msra.mxu0 0.0
    %4988 = vmatprep.subr.mxu0 0.0
    %4989 = vmatpush1.msra.mxu0 0.0
    %4990 = vmatprep.subr.mxu0 0.0
    %4991 = vmatpush1.msra.mxu0 0.0
    %4992 = vmatprep.subr.mxu0 0.0
    %4993 = vmatpush1.msra.mxu0 0.0
    %4994 = vmatprep.subr.mxu0 0.0
    %4995 = vmatpush1.msra.mxu0 0.0
    %4996 = vmatprep.subr.mxu0 0.0
    %4997 = vmatpush1.msra.mxu0 0.0
    %4998 = vmatprep.subr.mxu0 0.0
    %4999 = vmatpush1.msra.mxu0 0.0
    %5000 = vmatprep.subr.mxu0 0.0
    %5001 = vmatpush1.msra.mxu0 0.0
    %5002 = vmatprep.subr.mxu0 0.0
    %5003 = vmatpush1.msra.mxu0 0.0
    %5004 = vmatprep.subr.mxu0 0.0
    %5005 = vmatpush1.msra.mxu0 0.0
    %5006 = vmatprep.subr.mxu0 0.0
    %5007 = vmatpush1.msra.mxu0 0.0
    %5008 = vmatprep.subr.mxu0 0.0
    %5009 = vmatpush1.msra.mxu0 0.0
    %5010 = vmatprep.subr.mxu0 0.0
    %v5011 = vand.u32 %v4890, 4294901760
    %v5012 = vsub.f32 %v4890, %v5011
    %v5013 = vand.u32 %v5012, 4294901760
    %v5014 = vsub.f32 %v5012, %v5013
    %v5015 = vand.u32 %v5014, 4294901760
    %5016 = vmatpush1.msra.mxu0 %v5015
    %5017 = vmatprep.subr.mxu0 0.0
    %v5018 = vand.u32 %v4889, 4294901760
    %v5019 = vsub.f32 %v4889, %v5018
    %v5020 = vand.u32 %v5019, 4294901760
    %v5021 = vsub.f32 %v5019, %v5020
    %v5022 = vand.u32 %v5021, 4294901760
    %5023 = vmatpush1.msra.mxu0 %v5022
    %5024 = vmatprep.subr.mxu0 0.0
    %v5025 = vand.u32 %v4888, 4294901760
    %v5026 = vsub.f32 %v4888, %v5025
    %v5027 = vand.u32 %v5026, 4294901760
    %v5028 = vsub.f32 %v5026, %v5027
    %v5029 = vand.u32 %v5028, 4294901760
    %5030 = vmatpush1.msra.mxu0 %v5029
    %5031 = vmatprep.subr.mxu0 0.0
    %v5032 = vand.u32 %v4887, 4294901760
    %v5033 = vsub.f32 %v4887, %v5032
    %v5034 = vand.u32 %v5033, 4294901760
    %v5035 = vsub.f32 %v5033, %v5034
    %v5036 = vand.u32 %v5035, 4294901760
    %5037 = vmatpush1.msra.mxu0 %v5036
    %5038 = vmatprep.subr.mxu0 0.0
    %5039 = vmatpush2.msra.mxu0 0.0
    %5040 = vmatprep.subr.mxu0 0.0
    %5041 = vmatpush2.msra.mxu0 0.0
    %5042 = vmatprep.subr.mxu0 0.0
    %5043 = vmatpush2.msra.mxu0 0.0
    %5044 = vmatprep.subr.mxu0 0.0
    %5045 = vmatpush2.msra.mxu0 0.0
    %5046 = vmatprep.subr.mxu0 0.0
    %5047 = vmatpush2.msra.mxu0 0.0
    %5048 = vmatprep.subr.mxu0 0.0
    %5049 = vmatpush2.msra.mxu0 0.0
    %5050 = vmatprep.subr.mxu0 0.0
    %5051 = vmatpush2.msra.mxu0 0.0
    %5052 = vmatprep.subr.mxu0 0.0
    %5053 = vmatpush2.msra.mxu0 0.0
    %5054 = vmatprep.subr.mxu0 0.0
    %5055 = vmatpush2.msra.mxu0 0.0
    %5056 = vmatprep.subr.mxu0 0.0
    %5057 = vmatpush2.msra.mxu0 0.0
    %5058 = vmatprep.subr.mxu0 0.0
    %5059 = vmatpush2.msra.mxu0 0.0
    %5060 = vmatprep.subr.mxu0 0.0
    %5061 = vmatpush2.msra.mxu0 0.0
    %5062 = vmatprep.subr.mxu0 0.0
    %5063 = vmatpush2.msra.mxu0 0.0
    %5064 = vmatprep.subr.mxu0 0.0
    %5065 = vmatpush2.msra.mxu0 0.0
    %5066 = vmatprep.subr.mxu0 0.0
    %5067 = vmatpush2.msra.mxu0 0.0
    %5068 = vmatprep.subr.mxu0 0.0
    %5069 = vmatpush2.msra.mxu0 0.0
    %5070 = vmatprep.mubr.f32.mxu0 0.0
    %v5071 = vand.u32 %v4892, 4294901760
    %5072 = vmatmul.mubr.f32.gmra.mxu0 %v5071
    %v5073 = vpop.f32.mrf.mxu0
    %v5074 = vadd.f32 %v4973, %v5073
    %v5075 = vpop.f32.mrf.mxu0
    %5076 = vmatprep.mubr.f32.mxu0 0.0
    %v5077 = vand.u32 %v4895, 4294901760
    %5078 = vmatmul.mubr.f32.gmra.mxu0 %v5077
    %v5079 = vpop.f32.mrf.mxu0
    %v5080 = vadd.f32 %v4983, %v5079
    %v5081 = vpop.f32.mrf.mxu0
    %5082 = vdwg.mxu0
    %5083 = vmatprep.subr.mxu0 0.0
    %5084 = vmatpush1.msra.mxu0 0.0
    %5085 = vmatprep.subr.mxu0 0.0
    %5086 = vmatpush1.msra.mxu0 0.0
    %5087 = vmatprep.subr.mxu0 0.0
    %5088 = vmatpush1.msra.mxu0 0.0
    %5089 = vmatprep.subr.mxu0 0.0
    %5090 = vmatpush1.msra.mxu0 0.0
    %5091 = vmatprep.subr.mxu0 0.0
    %5092 = vmatpush1.msra.mxu0 0.0
    %5093 = vmatprep.subr.mxu0 0.0
    %5094 = vmatpush1.msra.mxu0 0.0
    %5095 = vmatprep.subr.mxu0 0.0
    %5096 = vmatpush1.msra.mxu0 0.0
    %5097 = vmatprep.subr.mxu0 0.0
    %5098 = vmatpush1.msra.mxu0 0.0
    %5099 = vmatprep.subr.mxu0 0.0
    %5100 = vmatpush1.msra.mxu0 0.0
    %5101 = vmatprep.subr.mxu0 0.0
    %5102 = vmatpush1.msra.mxu0 0.0
    %5103 = vmatprep.subr.mxu0 0.0
    %5104 = vmatpush1.msra.mxu0 0.0
    %5105 = vmatprep.subr.mxu0 0.0
    %5106 = vmatpush1.msra.mxu0 0.0
    %5107 = vmatprep.subr.mxu0 0.0
    %v5108 = vand.u32 %v4890, 4294901760
    %v5109 = vsub.f32 %v4890, %v5108
    %5110 = vmatpush1.msra.mxu0 %v5109
    %5111 = vmatprep.subr.mxu0 0.0
    %v5112 = vand.u32 %v4889, 4294901760
    %v5113 = vsub.f32 %v4889, %v5112
    %5114 = vmatpush1.msra.mxu0 %v5113
    %5115 = vmatprep.subr.mxu0 0.0
    %v5116 = vand.u32 %v4888, 4294901760
    %v5117 = vsub.f32 %v4888, %v5116
    %5118 = vmatpush1.msra.mxu0 %v5117
    %5119 = vmatprep.subr.mxu0 0.0
    %v5120 = vand.u32 %v4887, 4294901760
    %v5121 = vsub.f32 %v4887, %v5120
    %5122 = vmatpush1.msra.mxu0 %v5121
    %5123 = vmatprep.subr.mxu0 0.0
    %5124 = vmatpush2.msra.mxu0 0.0
    %5125 = vmatprep.subr.mxu0 0.0
    %5126 = vmatpush2.msra.mxu0 0.0
    %5127 = vmatprep.subr.mxu0 0.0
    %5128 = vmatpush2.msra.mxu0 0.0
    %5129 = vmatprep.subr.mxu0 0.0
    %5130 = vmatpush2.msra.mxu0 0.0
    %5131 = vmatprep.subr.mxu0 0.0
    %5132 = vmatpush2.msra.mxu0 0.0
    %5133 = vmatprep.subr.mxu0 0.0
    %5134 = vmatpush2.msra.mxu0 0.0
    %5135 = vmatprep.subr.mxu0 0.0
    %5136 = vmatpush2.msra.mxu0 0.0
    %5137 = vmatprep.subr.mxu0 0.0
    %5138 = vmatpush2.msra.mxu0 0.0
    %5139 = vmatprep.subr.mxu0 0.0
    %5140 = vmatpush2.msra.mxu0 0.0
    %5141 = vmatprep.subr.mxu0 0.0
    %5142 = vmatpush2.msra.mxu0 0.0
    %5143 = vmatprep.subr.mxu0 0.0
    %5144 = vmatpush2.msra.mxu0 0.0
    %5145 = vmatprep.subr.mxu0 0.0
    %5146 = vmatpush2.msra.mxu0 0.0
    %5147 = vmatprep.subr.mxu0 0.0
    %5148 = vmatpush2.msra.mxu0 0.0
    %5149 = vmatprep.subr.mxu0 0.0
    %5150 = vmatpush2.msra.mxu0 0.0
    %5151 = vmatprep.subr.mxu0 0.0
    %5152 = vmatpush2.msra.mxu0 0.0
    %5153 = vmatprep.subr.mxu0 0.0
    %5154 = vmatpush2.msra.mxu0 0.0
    %5155 = vmatprep.mubr.f32.mxu0 0.0
    %v5156 = vand.u32 %v4892, 4294901760
    %v5157 = vsub.f32 %v4892, %v5156
    %5158 = vmatmul.mubr.f32.gmra.mxu0 %v5157
    %v5159 = vpop.f32.mrf.mxu0
    %v5160 = vadd.f32 %v5074, %v5159
    %v5161 = vpop.f32.mrf.mxu0
    %5162 = vmatprep.mubr.f32.mxu0 0.0
    %v5163 = vand.u32 %v4895, 4294901760
    %v5164 = vsub.f32 %v4895, %v5163
    %5165 = vmatmul.mubr.f32.gmra.mxu0 %v5164
    %v5166 = vpop.f32.mrf.mxu0
    %v5167 = vadd.f32 %v5080, %v5166
    %v5168 = vpop.f32.mrf.mxu0
    %5169 = vdwg.mxu0
    %5170 = vmatprep.subr.mxu0 0.0
    %5171 = vmatpush1.msra.mxu0 0.0
    %5172 = vmatprep.subr.mxu0 0.0
    %5173 = vmatpush1.msra.mxu0 0.0
    %5174 = vmatprep.subr.mxu0 0.0
    %5175 = vmatpush1.msra.mxu0 0.0
    %5176 = vmatprep.subr.mxu0 0.0
    %5177 = vmatpush1.msra.mxu0 0.0
    %5178 = vmatprep.subr.mxu0 0.0
    %5179 = vmatpush1.msra.mxu0 0.0
    %5180 = vmatprep.subr.mxu0 0.0
    %5181 = vmatpush1.msra.mxu0 0.0
    %5182 = vmatprep.subr.mxu0 0.0
    %5183 = vmatpush1.msra.mxu0 0.0
    %5184 = vmatprep.subr.mxu0 0.0
    %5185 = vmatpush1.msra.mxu0 0.0
    %5186 = vmatprep.subr.mxu0 0.0
    %5187 = vmatpush1.msra.mxu0 0.0
    %5188 = vmatprep.subr.mxu0 0.0
    %5189 = vmatpush1.msra.mxu0 0.0
    %5190 = vmatprep.subr.mxu0 0.0
    %5191 = vmatpush1.msra.mxu0 0.0
    %5192 = vmatprep.subr.mxu0 0.0
    %5193 = vmatpush1.msra.mxu0 0.0
    %5194 = vmatprep.subr.mxu0 0.0
    %v5195 = vand.u32 %v4890, 4294901760
    %5196 = vmatpush1.msra.mxu0 %v5195
    %5197 = vmatprep.subr.mxu0 0.0
    %v5198 = vand.u32 %v4889, 4294901760
    %5199 = vmatpush1.msra.mxu0 %v5198
    %5200 = vmatprep.subr.mxu0 0.0
    %v5201 = vand.u32 %v4888, 4294901760
    %5202 = vmatpush1.msra.mxu0 %v5201
    %5203 = vmatprep.subr.mxu0 0.0
    %v5204 = vand.u32 %v4887, 4294901760
    %5205 = vmatpush1.msra.mxu0 %v5204
    %5206 = vmatprep.subr.mxu0 0.0
    %5207 = vmatpush2.msra.mxu0 0.0
    %5208 = vmatprep.subr.mxu0 0.0
    %5209 = vmatpush2.msra.mxu0 0.0
    %5210 = vmatprep.subr.mxu0 0.0
    %5211 = vmatpush2.msra.mxu0 0.0
    %5212 = vmatprep.subr.mxu0 0.0
    %5213 = vmatpush2.msra.mxu0 0.0
    %5214 = vmatprep.subr.mxu0 0.0
    %5215 = vmatpush2.msra.mxu0 0.0
    %5216 = vmatprep.subr.mxu0 0.0
    %5217 = vmatpush2.msra.mxu0 0.0
    %5218 = vmatprep.subr.mxu0 0.0
    %5219 = vmatpush2.msra.mxu0 0.0
    %5220 = vmatprep.subr.mxu0 0.0
    %5221 = vmatpush2.msra.mxu0 0.0
    %5222 = vmatprep.subr.mxu0 0.0
    %5223 = vmatpush2.msra.mxu0 0.0
    %5224 = vmatprep.subr.mxu0 0.0
    %5225 = vmatpush2.msra.mxu0 0.0
    %5226 = vmatprep.subr.mxu0 0.0
    %5227 = vmatpush2.msra.mxu0 0.0
    %5228 = vmatprep.subr.mxu0 0.0
    %5229 = vmatpush2.msra.mxu0 0.0
    %5230 = vmatprep.subr.mxu0 0.0
    %5231 = vmatpush2.msra.mxu0 0.0
    %5232 = vmatprep.subr.mxu0 0.0
    %5233 = vmatpush2.msra.mxu0 0.0
    %5234 = vmatprep.subr.mxu0 0.0
    %5235 = vmatpush2.msra.mxu0 0.0
    %5236 = vmatprep.subr.mxu0 0.0
    %5237 = vmatpush2.msra.mxu0 0.0
    %5238 = vmatprep.mubr.f32.mxu0 0.0
    %v5239 = vand.u32 %v4892, 4294901760
    %v5240 = vsub.f32 %v4892, %v5239
    %v5241 = vand.u32 %v5240, 4294901760
    %5242 = vmatmul.mubr.f32.gmra.mxu0 %v5241
    %v5243 = vpop.f32.mrf.mxu0
    %v5244 = vadd.f32 %v5160, %v5243
    %v5245 = vpop.f32.mrf.mxu0
    %5246 = vmatprep.mubr.f32.mxu0 0.0
    %v5247 = vand.u32 %v4895, 4294901760
    %v5248 = vsub.f32 %v4895, %v5247
    %v5249 = vand.u32 %v5248, 4294901760
    %5250 = vmatmul.mubr.f32.gmra.mxu0 %v5249
    %v5251 = vpop.f32.mrf.mxu0
    %v5252 = vadd.f32 %v5167, %v5251
    %v5253 = vpop.f32.mrf.mxu0
    %5254 = vdwg.mxu0
    %5255 = vmatprep.subr.mxu0 0.0
    %5256 = vmatpush1.msra.mxu0 0.0
    %5257 = vmatprep.subr.mxu0 0.0
    %5258 = vmatpush1.msra.mxu0 0.0
    %5259 = vmatprep.subr.mxu0 0.0
    %5260 = vmatpush1.msra.mxu0 0.0
    %5261 = vmatprep.subr.mxu0 0.0
    %5262 = vmatpush1.msra.mxu0 0.0
    %5263 = vmatprep.subr.mxu0 0.0
    %5264 = vmatpush1.msra.mxu0 0.0
    %5265 = vmatprep.subr.mxu0 0.0
    %5266 = vmatpush1.msra.mxu0 0.0
    %5267 = vmatprep.subr.mxu0 0.0
    %5268 = vmatpush1.msra.mxu0 0.0
    %5269 = vmatprep.subr.mxu0 0.0
    %5270 = vmatpush1.msra.mxu0 0.0
    %5271 = vmatprep.subr.mxu0 0.0
    %5272 = vmatpush1.msra.mxu0 0.0
    %5273 = vmatprep.subr.mxu0 0.0
    %5274 = vmatpush1.msra.mxu0 0.0
    %5275 = vmatprep.subr.mxu0 0.0
    %5276 = vmatpush1.msra.mxu0 0.0
    %5277 = vmatprep.subr.mxu0 0.0
    %5278 = vmatpush1.msra.mxu0 0.0
    %5279 = vmatprep.subr.mxu0 0.0
    %v5280 = vand.u32 %v4890, 4294901760
    %v5281 = vsub.f32 %v4890, %v5280
    %v5282 = vand.u32 %v5281, 4294901760
    %5283 = vmatpush1.msra.mxu0 %v5282
    %5284 = vmatprep.subr.mxu0 0.0
    %v5285 = vand.u32 %v4889, 4294901760
    %v5286 = vsub.f32 %v4889, %v5285
    %v5287 = vand.u32 %v5286, 4294901760
    %5288 = vmatpush1.msra.mxu0 %v5287
    %5289 = vmatprep.subr.mxu0 0.0
    %v5290 = vand.u32 %v4888, 4294901760
    %v5291 = vsub.f32 %v4888, %v5290
    %v5292 = vand.u32 %v5291, 4294901760
    %5293 = vmatpush1.msra.mxu0 %v5292
    %5294 = vmatprep.subr.mxu0 0.0
    %v5295 = vand.u32 %v4887, 4294901760
    %v5296 = vsub.f32 %v4887, %v5295
    %v5297 = vand.u32 %v5296, 4294901760
    %5298 = vmatpush1.msra.mxu0 %v5297
    %5299 = vmatprep.subr.mxu0 0.0
    %5300 = vmatpush2.msra.mxu0 0.0
    %5301 = vmatprep.subr.mxu0 0.0
    %5302 = vmatpush2.msra.mxu0 0.0
    %5303 = vmatprep.subr.mxu0 0.0
    %5304 = vmatpush2.msra.mxu0 0.0
    %5305 = vmatprep.subr.mxu0 0.0
    %5306 = vmatpush2.msra.mxu0 0.0
    %5307 = vmatprep.subr.mxu0 0.0
    %5308 = vmatpush2.msra.mxu0 0.0
    %5309 = vmatprep.subr.mxu0 0.0
    %5310 = vmatpush2.msra.mxu0 0.0
    %5311 = vmatprep.subr.mxu0 0.0
    %5312 = vmatpush2.msra.mxu0 0.0
    %5313 = vmatprep.subr.mxu0 0.0
    %5314 = vmatpush2.msra.mxu0 0.0
    %5315 = vmatprep.subr.mxu0 0.0
    %5316 = vmatpush2.msra.mxu0 0.0
    %5317 = vmatprep.subr.mxu0 0.0
    %5318 = vmatpush2.msra.mxu0 0.0
    %5319 = vmatprep.subr.mxu0 0.0
    %5320 = vmatpush2.msra.mxu0 0.0
    %5321 = vmatprep.subr.mxu0 0.0
    %5322 = vmatpush2.msra.mxu0 0.0
    %5323 = vmatprep.subr.mxu0 0.0
    %5324 = vmatpush2.msra.mxu0 0.0
    %5325 = vmatprep.subr.mxu0 0.0
    %5326 = vmatpush2.msra.mxu0 0.0
    %5327 = vmatprep.subr.mxu0 0.0
    %5328 = vmatpush2.msra.mxu0 0.0
    %5329 = vmatprep.subr.mxu0 0.0
    %5330 = vmatpush2.msra.mxu0 0.0
    %5331 = vmatprep.mubr.f32.mxu0 0.0
    %v5332 = vand.u32 %v4892, 4294901760
    %5333 = vmatmul.mubr.f32.gmra.mxu0 %v5332
    %v5334 = vpop.f32.mrf.mxu0
    %v5335 = vadd.f32 %v5244, %v5334
    %v5336 = vpop.f32.mrf.mxu0
    %5337 = vmatprep.mubr.f32.mxu0 0.0
    %v5338 = vand.u32 %v4895, 4294901760
    %5339 = vmatmul.mubr.f32.gmra.mxu0 %v5338
    %v5340 = vpop.f32.mrf.mxu0
    %v5341 = vadd.f32 %v5252, %v5340
    %v5342 = vpop.f32.mrf.mxu0
    %5343 = vdwg.mxu0
    %5344 = vmatprep.subr.mxu0 0.0
    %5345 = vmatpush1.msra.mxu0 0.0
    %5346 = vmatprep.subr.mxu0 0.0
    %5347 = vmatpush1.msra.mxu0 0.0
    %5348 = vmatprep.subr.mxu0 0.0
    %5349 = vmatpush1.msra.mxu0 0.0
    %5350 = vmatprep.subr.mxu0 0.0
    %5351 = vmatpush1.msra.mxu0 0.0
    %5352 = vmatprep.subr.mxu0 0.0
    %5353 = vmatpush1.msra.mxu0 0.0
    %5354 = vmatprep.subr.mxu0 0.0
    %5355 = vmatpush1.msra.mxu0 0.0
    %5356 = vmatprep.subr.mxu0 0.0
    %5357 = vmatpush1.msra.mxu0 0.0
    %5358 = vmatprep.subr.mxu0 0.0
    %5359 = vmatpush1.msra.mxu0 0.0
    %5360 = vmatprep.subr.mxu0 0.0
    %5361 = vmatpush1.msra.mxu0 0.0
    %5362 = vmatprep.subr.mxu0 0.0
    %5363 = vmatpush1.msra.mxu0 0.0
    %5364 = vmatprep.subr.mxu0 0.0
    %5365 = vmatpush1.msra.mxu0 0.0
    %5366 = vmatprep.subr.mxu0 0.0
    %5367 = vmatpush1.msra.mxu0 0.0
    %5368 = vmatprep.subr.mxu0 0.0
    %v5369 = vand.u32 %v4890, 4294901760
    %5370 = vmatpush1.msra.mxu0 %v5369
    %5371 = vmatprep.subr.mxu0 0.0
    %v5372 = vand.u32 %v4889, 4294901760
    %5373 = vmatpush1.msra.mxu0 %v5372
    %5374 = vmatprep.subr.mxu0 0.0
    %v5375 = vand.u32 %v4888, 4294901760
    %5376 = vmatpush1.msra.mxu0 %v5375
    %5377 = vmatprep.subr.mxu0 0.0
    %v5378 = vand.u32 %v4887, 4294901760
    %5379 = vmatpush1.msra.mxu0 %v5378
    %5380 = vmatprep.subr.mxu0 0.0
    %5381 = vmatpush2.msra.mxu0 0.0
    %5382 = vmatprep.subr.mxu0 0.0
    %5383 = vmatpush2.msra.mxu0 0.0
    %5384 = vmatprep.subr.mxu0 0.0
    %5385 = vmatpush2.msra.mxu0 0.0
    %5386 = vmatprep.subr.mxu0 0.0
    %5387 = vmatpush2.msra.mxu0 0.0
    %5388 = vmatprep.subr.mxu0 0.0
    %5389 = vmatpush2.msra.mxu0 0.0
    %5390 = vmatprep.subr.mxu0 0.0
    %5391 = vmatpush2.msra.mxu0 0.0
    %5392 = vmatprep.subr.mxu0 0.0
    %5393 = vmatpush2.msra.mxu0 0.0
    %5394 = vmatprep.subr.mxu0 0.0
    %5395 = vmatpush2.msra.mxu0 0.0
    %5396 = vmatprep.subr.mxu0 0.0
    %5397 = vmatpush2.msra.mxu0 0.0
    %5398 = vmatprep.subr.mxu0 0.0
    %5399 = vmatpush2.msra.mxu0 0.0
    %5400 = vmatprep.subr.mxu0 0.0
    %5401 = vmatpush2.msra.mxu0 0.0
    %5402 = vmatprep.subr.mxu0 0.0
    %5403 = vmatpush2.msra.mxu0 0.0
    %5404 = vmatprep.subr.mxu0 0.0
    %5405 = vmatpush2.msra.mxu0 0.0
    %5406 = vmatprep.subr.mxu0 0.0
    %5407 = vmatpush2.msra.mxu0 0.0
    %5408 = vmatprep.subr.mxu0 0.0
    %5409 = vmatpush2.msra.mxu0 0.0
    %5410 = vmatprep.subr.mxu0 0.0
    %5411 = vmatpush2.msra.mxu0 0.0
    %5412 = vmatprep.mubr.f32.mxu0 0.0
    %v5413 = vand.u32 %v4892, 4294901760
    %5414 = vmatmul.mubr.f32.gmra.mxu0 %v5413
    %v5415 = vpop.f32.mrf.mxu0
    %v5416 = vadd.f32 %v5335, %v5415
    %v5417 = vpop.f32.mrf.mxu0
    %5418 = vmatprep.mubr.f32.mxu0 0.0
    %v5419 = vand.u32 %v4895, 4294901760
    %5420 = vmatmul.mubr.f32.gmra.mxu0 %v5419
    %v5421 = vpop.f32.mrf.mxu0
    %v5422 = vadd.f32 %v5341, %v5421
    %v5423 = vpop.f32.mrf.mxu0
    %5424 = vdwg.mxu0
    %v5425 = vadd.f32 %v4282, %v5416
    %v5426 = vadd.f32 %v4283, %v5422
    %v5427 = vld [vmem:[%s1 + $0xc0] ss:$0 sm:$0xff]
    %v5428 = vadd.f32 %v5425, %v5427
    %v5429 = vadd.f32 %v5426, %v5427
    %v5430 = vmul.f32 %v5428, %v5428
    %v5431 = vmul.f32 %v5429, %v5429
    %v5432 = vsel %vm32, %v5430, 0.0
    %5433 = vadd.xlane.f32.xlu0 %v5432
    %v5434 = vpop.xlane.xlu0 %5433
    %v5435 = vsel %vm32, %v5431, 0.0
    %5436 = vadd.xlane.f32.xlu0 %v5435
    %v5437 = vpop.xlane.xlu0 %5436
    %v5438 = vmul.f32 %v5434, %v39
    %v5439 = vmul.f32 %v5437, %v39
    %v5440 = vrsqrt.pop %v5438
    %v5441 = vmul.f32 %v5438, %v5440
    %vm5442 = vcmp.eq.f32.partialorder %v5438, inf
    %v5443 = vsel %vm5442, %v5438, %v5441
    %vm5444 = vcmp.eq.f32.partialorder %v5438, 0.0
    %v5445 = vand.u32 %v5438, 2147483648
    %v5446 = vsel %vm5444, %v5445, %v5443
    %v5447 = vrsqrt.pop %v5439
    %v5448 = vmul.f32 %v5439, %v5447
    %vm5449 = vcmp.eq.f32.partialorder %v5439, inf
    %v5450 = vsel %vm5449, %v5439, %v5448
    %vm5451 = vcmp.eq.f32.partialorder %v5439, 0.0
    %v5452 = vand.u32 %v5439, 2147483648
    %v5453 = vsel %vm5451, %v5452, %v5450
    %v5454 = vadd.f32 %v5446, 1e-06
    %v5455 = vadd.f32 %v5453, 1e-06
    %v5456 = vrcp.pop %v5454
    %v5457 = vmul.f32 1.0, %v5456
    %v5458 = vrcp.pop %v5455
    %v5459 = vmul.f32 1.0, %v5458
    %v5460 = vmul.f32 %v5428, %v5457
    %v5461 = vmul.f32 %v5429, %v5459
    %s5462 = scalar_lea.vmem %s1, 200
    %v5463 = vld [vmem:[%s5462] sm:$0xff]
    %v5464 = vld [vmem:[%s5462 + $0x8] sm:$0xff]
    %v5465 = vld [vmem:[%s5462 + $0x28] sm:$0xff]
    %v5466 = vld [vmem:[%s5462 + $0x30] sm:$0xff]
    %v5467 = vld [vmem:[%s5462 + $0x50] sm:$0xff]
    %v5468 = vld [vmem:[%s5462 + $0x58] sm:$0xff]
    %v5469 = vld [vmem:[%s5462 + $0x78] sm:$0xff]
    %v5470 = vld [vmem:[%s5462 + $0x80] sm:$0xff]
    %s5471 = scalar_lea.vmem %s5462, 160
    %v5472 = vld [vmem:[%s5471] ss:$8 sm:$0x3]
    %v5474 = vlaneseq
    %v5475 = vshrl.u32 %v5474, 7
    %v5476 = vsub.s32 0, %v5475
    %v5477 = vrot.slane %v5472, %v5476
    %v5478 = vlaneseq
    %v5479 = vshrl.u32 %v5478, 7
    %v5480 = vsub.s32 1, %v5479
    %v5481 = vrot.slane %v5472, %v5480
    %v5485 = vsel %vm32, %v5460, 0
    %v5488 = vsel %vm32, %v5461, 0
    %5490 = vmatprep.subr.mxu0 0.0
    %5491 = vmatpush1.msra.mxu0 0.0
    %5492 = vmatprep.subr.mxu0 0.0
    %5493 = vmatpush1.msra.mxu0 0.0
    %5494 = vmatprep.subr.mxu0 0.0
    %5495 = vmatpush1.msra.mxu0 0.0
    %5496 = vmatprep.subr.mxu0 0.0
    %5497 = vmatpush1.msra.mxu0 0.0
    %5498 = vmatprep.subr.mxu0 0.0
    %5499 = vmatpush1.msra.mxu0 0.0
    %5500 = vmatprep.subr.mxu0 0.0
    %5501 = vmatpush1.msra.mxu0 0.0
    %5502 = vmatprep.subr.mxu0 0.0
    %5503 = vmatpush1.msra.mxu0 0.0
    %5504 = vmatprep.subr.mxu0 0.0
    %5505 = vmatpush1.msra.mxu0 0.0
    %5506 = vmatprep.subr.mxu0 0.0
    %5507 = vmatpush1.msra.mxu0 0.0
    %5508 = vmatprep.subr.mxu0 0.0
    %5509 = vmatpush1.msra.mxu0 0.0
    %5510 = vmatprep.subr.mxu0 0.0
    %5511 = vmatpush1.msra.mxu0 0.0
    %5512 = vmatprep.subr.mxu0 0.0
    %5513 = vmatpush1.msra.mxu0 0.0
    %v5514 = vand.u32 %v5470, 4294901760
    %5515 = vmatprep.subr.mxu0 %v5514
    %v5516 = vand.u32 %v5469, 4294901760
    %5517 = vmatpush1.msra.mxu0 %v5516
    %v5518 = vand.u32 %v5468, 4294901760
    %5519 = vmatprep.subr.mxu0 %v5518
    %v5520 = vand.u32 %v5467, 4294901760
    %5521 = vmatpush1.msra.mxu0 %v5520
    %v5522 = vand.u32 %v5466, 4294901760
    %5523 = vmatprep.subr.mxu0 %v5522
    %v5524 = vand.u32 %v5465, 4294901760
    %5525 = vmatpush1.msra.mxu0 %v5524
    %v5526 = vand.u32 %v5464, 4294901760
    %5527 = vmatprep.subr.mxu0 %v5526
    %v5528 = vand.u32 %v5463, 4294901760
    %5529 = vmatpush1.msra.mxu0 %v5528
    %5530 = vmatprep.subr.mxu0 0.0
    %5531 = vmatpush2.msra.mxu0 0.0
    %5532 = vmatprep.subr.mxu0 0.0
    %5533 = vmatpush2.msra.mxu0 0.0
    %5534 = vmatprep.subr.mxu0 0.0
    %5535 = vmatpush2.msra.mxu0 0.0
    %5536 = vmatprep.subr.mxu0 0.0
    %5537 = vmatpush2.msra.mxu0 0.0
    %5538 = vmatprep.subr.mxu0 0.0
    %5539 = vmatpush2.msra.mxu0 0.0
    %5540 = vmatprep.subr.mxu0 0.0
    %5541 = vmatpush2.msra.mxu0 0.0
    %5542 = vmatprep.subr.mxu0 0.0
    %5543 = vmatpush2.msra.mxu0 0.0
    %5544 = vmatprep.subr.mxu0 0.0
    %5545 = vmatpush2.msra.mxu0 0.0
    %5546 = vmatprep.subr.mxu0 0.0
    %5547 = vmatpush2.msra.mxu0 0.0
    %5548 = vmatprep.subr.mxu0 0.0
    %5549 = vmatpush2.msra.mxu0 0.0
    %5550 = vmatprep.subr.mxu0 0.0
    %5551 = vmatpush2.msra.mxu0 0.0
    %5552 = vmatprep.subr.mxu0 0.0
    %5553 = vmatpush2.msra.mxu0 0.0
    %5554 = vmatprep.subr.mxu0 0.0
    %5555 = vmatpush2.msra.mxu0 0.0
    %5556 = vmatprep.subr.mxu0 0.0
    %5557 = vmatpush2.msra.mxu0 0.0
    %5558 = vmatprep.subr.mxu0 0.0
    %5559 = vmatpush2.msra.mxu0 0.0
    %5560 = vmatprep.subr.mxu0 0.0
    %5561 = vmatpush2.msra.mxu0 0.0
    %5562 = vmatprep.mubr.f32.mxu0 0.0
    %v5563 = vand.u32 %v5485, 4294901760
    %v5564 = vsub.f32 %v5485, %v5563
    %v5565 = vand.u32 %v5564, 4294901760
    %v5566 = vsub.f32 %v5564, %v5565
    %v5567 = vand.u32 %v5566, 4294901760
    %5568 = vmatmul.mubr.f32.gmra.mxu0 %v5567
    %v5569 = vpop.f32.mrf.mxu0
    %v5570 = vadd.f32 %v5477, %v5569
    %v5571 = vpop.f32.mrf.mxu0
    %v5572 = vadd.f32 %v5481, %v5571
    %5573 = vmatprep.mubr.f32.mxu0 0.0
    %v5574 = vand.u32 %v5488, 4294901760
    %v5575 = vsub.f32 %v5488, %v5574
    %v5576 = vand.u32 %v5575, 4294901760
    %v5577 = vsub.f32 %v5575, %v5576
    %v5578 = vand.u32 %v5577, 4294901760
    %5579 = vmatmul.mubr.f32.gmra.mxu0 %v5578
    %v5580 = vpop.f32.mrf.mxu0
    %v5581 = vadd.f32 %v5477, %v5580
    %v5582 = vpop.f32.mrf.mxu0
    %v5583 = vadd.f32 %v5481, %v5582
    %5584 = vdwg.mxu0
    %5585 = vmatprep.subr.mxu0 0.0
    %5586 = vmatpush1.msra.mxu0 0.0
    %5587 = vmatprep.subr.mxu0 0.0
    %5588 = vmatpush1.msra.mxu0 0.0
    %5589 = vmatprep.subr.mxu0 0.0
    %5590 = vmatpush1.msra.mxu0 0.0
    %5591 = vmatprep.subr.mxu0 0.0
    %5592 = vmatpush1.msra.mxu0 0.0
    %5593 = vmatprep.subr.mxu0 0.0
    %5594 = vmatpush1.msra.mxu0 0.0
    %5595 = vmatprep.subr.mxu0 0.0
    %5596 = vmatpush1.msra.mxu0 0.0
    %5597 = vmatprep.subr.mxu0 0.0
    %5598 = vmatpush1.msra.mxu0 0.0
    %5599 = vmatprep.subr.mxu0 0.0
    %5600 = vmatpush1.msra.mxu0 0.0
    %5601 = vmatprep.subr.mxu0 0.0
    %5602 = vmatpush1.msra.mxu0 0.0
    %5603 = vmatprep.subr.mxu0 0.0
    %5604 = vmatpush1.msra.mxu0 0.0
    %5605 = vmatprep.subr.mxu0 0.0
    %5606 = vmatpush1.msra.mxu0 0.0
    %5607 = vmatprep.subr.mxu0 0.0
    %5608 = vmatpush1.msra.mxu0 0.0
    %v5609 = vand.u32 %v5470, 4294901760
    %v5610 = vsub.f32 %v5470, %v5609
    %v5611 = vand.u32 %v5610, 4294901760
    %v5612 = vsub.f32 %v5610, %v5611
    %v5613 = vand.u32 %v5612, 4294901760
    %5614 = vmatprep.subr.mxu0 %v5613
    %v5615 = vand.u32 %v5469, 4294901760
    %v5616 = vsub.f32 %v5469, %v5615
    %v5617 = vand.u32 %v5616, 4294901760
    %v5618 = vsub.f32 %v5616, %v5617
    %v5619 = vand.u32 %v5618, 4294901760
    %5620 = vmatpush1.msra.mxu0 %v5619
    %v5621 = vand.u32 %v5468, 4294901760
    %v5622 = vsub.f32 %v5468, %v5621
    %v5623 = vand.u32 %v5622, 4294901760
    %v5624 = vsub.f32 %v5622, %v5623
    %v5625 = vand.u32 %v5624, 4294901760
    %5626 = vmatprep.subr.mxu0 %v5625
    %v5627 = vand.u32 %v5467, 4294901760
    %v5628 = vsub.f32 %v5467, %v5627
    %v5629 = vand.u32 %v5628, 4294901760
    %v5630 = vsub.f32 %v5628, %v5629
    %v5631 = vand.u32 %v5630, 4294901760
    %5632 = vmatpush1.msra.mxu0 %v5631
    %v5633 = vand.u32 %v5466, 4294901760
    %v5634 = vsub.f32 %v5466, %v5633
    %v5635 = vand.u32 %v5634, 4294901760
    %v5636 = vsub.f32 %v5634, %v5635
    %v5637 = vand.u32 %v5636, 4294901760
    %5638 = vmatprep.subr.mxu0 %v5637
    %v5639 = vand.u32 %v5465, 4294901760
    %v5640 = vsub.f32 %v5465, %v5639
    %v5641 = vand.u32 %v5640, 4294901760
    %v5642 = vsub.f32 %v5640, %v5641
    %v5643 = vand.u32 %v5642, 4294901760
    %5644 = vmatpush1.msra.mxu0 %v5643
    %v5645 = vand.u32 %v5464, 4294901760
    %v5646 = vsub.f32 %v5464, %v5645
    %v5647 = vand.u32 %v5646, 4294901760
    %v5648 = vsub.f32 %v5646, %v5647
    %v5649 = vand.u32 %v5648, 4294901760
    %5650 = vmatprep.subr.mxu0 %v5649
    %v5651 = vand.u32 %v5463, 4294901760
    %v5652 = vsub.f32 %v5463, %v5651
    %v5653 = vand.u32 %v5652, 4294901760
    %v5654 = vsub.f32 %v5652, %v5653
    %v5655 = vand.u32 %v5654, 4294901760
    %5656 = vmatpush1.msra.mxu0 %v5655
    %5657 = vmatprep.subr.mxu0 0.0
    %5658 = vmatpush2.msra.mxu0 0.0
    %5659 = vmatprep.subr.mxu0 0.0
    %5660 = vmatpush2.msra.mxu0 0.0
    %5661 = vmatprep.subr.mxu0 0.0
    %5662 = vmatpush2.msra.mxu0 0.0
    %5663 = vmatprep.subr.mxu0 0.0
    %5664 = vmatpush2.msra.mxu0 0.0
    %5665 = vmatprep.subr.mxu0 0.0
    %5666 = vmatpush2.msra.mxu0 0.0
    %5667 = vmatprep.subr.mxu0 0.0
    %5668 = vmatpush2.msra.mxu0 0.0
    %5669 = vmatprep.subr.mxu0 0.0
    %5670 = vmatpush2.msra.mxu0 0.0
    %5671 = vmatprep.subr.mxu0 0.0
    %5672 = vmatpush2.msra.mxu0 0.0
    %5673 = vmatprep.subr.mxu0 0.0
    %5674 = vmatpush2.msra.mxu0 0.0
    %5675 = vmatprep.subr.mxu0 0.0
    %5676 = vmatpush2.msra.mxu0 0.0
    %5677 = vmatprep.subr.mxu0 0.0
    %5678 = vmatpush2.msra.mxu0 0.0
    %5679 = vmatprep.subr.mxu0 0.0
    %5680 = vmatpush2.msra.mxu0 0.0
    %5681 = vmatprep.subr.mxu0 0.0
    %5682 = vmatpush2.msra.mxu0 0.0
    %5683 = vmatprep.subr.mxu0 0.0
    %5684 = vmatpush2.msra.mxu0 0.0
    %5685 = vmatprep.subr.mxu0 0.0
    %5686 = vmatpush2.msra.mxu0 0.0
    %5687 = vmatprep.subr.mxu0 0.0
    %5688 = vmatpush2.msra.mxu0 0.0
    %5689 = vmatprep.mubr.f32.mxu0 0.0
    %v5690 = vand.u32 %v5485, 4294901760
    %5691 = vmatmul.mubr.f32.gmra.mxu0 %v5690
    %v5692 = vpop.f32.mrf.mxu0
    %v5693 = vadd.f32 %v5570, %v5692
    %v5694 = vpop.f32.mrf.mxu0
    %v5695 = vadd.f32 %v5572, %v5694
    %5696 = vmatprep.mubr.f32.mxu0 0.0
    %v5697 = vand.u32 %v5488, 4294901760
    %5698 = vmatmul.mubr.f32.gmra.mxu0 %v5697
    %v5699 = vpop.f32.mrf.mxu0
    %v5700 = vadd.f32 %v5581, %v5699
    %v5701 = vpop.f32.mrf.mxu0
    %v5702 = vadd.f32 %v5583, %v5701
    %5703 = vdwg.mxu0
    %5704 = vmatprep.subr.mxu0 0.0
    %5705 = vmatpush1.msra.mxu0 0.0
    %5706 = vmatprep.subr.mxu0 0.0
    %5707 = vmatpush1.msra.mxu0 0.0
    %5708 = vmatprep.subr.mxu0 0.0
    %5709 = vmatpush1.msra.mxu0 0.0
    %5710 = vmatprep.subr.mxu0 0.0
    %5711 = vmatpush1.msra.mxu0 0.0
    %5712 = vmatprep.subr.mxu0 0.0
    %5713 = vmatpush1.msra.mxu0 0.0
    %5714 = vmatprep.subr.mxu0 0.0
    %5715 = vmatpush1.msra.mxu0 0.0
    %5716 = vmatprep.subr.mxu0 0.0
    %5717 = vmatpush1.msra.mxu0 0.0
    %5718 = vmatprep.subr.mxu0 0.0
    %5719 = vmatpush1.msra.mxu0 0.0
    %5720 = vmatprep.subr.mxu0 0.0
    %5721 = vmatpush1.msra.mxu0 0.0
    %5722 = vmatprep.subr.mxu0 0.0
    %5723 = vmatpush1.msra.mxu0 0.0
    %5724 = vmatprep.subr.mxu0 0.0
    %5725 = vmatpush1.msra.mxu0 0.0
    %5726 = vmatprep.subr.mxu0 0.0
    %5727 = vmatpush1.msra.mxu0 0.0
    %v5728 = vand.u32 %v5470, 4294901760
    %v5729 = vsub.f32 %v5470, %v5728
    %5730 = vmatprep.subr.mxu0 %v5729
    %v5731 = vand.u32 %v5469, 4294901760
    %v5732 = vsub.f32 %v5469, %v5731
    %5733 = vmatpush1.msra.mxu0 %v5732
    %v5734 = vand.u32 %v5468, 4294901760
    %v5735 = vsub.f32 %v5468, %v5734
    %5736 = vmatprep.subr.mxu0 %v5735
    %v5737 = vand.u32 %v5467, 4294901760
    %v5738 = vsub.f32 %v5467, %v5737
    %5739 = vmatpush1.msra.mxu0 %v5738
    %v5740 = vand.u32 %v5466, 4294901760
    %v5741 = vsub.f32 %v5466, %v5740
    %5742 = vmatprep.subr.mxu0 %v5741
    %v5743 = vand.u32 %v5465, 4294901760
    %v5744 = vsub.f32 %v5465, %v5743
    %5745 = vmatpush1.msra.mxu0 %v5744
    %v5746 = vand.u32 %v5464, 4294901760
    %v5747 = vsub.f32 %v5464, %v5746
    %5748 = vmatprep.subr.mxu0 %v5747
    %v5749 = vand.u32 %v5463, 4294901760
    %v5750 = vsub.f32 %v5463, %v5749
    %5751 = vmatpush1.msra.mxu0 %v5750
    %5752 = vmatprep.subr.mxu0 0.0
    %5753 = vmatpush2.msra.mxu0 0.0
    %5754 = vmatprep.subr.mxu0 0.0
    %5755 = vmatpush2.msra.mxu0 0.0
    %5756 = vmatprep.subr.mxu0 0.0
    %5757 = vmatpush2.msra.mxu0 0.0
    %5758 = vmatprep.subr.mxu0 0.0
    %5759 = vmatpush2.msra.mxu0 0.0
    %5760 = vmatprep.subr.mxu0 0.0
    %5761 = vmatpush2.msra.mxu0 0.0
    %5762 = vmatprep.subr.mxu0 0.0
    %5763 = vmatpush2.msra.mxu0 0.0
    %5764 = vmatprep.subr.mxu0 0.0
    %5765 = vmatpush2.msra.mxu0 0.0
    %5766 = vmatprep.subr.mxu0 0.0
    %5767 = vmatpush2.msra.mxu0 0.0
    %5768 = vmatprep.subr.mxu0 0.0
    %5769 = vmatpush2.msra.mxu0 0.0
    %5770 = vmatprep.subr.mxu0 0.0
    %5771 = vmatpush2.msra.mxu0 0.0
    %5772 = vmatprep.subr.mxu0 0.0
    %5773 = vmatpush2.msra.mxu0 0.0
    %5774 = vmatprep.subr.mxu0 0.0
    %5775 = vmatpush2.msra.mxu0 0.0
    %5776 = vmatprep.subr.mxu0 0.0
    %5777 = vmatpush2.msra.mxu0 0.0
    %5778 = vmatprep.subr.mxu0 0.0
    %5779 = vmatpush2.msra.mxu0 0.0
    %5780 = vmatprep.subr.mxu0 0.0
    %5781 = vmatpush2.msra.mxu0 0.0
    %5782 = vmatprep.subr.mxu0 0.0
    %5783 = vmatpush2.msra.mxu0 0.0
    %5784 = vmatprep.mubr.f32.mxu0 0.0
    %v5785 = vand.u32 %v5485, 4294901760
    %v5786 = vsub.f32 %v5485, %v5785
    %5787 = vmatmul.mubr.f32.gmra.mxu0 %v5786
    %v5788 = vpop.f32.mrf.mxu0
    %v5789 = vadd.f32 %v5693, %v5788
    %v5790 = vpop.f32.mrf.mxu0
    %v5791 = vadd.f32 %v5695, %v5790
    %5792 = vmatprep.mubr.f32.mxu0 0.0
    %v5793 = vand.u32 %v5488, 4294901760
    %v5794 = vsub.f32 %v5488, %v5793
    %5795 = vmatmul.mubr.f32.gmra.mxu0 %v5794
    %v5796 = vpop.f32.mrf.mxu0
    %v5797 = vadd.f32 %v5700, %v5796
    %v5798 = vpop.f32.mrf.mxu0
    %v5799 = vadd.f32 %v5702, %v5798
    %5800 = vdwg.mxu0
    %5801 = vmatprep.subr.mxu0 0.0
    %5802 = vmatpush1.msra.mxu0 0.0
    %5803 = vmatprep.subr.mxu0 0.0
    %5804 = vmatpush1.msra.mxu0 0.0
    %5805 = vmatprep.subr.mxu0 0.0
    %5806 = vmatpush1.msra.mxu0 0.0
    %5807 = vmatprep.subr.mxu0 0.0
    %5808 = vmatpush1.msra.mxu0 0.0
    %5809 = vmatprep.subr.mxu0 0.0
    %5810 = vmatpush1.msra.mxu0 0.0
    %5811 = vmatprep.subr.mxu0 0.0
    %5812 = vmatpush1.msra.mxu0 0.0
    %5813 = vmatprep.subr.mxu0 0.0
    %5814 = vmatpush1.msra.mxu0 0.0
    %5815 = vmatprep.subr.mxu0 0.0
    %5816 = vmatpush1.msra.mxu0 0.0
    %5817 = vmatprep.subr.mxu0 0.0
    %5818 = vmatpush1.msra.mxu0 0.0
    %5819 = vmatprep.subr.mxu0 0.0
    %5820 = vmatpush1.msra.mxu0 0.0
    %5821 = vmatprep.subr.mxu0 0.0
    %5822 = vmatpush1.msra.mxu0 0.0
    %5823 = vmatprep.subr.mxu0 0.0
    %5824 = vmatpush1.msra.mxu0 0.0
    %v5825 = vand.u32 %v5470, 4294901760
    %5826 = vmatprep.subr.mxu0 %v5825
    %v5827 = vand.u32 %v5469, 4294901760
    %5828 = vmatpush1.msra.mxu0 %v5827
    %v5829 = vand.u32 %v5468, 4294901760
    %5830 = vmatprep.subr.mxu0 %v5829
    %v5831 = vand.u32 %v5467, 4294901760
    %5832 = vmatpush1.msra.mxu0 %v5831
    %v5833 = vand.u32 %v5466, 4294901760
    %5834 = vmatprep.subr.mxu0 %v5833
    %v5835 = vand.u32 %v5465, 4294901760
    %5836 = vmatpush1.msra.mxu0 %v5835
    %v5837 = vand.u32 %v5464, 4294901760
    %5838 = vmatprep.subr.mxu0 %v5837
    %v5839 = vand.u32 %v5463, 4294901760
    %5840 = vmatpush1.msra.mxu0 %v5839
    %5841 = vmatprep.subr.mxu0 0.0
    %5842 = vmatpush2.msra.mxu0 0.0
    %5843 = vmatprep.subr.mxu0 0.0
    %5844 = vmatpush2.msra.mxu0 0.0
    %5845 = vmatprep.subr.mxu0 0.0
    %5846 = vmatpush2.msra.mxu0 0.0
    %5847 = vmatprep.subr.mxu0 0.0
    %5848 = vmatpush2.msra.mxu0 0.0
    %5849 = vmatprep.subr.mxu0 0.0
    %5850 = vmatpush2.msra.mxu0 0.0
    %5851 = vmatprep.subr.mxu0 0.0
    %5852 = vmatpush2.msra.mxu0 0.0
    %5853 = vmatprep.subr.mxu0 0.0
    %5854 = vmatpush2.msra.mxu0 0.0
    %5855 = vmatprep.subr.mxu0 0.0
    %5856 = vmatpush2.msra.mxu0 0.0
    %5857 = vmatprep.subr.mxu0 0.0
    %5858 = vmatpush2.msra.mxu0 0.0
    %5859 = vmatprep.subr.mxu0 0.0
    %5860 = vmatpush2.msra.mxu0 0.0
    %5861 = vmatprep.subr.mxu0 0.0
    %5862 = vmatpush2.msra.mxu0 0.0
    %5863 = vmatprep.subr.mxu0 0.0
    %5864 = vmatpush2.msra.mxu0 0.0
    %5865 = vmatprep.subr.mxu0 0.0
    %5866 = vmatpush2.msra.mxu0 0.0
    %5867 = vmatprep.subr.mxu0 0.0
    %5868 = vmatpush2.msra.mxu0 0.0
    %5869 = vmatprep.subr.mxu0 0.0
    %5870 = vmatpush2.msra.mxu0 0.0
    %5871 = vmatprep.subr.mxu0 0.0
    %5872 = vmatpush2.msra.mxu0 0.0
    %5873 = vmatprep.mubr.f32.mxu0 0.0
    %v5874 = vand.u32 %v5485, 4294901760
    %v5875 = vsub.f32 %v5485, %v5874
    %v5876 = vand.u32 %v5875, 4294901760
    %5877 = vmatmul.mubr.f32.gmra.mxu0 %v5876
    %v5878 = vpop.f32.mrf.mxu0
    %v5879 = vadd.f32 %v5789, %v5878
    %v5880 = vpop.f32.mrf.mxu0
    %v5881 = vadd.f32 %v5791, %v5880
    %5882 = vmatprep.mubr.f32.mxu0 0.0
    %v5883 = vand.u32 %v5488, 4294901760
    %v5884 = vsub.f32 %v5488, %v5883
    %v5885 = vand.u32 %v5884, 4294901760
    %5886 = vmatmul.mubr.f32.gmra.mxu0 %v5885
    %v5887 = vpop.f32.mrf.mxu0
    %v5888 = vadd.f32 %v5797, %v5887
    %v5889 = vpop.f32.mrf.mxu0
    %v5890 = vadd.f32 %v5799, %v5889
    %5891 = vdwg.mxu0
    %5892 = vmatprep.subr.mxu0 0.0
    %5893 = vmatpush1.msra.mxu0 0.0
    %5894 = vmatprep.subr.mxu0 0.0
    %5895 = vmatpush1.msra.mxu0 0.0
    %5896 = vmatprep.subr.mxu0 0.0
    %5897 = vmatpush1.msra.mxu0 0.0
    %5898 = vmatprep.subr.mxu0 0.0
    %5899 = vmatpush1.msra.mxu0 0.0
    %5900 = vmatprep.subr.mxu0 0.0
    %5901 = vmatpush1.msra.mxu0 0.0
    %5902 = vmatprep.subr.mxu0 0.0
    %5903 = vmatpush1.msra.mxu0 0.0
    %5904 = vmatprep.subr.mxu0 0.0
    %5905 = vmatpush1.msra.mxu0 0.0
    %5906 = vmatprep.subr.mxu0 0.0
    %5907 = vmatpush1.msra.mxu0 0.0
    %5908 = vmatprep.subr.mxu0 0.0
    %5909 = vmatpush1.msra.mxu0 0.0
    %5910 = vmatprep.subr.mxu0 0.0
    %5911 = vmatpush1.msra.mxu0 0.0
    %5912 = vmatprep.subr.mxu0 0.0
    %5913 = vmatpush1.msra.mxu0 0.0
    %5914 = vmatprep.subr.mxu0 0.0
    %5915 = vmatpush1.msra.mxu0 0.0
    %v5916 = vand.u32 %v5470, 4294901760
    %v5917 = vsub.f32 %v5470, %v5916
    %v5918 = vand.u32 %v5917, 4294901760
    %5919 = vmatprep.subr.mxu0 %v5918
    %v5920 = vand.u32 %v5469, 4294901760
    %v5921 = vsub.f32 %v5469, %v5920
    %v5922 = vand.u32 %v5921, 4294901760
    %5923 = vmatpush1.msra.mxu0 %v5922
    %v5924 = vand.u32 %v5468, 4294901760
    %v5925 = vsub.f32 %v5468, %v5924
    %v5926 = vand.u32 %v5925, 4294901760
    %5927 = vmatprep.subr.mxu0 %v5926
    %v5928 = vand.u32 %v5467, 4294901760
    %v5929 = vsub.f32 %v5467, %v5928
    %v5930 = vand.u32 %v5929, 4294901760
    %5931 = vmatpush1.msra.mxu0 %v5930
    %v5932 = vand.u32 %v5466, 4294901760
    %v5933 = vsub.f32 %v5466, %v5932
    %v5934 = vand.u32 %v5933, 4294901760
    %5935 = vmatprep.subr.mxu0 %v5934
    %v5936 = vand.u32 %v5465, 4294901760
    %v5937 = vsub.f32 %v5465, %v5936
    %v5938 = vand.u32 %v5937, 4294901760
    %5939 = vmatpush1.msra.mxu0 %v5938
    %v5940 = vand.u32 %v5464, 4294901760
    %v5941 = vsub.f32 %v5464, %v5940
    %v5942 = vand.u32 %v5941, 4294901760
    %5943 = vmatprep.subr.mxu0 %v5942
    %v5944 = vand.u32 %v5463, 4294901760
    %v5945 = vsub.f32 %v5463, %v5944
    %v5946 = vand.u32 %v5945, 4294901760
    %5947 = vmatpush1.msra.mxu0 %v5946
    %5948 = vmatprep.subr.mxu0 0.0
    %5949 = vmatpush2.msra.mxu0 0.0
    %5950 = vmatprep.subr.mxu0 0.0
    %5951 = vmatpush2.msra.mxu0 0.0
    %5952 = vmatprep.subr.mxu0 0.0
    %5953 = vmatpush2.msra.mxu0 0.0
    %5954 = vmatprep.subr.mxu0 0.0
    %5955 = vmatpush2.msra.mxu0 0.0
    %5956 = vmatprep.subr.mxu0 0.0
    %5957 = vmatpush2.msra.mxu0 0.0
    %5958 = vmatprep.subr.mxu0 0.0
    %5959 = vmatpush2.msra.mxu0 0.0
    %5960 = vmatprep.subr.mxu0 0.0
    %5961 = vmatpush2.msra.mxu0 0.0
    %5962 = vmatprep.subr.mxu0 0.0
    %5963 = vmatpush2.msra.mxu0 0.0
    %5964 = vmatprep.subr.mxu0 0.0
    %5965 = vmatpush2.msra.mxu0 0.0
    %5966 = vmatprep.subr.mxu0 0.0
    %5967 = vmatpush2.msra.mxu0 0.0
    %5968 = vmatprep.subr.mxu0 0.0
    %5969 = vmatpush2.msra.mxu0 0.0
    %5970 = vmatprep.subr.mxu0 0.0
    %5971 = vmatpush2.msra.mxu0 0.0
    %5972 = vmatprep.subr.mxu0 0.0
    %5973 = vmatpush2.msra.mxu0 0.0
    %5974 = vmatprep.subr.mxu0 0.0
    %5975 = vmatpush2.msra.mxu0 0.0
    %5976 = vmatprep.subr.mxu0 0.0
    %5977 = vmatpush2.msra.mxu0 0.0
    %5978 = vmatprep.subr.mxu0 0.0
    %5979 = vmatpush2.msra.mxu0 0.0
    %5980 = vmatprep.mubr.f32.mxu0 0.0
    %v5981 = vand.u32 %v5485, 4294901760
    %5982 = vmatmul.mubr.f32.gmra.mxu0 %v5981
    %v5983 = vpop.f32.mrf.mxu0
    %v5984 = vadd.f32 %v5879, %v5983
    %v5985 = vpop.f32.mrf.mxu0
    %v5986 = vadd.f32 %v5881, %v5985
    %5987 = vmatprep.mubr.f32.mxu0 0.0
    %v5988 = vand.u32 %v5488, 4294901760
    %5989 = vmatmul.mubr.f32.gmra.mxu0 %v5988
    %v5990 = vpop.f32.mrf.mxu0
    %v5991 = vadd.f32 %v5888, %v5990
    %v5992 = vpop.f32.mrf.mxu0
    %v5993 = vadd.f32 %v5890, %v5992
    %5994 = vdwg.mxu0
    %5995 = vmatprep.subr.mxu0 0.0
    %5996 = vmatpush1.msra.mxu0 0.0
    %5997 = vmatprep.subr.mxu0 0.0
    %5998 = vmatpush1.msra.mxu0 0.0
    %5999 = vmatprep.subr.mxu0 0.0
    %6000 = vmatpush1.msra.mxu0 0.0
    %6001 = vmatprep.subr.mxu0 0.0
    %6002 = vmatpush1.msra.mxu0 0.0
    %6003 = vmatprep.subr.mxu0 0.0
    %6004 = vmatpush1.msra.mxu0 0.0
    %6005 = vmatprep.subr.mxu0 0.0
    %6006 = vmatpush1.msra.mxu0 0.0
    %6007 = vmatprep.subr.mxu0 0.0
    %6008 = vmatpush1.msra.mxu0 0.0
    %6009 = vmatprep.subr.mxu0 0.0
    %6010 = vmatpush1.msra.mxu0 0.0
    %6011 = vmatprep.subr.mxu0 0.0
    %6012 = vmatpush1.msra.mxu0 0.0
    %6013 = vmatprep.subr.mxu0 0.0
    %6014 = vmatpush1.msra.mxu0 0.0
    %6015 = vmatprep.subr.mxu0 0.0
    %6016 = vmatpush1.msra.mxu0 0.0
    %6017 = vmatprep.subr.mxu0 0.0
    %6018 = vmatpush1.msra.mxu0 0.0
    %v6019 = vand.u32 %v5470, 4294901760
    %6020 = vmatprep.subr.mxu0 %v6019
    %v6021 = vand.u32 %v5469, 4294901760
    %6022 = vmatpush1.msra.mxu0 %v6021
    %v6023 = vand.u32 %v5468, 4294901760
    %6024 = vmatprep.subr.mxu0 %v6023
    %v6025 = vand.u32 %v5467, 4294901760
    %6026 = vmatpush1.msra.mxu0 %v6025
    %v6027 = vand.u32 %v5466, 4294901760
    %6028 = vmatprep.subr.mxu0 %v6027
    %v6029 = vand.u32 %v5465, 4294901760
    %6030 = vmatpush1.msra.mxu0 %v6029
    %v6031 = vand.u32 %v5464, 4294901760
    %6032 = vmatprep.subr.mxu0 %v6031
    %v6033 = vand.u32 %v5463, 4294901760
    %6034 = vmatpush1.msra.mxu0 %v6033
    %6035 = vmatprep.subr.mxu0 0.0
    %6036 = vmatpush2.msra.mxu0 0.0
    %6037 = vmatprep.subr.mxu0 0.0
    %6038 = vmatpush2.msra.mxu0 0.0
    %6039 = vmatprep.subr.mxu0 0.0
    %6040 = vmatpush2.msra.mxu0 0.0
    %6041 = vmatprep.subr.mxu0 0.0
    %6042 = vmatpush2.msra.mxu0 0.0
    %6043 = vmatprep.subr.mxu0 0.0
    %6044 = vmatpush2.msra.mxu0 0.0
    %6045 = vmatprep.subr.mxu0 0.0
    %6046 = vmatpush2.msra.mxu0 0.0
    %6047 = vmatprep.subr.mxu0 0.0
    %6048 = vmatpush2.msra.mxu0 0.0
    %6049 = vmatprep.subr.mxu0 0.0
    %6050 = vmatpush2.msra.mxu0 0.0
    %6051 = vmatprep.subr.mxu0 0.0
    %6052 = vmatpush2.msra.mxu0 0.0
    %6053 = vmatprep.subr.mxu0 0.0
    %6054 = vmatpush2.msra.mxu0 0.0
    %6055 = vmatprep.subr.mxu0 0.0
    %6056 = vmatpush2.msra.mxu0 0.0
    %6057 = vmatprep.subr.mxu0 0.0
    %6058 = vmatpush2.msra.mxu0 0.0
    %6059 = vmatprep.subr.mxu0 0.0
    %6060 = vmatpush2.msra.mxu0 0.0
    %6061 = vmatprep.subr.mxu0 0.0
    %6062 = vmatpush2.msra.mxu0 0.0
    %6063 = vmatprep.subr.mxu0 0.0
    %6064 = vmatpush2.msra.mxu0 0.0
    %6065 = vmatprep.subr.mxu0 0.0
    %6066 = vmatpush2.msra.mxu0 0.0
    %6067 = vmatprep.mubr.f32.mxu0 0.0
    %v6068 = vand.u32 %v5485, 4294901760
    %6069 = vmatmul.mubr.f32.gmra.mxu0 %v6068
    %v6070 = vpop.f32.mrf.mxu0
    %v6071 = vadd.f32 %v5984, %v6070
    %v6072 = vpop.f32.mrf.mxu0
    %v6073 = vadd.f32 %v5986, %v6072
    %6074 = vmatprep.mubr.f32.mxu0 0.0
    %v6075 = vand.u32 %v5488, 4294901760
    %6076 = vmatmul.mubr.f32.gmra.mxu0 %v6075
    %v6077 = vpop.f32.mrf.mxu0
    %v6078 = vadd.f32 %v5991, %v6077
    %v6079 = vpop.f32.mrf.mxu0
    %v6080 = vadd.f32 %v5993, %v6079
    %6081 = vdwg.mxu0
    %v6082 = vmul.f32 %v6071, %v25
    %v6083 = vmul.f32 %v6078, %v26
    %v6084 = vmul.f32 %v6071, %v688
    %v6085 = vmul.f32 %v6073, %v688
    %v6086 = vmul.f32 %v6078, %v690
    %v6087 = vmul.f32 %v6080, %v690
    %6092 = vrot.lane.b32.xlu0 %v6084, 32
    %v6093 = vpop.permute.xlu0 %6092
    %6094 = vrot.lane.b32.xlu0 %v6085, 32
    %v6095 = vpop.permute.xlu0 %6094
    %6096 = vrot.lane.b32.xlu0 %v6086, 32
    %v6097 = vpop.permute.xlu0 %6096
    %6098 = vrot.lane.b32.xlu0 %v6087, 32
    %v6099 = vpop.permute.xlu0 %6098
    %v6100 = vsel %vm32, %v6093, %v6095
    %v6101 = vsel %vm32, %v6097, %v6099
    %v6104 = vadd.f32 %v6082, %v6100
    %v6105 = vadd.f32 %v6083, %v6101
    %6108 = vrot.lane.b32.xlu0 %v6104, 120
    %v6109 = vpop.permute.xlu0 %6108
    %6110 = vrot.lane.b32.xlu0 %v6105, 120
    %v6111 = vpop.permute.xlu0 %6110
    %6114 = vrot.lane.b32.xlu0 %v6104, 112
    %v6115 = vpop.permute.xlu0 %6114
    %6116 = vrot.lane.b32.xlu0 %v6105, 112
    %v6117 = vpop.permute.xlu0 %6116
    %6120 = vrot.lane.b32.xlu0 %v6104, 104
    %v6121 = vpop.permute.xlu0 %6120
    %6122 = vrot.lane.b32.xlu0 %v6105, 104
    %v6123 = vpop.permute.xlu0 %6122
    %6126 = vrot.lane.b32.xlu0 %v6104, 96
    %v6127 = vpop.permute.xlu0 %6126
    %6128 = vrot.lane.b32.xlu0 %v6105, 96
    %v6129 = vpop.permute.xlu0 %6128
    %6132 = vrot.lane.b32.xlu0 %v6104, 88
    %v6133 = vpop.permute.xlu0 %6132
    %6134 = vrot.lane.b32.xlu0 %v6105, 88
    %v6135 = vpop.permute.xlu0 %6134
    %6138 = vrot.lane.b32.xlu0 %v6104, 80
    %v6139 = vpop.permute.xlu0 %6138
    %6140 = vrot.lane.b32.xlu0 %v6105, 80
    %v6141 = vpop.permute.xlu0 %6140
    %6144 = vrot.lane.b32.xlu0 %v6104, 72
    %v6145 = vpop.permute.xlu0 %6144
    %6146 = vrot.lane.b32.xlu0 %v6105, 72
    %v6147 = vpop.permute.xlu0 %6146
    %6150 = vrot.lane.b32.xlu0 %v6104, 64
    %v6151 = vpop.permute.xlu0 %6150
    %6152 = vrot.lane.b32.xlu0 %v6105, 64
    %v6153 = vpop.permute.xlu0 %6152
    %6156 = vrot.lane.b32.xlu0 %v6104, 56
    %v6157 = vpop.permute.xlu0 %6156
    %6158 = vrot.lane.b32.xlu0 %v6105, 56
    %v6159 = vpop.permute.xlu0 %6158
    %6162 = vrot.lane.b32.xlu0 %v6104, 48
    %v6163 = vpop.permute.xlu0 %6162
    %6164 = vrot.lane.b32.xlu0 %v6105, 48
    %v6165 = vpop.permute.xlu0 %6164
    %6168 = vrot.lane.b32.xlu0 %v6104, 40
    %v6169 = vpop.permute.xlu0 %6168
    %6170 = vrot.lane.b32.xlu0 %v6105, 40
    %v6171 = vpop.permute.xlu0 %6170
    %v6174 = vcombine.low %v6104, %v6115
    %v6175 = vcombine.high %v6104, %v6115
    %v6177 = vunpack.c.l.s4 1983009808
    %v6178 = vunpack.c.0.s8 %v6177
    %v6179 = vlaneseq
    %v6180 = vshrl.u32 %v6179, 7
    %v6181 = vsub.s32 %v6178, %v6180
    %v6182 = vrot.slane %v6174, %v6181
    %v6184 = vunpack.c.l.s4 1983009808
    %v6185 = vunpack.c.0.s8 %v6184
    %v6186 = vlaneseq
    %v6187 = vshrl.u32 %v6186, 7
    %v6188 = vsub.s32 %v6185, %v6187
    %v6189 = vrot.slane %v6175, %v6188
    %v6190 = vcombine.low %v6109, %v6121
    %v6191 = vcombine.high %v6109, %v6121
    %v6193 = vunpack.c.l.s4 1983009808
    %v6194 = vunpack.c.0.s8 %v6193
    %v6195 = vlaneseq
    %v6196 = vshrl.u32 %v6195, 7
    %v6197 = vsub.s32 %v6194, %v6196
    %v6198 = vrot.slane %v6190, %v6197
    %v6200 = vunpack.c.l.s4 1983009808
    %v6201 = vunpack.c.0.s8 %v6200
    %v6202 = vlaneseq
    %v6203 = vshrl.u32 %v6202, 7
    %v6204 = vsub.s32 %v6201, %v6203
    %v6205 = vrot.slane %v6191, %v6204
    %v6206 = vcombine.low %v6127, %v6139
    %v6207 = vcombine.high %v6127, %v6139
    %v6209 = vunpack.c.l.s4 1983009808
    %v6210 = vunpack.c.0.s8 %v6209
    %v6211 = vlaneseq
    %v6212 = vshrl.u32 %v6211, 7
    %v6213 = vsub.s32 %v6210, %v6212
    %v6214 = vrot.slane %v6206, %v6213
    %v6216 = vunpack.c.l.s4 1983009808
    %v6217 = vunpack.c.0.s8 %v6216
    %v6218 = vlaneseq
    %v6219 = vshrl.u32 %v6218, 7
    %v6220 = vsub.s32 %v6217, %v6219
    %v6221 = vrot.slane %v6207, %v6220
    %v6222 = vcombine.low %v6133, %v6145
    %v6223 = vcombine.high %v6133, %v6145
    %v6225 = vunpack.c.l.s4 1983009808
    %v6226 = vunpack.c.0.s8 %v6225
    %v6227 = vlaneseq
    %v6228 = vshrl.u32 %v6227, 7
    %v6229 = vsub.s32 %v6226, %v6228
    %v6230 = vrot.slane %v6222, %v6229
    %v6232 = vunpack.c.l.s4 1983009808
    %v6233 = vunpack.c.0.s8 %v6232
    %v6234 = vlaneseq
    %v6235 = vshrl.u32 %v6234, 7
    %v6236 = vsub.s32 %v6233, %v6235
    %v6237 = vrot.slane %v6223, %v6236
    %v6238 = vcombine.low %v6182, %v6198
    %v6239 = vcombine.high %v6182, %v6198
    %v6241 = vunpack.c.l.s4 1934713408
    %v6242 = vunpack.c.0.s8 %v6241
    %v6243 = vlaneseq
    %v6244 = vshrl.u32 %v6243, 7
    %v6245 = vsub.s32 %v6242, %v6244
    %v6246 = vrot.slane %v6238, %v6245
    %v6248 = vunpack.c.l.s4 1934713408
    %v6249 = vunpack.c.0.s8 %v6248
    %v6250 = vlaneseq
    %v6251 = vshrl.u32 %v6250, 7
    %v6252 = vsub.s32 %v6249, %v6251
    %v6253 = vrot.slane %v6239, %v6252
    %v6254 = vcombine.low %v6189, %v6205
    %v6255 = vcombine.high %v6189, %v6205
    %v6257 = vunpack.c.l.s4 1934713408
    %v6258 = vunpack.c.0.s8 %v6257
    %v6259 = vlaneseq
    %v6260 = vshrl.u32 %v6259, 7
    %v6261 = vsub.s32 %v6258, %v6260
    %v6262 = vrot.slane %v6254, %v6261
    %v6264 = vunpack.c.l.s4 1934713408
    %v6265 = vunpack.c.0.s8 %v6264
    %v6266 = vlaneseq
    %v6267 = vshrl.u32 %v6266, 7
    %v6268 = vsub.s32 %v6265, %v6267
    %v6269 = vrot.slane %v6255, %v6268
    %v6270 = vcombine.low %v6214, %v6230
    %v6271 = vcombine.high %v6214, %v6230
    %v6273 = vunpack.c.l.s4 1934713408
    %v6274 = vunpack.c.0.s8 %v6273
    %v6275 = vlaneseq
    %v6276 = vshrl.u32 %v6275, 7
    %v6277 = vsub.s32 %v6274, %v6276
    %v6278 = vrot.slane %v6270, %v6277
    %v6280 = vunpack.c.l.s4 1934713408
    %v6281 = vunpack.c.0.s8 %v6280
    %v6282 = vlaneseq
    %v6283 = vshrl.u32 %v6282, 7
    %v6284 = vsub.s32 %v6281, %v6283
    %v6285 = vrot.slane %v6271, %v6284
    %v6286 = vcombine.low %v6221, %v6237
    %v6287 = vcombine.high %v6221, %v6237
    %v6289 = vunpack.c.l.s4 1934713408
    %v6290 = vunpack.c.0.s8 %v6289
    %v6291 = vlaneseq
    %v6292 = vshrl.u32 %v6291, 7
    %v6293 = vsub.s32 %v6290, %v6292
    %v6294 = vrot.slane %v6286, %v6293
    %v6296 = vunpack.c.l.s4 1934713408
    %v6297 = vunpack.c.0.s8 %v6296
    %v6298 = vlaneseq
    %v6299 = vshrl.u32 %v6298, 7
    %v6300 = vsub.s32 %v6297, %v6299
    %v6301 = vrot.slane %v6287, %v6300
    %v6302 = vcombine.low %v6246, %v6278
    %v6303 = vcombine.high %v6246, %v6278
    %v6304 = vcombine.low %v6253, %v6285
    %v6305 = vcombine.high %v6253, %v6285
    %v6306 = vcombine.low %v6262, %v6294
    %v6307 = vcombine.high %v6262, %v6294
    %v6308 = vcombine.low %v6269, %v6301
    %v6309 = vcombine.high %v6269, %v6301
    %v6310 = vcombine.low %v6151, %v6163
    %v6311 = vcombine.high %v6151, %v6163
    %v6313 = vunpack.c.l.s4 1983009808
    %v6314 = vunpack.c.0.s8 %v6313
    %v6315 = vlaneseq
    %v6316 = vshrl.u32 %v6315, 7
    %v6317 = vsub.s32 %v6314, %v6316
    %v6318 = vrot.slane %v6310, %v6317
    %v6320 = vunpack.c.l.s4 1983009808
    %v6321 = vunpack.c.0.s8 %v6320
    %v6322 = vlaneseq
    %v6323 = vshrl.u32 %v6322, 7
    %v6324 = vsub.s32 %v6321, %v6323
    %v6325 = vrot.slane %v6311, %v6324
    %v6326 = vcombine.low %v6157, %v6169
    %v6327 = vcombine.high %v6157, %v6169
    %v6329 = vunpack.c.l.s4 1983009808
    %v6330 = vunpack.c.0.s8 %v6329
    %v6331 = vlaneseq
    %v6332 = vshrl.u32 %v6331, 7
    %v6333 = vsub.s32 %v6330, %v6332
    %v6334 = vrot.slane %v6326, %v6333
    %v6336 = vunpack.c.l.s4 1983009808
    %v6337 = vunpack.c.0.s8 %v6336
    %v6338 = vlaneseq
    %v6339 = vshrl.u32 %v6338, 7
    %v6340 = vsub.s32 %v6337, %v6339
    %v6341 = vrot.slane %v6327, %v6340
    %v6342 = vcombine.low %v6318, %v6334
    %v6343 = vcombine.high %v6318, %v6334
    %v6345 = vunpack.c.l.s4 1934713408
    %v6346 = vunpack.c.0.s8 %v6345
    %v6347 = vlaneseq
    %v6348 = vshrl.u32 %v6347, 7
    %v6349 = vsub.s32 %v6346, %v6348
    %v6350 = vrot.slane %v6342, %v6349
    %v6352 = vunpack.c.l.s4 1934713408
    %v6353 = vunpack.c.0.s8 %v6352
    %v6354 = vlaneseq
    %v6355 = vshrl.u32 %v6354, 7
    %v6356 = vsub.s32 %v6353, %v6355
    %v6357 = vrot.slane %v6343, %v6356
    %v6358 = vcombine.low %v6325, %v6341
    %v6359 = vcombine.high %v6325, %v6341
    %v6361 = vunpack.c.l.s4 1934713408
    %v6362 = vunpack.c.0.s8 %v6361
    %v6363 = vlaneseq
    %v6364 = vshrl.u32 %v6363, 7
    %v6365 = vsub.s32 %v6362, %v6364
    %v6366 = vrot.slane %v6358, %v6365
    %v6368 = vunpack.c.l.s4 1934713408
    %v6369 = vunpack.c.0.s8 %v6368
    %v6370 = vlaneseq
    %v6371 = vshrl.u32 %v6370, 7
    %v6372 = vsub.s32 %v6369, %v6371
    %v6373 = vrot.slane %v6359, %v6372
    %v6374 = vcombine.high %v6350, 0.0
    %v6375 = vcombine.high %v6357, 0.0
    %v6376 = vcombine.high %v6366, 0.0
    %v6377 = vcombine.high %v6373, 0.0
    %v6378 = vcombine.low %v6105, %v6117
    %v6379 = vcombine.high %v6105, %v6117
    %v6381 = vunpack.c.l.s4 1983009808
    %v6382 = vunpack.c.0.s8 %v6381
    %v6383 = vlaneseq
    %v6384 = vshrl.u32 %v6383, 7
    %v6385 = vsub.s32 %v6382, %v6384
    %v6386 = vrot.slane %v6378, %v6385
    %v6388 = vunpack.c.l.s4 1983009808
    %v6389 = vunpack.c.0.s8 %v6388
    %v6390 = vlaneseq
    %v6391 = vshrl.u32 %v6390, 7
    %v6392 = vsub.s32 %v6389, %v6391
    %v6393 = vrot.slane %v6379, %v6392
    %v6394 = vcombine.low %v6111, %v6123
    %v6395 = vcombine.high %v6111, %v6123
    %v6397 = vunpack.c.l.s4 1983009808
    %v6398 = vunpack.c.0.s8 %v6397
    %v6399 = vlaneseq
    %v6400 = vshrl.u32 %v6399, 7
    %v6401 = vsub.s32 %v6398, %v6400
    %v6402 = vrot.slane %v6394, %v6401
    %v6404 = vunpack.c.l.s4 1983009808
    %v6405 = vunpack.c.0.s8 %v6404
    %v6406 = vlaneseq
    %v6407 = vshrl.u32 %v6406, 7
    %v6408 = vsub.s32 %v6405, %v6407
    %v6409 = vrot.slane %v6395, %v6408
    %v6410 = vcombine.low %v6129, %v6141
    %v6411 = vcombine.high %v6129, %v6141
    %v6413 = vunpack.c.l.s4 1983009808
    %v6414 = vunpack.c.0.s8 %v6413
    %v6415 = vlaneseq
    %v6416 = vshrl.u32 %v6415, 7
    %v6417 = vsub.s32 %v6414, %v6416
    %v6418 = vrot.slane %v6410, %v6417
    %v6420 = vunpack.c.l.s4 1983009808
    %v6421 = vunpack.c.0.s8 %v6420
    %v6422 = vlaneseq
    %v6423 = vshrl.u32 %v6422, 7
    %v6424 = vsub.s32 %v6421, %v6423
    %v6425 = vrot.slane %v6411, %v6424
    %v6426 = vcombine.low %v6135, %v6147
    %v6427 = vcombine.high %v6135, %v6147
    %v6429 = vunpack.c.l.s4 1983009808
    %v6430 = vunpack.c.0.s8 %v6429
    %v6431 = vlaneseq
    %v6432 = vshrl.u32 %v6431, 7
    %v6433 = vsub.s32 %v6430, %v6432
    %v6434 = vrot.slane %v6426, %v6433
    %v6436 = vunpack.c.l.s4 1983009808
    %v6437 = vunpack.c.0.s8 %v6436
    %v6438 = vlaneseq
    %v6439 = vshrl.u32 %v6438, 7
    %v6440 = vsub.s32 %v6437, %v6439
    %v6441 = vrot.slane %v6427, %v6440
    %v6442 = vcombine.low %v6386, %v6402
    %v6443 = vcombine.high %v6386, %v6402
    %v6445 = vunpack.c.l.s4 1934713408
    %v6446 = vunpack.c.0.s8 %v6445
    %v6447 = vlaneseq
    %v6448 = vshrl.u32 %v6447, 7
    %v6449 = vsub.s32 %v6446, %v6448
    %v6450 = vrot.slane %v6442, %v6449
    %v6452 = vunpack.c.l.s4 1934713408
    %v6453 = vunpack.c.0.s8 %v6452
    %v6454 = vlaneseq
    %v6455 = vshrl.u32 %v6454, 7
    %v6456 = vsub.s32 %v6453, %v6455
    %v6457 = vrot.slane %v6443, %v6456
    %v6458 = vcombine.low %v6393, %v6409
    %v6459 = vcombine.high %v6393, %v6409
    %v6461 = vunpack.c.l.s4 1934713408
    %v6462 = vunpack.c.0.s8 %v6461
    %v6463 = vlaneseq
    %v6464 = vshrl.u32 %v6463, 7
    %v6465 = vsub.s32 %v6462, %v6464
    %v6466 = vrot.slane %v6458, %v6465
    %v6468 = vunpack.c.l.s4 1934713408
    %v6469 = vunpack.c.0.s8 %v6468
    %v6470 = vlaneseq
    %v6471 = vshrl.u32 %v6470, 7
    %v6472 = vsub.s32 %v6469, %v6471
    %v6473 = vrot.slane %v6459, %v6472
    %v6474 = vcombine.low %v6418, %v6434
    %v6475 = vcombine.high %v6418, %v6434
    %v6477 = vunpack.c.l.s4 1934713408
    %v6478 = vunpack.c.0.s8 %v6477
    %v6479 = vlaneseq
    %v6480 = vshrl.u32 %v6479, 7
    %v6481 = vsub.s32 %v6478, %v6480
    %v6482 = vrot.slane %v6474, %v6481
    %v6484 = vunpack.c.l.s4 1934713408
    %v6485 = vunpack.c.0.s8 %v6484
    %v6486 = vlaneseq
    %v6487 = vshrl.u32 %v6486, 7
    %v6488 = vsub.s32 %v6485, %v6487
    %v6489 = vrot.slane %v6475, %v6488
    %v6490 = vcombine.low %v6425, %v6441
    %v6491 = vcombine.high %v6425, %v6441
    %v6493 = vunpack.c.l.s4 1934713408
    %v6494 = vunpack.c.0.s8 %v6493
    %v6495 = vlaneseq
    %v6496 = vshrl.u32 %v6495, 7
    %v6497 = vsub.s32 %v6494, %v6496
    %v6498 = vrot.slane %v6490, %v6497
    %v6500 = vunpack.c.l.s4 1934713408
    %v6501 = vunpack.c.0.s8 %v6500
    %v6502 = vlaneseq
    %v6503 = vshrl.u32 %v6502, 7
    %v6504 = vsub.s32 %v6501, %v6503
    %v6505 = vrot.slane %v6491, %v6504
    %v6506 = vcombine.low %v6450, %v6482
    %v6507 = vcombine.high %v6450, %v6482
    %v6508 = vcombine.low %v6457, %v6489
    %v6509 = vcombine.high %v6457, %v6489
    %v6510 = vcombine.low %v6466, %v6498
    %v6511 = vcombine.high %v6466, %v6498
    %v6512 = vcombine.low %v6473, %v6505
    %v6513 = vcombine.high %v6473, %v6505
    %v6514 = vcombine.low %v6153, %v6165
    %v6515 = vcombine.high %v6153, %v6165
    %v6517 = vunpack.c.l.s4 1983009808
    %v6518 = vunpack.c.0.s8 %v6517
    %v6519 = vlaneseq
    %v6520 = vshrl.u32 %v6519, 7
    %v6521 = vsub.s32 %v6518, %v6520
    %v6522 = vrot.slane %v6514, %v6521
    %v6524 = vunpack.c.l.s4 1983009808
    %v6525 = vunpack.c.0.s8 %v6524
    %v6526 = vlaneseq
    %v6527 = vshrl.u32 %v6526, 7
    %v6528 = vsub.s32 %v6525, %v6527
    %v6529 = vrot.slane %v6515, %v6528
    %v6530 = vcombine.low %v6159, %v6171
    %v6531 = vcombine.high %v6159, %v6171
    %v6533 = vunpack.c.l.s4 1983009808
    %v6534 = vunpack.c.0.s8 %v6533
    %v6535 = vlaneseq
    %v6536 = vshrl.u32 %v6535, 7
    %v6537 = vsub.s32 %v6534, %v6536
    %v6538 = vrot.slane %v6530, %v6537
    %v6540 = vunpack.c.l.s4 1983009808
    %v6541 = vunpack.c.0.s8 %v6540
    %v6542 = vlaneseq
    %v6543 = vshrl.u32 %v6542, 7
    %v6544 = vsub.s32 %v6541, %v6543
    %v6545 = vrot.slane %v6531, %v6544
    %v6546 = vcombine.low %v6522, %v6538
    %v6547 = vcombine.high %v6522, %v6538
    %v6549 = vunpack.c.l.s4 1934713408
    %v6550 = vunpack.c.0.s8 %v6549
    %v6551 = vlaneseq
    %v6552 = vshrl.u32 %v6551, 7
    %v6553 = vsub.s32 %v6550, %v6552
    %v6554 = vrot.slane %v6546, %v6553
    %v6556 = vunpack.c.l.s4 1934713408
    %v6557 = vunpack.c.0.s8 %v6556
    %v6558 = vlaneseq
    %v6559 = vshrl.u32 %v6558, 7
    %v6560 = vsub.s32 %v6557, %v6559
    %v6561 = vrot.slane %v6547, %v6560
    %v6562 = vcombine.low %v6529, %v6545
    %v6563 = vcombine.high %v6529, %v6545
    %v6565 = vunpack.c.l.s4 1934713408
    %v6566 = vunpack.c.0.s8 %v6565
    %v6567 = vlaneseq
    %v6568 = vshrl.u32 %v6567, 7
    %v6569 = vsub.s32 %v6566, %v6568
    %v6570 = vrot.slane %v6562, %v6569
    %v6572 = vunpack.c.l.s4 1934713408
    %v6573 = vunpack.c.0.s8 %v6572
    %v6574 = vlaneseq
    %v6575 = vshrl.u32 %v6574, 7
    %v6576 = vsub.s32 %v6573, %v6575
    %v6577 = vrot.slane %v6563, %v6576
    %v6578 = vcombine.high %v6554, 0.0
    %v6579 = vcombine.high %v6561, 0.0
    %v6580 = vcombine.high %v6570, 0.0
    %v6581 = vcombine.high %v6577, 0.0
    %v6582 = vcombine.low %v6302, %v6304
    %v6583 = vcombine.high %v6302, %v6304
    %v6585 = vunpack.c.l.s4 1983009808
    %v6586 = vunpack.c.0.s8 %v6585
    %v6587 = vlaneseq
    %v6588 = vshrl.u32 %v6587, 7
    %v6589 = vsub.s32 %v6586, %v6588
    %v6590 = vrot.slane %v6582, %v6589
    %v6592 = vunpack.c.l.s4 1983009808
    %v6593 = vunpack.c.0.s8 %v6592
    %v6594 = vlaneseq
    %v6595 = vshrl.u32 %v6594, 7
    %v6596 = vsub.s32 %v6593, %v6595
    %v6597 = vrot.slane %v6583, %v6596
    %v6598 = vcombine.low %v6303, %v6305
    %v6599 = vcombine.high %v6303, %v6305
    %v6601 = vunpack.c.l.s4 1983009808
    %v6602 = vunpack.c.0.s8 %v6601
    %v6603 = vlaneseq
    %v6604 = vshrl.u32 %v6603, 7
    %v6605 = vsub.s32 %v6602, %v6604
    %v6606 = vrot.slane %v6598, %v6605
    %v6608 = vunpack.c.l.s4 1983009808
    %v6609 = vunpack.c.0.s8 %v6608
    %v6610 = vlaneseq
    %v6611 = vshrl.u32 %v6610, 7
    %v6612 = vsub.s32 %v6609, %v6611
    %v6613 = vrot.slane %v6599, %v6612
    %v6614 = vcombine.low %v6306, %v6308
    %v6615 = vcombine.high %v6306, %v6308
    %v6617 = vunpack.c.l.s4 1983009808
    %v6618 = vunpack.c.0.s8 %v6617
    %v6619 = vlaneseq
    %v6620 = vshrl.u32 %v6619, 7
    %v6621 = vsub.s32 %v6618, %v6620
    %v6622 = vrot.slane %v6614, %v6621
    %v6624 = vunpack.c.l.s4 1983009808
    %v6625 = vunpack.c.0.s8 %v6624
    %v6626 = vlaneseq
    %v6627 = vshrl.u32 %v6626, 7
    %v6628 = vsub.s32 %v6625, %v6627
    %v6629 = vrot.slane %v6615, %v6628
    %v6630 = vcombine.low %v6307, %v6309
    %v6631 = vcombine.high %v6307, %v6309
    %v6633 = vunpack.c.l.s4 1983009808
    %v6634 = vunpack.c.0.s8 %v6633
    %v6635 = vlaneseq
    %v6636 = vshrl.u32 %v6635, 7
    %v6637 = vsub.s32 %v6634, %v6636
    %v6638 = vrot.slane %v6630, %v6637
    %v6640 = vunpack.c.l.s4 1983009808
    %v6641 = vunpack.c.0.s8 %v6640
    %v6642 = vlaneseq
    %v6643 = vshrl.u32 %v6642, 7
    %v6644 = vsub.s32 %v6641, %v6643
    %v6645 = vrot.slane %v6631, %v6644
    %v6646 = vcombine.low %v6590, %v6606
    %v6647 = vcombine.high %v6590, %v6606
    %v6649 = vunpack.c.l.s4 1934713408
    %v6650 = vunpack.c.0.s8 %v6649
    %v6651 = vlaneseq
    %v6652 = vshrl.u32 %v6651, 7
    %v6653 = vsub.s32 %v6650, %v6652
    %v6654 = vrot.slane %v6646, %v6653
    %v6656 = vunpack.c.l.s4 1934713408
    %v6657 = vunpack.c.0.s8 %v6656
    %v6658 = vlaneseq
    %v6659 = vshrl.u32 %v6658, 7
    %v6660 = vsub.s32 %v6657, %v6659
    %v6661 = vrot.slane %v6647, %v6660
    %v6662 = vcombine.low %v6597, %v6613
    %v6663 = vcombine.high %v6597, %v6613
    %v6665 = vunpack.c.l.s4 1934713408
    %v6666 = vunpack.c.0.s8 %v6665
    %v6667 = vlaneseq
    %v6668 = vshrl.u32 %v6667, 7
    %v6669 = vsub.s32 %v6666, %v6668
    %v6670 = vrot.slane %v6662, %v6669
    %v6672 = vunpack.c.l.s4 1934713408
    %v6673 = vunpack.c.0.s8 %v6672
    %v6674 = vlaneseq
    %v6675 = vshrl.u32 %v6674, 7
    %v6676 = vsub.s32 %v6673, %v6675
    %v6677 = vrot.slane %v6663, %v6676
    %v6678 = vcombine.low %v6622, %v6638
    %v6679 = vcombine.high %v6622, %v6638
    %v6681 = vunpack.c.l.s4 1934713408
    %v6682 = vunpack.c.0.s8 %v6681
    %v6683 = vlaneseq
    %v6684 = vshrl.u32 %v6683, 7
    %v6685 = vsub.s32 %v6682, %v6684
    %v6686 = vrot.slane %v6678, %v6685
    %v6688 = vunpack.c.l.s4 1934713408
    %v6689 = vunpack.c.0.s8 %v6688
    %v6690 = vlaneseq
    %v6691 = vshrl.u32 %v6690, 7
    %v6692 = vsub.s32 %v6689, %v6691
    %v6693 = vrot.slane %v6679, %v6692
    %v6694 = vcombine.low %v6629, %v6645
    %v6695 = vcombine.high %v6629, %v6645
    %v6697 = vunpack.c.l.s4 1934713408
    %v6698 = vunpack.c.0.s8 %v6697
    %v6699 = vlaneseq
    %v6700 = vshrl.u32 %v6699, 7
    %v6701 = vsub.s32 %v6698, %v6700
    %v6702 = vrot.slane %v6694, %v6701
    %v6704 = vunpack.c.l.s4 1934713408
    %v6705 = vunpack.c.0.s8 %v6704
    %v6706 = vlaneseq
    %v6707 = vshrl.u32 %v6706, 7
    %v6708 = vsub.s32 %v6705, %v6707
    %v6709 = vrot.slane %v6695, %v6708
    %v6710 = vcombine.low %v6654, %v6686
    %v6711 = vcombine.high %v6654, %v6686
    %v6712 = vcombine.low %v6661, %v6693
    %v6713 = vcombine.high %v6661, %v6693
    %v6714 = vcombine.low %v6670, %v6702
    %v6715 = vcombine.high %v6670, %v6702
    %v6716 = vcombine.low %v6677, %v6709
    %v6717 = vcombine.high %v6677, %v6709
    %v6718 = vcombine.low %v6506, %v6508
    %v6719 = vcombine.high %v6506, %v6508
    %v6721 = vunpack.c.l.s4 1983009808
    %v6722 = vunpack.c.0.s8 %v6721
    %v6723 = vlaneseq
    %v6724 = vshrl.u32 %v6723, 7
    %v6725 = vsub.s32 %v6722, %v6724
    %v6726 = vrot.slane %v6718, %v6725
    %v6728 = vunpack.c.l.s4 1983009808
    %v6729 = vunpack.c.0.s8 %v6728
    %v6730 = vlaneseq
    %v6731 = vshrl.u32 %v6730, 7
    %v6732 = vsub.s32 %v6729, %v6731
    %v6733 = vrot.slane %v6719, %v6732
    %v6734 = vcombine.low %v6507, %v6509
    %v6735 = vcombine.high %v6507, %v6509
    %v6737 = vunpack.c.l.s4 1983009808
    %v6738 = vunpack.c.0.s8 %v6737
    %v6739 = vlaneseq
    %v6740 = vshrl.u32 %v6739, 7
    %v6741 = vsub.s32 %v6738, %v6740
    %v6742 = vrot.slane %v6734, %v6741
    %v6744 = vunpack.c.l.s4 1983009808
    %v6745 = vunpack.c.0.s8 %v6744
    %v6746 = vlaneseq
    %v6747 = vshrl.u32 %v6746, 7
    %v6748 = vsub.s32 %v6745, %v6747
    %v6749 = vrot.slane %v6735, %v6748
    %v6750 = vcombine.low %v6510, %v6512
    %v6751 = vcombine.high %v6510, %v6512
    %v6753 = vunpack.c.l.s4 1983009808
    %v6754 = vunpack.c.0.s8 %v6753
    %v6755 = vlaneseq
    %v6756 = vshrl.u32 %v6755, 7
    %v6757 = vsub.s32 %v6754, %v6756
    %v6758 = vrot.slane %v6750, %v6757
    %v6760 = vunpack.c.l.s4 1983009808
    %v6761 = vunpack.c.0.s8 %v6760
    %v6762 = vlaneseq
    %v6763 = vshrl.u32 %v6762, 7
    %v6764 = vsub.s32 %v6761, %v6763
    %v6765 = vrot.slane %v6751, %v6764
    %v6766 = vcombine.low %v6511, %v6513
    %v6767 = vcombine.high %v6511, %v6513
    %v6769 = vunpack.c.l.s4 1983009808
    %v6770 = vunpack.c.0.s8 %v6769
    %v6771 = vlaneseq
    %v6772 = vshrl.u32 %v6771, 7
    %v6773 = vsub.s32 %v6770, %v6772
    %v6774 = vrot.slane %v6766, %v6773
    %v6776 = vunpack.c.l.s4 1983009808
    %v6777 = vunpack.c.0.s8 %v6776
    %v6778 = vlaneseq
    %v6779 = vshrl.u32 %v6778, 7
    %v6780 = vsub.s32 %v6777, %v6779
    %v6781 = vrot.slane %v6767, %v6780
    %v6782 = vcombine.low %v6726, %v6742
    %v6783 = vcombine.high %v6726, %v6742
    %v6785 = vunpack.c.l.s4 1934713408
    %v6786 = vunpack.c.0.s8 %v6785
    %v6787 = vlaneseq
    %v6788 = vshrl.u32 %v6787, 7
    %v6789 = vsub.s32 %v6786, %v6788
    %v6790 = vrot.slane %v6782, %v6789
    %v6792 = vunpack.c.l.s4 1934713408
    %v6793 = vunpack.c.0.s8 %v6792
    %v6794 = vlaneseq
    %v6795 = vshrl.u32 %v6794, 7
    %v6796 = vsub.s32 %v6793, %v6795
    %v6797 = vrot.slane %v6783, %v6796
    %v6798 = vcombine.low %v6733, %v6749
    %v6799 = vcombine.high %v6733, %v6749
    %v6801 = vunpack.c.l.s4 1934713408
    %v6802 = vunpack.c.0.s8 %v6801
    %v6803 = vlaneseq
    %v6804 = vshrl.u32 %v6803, 7
    %v6805 = vsub.s32 %v6802, %v6804
    %v6806 = vrot.slane %v6798, %v6805
    %v6808 = vunpack.c.l.s4 1934713408
    %v6809 = vunpack.c.0.s8 %v6808
    %v6810 = vlaneseq
    %v6811 = vshrl.u32 %v6810, 7
    %v6812 = vsub.s32 %v6809, %v6811
    %v6813 = vrot.slane %v6799, %v6812
    %v6814 = vcombine.low %v6758, %v6774
    %v6815 = vcombine.high %v6758, %v6774
    %v6817 = vunpack.c.l.s4 1934713408
    %v6818 = vunpack.c.0.s8 %v6817
    %v6819 = vlaneseq
    %v6820 = vshrl.u32 %v6819, 7
    %v6821 = vsub.s32 %v6818, %v6820
    %v6822 = vrot.slane %v6814, %v6821
    %v6824 = vunpack.c.l.s4 1934713408
    %v6825 = vunpack.c.0.s8 %v6824
    %v6826 = vlaneseq
    %v6827 = vshrl.u32 %v6826, 7
    %v6828 = vsub.s32 %v6825, %v6827
    %v6829 = vrot.slane %v6815, %v6828
    %v6830 = vcombine.low %v6765, %v6781
    %v6831 = vcombine.high %v6765, %v6781
    %v6833 = vunpack.c.l.s4 1934713408
    %v6834 = vunpack.c.0.s8 %v6833
    %v6835 = vlaneseq
    %v6836 = vshrl.u32 %v6835, 7
    %v6837 = vsub.s32 %v6834, %v6836
    %v6838 = vrot.slane %v6830, %v6837
    %v6840 = vunpack.c.l.s4 1934713408
    %v6841 = vunpack.c.0.s8 %v6840
    %v6842 = vlaneseq
    %v6843 = vshrl.u32 %v6842, 7
    %v6844 = vsub.s32 %v6841, %v6843
    %v6845 = vrot.slane %v6831, %v6844
    %v6846 = vcombine.low %v6790, %v6822
    %v6847 = vcombine.high %v6790, %v6822
    %v6848 = vcombine.low %v6797, %v6829
    %v6849 = vcombine.high %v6797, %v6829
    %v6850 = vcombine.low %v6806, %v6838
    %v6851 = vcombine.high %v6806, %v6838
    %v6852 = vcombine.low %v6813, %v6845
    %v6853 = vcombine.high %v6813, %v6845
    %v6854 = vcombine.low %v6350, %v6357
    %v6856 = vunpack.c.l.s4 1983009808
    %v6857 = vunpack.c.0.s8 %v6856
    %v6858 = vlaneseq
    %v6859 = vshrl.u32 %v6858, 7
    %v6860 = vsub.s32 %v6857, %v6859
    %v6861 = vrot.slane %v6854, %v6860
    %v6862 = vcombine.low %v6374, %v6375
    %v6864 = vunpack.c.l.s4 1983009808
    %v6865 = vunpack.c.0.s8 %v6864
    %v6866 = vlaneseq
    %v6867 = vshrl.u32 %v6866, 7
    %v6868 = vsub.s32 %v6865, %v6867
    %v6869 = vrot.slane %v6862, %v6868
    %v6870 = vcombine.low %v6366, %v6373
    %v6872 = vunpack.c.l.s4 1983009808
    %v6873 = vunpack.c.0.s8 %v6872
    %v6874 = vlaneseq
    %v6875 = vshrl.u32 %v6874, 7
    %v6876 = vsub.s32 %v6873, %v6875
    %v6877 = vrot.slane %v6870, %v6876
    %v6878 = vcombine.low %v6376, %v6377
    %v6880 = vunpack.c.l.s4 1983009808
    %v6881 = vunpack.c.0.s8 %v6880
    %v6882 = vlaneseq
    %v6883 = vshrl.u32 %v6882, 7
    %v6884 = vsub.s32 %v6881, %v6883
    %v6885 = vrot.slane %v6878, %v6884
    %v6886 = vcombine.low %v6861, %v6869
    %v6887 = vcombine.high %v6861, %v6869
    %v6889 = vunpack.c.l.s4 1934713408
    %v6890 = vunpack.c.0.s8 %v6889
    %v6891 = vlaneseq
    %v6892 = vshrl.u32 %v6891, 7
    %v6893 = vsub.s32 %v6890, %v6892
    %v6894 = vrot.slane %v6886, %v6893
    %v6896 = vunpack.c.l.s4 1934713408
    %v6897 = vunpack.c.0.s8 %v6896
    %v6898 = vlaneseq
    %v6899 = vshrl.u32 %v6898, 7
    %v6900 = vsub.s32 %v6897, %v6899
    %v6901 = vrot.slane %v6887, %v6900
    %v6902 = vcombine.low %v6877, %v6885
    %v6903 = vcombine.high %v6877, %v6885
    %v6905 = vunpack.c.l.s4 1934713408
    %v6906 = vunpack.c.0.s8 %v6905
    %v6907 = vlaneseq
    %v6908 = vshrl.u32 %v6907, 7
    %v6909 = vsub.s32 %v6906, %v6908
    %v6910 = vrot.slane %v6902, %v6909
    %v6912 = vunpack.c.l.s4 1934713408
    %v6913 = vunpack.c.0.s8 %v6912
    %v6914 = vlaneseq
    %v6915 = vshrl.u32 %v6914, 7
    %v6916 = vsub.s32 %v6913, %v6915
    %v6917 = vrot.slane %v6903, %v6916
    %v6918 = vcombine.low %v6894, %v6910
    %v6919 = vcombine.high %v6894, %v6910
    %v6920 = vcombine.low %v6901, %v6917
    %v6921 = vcombine.high %v6901, %v6917
    %v6922 = vcombine.low %v6554, %v6561
    %v6924 = vunpack.c.l.s4 1983009808
    %v6925 = vunpack.c.0.s8 %v6924
    %v6926 = vlaneseq
    %v6927 = vshrl.u32 %v6926, 7
    %v6928 = vsub.s32 %v6925, %v6927
    %v6929 = vrot.slane %v6922, %v6928
    %v6930 = vcombine.low %v6578, %v6579
    %v6932 = vunpack.c.l.s4 1983009808
    %v6933 = vunpack.c.0.s8 %v6932
    %v6934 = vlaneseq
    %v6935 = vshrl.u32 %v6934, 7
    %v6936 = vsub.s32 %v6933, %v6935
    %v6937 = vrot.slane %v6930, %v6936
    %v6938 = vcombine.low %v6570, %v6577
    %v6940 = vunpack.c.l.s4 1983009808
    %v6941 = vunpack.c.0.s8 %v6940
    %v6942 = vlaneseq
    %v6943 = vshrl.u32 %v6942, 7
    %v6944 = vsub.s32 %v6941, %v6943
    %v6945 = vrot.slane %v6938, %v6944
    %v6946 = vcombine.low %v6580, %v6581
    %v6948 = vunpack.c.l.s4 1983009808
    %v6949 = vunpack.c.0.s8 %v6948
    %v6950 = vlaneseq
    %v6951 = vshrl.u32 %v6950, 7
    %v6952 = vsub.s32 %v6949, %v6951
    %v6953 = vrot.slane %v6946, %v6952
    %v6954 = vcombine.low %v6929, %v6937
    %v6955 = vcombine.high %v6929, %v6937
    %v6957 = vunpack.c.l.s4 1934713408
    %v6958 = vunpack.c.0.s8 %v6957
    %v6959 = vlaneseq
    %v6960 = vshrl.u32 %v6959, 7
    %v6961 = vsub.s32 %v6958, %v6960
    %v6962 = vrot.slane %v6954, %v6961
    %v6964 = vunpack.c.l.s4 1934713408
    %v6965 = vunpack.c.0.s8 %v6964
    %v6966 = vlaneseq
    %v6967 = vshrl.u32 %v6966, 7
    %v6968 = vsub.s32 %v6965, %v6967
    %v6969 = vrot.slane %v6955, %v6968
    %v6970 = vcombine.low %v6945, %v6953
    %v6971 = vcombine.high %v6945, %v6953
    %v6973 = vunpack.c.l.s4 1934713408
    %v6974 = vunpack.c.0.s8 %v6973
    %v6975 = vlaneseq
    %v6976 = vshrl.u32 %v6975, 7
    %v6977 = vsub.s32 %v6974, %v6976
    %v6978 = vrot.slane %v6970, %v6977
    %v6980 = vunpack.c.l.s4 1934713408
    %v6981 = vunpack.c.0.s8 %v6980
    %v6982 = vlaneseq
    %v6983 = vshrl.u32 %v6982, 7
    %v6984 = vsub.s32 %v6981, %v6983
    %v6985 = vrot.slane %v6971, %v6984
    %v6986 = vcombine.low %v6962, %v6978
    %v6987 = vcombine.high %v6962, %v6978
    %v6988 = vcombine.low %v6969, %v6985
    %v6989 = vcombine.high %v6969, %v6985
    %v6991 = vsel %vm1599, %v6710, 0
    %v6994 = vsel %vm1599, %v6846, 0
    %v6997 = vsel %vm1599, %v6711, 0
    %v7000 = vsel %vm1599, %v6847, 0
    %v7003 = vsel %vm1599, %v6712, 0
    %v7006 = vsel %vm1599, %v6848, 0
    %v7009 = vsel %vm1599, %v6713, 0
    %v7012 = vsel %vm1599, %v6849, 0
    %v7015 = vsel %vm1599, %v6714, 0
    %v7018 = vsel %vm1599, %v6850, 0
    %v7021 = vsel %vm1599, %v6715, 0
    %v7024 = vsel %vm1599, %v6851, 0
    %v7027 = vsel %vm1599, %v6716, 0
    %v7030 = vsel %vm1599, %v6852, 0
    %v7033 = vsel %vm1599, %v6717, 0
    %v7036 = vsel %vm1599, %v6853, 0
    %7038 = vmatprep.subr.mxu0 0.0
    %7039 = vmatpush1.xpose.msra.mxu0 0.0
    %7040 = vmatprep.subr.mxu0 0.0
    %7041 = vmatpush1.xpose.msra.mxu0 0.0
    %7042 = vmatprep.subr.mxu0 0.0
    %7043 = vmatpush1.xpose.msra.mxu0 0.0
    %7044 = vmatprep.subr.mxu0 0.0
    %7045 = vmatpush1.xpose.msra.mxu0 0.0
    %7046 = vmatprep.subr.mxu0 0.0
    %7047 = vmatpush1.xpose.msra.mxu0 0.0
    %7048 = vmatprep.subr.mxu0 0.0
    %7049 = vmatpush1.xpose.msra.mxu0 0.0
    %7050 = vmatprep.subr.mxu0 0.0
    %7051 = vmatpush1.xpose.msra.mxu0 0.0
    %7052 = vmatprep.subr.mxu0 0.0
    %7053 = vmatpush1.xpose.msra.mxu0 0.0
    %7054 = vmatprep.subr.mxu0 0.0
    %v7055 = vand.u32 %v7036, 4294901760
    %7056 = vmatpush1.xpose.msra.mxu0 %v7055
    %7057 = vmatprep.subr.mxu0 0.0
    %v7058 = vand.u32 %v7033, 4294901760
    %7059 = vmatpush1.xpose.msra.mxu0 %v7058
    %7060 = vmatprep.subr.mxu0 0.0
    %v7061 = vand.u32 %v7030, 4294901760
    %7062 = vmatpush1.xpose.msra.mxu0 %v7061
    %7063 = vmatprep.subr.mxu0 0.0
    %v7064 = vand.u32 %v7027, 4294901760
    %7065 = vmatpush1.xpose.msra.mxu0 %v7064
    %7066 = vmatprep.subr.mxu0 0.0
    %v7067 = vand.u32 %v7024, 4294901760
    %7068 = vmatpush1.xpose.msra.mxu0 %v7067
    %7069 = vmatprep.subr.mxu0 0.0
    %v7070 = vand.u32 %v7021, 4294901760
    %7071 = vmatpush1.xpose.msra.mxu0 %v7070
    %7072 = vmatprep.subr.mxu0 0.0
    %v7073 = vand.u32 %v7018, 4294901760
    %7074 = vmatpush1.xpose.msra.mxu0 %v7073
    %7075 = vmatprep.subr.mxu0 0.0
    %v7076 = vand.u32 %v7015, 4294901760
    %7077 = vmatpush1.xpose.msra.mxu0 %v7076
    %7078 = vmatprep.subr.mxu0 0.0
    %7079 = vmatpush2.xpose.msra.mxu0 0.0
    %7080 = vmatprep.subr.mxu0 0.0
    %7081 = vmatpush2.xpose.msra.mxu0 0.0
    %7082 = vmatprep.subr.mxu0 0.0
    %7083 = vmatpush2.xpose.msra.mxu0 0.0
    %7084 = vmatprep.subr.mxu0 0.0
    %7085 = vmatpush2.xpose.msra.mxu0 0.0
    %7086 = vmatprep.subr.mxu0 0.0
    %7087 = vmatpush2.xpose.msra.mxu0 0.0
    %7088 = vmatprep.subr.mxu0 0.0
    %7089 = vmatpush2.xpose.msra.mxu0 0.0
    %7090 = vmatprep.subr.mxu0 0.0
    %7091 = vmatpush2.xpose.msra.mxu0 0.0
    %7092 = vmatprep.subr.mxu0 0.0
    %7093 = vmatpush2.xpose.msra.mxu0 0.0
    %7094 = vmatprep.subr.mxu0 0.0
    %7095 = vmatpush2.xpose.msra.mxu0 0.0
    %7096 = vmatprep.subr.mxu0 0.0
    %7097 = vmatpush2.xpose.msra.mxu0 0.0
    %7098 = vmatprep.subr.mxu0 0.0
    %7099 = vmatpush2.xpose.msra.mxu0 0.0
    %7100 = vmatprep.subr.mxu0 0.0
    %7101 = vmatpush2.xpose.msra.mxu0 0.0
    %7102 = vmatprep.subr.mxu0 0.0
    %7103 = vmatpush2.xpose.msra.mxu0 0.0
    %7104 = vmatprep.subr.mxu0 0.0
    %7105 = vmatpush2.xpose.msra.mxu0 0.0
    %7106 = vmatprep.subr.mxu0 0.0
    %7107 = vmatpush2.xpose.msra.mxu0 0.0
    %7108 = vmatprep.subr.mxu0 0.0
    %7109 = vmatpush2.xpose.msra.mxu0 0.0
    %7110 = vmatprep.mubr.f32.mxu0 0.0
    %v7111 = vand.u32 %v6991, 4294901760
    %v7112 = vsub.f32 %v6991, %v7111
    %v7113 = vand.u32 %v7112, 4294901760
    %v7114 = vsub.f32 %v7112, %v7113
    %v7115 = vand.u32 %v7114, 4294901760
    %7116 = vmatmul.mubr.f32.gmra.mxu0 %v7115
    %v7117 = vpop.f32.mrf.mxu0
    %v7118 = vadd.f32 %v17, %v7117
    %v7119 = vpop.f32.mrf.mxu0
    %7120 = vmatprep.mubr.f32.mxu0 0.0
    %v7121 = vand.u32 %v6994, 4294901760
    %v7122 = vsub.f32 %v6994, %v7121
    %v7123 = vand.u32 %v7122, 4294901760
    %v7124 = vsub.f32 %v7122, %v7123
    %v7125 = vand.u32 %v7124, 4294901760
    %7126 = vmatmul.mubr.f32.gmra.mxu0 %v7125
    %v7127 = vpop.f32.mrf.mxu0
    %v7128 = vadd.f32 %v18, %v7127
    %v7129 = vpop.f32.mrf.mxu0
    %7130 = vmatprep.mubr.f32.mxu0 0.0
    %v7131 = vand.u32 %v6997, 4294901760
    %v7132 = vsub.f32 %v6997, %v7131
    %v7133 = vand.u32 %v7132, 4294901760
    %v7134 = vsub.f32 %v7132, %v7133
    %v7135 = vand.u32 %v7134, 4294901760
    %7136 = vmatmul.mubr.f32.gmra.mxu0 %v7135
    %v7137 = vpop.f32.mrf.mxu0
    %v7138 = vadd.f32 %v19, %v7137
    %v7139 = vpop.f32.mrf.mxu0
    %7140 = vmatprep.mubr.f32.mxu0 0.0
    %v7141 = vand.u32 %v7000, 4294901760
    %v7142 = vsub.f32 %v7000, %v7141
    %v7143 = vand.u32 %v7142, 4294901760
    %v7144 = vsub.f32 %v7142, %v7143
    %v7145 = vand.u32 %v7144, 4294901760
    %7146 = vmatmul.mubr.f32.gmra.mxu0 %v7145
    %v7147 = vpop.f32.mrf.mxu0
    %v7148 = vadd.f32 %v20, %v7147
    %v7149 = vpop.f32.mrf.mxu0
    %7150 = vmatprep.mubr.f32.mxu0 0.0
    %v7151 = vand.u32 %v7003, 4294901760
    %v7152 = vsub.f32 %v7003, %v7151
    %v7153 = vand.u32 %v7152, 4294901760
    %v7154 = vsub.f32 %v7152, %v7153
    %v7155 = vand.u32 %v7154, 4294901760
    %7156 = vmatmul.mubr.f32.gmra.mxu0 %v7155
    %v7157 = vpop.f32.mrf.mxu0
    %v7158 = vadd.f32 %v21, %v7157
    %v7159 = vpop.f32.mrf.mxu0
    %7160 = vmatprep.mubr.f32.mxu0 0.0
    %v7161 = vand.u32 %v7006, 4294901760
    %v7162 = vsub.f32 %v7006, %v7161
    %v7163 = vand.u32 %v7162, 4294901760
    %v7164 = vsub.f32 %v7162, %v7163
    %v7165 = vand.u32 %v7164, 4294901760
    %7166 = vmatmul.mubr.f32.gmra.mxu0 %v7165
    %v7167 = vpop.f32.mrf.mxu0
    %v7168 = vadd.f32 %v22, %v7167
    %v7169 = vpop.f32.mrf.mxu0
    %7170 = vmatprep.mubr.f32.mxu0 0.0
    %v7171 = vand.u32 %v7009, 4294901760
    %v7172 = vsub.f32 %v7009, %v7171
    %v7173 = vand.u32 %v7172, 4294901760
    %v7174 = vsub.f32 %v7172, %v7173
    %v7175 = vand.u32 %v7174, 4294901760
    %7176 = vmatmul.mubr.f32.gmra.mxu0 %v7175
    %v7177 = vpop.f32.mrf.mxu0
    %v7178 = vadd.f32 %v23, %v7177
    %v7179 = vpop.f32.mrf.mxu0
    %7180 = vmatprep.mubr.f32.mxu0 0.0
    %v7181 = vand.u32 %v7012, 4294901760
    %v7182 = vsub.f32 %v7012, %v7181
    %v7183 = vand.u32 %v7182, 4294901760
    %v7184 = vsub.f32 %v7182, %v7183
    %v7185 = vand.u32 %v7184, 4294901760
    %7186 = vmatmul.mubr.f32.gmra.mxu0 %v7185
    %v7187 = vpop.f32.mrf.mxu0
    %v7188 = vadd.f32 %v24, %v7187
    %v7189 = vpop.f32.mrf.mxu0
    %7190 = vdwg.mxu0
    %7191 = vmatprep.subr.mxu0 0.0
    %7192 = vmatpush1.xpose.msra.mxu0 0.0
    %7193 = vmatprep.subr.mxu0 0.0
    %7194 = vmatpush1.xpose.msra.mxu0 0.0
    %7195 = vmatprep.subr.mxu0 0.0
    %7196 = vmatpush1.xpose.msra.mxu0 0.0
    %7197 = vmatprep.subr.mxu0 0.0
    %7198 = vmatpush1.xpose.msra.mxu0 0.0
    %7199 = vmatprep.subr.mxu0 0.0
    %7200 = vmatpush1.xpose.msra.mxu0 0.0
    %7201 = vmatprep.subr.mxu0 0.0
    %7202 = vmatpush1.xpose.msra.mxu0 0.0
    %7203 = vmatprep.subr.mxu0 0.0
    %7204 = vmatpush1.xpose.msra.mxu0 0.0
    %7205 = vmatprep.subr.mxu0 0.0
    %7206 = vmatpush1.xpose.msra.mxu0 0.0
    %7207 = vmatprep.subr.mxu0 0.0
    %v7208 = vand.u32 %v7036, 4294901760
    %v7209 = vsub.f32 %v7036, %v7208
    %v7210 = vand.u32 %v7209, 4294901760
    %v7211 = vsub.f32 %v7209, %v7210
    %v7212 = vand.u32 %v7211, 4294901760
    %7213 = vmatpush1.xpose.msra.mxu0 %v7212
    %7214 = vmatprep.subr.mxu0 0.0
    %v7215 = vand.u32 %v7033, 4294901760
    %v7216 = vsub.f32 %v7033, %v7215
    %v7217 = vand.u32 %v7216, 4294901760
    %v7218 = vsub.f32 %v7216, %v7217
    %v7219 = vand.u32 %v7218, 4294901760
    %7220 = vmatpush1.xpose.msra.mxu0 %v7219
    %7221 = vmatprep.subr.mxu0 0.0
    %v7222 = vand.u32 %v7030, 4294901760
    %v7223 = vsub.f32 %v7030, %v7222
    %v7224 = vand.u32 %v7223, 4294901760
    %v7225 = vsub.f32 %v7223, %v7224
    %v7226 = vand.u32 %v7225, 4294901760
    %7227 = vmatpush1.xpose.msra.mxu0 %v7226
    %7228 = vmatprep.subr.mxu0 0.0
    %v7229 = vand.u32 %v7027, 4294901760
    %v7230 = vsub.f32 %v7027, %v7229
    %v7231 = vand.u32 %v7230, 4294901760
    %v7232 = vsub.f32 %v7230, %v7231
    %v7233 = vand.u32 %v7232, 4294901760
    %7234 = vmatpush1.xpose.msra.mxu0 %v7233
    %7235 = vmatprep.subr.mxu0 0.0
    %v7236 = vand.u32 %v7024, 4294901760
    %v7237 = vsub.f32 %v7024, %v7236
    %v7238 = vand.u32 %v7237, 4294901760
    %v7239 = vsub.f32 %v7237, %v7238
    %v7240 = vand.u32 %v7239, 4294901760
    %7241 = vmatpush1.xpose.msra.mxu0 %v7240
    %7242 = vmatprep.subr.mxu0 0.0
    %v7243 = vand.u32 %v7021, 4294901760
    %v7244 = vsub.f32 %v7021, %v7243
    %v7245 = vand.u32 %v7244, 4294901760
    %v7246 = vsub.f32 %v7244, %v7245
    %v7247 = vand.u32 %v7246, 4294901760
    %7248 = vmatpush1.xpose.msra.mxu0 %v7247
    %7249 = vmatprep.subr.mxu0 0.0
    %v7250 = vand.u32 %v7018, 4294901760
    %v7251 = vsub.f32 %v7018, %v7250
    %v7252 = vand.u32 %v7251, 4294901760
    %v7253 = vsub.f32 %v7251, %v7252
    %v7254 = vand.u32 %v7253, 4294901760
    %7255 = vmatpush1.xpose.msra.mxu0 %v7254
    %7256 = vmatprep.subr.mxu0 0.0
    %v7257 = vand.u32 %v7015, 4294901760
    %v7258 = vsub.f32 %v7015, %v7257
    %v7259 = vand.u32 %v7258, 4294901760
    %v7260 = vsub.f32 %v7258, %v7259
    %v7261 = vand.u32 %v7260, 4294901760
    %7262 = vmatpush1.xpose.msra.mxu0 %v7261
    %7263 = vmatprep.subr.mxu0 0.0
    %7264 = vmatpush2.xpose.msra.mxu0 0.0
    %7265 = vmatprep.subr.mxu0 0.0
    %7266 = vmatpush2.xpose.msra.mxu0 0.0
    %7267 = vmatprep.subr.mxu0 0.0
    %7268 = vmatpush2.xpose.msra.mxu0 0.0
    %7269 = vmatprep.subr.mxu0 0.0
    %7270 = vmatpush2.xpose.msra.mxu0 0.0
    %7271 = vmatprep.subr.mxu0 0.0
    %7272 = vmatpush2.xpose.msra.mxu0 0.0
    %7273 = vmatprep.subr.mxu0 0.0
    %7274 = vmatpush2.xpose.msra.mxu0 0.0
    %7275 = vmatprep.subr.mxu0 0.0
    %7276 = vmatpush2.xpose.msra.mxu0 0.0
    %7277 = vmatprep.subr.mxu0 0.0
    %7278 = vmatpush2.xpose.msra.mxu0 0.0
    %7279 = vmatprep.subr.mxu0 0.0
    %7280 = vmatpush2.xpose.msra.mxu0 0.0
    %7281 = vmatprep.subr.mxu0 0.0
    %7282 = vmatpush2.xpose.msra.mxu0 0.0
    %7283 = vmatprep.subr.mxu0 0.0
    %7284 = vmatpush2.xpose.msra.mxu0 0.0
    %7285 = vmatprep.subr.mxu0 0.0
    %7286 = vmatpush2.xpose.msra.mxu0 0.0
    %7287 = vmatprep.subr.mxu0 0.0
    %7288 = vmatpush2.xpose.msra.mxu0 0.0
    %7289 = vmatprep.subr.mxu0 0.0
    %7290 = vmatpush2.xpose.msra.mxu0 0.0
    %7291 = vmatprep.subr.mxu0 0.0
    %7292 = vmatpush2.xpose.msra.mxu0 0.0
    %7293 = vmatprep.subr.mxu0 0.0
    %7294 = vmatpush2.xpose.msra.mxu0 0.0
    %7295 = vmatprep.mubr.f32.mxu0 0.0
    %v7296 = vand.u32 %v6991, 4294901760
    %7297 = vmatmul.mubr.f32.gmra.mxu0 %v7296
    %v7298 = vpop.f32.mrf.mxu0
    %v7299 = vadd.f32 %v7118, %v7298
    %v7300 = vpop.f32.mrf.mxu0
    %7301 = vmatprep.mubr.f32.mxu0 0.0
    %v7302 = vand.u32 %v6994, 4294901760
    %7303 = vmatmul.mubr.f32.gmra.mxu0 %v7302
    %v7304 = vpop.f32.mrf.mxu0
    %v7305 = vadd.f32 %v7128, %v7304
    %v7306 = vpop.f32.mrf.mxu0
    %7307 = vmatprep.mubr.f32.mxu0 0.0
    %v7308 = vand.u32 %v6997, 4294901760
    %7309 = vmatmul.mubr.f32.gmra.mxu0 %v7308
    %v7310 = vpop.f32.mrf.mxu0
    %v7311 = vadd.f32 %v7138, %v7310
    %v7312 = vpop.f32.mrf.mxu0
    %7313 = vmatprep.mubr.f32.mxu0 0.0
    %v7314 = vand.u32 %v7000, 4294901760
    %7315 = vmatmul.mubr.f32.gmra.mxu0 %v7314
    %v7316 = vpop.f32.mrf.mxu0
    %v7317 = vadd.f32 %v7148, %v7316
    %v7318 = vpop.f32.mrf.mxu0
    %7319 = vmatprep.mubr.f32.mxu0 0.0
    %v7320 = vand.u32 %v7003, 4294901760
    %7321 = vmatmul.mubr.f32.gmra.mxu0 %v7320
    %v7322 = vpop.f32.mrf.mxu0
    %v7323 = vadd.f32 %v7158, %v7322
    %v7324 = vpop.f32.mrf.mxu0
    %7325 = vmatprep.mubr.f32.mxu0 0.0
    %v7326 = vand.u32 %v7006, 4294901760
    %7327 = vmatmul.mubr.f32.gmra.mxu0 %v7326
    %v7328 = vpop.f32.mrf.mxu0
    %v7329 = vadd.f32 %v7168, %v7328
    %v7330 = vpop.f32.mrf.mxu0
    %7331 = vmatprep.mubr.f32.mxu0 0.0
    %v7332 = vand.u32 %v7009, 4294901760
    %7333 = vmatmul.mubr.f32.gmra.mxu0 %v7332
    %v7334 = vpop.f32.mrf.mxu0
    %v7335 = vadd.f32 %v7178, %v7334
    %v7336 = vpop.f32.mrf.mxu0
    %7337 = vmatprep.mubr.f32.mxu0 0.0
    %v7338 = vand.u32 %v7012, 4294901760
    %7339 = vmatmul.mubr.f32.gmra.mxu0 %v7338
    %v7340 = vpop.f32.mrf.mxu0
    %v7341 = vadd.f32 %v7188, %v7340
    %v7342 = vpop.f32.mrf.mxu0
    %7343 = vdwg.mxu0
    %7344 = vmatprep.subr.mxu0 0.0
    %7345 = vmatpush1.xpose.msra.mxu0 0.0
    %7346 = vmatprep.subr.mxu0 0.0
    %7347 = vmatpush1.xpose.msra.mxu0 0.0
    %7348 = vmatprep.subr.mxu0 0.0
    %7349 = vmatpush1.xpose.msra.mxu0 0.0
    %7350 = vmatprep.subr.mxu0 0.0
    %7351 = vmatpush1.xpose.msra.mxu0 0.0
    %7352 = vmatprep.subr.mxu0 0.0
    %7353 = vmatpush1.xpose.msra.mxu0 0.0
    %7354 = vmatprep.subr.mxu0 0.0
    %7355 = vmatpush1.xpose.msra.mxu0 0.0
    %7356 = vmatprep.subr.mxu0 0.0
    %7357 = vmatpush1.xpose.msra.mxu0 0.0
    %7358 = vmatprep.subr.mxu0 0.0
    %7359 = vmatpush1.xpose.msra.mxu0 0.0
    %7360 = vmatprep.subr.mxu0 0.0
    %v7361 = vand.u32 %v7036, 4294901760
    %v7362 = vsub.f32 %v7036, %v7361
    %7363 = vmatpush1.xpose.msra.mxu0 %v7362
    %7364 = vmatprep.subr.mxu0 0.0
    %v7365 = vand.u32 %v7033, 4294901760
    %v7366 = vsub.f32 %v7033, %v7365
    %7367 = vmatpush1.xpose.msra.mxu0 %v7366
    %7368 = vmatprep.subr.mxu0 0.0
    %v7369 = vand.u32 %v7030, 4294901760
    %v7370 = vsub.f32 %v7030, %v7369
    %7371 = vmatpush1.xpose.msra.mxu0 %v7370
    %7372 = vmatprep.subr.mxu0 0.0
    %v7373 = vand.u32 %v7027, 4294901760
    %v7374 = vsub.f32 %v7027, %v7373
    %7375 = vmatpush1.xpose.msra.mxu0 %v7374
    %7376 = vmatprep.subr.mxu0 0.0
    %v7377 = vand.u32 %v7024, 4294901760
    %v7378 = vsub.f32 %v7024, %v7377
    %7379 = vmatpush1.xpose.msra.mxu0 %v7378
    %7380 = vmatprep.subr.mxu0 0.0
    %v7381 = vand.u32 %v7021, 4294901760
    %v7382 = vsub.f32 %v7021, %v7381
    %7383 = vmatpush1.xpose.msra.mxu0 %v7382
    %7384 = vmatprep.subr.mxu0 0.0
    %v7385 = vand.u32 %v7018, 4294901760
    %v7386 = vsub.f32 %v7018, %v7385
    %7387 = vmatpush1.xpose.msra.mxu0 %v7386
    %7388 = vmatprep.subr.mxu0 0.0
    %v7389 = vand.u32 %v7015, 4294901760
    %v7390 = vsub.f32 %v7015, %v7389
    %7391 = vmatpush1.xpose.msra.mxu0 %v7390
    %7392 = vmatprep.subr.mxu0 0.0
    %7393 = vmatpush2.xpose.msra.mxu0 0.0
    %7394 = vmatprep.subr.mxu0 0.0
    %7395 = vmatpush2.xpose.msra.mxu0 0.0
    %7396 = vmatprep.subr.mxu0 0.0
    %7397 = vmatpush2.xpose.msra.mxu0 0.0
    %7398 = vmatprep.subr.mxu0 0.0
    %7399 = vmatpush2.xpose.msra.mxu0 0.0
    %7400 = vmatprep.subr.mxu0 0.0
    %7401 = vmatpush2.xpose.msra.mxu0 0.0
    %7402 = vmatprep.subr.mxu0 0.0
    %7403 = vmatpush2.xpose.msra.mxu0 0.0
    %7404 = vmatprep.subr.mxu0 0.0
    %7405 = vmatpush2.xpose.msra.mxu0 0.0
    %7406 = vmatprep.subr.mxu0 0.0
    %7407 = vmatpush2.xpose.msra.mxu0 0.0
    %7408 = vmatprep.subr.mxu0 0.0
    %7409 = vmatpush2.xpose.msra.mxu0 0.0
    %7410 = vmatprep.subr.mxu0 0.0
    %7411 = vmatpush2.xpose.msra.mxu0 0.0
    %7412 = vmatprep.subr.mxu0 0.0
    %7413 = vmatpush2.xpose.msra.mxu0 0.0
    %7414 = vmatprep.subr.mxu0 0.0
    %7415 = vmatpush2.xpose.msra.mxu0 0.0
    %7416 = vmatprep.subr.mxu0 0.0
    %7417 = vmatpush2.xpose.msra.mxu0 0.0
    %7418 = vmatprep.subr.mxu0 0.0
    %7419 = vmatpush2.xpose.msra.mxu0 0.0
    %7420 = vmatprep.subr.mxu0 0.0
    %7421 = vmatpush2.xpose.msra.mxu0 0.0
    %7422 = vmatprep.subr.mxu0 0.0
    %7423 = vmatpush2.xpose.msra.mxu0 0.0
    %7424 = vmatprep.mubr.f32.mxu0 0.0
    %v7425 = vand.u32 %v6991, 4294901760
    %v7426 = vsub.f32 %v6991, %v7425
    %7427 = vmatmul.mubr.f32.gmra.mxu0 %v7426
    %v7428 = vpop.f32.mrf.mxu0
    %v7429 = vadd.f32 %v7299, %v7428
    %v7430 = vpop.f32.mrf.mxu0
    %7431 = vmatprep.mubr.f32.mxu0 0.0
    %v7432 = vand.u32 %v6994, 4294901760
    %v7433 = vsub.f32 %v6994, %v7432
    %7434 = vmatmul.mubr.f32.gmra.mxu0 %v7433
    %v7435 = vpop.f32.mrf.mxu0
    %v7436 = vadd.f32 %v7305, %v7435
    %v7437 = vpop.f32.mrf.mxu0
    %7438 = vmatprep.mubr.f32.mxu0 0.0
    %v7439 = vand.u32 %v6997, 4294901760
    %v7440 = vsub.f32 %v6997, %v7439
    %7441 = vmatmul.mubr.f32.gmra.mxu0 %v7440
    %v7442 = vpop.f32.mrf.mxu0
    %v7443 = vadd.f32 %v7311, %v7442
    %v7444 = vpop.f32.mrf.mxu0
    %7445 = vmatprep.mubr.f32.mxu0 0.0
    %v7446 = vand.u32 %v7000, 4294901760
    %v7447 = vsub.f32 %v7000, %v7446
    %7448 = vmatmul.mubr.f32.gmra.mxu0 %v7447
    %v7449 = vpop.f32.mrf.mxu0
    %v7450 = vadd.f32 %v7317, %v7449
    %v7451 = vpop.f32.mrf.mxu0
    %7452 = vmatprep.mubr.f32.mxu0 0.0
    %v7453 = vand.u32 %v7003, 4294901760
    %v7454 = vsub.f32 %v7003, %v7453
    %7455 = vmatmul.mubr.f32.gmra.mxu0 %v7454
    %v7456 = vpop.f32.mrf.mxu0
    %v7457 = vadd.f32 %v7323, %v7456
    %v7458 = vpop.f32.mrf.mxu0
    %7459 = vmatprep.mubr.f32.mxu0 0.0
    %v7460 = vand.u32 %v7006, 4294901760
    %v7461 = vsub.f32 %v7006, %v7460
    %7462 = vmatmul.mubr.f32.gmra.mxu0 %v7461
    %v7463 = vpop.f32.mrf.mxu0
    %v7464 = vadd.f32 %v7329, %v7463
    %v7465 = vpop.f32.mrf.mxu0
    %7466 = vmatprep.mubr.f32.mxu0 0.0
    %v7467 = vand.u32 %v7009, 4294901760
    %v7468 = vsub.f32 %v7009, %v7467
    %7469 = vmatmul.mubr.f32.gmra.mxu0 %v7468
    %v7470 = vpop.f32.mrf.mxu0
    %v7471 = vadd.f32 %v7335, %v7470
    %v7472 = vpop.f32.mrf.mxu0
    %7473 = vmatprep.mubr.f32.mxu0 0.0
    %v7474 = vand.u32 %v7012, 4294901760
    %v7475 = vsub.f32 %v7012, %v7474
    %7476 = vmatmul.mubr.f32.gmra.mxu0 %v7475
    %v7477 = vpop.f32.mrf.mxu0
    %v7478 = vadd.f32 %v7341, %v7477
    %v7479 = vpop.f32.mrf.mxu0
    %7480 = vdwg.mxu0
    %7481 = vmatprep.subr.mxu0 0.0
    %7482 = vmatpush1.xpose.msra.mxu0 0.0
    %7483 = vmatprep.subr.mxu0 0.0
    %7484 = vmatpush1.xpose.msra.mxu0 0.0
    %7485 = vmatprep.subr.mxu0 0.0
    %7486 = vmatpush1.xpose.msra.mxu0 0.0
    %7487 = vmatprep.subr.mxu0 0.0
    %7488 = vmatpush1.xpose.msra.mxu0 0.0
    %7489 = vmatprep.subr.mxu0 0.0
    %7490 = vmatpush1.xpose.msra.mxu0 0.0
    %7491 = vmatprep.subr.mxu0 0.0
    %7492 = vmatpush1.xpose.msra.mxu0 0.0
    %7493 = vmatprep.subr.mxu0 0.0
    %7494 = vmatpush1.xpose.msra.mxu0 0.0
    %7495 = vmatprep.subr.mxu0 0.0
    %7496 = vmatpush1.xpose.msra.mxu0 0.0
    %7497 = vmatprep.subr.mxu0 0.0
    %v7498 = vand.u32 %v7036, 4294901760
    %7499 = vmatpush1.xpose.msra.mxu0 %v7498
    %7500 = vmatprep.subr.mxu0 0.0
    %v7501 = vand.u32 %v7033, 4294901760
    %7502 = vmatpush1.xpose.msra.mxu0 %v7501
    %7503 = vmatprep.subr.mxu0 0.0
    %v7504 = vand.u32 %v7030, 4294901760
    %7505 = vmatpush1.xpose.msra.mxu0 %v7504
    %7506 = vmatprep.subr.mxu0 0.0
    %v7507 = vand.u32 %v7027, 4294901760
    %7508 = vmatpush1.xpose.msra.mxu0 %v7507
    %7509 = vmatprep.subr.mxu0 0.0
    %v7510 = vand.u32 %v7024, 4294901760
    %7511 = vmatpush1.xpose.msra.mxu0 %v7510
    %7512 = vmatprep.subr.mxu0 0.0
    %v7513 = vand.u32 %v7021, 4294901760
    %7514 = vmatpush1.xpose.msra.mxu0 %v7513
    %7515 = vmatprep.subr.mxu0 0.0
    %v7516 = vand.u32 %v7018, 4294901760
    %7517 = vmatpush1.xpose.msra.mxu0 %v7516
    %7518 = vmatprep.subr.mxu0 0.0
    %v7519 = vand.u32 %v7015, 4294901760
    %7520 = vmatpush1.xpose.msra.mxu0 %v7519
    %7521 = vmatprep.subr.mxu0 0.0
    %7522 = vmatpush2.xpose.msra.mxu0 0.0
    %7523 = vmatprep.subr.mxu0 0.0
    %7524 = vmatpush2.xpose.msra.mxu0 0.0
    %7525 = vmatprep.subr.mxu0 0.0
    %7526 = vmatpush2.xpose.msra.mxu0 0.0
    %7527 = vmatprep.subr.mxu0 0.0
    %7528 = vmatpush2.xpose.msra.mxu0 0.0
    %7529 = vmatprep.subr.mxu0 0.0
    %7530 = vmatpush2.xpose.msra.mxu0 0.0
    %7531 = vmatprep.subr.mxu0 0.0
    %7532 = vmatpush2.xpose.msra.mxu0 0.0
    %7533 = vmatprep.subr.mxu0 0.0
    %7534 = vmatpush2.xpose.msra.mxu0 0.0
    %7535 = vmatprep.subr.mxu0 0.0
    %7536 = vmatpush2.xpose.msra.mxu0 0.0
    %7537 = vmatprep.subr.mxu0 0.0
    %7538 = vmatpush2.xpose.msra.mxu0 0.0
    %7539 = vmatprep.subr.mxu0 0.0
    %7540 = vmatpush2.xpose.msra.mxu0 0.0
    %7541 = vmatprep.subr.mxu0 0.0
    %7542 = vmatpush2.xpose.msra.mxu0 0.0
    %7543 = vmatprep.subr.mxu0 0.0
    %7544 = vmatpush2.xpose.msra.mxu0 0.0
    %7545 = vmatprep.subr.mxu0 0.0
    %7546 = vmatpush2.xpose.msra.mxu0 0.0
    %7547 = vmatprep.subr.mxu0 0.0
    %7548 = vmatpush2.xpose.msra.mxu0 0.0
    %7549 = vmatprep.subr.mxu0 0.0
    %7550 = vmatpush2.xpose.msra.mxu0 0.0
    %7551 = vmatprep.subr.mxu0 0.0
    %7552 = vmatpush2.xpose.msra.mxu0 0.0
    %7553 = vmatprep.mubr.f32.mxu0 0.0
    %v7554 = vand.u32 %v6991, 4294901760
    %v7555 = vsub.f32 %v6991, %v7554
    %v7556 = vand.u32 %v7555, 4294901760
    %7557 = vmatmul.mubr.f32.gmra.mxu0 %v7556
    %v7558 = vpop.f32.mrf.mxu0
    %v7559 = vadd.f32 %v7429, %v7558
    %v7560 = vpop.f32.mrf.mxu0
    %7561 = vmatprep.mubr.f32.mxu0 0.0
    %v7562 = vand.u32 %v6994, 4294901760
    %v7563 = vsub.f32 %v6994, %v7562
    %v7564 = vand.u32 %v7563, 4294901760
    %7565 = vmatmul.mubr.f32.gmra.mxu0 %v7564
    %v7566 = vpop.f32.mrf.mxu0
    %v7567 = vadd.f32 %v7436, %v7566
    %v7568 = vpop.f32.mrf.mxu0
    %7569 = vmatprep.mubr.f32.mxu0 0.0
    %v7570 = vand.u32 %v6997, 4294901760
    %v7571 = vsub.f32 %v6997, %v7570
    %v7572 = vand.u32 %v7571, 4294901760
    %7573 = vmatmul.mubr.f32.gmra.mxu0 %v7572
    %v7574 = vpop.f32.mrf.mxu0
    %v7575 = vadd.f32 %v7443, %v7574
    %v7576 = vpop.f32.mrf.mxu0
    %7577 = vmatprep.mubr.f32.mxu0 0.0
    %v7578 = vand.u32 %v7000, 4294901760
    %v7579 = vsub.f32 %v7000, %v7578
    %v7580 = vand.u32 %v7579, 4294901760
    %7581 = vmatmul.mubr.f32.gmra.mxu0 %v7580
    %v7582 = vpop.f32.mrf.mxu0
    %v7583 = vadd.f32 %v7450, %v7582
    %v7584 = vpop.f32.mrf.mxu0
    %7585 = vmatprep.mubr.f32.mxu0 0.0
    %v7586 = vand.u32 %v7003, 4294901760
    %v7587 = vsub.f32 %v7003, %v7586
    %v7588 = vand.u32 %v7587, 4294901760
    %7589 = vmatmul.mubr.f32.gmra.mxu0 %v7588
    %v7590 = vpop.f32.mrf.mxu0
    %v7591 = vadd.f32 %v7457, %v7590
    %v7592 = vpop.f32.mrf.mxu0
    %7593 = vmatprep.mubr.f32.mxu0 0.0
    %v7594 = vand.u32 %v7006, 4294901760
    %v7595 = vsub.f32 %v7006, %v7594
    %v7596 = vand.u32 %v7595, 4294901760
    %7597 = vmatmul.mubr.f32.gmra.mxu0 %v7596
    %v7598 = vpop.f32.mrf.mxu0
    %v7599 = vadd.f32 %v7464, %v7598
    %v7600 = vpop.f32.mrf.mxu0
    %7601 = vmatprep.mubr.f32.mxu0 0.0
    %v7602 = vand.u32 %v7009, 4294901760
    %v7603 = vsub.f32 %v7009, %v7602
    %v7604 = vand.u32 %v7603, 4294901760
    %7605 = vmatmul.mubr.f32.gmra.mxu0 %v7604
    %v7606 = vpop.f32.mrf.mxu0
    %v7607 = vadd.f32 %v7471, %v7606
    %v7608 = vpop.f32.mrf.mxu0
    %7609 = vmatprep.mubr.f32.mxu0 0.0
    %v7610 = vand.u32 %v7012, 4294901760
    %v7611 = vsub.f32 %v7012, %v7610
    %v7612 = vand.u32 %v7611, 4294901760
    %7613 = vmatmul.mubr.f32.gmra.mxu0 %v7612
    %v7614 = vpop.f32.mrf.mxu0
    %v7615 = vadd.f32 %v7478, %v7614
    %v7616 = vpop.f32.mrf.mxu0
    %7617 = vdwg.mxu0
    %7618 = vmatprep.subr.mxu0 0.0
    %7619 = vmatpush1.xpose.msra.mxu0 0.0
    %7620 = vmatprep.subr.mxu0 0.0
    %7621 = vmatpush1.xpose.msra.mxu0 0.0
    %7622 = vmatprep.subr.mxu0 0.0
    %7623 = vmatpush1.xpose.msra.mxu0 0.0
    %7624 = vmatprep.subr.mxu0 0.0
    %7625 = vmatpush1.xpose.msra.mxu0 0.0
    %7626 = vmatprep.subr.mxu0 0.0
    %7627 = vmatpush1.xpose.msra.mxu0 0.0
    %7628 = vmatprep.subr.mxu0 0.0
    %7629 = vmatpush1.xpose.msra.mxu0 0.0
    %7630 = vmatprep.subr.mxu0 0.0
    %7631 = vmatpush1.xpose.msra.mxu0 0.0
    %7632 = vmatprep.subr.mxu0 0.0
    %7633 = vmatpush1.xpose.msra.mxu0 0.0
    %7634 = vmatprep.subr.mxu0 0.0
    %v7635 = vand.u32 %v7036, 4294901760
    %v7636 = vsub.f32 %v7036, %v7635
    %v7637 = vand.u32 %v7636, 4294901760
    %7638 = vmatpush1.xpose.msra.mxu0 %v7637
    %7639 = vmatprep.subr.mxu0 0.0
    %v7640 = vand.u32 %v7033, 4294901760
    %v7641 = vsub.f32 %v7033, %v7640
    %v7642 = vand.u32 %v7641, 4294901760
    %7643 = vmatpush1.xpose.msra.mxu0 %v7642
    %7644 = vmatprep.subr.mxu0 0.0
    %v7645 = vand.u32 %v7030, 4294901760
    %v7646 = vsub.f32 %v7030, %v7645
    %v7647 = vand.u32 %v7646, 4294901760
    %7648 = vmatpush1.xpose.msra.mxu0 %v7647
    %7649 = vmatprep.subr.mxu0 0.0
    %v7650 = vand.u32 %v7027, 4294901760
    %v7651 = vsub.f32 %v7027, %v7650
    %v7652 = vand.u32 %v7651, 4294901760
    %7653 = vmatpush1.xpose.msra.mxu0 %v7652
    %7654 = vmatprep.subr.mxu0 0.0
    %v7655 = vand.u32 %v7024, 4294901760
    %v7656 = vsub.f32 %v7024, %v7655
    %v7657 = vand.u32 %v7656, 4294901760
    %7658 = vmatpush1.xpose.msra.mxu0 %v7657
    %7659 = vmatprep.subr.mxu0 0.0
    %v7660 = vand.u32 %v7021, 4294901760
    %v7661 = vsub.f32 %v7021, %v7660
    %v7662 = vand.u32 %v7661, 4294901760
    %7663 = vmatpush1.xpose.msra.mxu0 %v7662
    %7664 = vmatprep.subr.mxu0 0.0
    %v7665 = vand.u32 %v7018, 4294901760
    %v7666 = vsub.f32 %v7018, %v7665
    %v7667 = vand.u32 %v7666, 4294901760
    %7668 = vmatpush1.xpose.msra.mxu0 %v7667
    %7669 = vmatprep.subr.mxu0 0.0
    %v7670 = vand.u32 %v7015, 4294901760
    %v7671 = vsub.f32 %v7015, %v7670
    %v7672 = vand.u32 %v7671, 4294901760
    %7673 = vmatpush1.xpose.msra.mxu0 %v7672
    %7674 = vmatprep.subr.mxu0 0.0
    %7675 = vmatpush2.xpose.msra.mxu0 0.0
    %7676 = vmatprep.subr.mxu0 0.0
    %7677 = vmatpush2.xpose.msra.mxu0 0.0
    %7678 = vmatprep.subr.mxu0 0.0
    %7679 = vmatpush2.xpose.msra.mxu0 0.0
    %7680 = vmatprep.subr.mxu0 0.0
    %7681 = vmatpush2.xpose.msra.mxu0 0.0
    %7682 = vmatprep.subr.mxu0 0.0
    %7683 = vmatpush2.xpose.msra.mxu0 0.0
    %7684 = vmatprep.subr.mxu0 0.0
    %7685 = vmatpush2.xpose.msra.mxu0 0.0
    %7686 = vmatprep.subr.mxu0 0.0
    %7687 = vmatpush2.xpose.msra.mxu0 0.0
    %7688 = vmatprep.subr.mxu0 0.0
    %7689 = vmatpush2.xpose.msra.mxu0 0.0
    %7690 = vmatprep.subr.mxu0 0.0
    %7691 = vmatpush2.xpose.msra.mxu0 0.0
    %7692 = vmatprep.subr.mxu0 0.0
    %7693 = vmatpush2.xpose.msra.mxu0 0.0
    %7694 = vmatprep.subr.mxu0 0.0
    %7695 = vmatpush2.xpose.msra.mxu0 0.0
    %7696 = vmatprep.subr.mxu0 0.0
    %7697 = vmatpush2.xpose.msra.mxu0 0.0
    %7698 = vmatprep.subr.mxu0 0.0
    %7699 = vmatpush2.xpose.msra.mxu0 0.0
    %7700 = vmatprep.subr.mxu0 0.0
    %7701 = vmatpush2.xpose.msra.mxu0 0.0
    %7702 = vmatprep.subr.mxu0 0.0
    %7703 = vmatpush2.xpose.msra.mxu0 0.0
    %7704 = vmatprep.subr.mxu0 0.0
    %7705 = vmatpush2.xpose.msra.mxu0 0.0
    %7706 = vmatprep.mubr.f32.mxu0 0.0
    %v7707 = vand.u32 %v6991, 4294901760
    %7708 = vmatmul.mubr.f32.gmra.mxu0 %v7707
    %v7709 = vpop.f32.mrf.mxu0
    %v7710 = vadd.f32 %v7559, %v7709
    %v7711 = vpop.f32.mrf.mxu0
    %7712 = vmatprep.mubr.f32.mxu0 0.0
    %v7713 = vand.u32 %v6994, 4294901760
    %7714 = vmatmul.mubr.f32.gmra.mxu0 %v7713
    %v7715 = vpop.f32.mrf.mxu0
    %v7716 = vadd.f32 %v7567, %v7715
    %v7717 = vpop.f32.mrf.mxu0
    %7718 = vmatprep.mubr.f32.mxu0 0.0
    %v7719 = vand.u32 %v6997, 4294901760
    %7720 = vmatmul.mubr.f32.gmra.mxu0 %v7719
    %v7721 = vpop.f32.mrf.mxu0
    %v7722 = vadd.f32 %v7575, %v7721
    %v7723 = vpop.f32.mrf.mxu0
    %7724 = vmatprep.mubr.f32.mxu0 0.0
    %v7725 = vand.u32 %v7000, 4294901760
    %7726 = vmatmul.mubr.f32.gmra.mxu0 %v7725
    %v7727 = vpop.f32.mrf.mxu0
    %v7728 = vadd.f32 %v7583, %v7727
    %v7729 = vpop.f32.mrf.mxu0
    %7730 = vmatprep.mubr.f32.mxu0 0.0
    %v7731 = vand.u32 %v7003, 4294901760
    %7732 = vmatmul.mubr.f32.gmra.mxu0 %v7731
    %v7733 = vpop.f32.mrf.mxu0
    %v7734 = vadd.f32 %v7591, %v7733
    %v7735 = vpop.f32.mrf.mxu0
    %7736 = vmatprep.mubr.f32.mxu0 0.0
    %v7737 = vand.u32 %v7006, 4294901760
    %7738 = vmatmul.mubr.f32.gmra.mxu0 %v7737
    %v7739 = vpop.f32.mrf.mxu0
    %v7740 = vadd.f32 %v7599, %v7739
    %v7741 = vpop.f32.mrf.mxu0
    %7742 = vmatprep.mubr.f32.mxu0 0.0
    %v7743 = vand.u32 %v7009, 4294901760
    %7744 = vmatmul.mubr.f32.gmra.mxu0 %v7743
    %v7745 = vpop.f32.mrf.mxu0
    %v7746 = vadd.f32 %v7607, %v7745
    %v7747 = vpop.f32.mrf.mxu0
    %7748 = vmatprep.mubr.f32.mxu0 0.0
    %v7749 = vand.u32 %v7012, 4294901760
    %7750 = vmatmul.mubr.f32.gmra.mxu0 %v7749
    %v7751 = vpop.f32.mrf.mxu0
    %v7752 = vadd.f32 %v7615, %v7751
    %v7753 = vpop.f32.mrf.mxu0
    %7754 = vdwg.mxu0
    %7755 = vmatprep.subr.mxu0 0.0
    %7756 = vmatpush1.xpose.msra.mxu0 0.0
    %7757 = vmatprep.subr.mxu0 0.0
    %7758 = vmatpush1.xpose.msra.mxu0 0.0
    %7759 = vmatprep.subr.mxu0 0.0
    %7760 = vmatpush1.xpose.msra.mxu0 0.0
    %7761 = vmatprep.subr.mxu0 0.0
    %7762 = vmatpush1.xpose.msra.mxu0 0.0
    %7763 = vmatprep.subr.mxu0 0.0
    %7764 = vmatpush1.xpose.msra.mxu0 0.0
    %7765 = vmatprep.subr.mxu0 0.0
    %7766 = vmatpush1.xpose.msra.mxu0 0.0
    %7767 = vmatprep.subr.mxu0 0.0
    %7768 = vmatpush1.xpose.msra.mxu0 0.0
    %7769 = vmatprep.subr.mxu0 0.0
    %7770 = vmatpush1.xpose.msra.mxu0 0.0
    %7771 = vmatprep.subr.mxu0 0.0
    %v7772 = vand.u32 %v7036, 4294901760
    %7773 = vmatpush1.xpose.msra.mxu0 %v7772
    %7774 = vmatprep.subr.mxu0 0.0
    %v7775 = vand.u32 %v7033, 4294901760
    %7776 = vmatpush1.xpose.msra.mxu0 %v7775
    %7777 = vmatprep.subr.mxu0 0.0
    %v7778 = vand.u32 %v7030, 4294901760
    %7779 = vmatpush1.xpose.msra.mxu0 %v7778
    %7780 = vmatprep.subr.mxu0 0.0
    %v7781 = vand.u32 %v7027, 4294901760
    %7782 = vmatpush1.xpose.msra.mxu0 %v7781
    %7783 = vmatprep.subr.mxu0 0.0
    %v7784 = vand.u32 %v7024, 4294901760
    %7785 = vmatpush1.xpose.msra.mxu0 %v7784
    %7786 = vmatprep.subr.mxu0 0.0
    %v7787 = vand.u32 %v7021, 4294901760
    %7788 = vmatpush1.xpose.msra.mxu0 %v7787
    %7789 = vmatprep.subr.mxu0 0.0
    %v7790 = vand.u32 %v7018, 4294901760
    %7791 = vmatpush1.xpose.msra.mxu0 %v7790
    %7792 = vmatprep.subr.mxu0 0.0
    %v7793 = vand.u32 %v7015, 4294901760
    %7794 = vmatpush1.xpose.msra.mxu0 %v7793
    %7795 = vmatprep.subr.mxu0 0.0
    %7796 = vmatpush2.xpose.msra.mxu0 0.0
    %7797 = vmatprep.subr.mxu0 0.0
    %7798 = vmatpush2.xpose.msra.mxu0 0.0
    %7799 = vmatprep.subr.mxu0 0.0
    %7800 = vmatpush2.xpose.msra.mxu0 0.0
    %7801 = vmatprep.subr.mxu0 0.0
    %7802 = vmatpush2.xpose.msra.mxu0 0.0
    %7803 = vmatprep.subr.mxu0 0.0
    %7804 = vmatpush2.xpose.msra.mxu0 0.0
    %7805 = vmatprep.subr.mxu0 0.0
    %7806 = vmatpush2.xpose.msra.mxu0 0.0
    %7807 = vmatprep.subr.mxu0 0.0
    %7808 = vmatpush2.xpose.msra.mxu0 0.0
    %7809 = vmatprep.subr.mxu0 0.0
    %7810 = vmatpush2.xpose.msra.mxu0 0.0
    %7811 = vmatprep.subr.mxu0 0.0
    %7812 = vmatpush2.xpose.msra.mxu0 0.0
    %7813 = vmatprep.subr.mxu0 0.0
    %7814 = vmatpush2.xpose.msra.mxu0 0.0
    %7815 = vmatprep.subr.mxu0 0.0
    %7816 = vmatpush2.xpose.msra.mxu0 0.0
    %7817 = vmatprep.subr.mxu0 0.0
    %7818 = vmatpush2.xpose.msra.mxu0 0.0
    %7819 = vmatprep.subr.mxu0 0.0
    %7820 = vmatpush2.xpose.msra.mxu0 0.0
    %7821 = vmatprep.subr.mxu0 0.0
    %7822 = vmatpush2.xpose.msra.mxu0 0.0
    %7823 = vmatprep.subr.mxu0 0.0
    %7824 = vmatpush2.xpose.msra.mxu0 0.0
    %7825 = vmatprep.subr.mxu0 0.0
    %7826 = vmatpush2.xpose.msra.mxu0 0.0
    %7827 = vmatprep.mubr.f32.mxu0 0.0
    %v7828 = vand.u32 %v6991, 4294901760
    %7829 = vmatmul.mubr.f32.gmra.mxu0 %v7828
    %v7830 = vpop.f32.mrf.mxu0
    %v7831 = vadd.f32 %v7710, %v7830
    %v7832 = vpop.f32.mrf.mxu0
    %7833 = vmatprep.mubr.f32.mxu0 0.0
    %v7834 = vand.u32 %v6994, 4294901760
    %7835 = vmatmul.mubr.f32.gmra.mxu0 %v7834
    %v7836 = vpop.f32.mrf.mxu0
    %v7837 = vadd.f32 %v7716, %v7836
    %v7838 = vpop.f32.mrf.mxu0
    %7839 = vmatprep.mubr.f32.mxu0 0.0
    %v7840 = vand.u32 %v6997, 4294901760
    %7841 = vmatmul.mubr.f32.gmra.mxu0 %v7840
    %v7842 = vpop.f32.mrf.mxu0
    %v7843 = vadd.f32 %v7722, %v7842
    %v7844 = vpop.f32.mrf.mxu0
    %7845 = vmatprep.mubr.f32.mxu0 0.0
    %v7846 = vand.u32 %v7000, 4294901760
    %7847 = vmatmul.mubr.f32.gmra.mxu0 %v7846
    %v7848 = vpop.f32.mrf.mxu0
    %v7849 = vadd.f32 %v7728, %v7848
    %v7850 = vpop.f32.mrf.mxu0
    %7851 = vmatprep.mubr.f32.mxu0 0.0
    %v7852 = vand.u32 %v7003, 4294901760
    %7853 = vmatmul.mubr.f32.gmra.mxu0 %v7852
    %v7854 = vpop.f32.mrf.mxu0
    %v7855 = vadd.f32 %v7734, %v7854
    %v7856 = vpop.f32.mrf.mxu0
    %7857 = vmatprep.mubr.f32.mxu0 0.0
    %v7858 = vand.u32 %v7006, 4294901760
    %7859 = vmatmul.mubr.f32.gmra.mxu0 %v7858
    %v7860 = vpop.f32.mrf.mxu0
    %v7861 = vadd.f32 %v7740, %v7860
    %v7862 = vpop.f32.mrf.mxu0
    %7863 = vmatprep.mubr.f32.mxu0 0.0
    %v7864 = vand.u32 %v7009, 4294901760
    %7865 = vmatmul.mubr.f32.gmra.mxu0 %v7864
    %v7866 = vpop.f32.mrf.mxu0
    %v7867 = vadd.f32 %v7746, %v7866
    %v7868 = vpop.f32.mrf.mxu0
    %7869 = vmatprep.mubr.f32.mxu0 0.0
    %v7870 = vand.u32 %v7012, 4294901760
    %7871 = vmatmul.mubr.f32.gmra.mxu0 %v7870
    %v7872 = vpop.f32.mrf.mxu0
    %v7873 = vadd.f32 %v7752, %v7872
    %v7874 = vpop.f32.mrf.mxu0
    %7875 = vdwg.mxu0
    %v7876 = vsel %vm2486, %v7831, -inf
    %7877 = vmax.xlane.f32.xlu0 %v7876
    %v7878 = vpop.xlane.xlu0 %7877
    %v7879 = vsel %vm2486, %v7837, -inf
    %7880 = vmax.xlane.f32.xlu0 %v7879
    %v7881 = vpop.xlane.xlu0 %7880
    %v7882 = vsel %vm2486, %v7843, -inf
    %7883 = vmax.xlane.f32.xlu0 %v7882
    %v7884 = vpop.xlane.xlu0 %7883
    %v7885 = vsel %vm2486, %v7849, -inf
    %7886 = vmax.xlane.f32.xlu0 %v7885
    %v7887 = vpop.xlane.xlu0 %7886
    %v7888 = vsel %vm2486, %v7855, -inf
    %7889 = vmax.xlane.f32.xlu0 %v7888
    %v7890 = vpop.xlane.xlu0 %7889
    %v7891 = vsel %vm2486, %v7861, -inf
    %7892 = vmax.xlane.f32.xlu0 %v7891
    %v7893 = vpop.xlane.xlu0 %7892
    %v7894 = vsel %vm2486, %v7867, -inf
    %7895 = vmax.xlane.f32.xlu0 %v7894
    %v7896 = vpop.xlane.xlu0 %7895
    %v7897 = vsel %vm2486, %v7873, -inf
    %7898 = vmax.xlane.f32.xlu0 %v7897
    %v7899 = vpop.xlane.xlu0 %7898
    %v7900 = vsub.f32 %v7831, %v7878
    %v7901 = vsub.f32 %v7837, %v7881
    %v7902 = vsub.f32 %v7843, %v7884
    %v7903 = vsub.f32 %v7849, %v7887
    %v7904 = vsub.f32 %v7855, %v7890
    %v7905 = vsub.f32 %v7861, %v7893
    %v7906 = vsub.f32 %v7867, %v7896
    %v7907 = vsub.f32 %v7873, %v7899
    %v7908 = vmul.f32 %v7900, 1.442695
    %v7909 = vpow.pop %v7908
    %v7910 = vmul.f32 %v7901, 1.442695
    %v7911 = vpow.pop %v7910
    %v7912 = vmul.f32 %v7902, 1.442695
    %v7913 = vpow.pop %v7912
    %v7914 = vmul.f32 %v7903, 1.442695
    %v7915 = vpow.pop %v7914
    %v7916 = vmul.f32 %v7904, 1.442695
    %v7917 = vpow.pop %v7916
    %v7918 = vmul.f32 %v7905, 1.442695
    %v7919 = vpow.pop %v7918
    %v7920 = vmul.f32 %v7906, 1.442695
    %v7921 = vpow.pop %v7920
    %v7922 = vmul.f32 %v7907, 1.442695
    %v7923 = vpow.pop %v7922
    %v7924 = vsel %vm2486, %v7909, 0.0
    %7925 = vadd.xlane.f32.xlu0 %v7924
    %v7926 = vpop.xlane.xlu0 %7925
    %v7927 = vsel %vm2486, %v7911, 0.0
    %7928 = vadd.xlane.f32.xlu0 %v7927
    %v7929 = vpop.xlane.xlu0 %7928
    %v7930 = vsel %vm2486, %v7913, 0.0
    %7931 = vadd.xlane.f32.xlu0 %v7930
    %v7932 = vpop.xlane.xlu0 %7931
    %v7933 = vsel %vm2486, %v7915, 0.0
    %7934 = vadd.xlane.f32.xlu0 %v7933
    %v7935 = vpop.xlane.xlu0 %7934
    %v7936 = vsel %vm2486, %v7917, 0.0
    %7937 = vadd.xlane.f32.xlu0 %v7936
    %v7938 = vpop.xlane.xlu0 %7937
    %v7939 = vsel %vm2486, %v7919, 0.0
    %7940 = vadd.xlane.f32.xlu0 %v7939
    %v7941 = vpop.xlane.xlu0 %7940
    %v7942 = vsel %vm2486, %v7921, 0.0
    %7943 = vadd.xlane.f32.xlu0 %v7942
    %v7944 = vpop.xlane.xlu0 %7943
    %v7945 = vsel %vm2486, %v7923, 0.0
    %7946 = vadd.xlane.f32.xlu0 %v7945
    %v7947 = vpop.xlane.xlu0 %7946
    %v7948 = vrcp.pop %v7926
    %v7949 = vmul.f32 %v7909, %v7948
    %v7950 = vrcp.pop %v7929
    %v7951 = vmul.f32 %v7911, %v7950
    %v7952 = vrcp.pop %v7932
    %v7953 = vmul.f32 %v7913, %v7952
    %v7954 = vrcp.pop %v7935
    %v7955 = vmul.f32 %v7915, %v7954
    %v7956 = vrcp.pop %v7938
    %v7957 = vmul.f32 %v7917, %v7956
    %v7958 = vrcp.pop %v7941
    %v7959 = vmul.f32 %v7919, %v7958
    %v7960 = vrcp.pop %v7944
    %v7961 = vmul.f32 %v7921, %v7960
    %v7962 = vrcp.pop %v7947
    %v7963 = vmul.f32 %v7923, %v7962
    %v7965 = vsel %vm2486, %v7949, 0
    %v7968 = vsel %vm2486, %v7951, 0
    %v7971 = vsel %vm2486, %v7953, 0
    %v7974 = vsel %vm2486, %v7955, 0
    %v7977 = vsel %vm2486, %v7957, 0
    %v7980 = vsel %vm2486, %v7959, 0
    %v7983 = vsel %vm2486, %v7961, 0
    %v7986 = vsel %vm2486, %v7963, 0
    %7988 = vmatprep.subr.mxu0 0.0
    %7989 = vmatpush1.msra.mxu0 0.0
    %7990 = vmatprep.subr.mxu0 0.0
    %7991 = vmatpush1.msra.mxu0 0.0
    %7992 = vmatprep.subr.mxu0 0.0
    %7993 = vmatpush1.msra.mxu0 0.0
    %7994 = vmatprep.subr.mxu0 0.0
    %7995 = vmatpush1.msra.mxu0 0.0
    %7996 = vmatprep.subr.mxu0 0.0
    %7997 = vmatpush1.msra.mxu0 0.0
    %7998 = vmatprep.subr.mxu0 0.0
    %7999 = vmatpush1.msra.mxu0 0.0
    %8000 = vmatprep.subr.mxu0 0.0
    %8001 = vmatpush1.msra.mxu0 0.0
    %8002 = vmatprep.subr.mxu0 0.0
    %8003 = vmatpush1.msra.mxu0 0.0
    %8004 = vmatprep.subr.mxu0 0.0
    %v8005 = vand.u32 %v6989, 4294901760
    %8006 = vmatpush1.msra.mxu0 %v8005
    %8007 = vmatprep.subr.mxu0 0.0
    %v8008 = vand.u32 %v6921, 4294901760
    %8009 = vmatpush1.msra.mxu0 %v8008
    %8010 = vmatprep.subr.mxu0 0.0
    %v8011 = vand.u32 %v6988, 4294901760
    %8012 = vmatpush1.msra.mxu0 %v8011
    %8013 = vmatprep.subr.mxu0 0.0
    %v8014 = vand.u32 %v6920, 4294901760
    %8015 = vmatpush1.msra.mxu0 %v8014
    %8016 = vmatprep.subr.mxu0 0.0
    %v8017 = vand.u32 %v6987, 4294901760
    %8018 = vmatpush1.msra.mxu0 %v8017
    %8019 = vmatprep.subr.mxu0 0.0
    %v8020 = vand.u32 %v6919, 4294901760
    %8021 = vmatpush1.msra.mxu0 %v8020
    %8022 = vmatprep.subr.mxu0 0.0
    %v8023 = vand.u32 %v6986, 4294901760
    %8024 = vmatpush1.msra.mxu0 %v8023
    %8025 = vmatprep.subr.mxu0 0.0
    %v8026 = vand.u32 %v6918, 4294901760
    %8027 = vmatpush1.msra.mxu0 %v8026
    %8028 = vmatprep.subr.mxu0 0.0
    %8029 = vmatpush2.msra.mxu0 0.0
    %8030 = vmatprep.subr.mxu0 0.0
    %8031 = vmatpush2.msra.mxu0 0.0
    %8032 = vmatprep.subr.mxu0 0.0
    %8033 = vmatpush2.msra.mxu0 0.0
    %8034 = vmatprep.subr.mxu0 0.0
    %8035 = vmatpush2.msra.mxu0 0.0
    %8036 = vmatprep.subr.mxu0 0.0
    %8037 = vmatpush2.msra.mxu0 0.0
    %8038 = vmatprep.subr.mxu0 0.0
    %8039 = vmatpush2.msra.mxu0 0.0
    %8040 = vmatprep.subr.mxu0 0.0
    %8041 = vmatpush2.msra.mxu0 0.0
    %8042 = vmatprep.subr.mxu0 0.0
    %8043 = vmatpush2.msra.mxu0 0.0
    %8044 = vmatprep.subr.mxu0 0.0
    %8045 = vmatpush2.msra.mxu0 0.0
    %8046 = vmatprep.subr.mxu0 0.0
    %8047 = vmatpush2.msra.mxu0 0.0
    %8048 = vmatprep.subr.mxu0 0.0
    %8049 = vmatpush2.msra.mxu0 0.0
    %8050 = vmatprep.subr.mxu0 0.0
    %8051 = vmatpush2.msra.mxu0 0.0
    %8052 = vmatprep.subr.mxu0 0.0
    %8053 = vmatpush2.msra.mxu0 0.0
    %8054 = vmatprep.subr.mxu0 0.0
    %8055 = vmatpush2.msra.mxu0 0.0
    %8056 = vmatprep.subr.mxu0 0.0
    %8057 = vmatpush2.msra.mxu0 0.0
    %8058 = vmatprep.subr.mxu0 0.0
    %8059 = vmatpush2.msra.mxu0 0.0
    %8060 = vmatprep.mubr.f32.mxu0 0.0
    %v8061 = vand.u32 %v7965, 4294901760
    %v8062 = vsub.f32 %v7965, %v8061
    %v8063 = vand.u32 %v8062, 4294901760
    %v8064 = vsub.f32 %v8062, %v8063
    %v8065 = vand.u32 %v8064, 4294901760
    %8066 = vmatmul.mubr.f32.gmra.mxu0 %v8065
    %v8067 = vpop.f32.mrf.mxu0
    %v8068 = vadd.f32 0.0, %v8067
    %v8069 = vpop.f32.mrf.mxu0
    %8070 = vmatprep.mubr.f32.mxu0 0.0
    %v8071 = vand.u32 %v7968, 4294901760
    %v8072 = vsub.f32 %v7968, %v8071
    %v8073 = vand.u32 %v8072, 4294901760
    %v8074 = vsub.f32 %v8072, %v8073
    %v8075 = vand.u32 %v8074, 4294901760
    %8076 = vmatmul.mubr.f32.gmra.mxu0 %v8075
    %v8077 = vpop.f32.mrf.mxu0
    %v8078 = vadd.f32 0.0, %v8077
    %v8079 = vpop.f32.mrf.mxu0
    %8080 = vmatprep.mubr.f32.mxu0 0.0
    %v8081 = vand.u32 %v7971, 4294901760
    %v8082 = vsub.f32 %v7971, %v8081
    %v8083 = vand.u32 %v8082, 4294901760
    %v8084 = vsub.f32 %v8082, %v8083
    %v8085 = vand.u32 %v8084, 4294901760
    %8086 = vmatmul.mubr.f32.gmra.mxu0 %v8085
    %v8087 = vpop.f32.mrf.mxu0
    %v8088 = vadd.f32 0.0, %v8087
    %v8089 = vpop.f32.mrf.mxu0
    %8090 = vmatprep.mubr.f32.mxu0 0.0
    %v8091 = vand.u32 %v7974, 4294901760
    %v8092 = vsub.f32 %v7974, %v8091
    %v8093 = vand.u32 %v8092, 4294901760
    %v8094 = vsub.f32 %v8092, %v8093
    %v8095 = vand.u32 %v8094, 4294901760
    %8096 = vmatmul.mubr.f32.gmra.mxu0 %v8095
    %v8097 = vpop.f32.mrf.mxu0
    %v8098 = vadd.f32 0.0, %v8097
    %v8099 = vpop.f32.mrf.mxu0
    %8100 = vmatprep.mubr.f32.mxu0 0.0
    %v8101 = vand.u32 %v7977, 4294901760
    %v8102 = vsub.f32 %v7977, %v8101
    %v8103 = vand.u32 %v8102, 4294901760
    %v8104 = vsub.f32 %v8102, %v8103
    %v8105 = vand.u32 %v8104, 4294901760
    %8106 = vmatmul.mubr.f32.gmra.mxu0 %v8105
    %v8107 = vpop.f32.mrf.mxu0
    %v8108 = vadd.f32 0.0, %v8107
    %v8109 = vpop.f32.mrf.mxu0
    %8110 = vmatprep.mubr.f32.mxu0 0.0
    %v8111 = vand.u32 %v7980, 4294901760
    %v8112 = vsub.f32 %v7980, %v8111
    %v8113 = vand.u32 %v8112, 4294901760
    %v8114 = vsub.f32 %v8112, %v8113
    %v8115 = vand.u32 %v8114, 4294901760
    %8116 = vmatmul.mubr.f32.gmra.mxu0 %v8115
    %v8117 = vpop.f32.mrf.mxu0
    %v8118 = vadd.f32 0.0, %v8117
    %v8119 = vpop.f32.mrf.mxu0
    %8120 = vmatprep.mubr.f32.mxu0 0.0
    %v8121 = vand.u32 %v7983, 4294901760
    %v8122 = vsub.f32 %v7983, %v8121
    %v8123 = vand.u32 %v8122, 4294901760
    %v8124 = vsub.f32 %v8122, %v8123
    %v8125 = vand.u32 %v8124, 4294901760
    %8126 = vmatmul.mubr.f32.gmra.mxu0 %v8125
    %v8127 = vpop.f32.mrf.mxu0
    %v8128 = vadd.f32 0.0, %v8127
    %v8129 = vpop.f32.mrf.mxu0
    %8130 = vmatprep.mubr.f32.mxu0 0.0
    %v8131 = vand.u32 %v7986, 4294901760
    %v8132 = vsub.f32 %v7986, %v8131
    %v8133 = vand.u32 %v8132, 4294901760
    %v8134 = vsub.f32 %v8132, %v8133
    %v8135 = vand.u32 %v8134, 4294901760
    %8136 = vmatmul.mubr.f32.gmra.mxu0 %v8135
    %v8137 = vpop.f32.mrf.mxu0
    %v8138 = vadd.f32 0.0, %v8137
    %v8139 = vpop.f32.mrf.mxu0
    %8140 = vdwg.mxu0
    %8141 = vmatprep.subr.mxu0 0.0
    %8142 = vmatpush1.msra.mxu0 0.0
    %8143 = vmatprep.subr.mxu0 0.0
    %8144 = vmatpush1.msra.mxu0 0.0
    %8145 = vmatprep.subr.mxu0 0.0
    %8146 = vmatpush1.msra.mxu0 0.0
    %8147 = vmatprep.subr.mxu0 0.0
    %8148 = vmatpush1.msra.mxu0 0.0
    %8149 = vmatprep.subr.mxu0 0.0
    %8150 = vmatpush1.msra.mxu0 0.0
    %8151 = vmatprep.subr.mxu0 0.0
    %8152 = vmatpush1.msra.mxu0 0.0
    %8153 = vmatprep.subr.mxu0 0.0
    %8154 = vmatpush1.msra.mxu0 0.0
    %8155 = vmatprep.subr.mxu0 0.0
    %8156 = vmatpush1.msra.mxu0 0.0
    %8157 = vmatprep.subr.mxu0 0.0
    %v8158 = vand.u32 %v6989, 4294901760
    %v8159 = vsub.f32 %v6989, %v8158
    %v8160 = vand.u32 %v8159, 4294901760
    %v8161 = vsub.f32 %v8159, %v8160
    %v8162 = vand.u32 %v8161, 4294901760
    %8163 = vmatpush1.msra.mxu0 %v8162
    %8164 = vmatprep.subr.mxu0 0.0
    %v8165 = vand.u32 %v6921, 4294901760
    %v8166 = vsub.f32 %v6921, %v8165
    %v8167 = vand.u32 %v8166, 4294901760
    %v8168 = vsub.f32 %v8166, %v8167
    %v8169 = vand.u32 %v8168, 4294901760
    %8170 = vmatpush1.msra.mxu0 %v8169
    %8171 = vmatprep.subr.mxu0 0.0
    %v8172 = vand.u32 %v6988, 4294901760
    %v8173 = vsub.f32 %v6988, %v8172
    %v8174 = vand.u32 %v8173, 4294901760
    %v8175 = vsub.f32 %v8173, %v8174
    %v8176 = vand.u32 %v8175, 4294901760
    %8177 = vmatpush1.msra.mxu0 %v8176
    %8178 = vmatprep.subr.mxu0 0.0
    %v8179 = vand.u32 %v6920, 4294901760
    %v8180 = vsub.f32 %v6920, %v8179
    %v8181 = vand.u32 %v8180, 4294901760
    %v8182 = vsub.f32 %v8180, %v8181
    %v8183 = vand.u32 %v8182, 4294901760
    %8184 = vmatpush1.msra.mxu0 %v8183
    %8185 = vmatprep.subr.mxu0 0.0
    %v8186 = vand.u32 %v6987, 4294901760
    %v8187 = vsub.f32 %v6987, %v8186
    %v8188 = vand.u32 %v8187, 4294901760
    %v8189 = vsub.f32 %v8187, %v8188
    %v8190 = vand.u32 %v8189, 4294901760
    %8191 = vmatpush1.msra.mxu0 %v8190
    %8192 = vmatprep.subr.mxu0 0.0
    %v8193 = vand.u32 %v6919, 4294901760
    %v8194 = vsub.f32 %v6919, %v8193
    %v8195 = vand.u32 %v8194, 4294901760
    %v8196 = vsub.f32 %v8194, %v8195
    %v8197 = vand.u32 %v8196, 4294901760
    %8198 = vmatpush1.msra.mxu0 %v8197
    %8199 = vmatprep.subr.mxu0 0.0
    %v8200 = vand.u32 %v6986, 4294901760
    %v8201 = vsub.f32 %v6986, %v8200
    %v8202 = vand.u32 %v8201, 4294901760
    %v8203 = vsub.f32 %v8201, %v8202
    %v8204 = vand.u32 %v8203, 4294901760
    %8205 = vmatpush1.msra.mxu0 %v8204
    %8206 = vmatprep.subr.mxu0 0.0
    %v8207 = vand.u32 %v6918, 4294901760
    %v8208 = vsub.f32 %v6918, %v8207
    %v8209 = vand.u32 %v8208, 4294901760
    %v8210 = vsub.f32 %v8208, %v8209
    %v8211 = vand.u32 %v8210, 4294901760
    %8212 = vmatpush1.msra.mxu0 %v8211
    %8213 = vmatprep.subr.mxu0 0.0
    %8214 = vmatpush2.msra.mxu0 0.0
    %8215 = vmatprep.subr.mxu0 0.0
    %8216 = vmatpush2.msra.mxu0 0.0
    %8217 = vmatprep.subr.mxu0 0.0
    %8218 = vmatpush2.msra.mxu0 0.0
    %8219 = vmatprep.subr.mxu0 0.0
    %8220 = vmatpush2.msra.mxu0 0.0
    %8221 = vmatprep.subr.mxu0 0.0
    %8222 = vmatpush2.msra.mxu0 0.0
    %8223 = vmatprep.subr.mxu0 0.0
    %8224 = vmatpush2.msra.mxu0 0.0
    %8225 = vmatprep.subr.mxu0 0.0
    %8226 = vmatpush2.msra.mxu0 0.0
    %8227 = vmatprep.subr.mxu0 0.0
    %8228 = vmatpush2.msra.mxu0 0.0
    %8229 = vmatprep.subr.mxu0 0.0
    %8230 = vmatpush2.msra.mxu0 0.0
    %8231 = vmatprep.subr.mxu0 0.0
    %8232 = vmatpush2.msra.mxu0 0.0
    %8233 = vmatprep.subr.mxu0 0.0
    %8234 = vmatpush2.msra.mxu0 0.0
    %8235 = vmatprep.subr.mxu0 0.0
    %8236 = vmatpush2.msra.mxu0 0.0
    %8237 = vmatprep.subr.mxu0 0.0
    %8238 = vmatpush2.msra.mxu0 0.0
    %8239 = vmatprep.subr.mxu0 0.0
    %8240 = vmatpush2.msra.mxu0 0.0
    %8241 = vmatprep.subr.mxu0 0.0
    %8242 = vmatpush2.msra.mxu0 0.0
    %8243 = vmatprep.subr.mxu0 0.0
    %8244 = vmatpush2.msra.mxu0 0.0
    %8245 = vmatprep.mubr.f32.mxu0 0.0
    %v8246 = vand.u32 %v7965, 4294901760
    %8247 = vmatmul.mubr.f32.gmra.mxu0 %v8246
    %v8248 = vpop.f32.mrf.mxu0
    %v8249 = vadd.f32 %v8068, %v8248
    %v8250 = vpop.f32.mrf.mxu0
    %8251 = vmatprep.mubr.f32.mxu0 0.0
    %v8252 = vand.u32 %v7968, 4294901760
    %8253 = vmatmul.mubr.f32.gmra.mxu0 %v8252
    %v8254 = vpop.f32.mrf.mxu0
    %v8255 = vadd.f32 %v8078, %v8254
    %v8256 = vpop.f32.mrf.mxu0
    %8257 = vmatprep.mubr.f32.mxu0 0.0
    %v8258 = vand.u32 %v7971, 4294901760
    %8259 = vmatmul.mubr.f32.gmra.mxu0 %v8258
    %v8260 = vpop.f32.mrf.mxu0
    %v8261 = vadd.f32 %v8088, %v8260
    %v8262 = vpop.f32.mrf.mxu0
    %8263 = vmatprep.mubr.f32.mxu0 0.0
    %v8264 = vand.u32 %v7974, 4294901760
    %8265 = vmatmul.mubr.f32.gmra.mxu0 %v8264
    %v8266 = vpop.f32.mrf.mxu0
    %v8267 = vadd.f32 %v8098, %v8266
    %v8268 = vpop.f32.mrf.mxu0
    %8269 = vmatprep.mubr.f32.mxu0 0.0
    %v8270 = vand.u32 %v7977, 4294901760
    %8271 = vmatmul.mubr.f32.gmra.mxu0 %v8270
    %v8272 = vpop.f32.mrf.mxu0
    %v8273 = vadd.f32 %v8108, %v8272
    %v8274 = vpop.f32.mrf.mxu0
    %8275 = vmatprep.mubr.f32.mxu0 0.0
    %v8276 = vand.u32 %v7980, 4294901760
    %8277 = vmatmul.mubr.f32.gmra.mxu0 %v8276
    %v8278 = vpop.f32.mrf.mxu0
    %v8279 = vadd.f32 %v8118, %v8278
    %v8280 = vpop.f32.mrf.mxu0
    %8281 = vmatprep.mubr.f32.mxu0 0.0
    %v8282 = vand.u32 %v7983, 4294901760
    %8283 = vmatmul.mubr.f32.gmra.mxu0 %v8282
    %v8284 = vpop.f32.mrf.mxu0
    %v8285 = vadd.f32 %v8128, %v8284
    %v8286 = vpop.f32.mrf.mxu0
    %8287 = vmatprep.mubr.f32.mxu0 0.0
    %v8288 = vand.u32 %v7986, 4294901760
    %8289 = vmatmul.mubr.f32.gmra.mxu0 %v8288
    %v8290 = vpop.f32.mrf.mxu0
    %v8291 = vadd.f32 %v8138, %v8290
    %v8292 = vpop.f32.mrf.mxu0
    %8293 = vdwg.mxu0
    %8294 = vmatprep.subr.mxu0 0.0
    %8295 = vmatpush1.msra.mxu0 0.0
    %8296 = vmatprep.subr.mxu0 0.0
    %8297 = vmatpush1.msra.mxu0 0.0
    %8298 = vmatprep.subr.mxu0 0.0
    %8299 = vmatpush1.msra.mxu0 0.0
    %8300 = vmatprep.subr.mxu0 0.0
    %8301 = vmatpush1.msra.mxu0 0.0
    %8302 = vmatprep.subr.mxu0 0.0
    %8303 = vmatpush1.msra.mxu0 0.0
    %8304 = vmatprep.subr.mxu0 0.0
    %8305 = vmatpush1.msra.mxu0 0.0
    %8306 = vmatprep.subr.mxu0 0.0
    %8307 = vmatpush1.msra.mxu0 0.0
    %8308 = vmatprep.subr.mxu0 0.0
    %8309 = vmatpush1.msra.mxu0 0.0
    %8310 = vmatprep.subr.mxu0 0.0
    %v8311 = vand.u32 %v6989, 4294901760
    %v8312 = vsub.f32 %v6989, %v8311
    %8313 = vmatpush1.msra.mxu0 %v8312
    %8314 = vmatprep.subr.mxu0 0.0
    %v8315 = vand.u32 %v6921, 4294901760
    %v8316 = vsub.f32 %v6921, %v8315
    %8317 = vmatpush1.msra.mxu0 %v8316
    %8318 = vmatprep.subr.mxu0 0.0
    %v8319 = vand.u32 %v6988, 4294901760
    %v8320 = vsub.f32 %v6988, %v8319
    %8321 = vmatpush1.msra.mxu0 %v8320
    %8322 = vmatprep.subr.mxu0 0.0
    %v8323 = vand.u32 %v6920, 4294901760
    %v8324 = vsub.f32 %v6920, %v8323
    %8325 = vmatpush1.msra.mxu0 %v8324
    %8326 = vmatprep.subr.mxu0 0.0
    %v8327 = vand.u32 %v6987, 4294901760
    %v8328 = vsub.f32 %v6987, %v8327
    %8329 = vmatpush1.msra.mxu0 %v8328
    %8330 = vmatprep.subr.mxu0 0.0
    %v8331 = vand.u32 %v6919, 4294901760
    %v8332 = vsub.f32 %v6919, %v8331
    %8333 = vmatpush1.msra.mxu0 %v8332
    %8334 = vmatprep.subr.mxu0 0.0
    %v8335 = vand.u32 %v6986, 4294901760
    %v8336 = vsub.f32 %v6986, %v8335
    %8337 = vmatpush1.msra.mxu0 %v8336
    %8338 = vmatprep.subr.mxu0 0.0
    %v8339 = vand.u32 %v6918, 4294901760
    %v8340 = vsub.f32 %v6918, %v8339
    %8341 = vmatpush1.msra.mxu0 %v8340
    %8342 = vmatprep.subr.mxu0 0.0
    %8343 = vmatpush2.msra.mxu0 0.0
    %8344 = vmatprep.subr.mxu0 0.0
    %8345 = vmatpush2.msra.mxu0 0.0
    %8346 = vmatprep.subr.mxu0 0.0
    %8347 = vmatpush2.msra.mxu0 0.0
    %8348 = vmatprep.subr.mxu0 0.0
    %8349 = vmatpush2.msra.mxu0 0.0
    %8350 = vmatprep.subr.mxu0 0.0
    %8351 = vmatpush2.msra.mxu0 0.0
    %8352 = vmatprep.subr.mxu0 0.0
    %8353 = vmatpush2.msra.mxu0 0.0
    %8354 = vmatprep.subr.mxu0 0.0
    %8355 = vmatpush2.msra.mxu0 0.0
    %8356 = vmatprep.subr.mxu0 0.0
    %8357 = vmatpush2.msra.mxu0 0.0
    %8358 = vmatprep.subr.mxu0 0.0
    %8359 = vmatpush2.msra.mxu0 0.0
    %8360 = vmatprep.subr.mxu0 0.0
    %8361 = vmatpush2.msra.mxu0 0.0
    %8362 = vmatprep.subr.mxu0 0.0
    %8363 = vmatpush2.msra.mxu0 0.0
    %8364 = vmatprep.subr.mxu0 0.0
    %8365 = vmatpush2.msra.mxu0 0.0
    %8366 = vmatprep.subr.mxu0 0.0
    %8367 = vmatpush2.msra.mxu0 0.0
    %8368 = vmatprep.subr.mxu0 0.0
    %8369 = vmatpush2.msra.mxu0 0.0
    %8370 = vmatprep.subr.mxu0 0.0
    %8371 = vmatpush2.msra.mxu0 0.0
    %8372 = vmatprep.subr.mxu0 0.0
    %8373 = vmatpush2.msra.mxu0 0.0
    %8374 = vmatprep.mubr.f32.mxu0 0.0
    %v8375 = vand.u32 %v7965, 4294901760
    %v8376 = vsub.f32 %v7965, %v8375
    %8377 = vmatmul.mubr.f32.gmra.mxu0 %v8376
    %v8378 = vpop.f32.mrf.mxu0
    %v8379 = vadd.f32 %v8249, %v8378
    %v8380 = vpop.f32.mrf.mxu0
    %8381 = vmatprep.mubr.f32.mxu0 0.0
    %v8382 = vand.u32 %v7968, 4294901760
    %v8383 = vsub.f32 %v7968, %v8382
    %8384 = vmatmul.mubr.f32.gmra.mxu0 %v8383
    %v8385 = vpop.f32.mrf.mxu0
    %v8386 = vadd.f32 %v8255, %v8385
    %v8387 = vpop.f32.mrf.mxu0
    %8388 = vmatprep.mubr.f32.mxu0 0.0
    %v8389 = vand.u32 %v7971, 4294901760
    %v8390 = vsub.f32 %v7971, %v8389
    %8391 = vmatmul.mubr.f32.gmra.mxu0 %v8390
    %v8392 = vpop.f32.mrf.mxu0
    %v8393 = vadd.f32 %v8261, %v8392
    %v8394 = vpop.f32.mrf.mxu0
    %8395 = vmatprep.mubr.f32.mxu0 0.0
    %v8396 = vand.u32 %v7974, 4294901760
    %v8397 = vsub.f32 %v7974, %v8396
    %8398 = vmatmul.mubr.f32.gmra.mxu0 %v8397
    %v8399 = vpop.f32.mrf.mxu0
    %v8400 = vadd.f32 %v8267, %v8399
    %v8401 = vpop.f32.mrf.mxu0
    %8402 = vmatprep.mubr.f32.mxu0 0.0
    %v8403 = vand.u32 %v7977, 4294901760
    %v8404 = vsub.f32 %v7977, %v8403
    %8405 = vmatmul.mubr.f32.gmra.mxu0 %v8404
    %v8406 = vpop.f32.mrf.mxu0
    %v8407 = vadd.f32 %v8273, %v8406
    %v8408 = vpop.f32.mrf.mxu0
    %8409 = vmatprep.mubr.f32.mxu0 0.0
    %v8410 = vand.u32 %v7980, 4294901760
    %v8411 = vsub.f32 %v7980, %v8410
    %8412 = vmatmul.mubr.f32.gmra.mxu0 %v8411
    %v8413 = vpop.f32.mrf.mxu0
    %v8414 = vadd.f32 %v8279, %v8413
    %v8415 = vpop.f32.mrf.mxu0
    %8416 = vmatprep.mubr.f32.mxu0 0.0
    %v8417 = vand.u32 %v7983, 4294901760
    %v8418 = vsub.f32 %v7983, %v8417
    %8419 = vmatmul.mubr.f32.gmra.mxu0 %v8418
    %v8420 = vpop.f32.mrf.mxu0
    %v8421 = vadd.f32 %v8285, %v8420
    %v8422 = vpop.f32.mrf.mxu0
    %8423 = vmatprep.mubr.f32.mxu0 0.0
    %v8424 = vand.u32 %v7986, 4294901760
    %v8425 = vsub.f32 %v7986, %v8424
    %8426 = vmatmul.mubr.f32.gmra.mxu0 %v8425
    %v8427 = vpop.f32.mrf.mxu0
    %v8428 = vadd.f32 %v8291, %v8427
    %v8429 = vpop.f32.mrf.mxu0
    %8430 = vdwg.mxu0
    %8431 = vmatprep.subr.mxu0 0.0
    %8432 = vmatpush1.msra.mxu0 0.0
    %8433 = vmatprep.subr.mxu0 0.0
    %8434 = vmatpush1.msra.mxu0 0.0
    %8435 = vmatprep.subr.mxu0 0.0
    %8436 = vmatpush1.msra.mxu0 0.0
    %8437 = vmatprep.subr.mxu0 0.0
    %8438 = vmatpush1.msra.mxu0 0.0
    %8439 = vmatprep.subr.mxu0 0.0
    %8440 = vmatpush1.msra.mxu0 0.0
    %8441 = vmatprep.subr.mxu0 0.0
    %8442 = vmatpush1.msra.mxu0 0.0
    %8443 = vmatprep.subr.mxu0 0.0
    %8444 = vmatpush1.msra.mxu0 0.0
    %8445 = vmatprep.subr.mxu0 0.0
    %8446 = vmatpush1.msra.mxu0 0.0
    %8447 = vmatprep.subr.mxu0 0.0
    %v8448 = vand.u32 %v6989, 4294901760
    %8449 = vmatpush1.msra.mxu0 %v8448
    %8450 = vmatprep.subr.mxu0 0.0
    %v8451 = vand.u32 %v6921, 4294901760
    %8452 = vmatpush1.msra.mxu0 %v8451
    %8453 = vmatprep.subr.mxu0 0.0
    %v8454 = vand.u32 %v6988, 4294901760
    %8455 = vmatpush1.msra.mxu0 %v8454
    %8456 = vmatprep.subr.mxu0 0.0
    %v8457 = vand.u32 %v6920, 4294901760
    %8458 = vmatpush1.msra.mxu0 %v8457
    %8459 = vmatprep.subr.mxu0 0.0
    %v8460 = vand.u32 %v6987, 4294901760
    %8461 = vmatpush1.msra.mxu0 %v8460
    %8462 = vmatprep.subr.mxu0 0.0
    %v8463 = vand.u32 %v6919, 4294901760
    %8464 = vmatpush1.msra.mxu0 %v8463
    %8465 = vmatprep.subr.mxu0 0.0
    %v8466 = vand.u32 %v6986, 4294901760
    %8467 = vmatpush1.msra.mxu0 %v8466
    %8468 = vmatprep.subr.mxu0 0.0
    %v8469 = vand.u32 %v6918, 4294901760
    %8470 = vmatpush1.msra.mxu0 %v8469
    %8471 = vmatprep.subr.mxu0 0.0
    %8472 = vmatpush2.msra.mxu0 0.0
    %8473 = vmatprep.subr.mxu0 0.0
    %8474 = vmatpush2.msra.mxu0 0.0
    %8475 = vmatprep.subr.mxu0 0.0
    %8476 = vmatpush2.msra.mxu0 0.0
    %8477 = vmatprep.subr.mxu0 0.0
    %8478 = vmatpush2.msra.mxu0 0.0
    %8479 = vmatprep.subr.mxu0 0.0
    %8480 = vmatpush2.msra.mxu0 0.0
    %8481 = vmatprep.subr.mxu0 0.0
    %8482 = vmatpush2.msra.mxu0 0.0
    %8483 = vmatprep.subr.mxu0 0.0
    %8484 = vmatpush2.msra.mxu0 0.0
    %8485 = vmatprep.subr.mxu0 0.0
    %8486 = vmatpush2.msra.mxu0 0.0
    %8487 = vmatprep.subr.mxu0 0.0
    %8488 = vmatpush2.msra.mxu0 0.0
    %8489 = vmatprep.subr.mxu0 0.0
    %8490 = vmatpush2.msra.mxu0 0.0
    %8491 = vmatprep.subr.mxu0 0.0
    %8492 = vmatpush2.msra.mxu0 0.0
    %8493 = vmatprep.subr.mxu0 0.0
    %8494 = vmatpush2.msra.mxu0 0.0
    %8495 = vmatprep.subr.mxu0 0.0
    %8496 = vmatpush2.msra.mxu0 0.0
    %8497 = vmatprep.subr.mxu0 0.0
    %8498 = vmatpush2.msra.mxu0 0.0
    %8499 = vmatprep.subr.mxu0 0.0
    %8500 = vmatpush2.msra.mxu0 0.0
    %8501 = vmatprep.subr.mxu0 0.0
    %8502 = vmatpush2.msra.mxu0 0.0
    %8503 = vmatprep.mubr.f32.mxu0 0.0
    %v8504 = vand.u32 %v7965, 4294901760
    %v8505 = vsub.f32 %v7965, %v8504
    %v8506 = vand.u32 %v8505, 4294901760
    %8507 = vmatmul.mubr.f32.gmra.mxu0 %v8506
    %v8508 = vpop.f32.mrf.mxu0
    %v8509 = vadd.f32 %v8379, %v8508
    %v8510 = vpop.f32.mrf.mxu0
    %8511 = vmatprep.mubr.f32.mxu0 0.0
    %v8512 = vand.u32 %v7968, 4294901760
    %v8513 = vsub.f32 %v7968, %v8512
    %v8514 = vand.u32 %v8513, 4294901760
    %8515 = vmatmul.mubr.f32.gmra.mxu0 %v8514
    %v8516 = vpop.f32.mrf.mxu0
    %v8517 = vadd.f32 %v8386, %v8516
    %v8518 = vpop.f32.mrf.mxu0
    %8519 = vmatprep.mubr.f32.mxu0 0.0
    %v8520 = vand.u32 %v7971, 4294901760
    %v8521 = vsub.f32 %v7971, %v8520
    %v8522 = vand.u32 %v8521, 4294901760
    %8523 = vmatmul.mubr.f32.gmra.mxu0 %v8522
    %v8524 = vpop.f32.mrf.mxu0
    %v8525 = vadd.f32 %v8393, %v8524
    %v8526 = vpop.f32.mrf.mxu0
    %8527 = vmatprep.mubr.f32.mxu0 0.0
    %v8528 = vand.u32 %v7974, 4294901760
    %v8529 = vsub.f32 %v7974, %v8528
    %v8530 = vand.u32 %v8529, 4294901760
    %8531 = vmatmul.mubr.f32.gmra.mxu0 %v8530
    %v8532 = vpop.f32.mrf.mxu0
    %v8533 = vadd.f32 %v8400, %v8532
    %v8534 = vpop.f32.mrf.mxu0
    %8535 = vmatprep.mubr.f32.mxu0 0.0
    %v8536 = vand.u32 %v7977, 4294901760
    %v8537 = vsub.f32 %v7977, %v8536
    %v8538 = vand.u32 %v8537, 4294901760
    %8539 = vmatmul.mubr.f32.gmra.mxu0 %v8538
    %v8540 = vpop.f32.mrf.mxu0
    %v8541 = vadd.f32 %v8407, %v8540
    %v8542 = vpop.f32.mrf.mxu0
    %8543 = vmatprep.mubr.f32.mxu0 0.0
    %v8544 = vand.u32 %v7980, 4294901760
    %v8545 = vsub.f32 %v7980, %v8544
    %v8546 = vand.u32 %v8545, 4294901760
    %8547 = vmatmul.mubr.f32.gmra.mxu0 %v8546
    %v8548 = vpop.f32.mrf.mxu0
    %v8549 = vadd.f32 %v8414, %v8548
    %v8550 = vpop.f32.mrf.mxu0
    %8551 = vmatprep.mubr.f32.mxu0 0.0
    %v8552 = vand.u32 %v7983, 4294901760
    %v8553 = vsub.f32 %v7983, %v8552
    %v8554 = vand.u32 %v8553, 4294901760
    %8555 = vmatmul.mubr.f32.gmra.mxu0 %v8554
    %v8556 = vpop.f32.mrf.mxu0
    %v8557 = vadd.f32 %v8421, %v8556
    %v8558 = vpop.f32.mrf.mxu0
    %8559 = vmatprep.mubr.f32.mxu0 0.0
    %v8560 = vand.u32 %v7986, 4294901760
    %v8561 = vsub.f32 %v7986, %v8560
    %v8562 = vand.u32 %v8561, 4294901760
    %8563 = vmatmul.mubr.f32.gmra.mxu0 %v8562
    %v8564 = vpop.f32.mrf.mxu0
    %v8565 = vadd.f32 %v8428, %v8564
    %v8566 = vpop.f32.mrf.mxu0
    %8567 = vdwg.mxu0
    %8568 = vmatprep.subr.mxu0 0.0
    %8569 = vmatpush1.msra.mxu0 0.0
    %8570 = vmatprep.subr.mxu0 0.0
    %8571 = vmatpush1.msra.mxu0 0.0
    %8572 = vmatprep.subr.mxu0 0.0
    %8573 = vmatpush1.msra.mxu0 0.0
    %8574 = vmatprep.subr.mxu0 0.0
    %8575 = vmatpush1.msra.mxu0 0.0
    %8576 = vmatprep.subr.mxu0 0.0
    %8577 = vmatpush1.msra.mxu0 0.0
    %8578 = vmatprep.subr.mxu0 0.0
    %8579 = vmatpush1.msra.mxu0 0.0
    %8580 = vmatprep.subr.mxu0 0.0
    %8581 = vmatpush1.msra.mxu0 0.0
    %8582 = vmatprep.subr.mxu0 0.0
    %8583 = vmatpush1.msra.mxu0 0.0
    %8584 = vmatprep.subr.mxu0 0.0
    %v8585 = vand.u32 %v6989, 4294901760
    %v8586 = vsub.f32 %v6989, %v8585
    %v8587 = vand.u32 %v8586, 4294901760
    %8588 = vmatpush1.msra.mxu0 %v8587
    %8589 = vmatprep.subr.mxu0 0.0
    %v8590 = vand.u32 %v6921, 4294901760
    %v8591 = vsub.f32 %v6921, %v8590
    %v8592 = vand.u32 %v8591, 4294901760
    %8593 = vmatpush1.msra.mxu0 %v8592
    %8594 = vmatprep.subr.mxu0 0.0
    %v8595 = vand.u32 %v6988, 4294901760
    %v8596 = vsub.f32 %v6988, %v8595
    %v8597 = vand.u32 %v8596, 4294901760
    %8598 = vmatpush1.msra.mxu0 %v8597
    %8599 = vmatprep.subr.mxu0 0.0
    %v8600 = vand.u32 %v6920, 4294901760
    %v8601 = vsub.f32 %v6920, %v8600
    %v8602 = vand.u32 %v8601, 4294901760
    %8603 = vmatpush1.msra.mxu0 %v8602
    %8604 = vmatprep.subr.mxu0 0.0
    %v8605 = vand.u32 %v6987, 4294901760
    %v8606 = vsub.f32 %v6987, %v8605
    %v8607 = vand.u32 %v8606, 4294901760
    %8608 = vmatpush1.msra.mxu0 %v8607
    %8609 = vmatprep.subr.mxu0 0.0
    %v8610 = vand.u32 %v6919, 4294901760
    %v8611 = vsub.f32 %v6919, %v8610
    %v8612 = vand.u32 %v8611, 4294901760
    %8613 = vmatpush1.msra.mxu0 %v8612
    %8614 = vmatprep.subr.mxu0 0.0
    %v8615 = vand.u32 %v6986, 4294901760
    %v8616 = vsub.f32 %v6986, %v8615
    %v8617 = vand.u32 %v8616, 4294901760
    %8618 = vmatpush1.msra.mxu0 %v8617
    %8619 = vmatprep.subr.mxu0 0.0
    %v8620 = vand.u32 %v6918, 4294901760
    %v8621 = vsub.f32 %v6918, %v8620
    %v8622 = vand.u32 %v8621, 4294901760
    %8623 = vmatpush1.msra.mxu0 %v8622
    %8624 = vmatprep.subr.mxu0 0.0
    %8625 = vmatpush2.msra.mxu0 0.0
    %8626 = vmatprep.subr.mxu0 0.0
    %8627 = vmatpush2.msra.mxu0 0.0
    %8628 = vmatprep.subr.mxu0 0.0
    %8629 = vmatpush2.msra.mxu0 0.0
    %8630 = vmatprep.subr.mxu0 0.0
    %8631 = vmatpush2.msra.mxu0 0.0
    %8632 = vmatprep.subr.mxu0 0.0
    %8633 = vmatpush2.msra.mxu0 0.0
    %8634 = vmatprep.subr.mxu0 0.0
    %8635 = vmatpush2.msra.mxu0 0.0
    %8636 = vmatprep.subr.mxu0 0.0
    %8637 = vmatpush2.msra.mxu0 0.0
    %8638 = vmatprep.subr.mxu0 0.0
    %8639 = vmatpush2.msra.mxu0 0.0
    %8640 = vmatprep.subr.mxu0 0.0
    %8641 = vmatpush2.msra.mxu0 0.0
    %8642 = vmatprep.subr.mxu0 0.0
    %8643 = vmatpush2.msra.mxu0 0.0
    %8644 = vmatprep.subr.mxu0 0.0
    %8645 = vmatpush2.msra.mxu0 0.0
    %8646 = vmatprep.subr.mxu0 0.0
    %8647 = vmatpush2.msra.mxu0 0.0
    %8648 = vmatprep.subr.mxu0 0.0
    %8649 = vmatpush2.msra.mxu0 0.0
    %8650 = vmatprep.subr.mxu0 0.0
    %8651 = vmatpush2.msra.mxu0 0.0
    %8652 = vmatprep.subr.mxu0 0.0
    %8653 = vmatpush2.msra.mxu0 0.0
    %8654 = vmatprep.subr.mxu0 0.0
    %8655 = vmatpush2.msra.mxu0 0.0
    %8656 = vmatprep.mubr.f32.mxu0 0.0
    %v8657 = vand.u32 %v7965, 4294901760
    %8658 = vmatmul.mubr.f32.gmra.mxu0 %v8657
    %v8659 = vpop.f32.mrf.mxu0
    %v8660 = vadd.f32 %v8509, %v8659
    %v8661 = vpop.f32.mrf.mxu0
    %8662 = vmatprep.mubr.f32.mxu0 0.0
    %v8663 = vand.u32 %v7968, 4294901760
    %8664 = vmatmul.mubr.f32.gmra.mxu0 %v8663
    %v8665 = vpop.f32.mrf.mxu0
    %v8666 = vadd.f32 %v8517, %v8665
    %v8667 = vpop.f32.mrf.mxu0
    %8668 = vmatprep.mubr.f32.mxu0 0.0
    %v8669 = vand.u32 %v7971, 4294901760
    %8670 = vmatmul.mubr.f32.gmra.mxu0 %v8669
    %v8671 = vpop.f32.mrf.mxu0
    %v8672 = vadd.f32 %v8525, %v8671
    %v8673 = vpop.f32.mrf.mxu0
    %8674 = vmatprep.mubr.f32.mxu0 0.0
    %v8675 = vand.u32 %v7974, 4294901760
    %8676 = vmatmul.mubr.f32.gmra.mxu0 %v8675
    %v8677 = vpop.f32.mrf.mxu0
    %v8678 = vadd.f32 %v8533, %v8677
    %v8679 = vpop.f32.mrf.mxu0
    %8680 = vmatprep.mubr.f32.mxu0 0.0
    %v8681 = vand.u32 %v7977, 4294901760
    %8682 = vmatmul.mubr.f32.gmra.mxu0 %v8681
    %v8683 = vpop.f32.mrf.mxu0
    %v8684 = vadd.f32 %v8541, %v8683
    %v8685 = vpop.f32.mrf.mxu0
    %8686 = vmatprep.mubr.f32.mxu0 0.0
    %v8687 = vand.u32 %v7980, 4294901760
    %8688 = vmatmul.mubr.f32.gmra.mxu0 %v8687
    %v8689 = vpop.f32.mrf.mxu0
    %v8690 = vadd.f32 %v8549, %v8689
    %v8691 = vpop.f32.mrf.mxu0
    %8692 = vmatprep.mubr.f32.mxu0 0.0
    %v8693 = vand.u32 %v7983, 4294901760
    %8694 = vmatmul.mubr.f32.gmra.mxu0 %v8693
    %v8695 = vpop.f32.mrf.mxu0
    %v8696 = vadd.f32 %v8557, %v8695
    %v8697 = vpop.f32.mrf.mxu0
    %8698 = vmatprep.mubr.f32.mxu0 0.0
    %v8699 = vand.u32 %v7986, 4294901760
    %8700 = vmatmul.mubr.f32.gmra.mxu0 %v8699
    %v8701 = vpop.f32.mrf.mxu0
    %v8702 = vadd.f32 %v8565, %v8701
    %v8703 = vpop.f32.mrf.mxu0
    %8704 = vdwg.mxu0
    %8705 = vmatprep.subr.mxu0 0.0
    %8706 = vmatpush1.msra.mxu0 0.0
    %8707 = vmatprep.subr.mxu0 0.0
    %8708 = vmatpush1.msra.mxu0 0.0
    %8709 = vmatprep.subr.mxu0 0.0
    %8710 = vmatpush1.msra.mxu0 0.0
    %8711 = vmatprep.subr.mxu0 0.0
    %8712 = vmatpush1.msra.mxu0 0.0
    %8713 = vmatprep.subr.mxu0 0.0
    %8714 = vmatpush1.msra.mxu0 0.0
    %8715 = vmatprep.subr.mxu0 0.0
    %8716 = vmatpush1.msra.mxu0 0.0
    %8717 = vmatprep.subr.mxu0 0.0
    %8718 = vmatpush1.msra.mxu0 0.0
    %8719 = vmatprep.subr.mxu0 0.0
    %8720 = vmatpush1.msra.mxu0 0.0
    %8721 = vmatprep.subr.mxu0 0.0
    %v8722 = vand.u32 %v6989, 4294901760
    %8723 = vmatpush1.msra.mxu0 %v8722
    %8724 = vmatprep.subr.mxu0 0.0
    %v8725 = vand.u32 %v6921, 4294901760
    %8726 = vmatpush1.msra.mxu0 %v8725
    %8727 = vmatprep.subr.mxu0 0.0
    %v8728 = vand.u32 %v6988, 4294901760
    %8729 = vmatpush1.msra.mxu0 %v8728
    %8730 = vmatprep.subr.mxu0 0.0
    %v8731 = vand.u32 %v6920, 4294901760
    %8732 = vmatpush1.msra.mxu0 %v8731
    %8733 = vmatprep.subr.mxu0 0.0
    %v8734 = vand.u32 %v6987, 4294901760
    %8735 = vmatpush1.msra.mxu0 %v8734
    %8736 = vmatprep.subr.mxu0 0.0
    %v8737 = vand.u32 %v6919, 4294901760
    %8738 = vmatpush1.msra.mxu0 %v8737
    %8739 = vmatprep.subr.mxu0 0.0
    %v8740 = vand.u32 %v6986, 4294901760
    %8741 = vmatpush1.msra.mxu0 %v8740
    %8742 = vmatprep.subr.mxu0 0.0
    %v8743 = vand.u32 %v6918, 4294901760
    %8744 = vmatpush1.msra.mxu0 %v8743
    %8745 = vmatprep.subr.mxu0 0.0
    %8746 = vmatpush2.msra.mxu0 0.0
    %8747 = vmatprep.subr.mxu0 0.0
    %8748 = vmatpush2.msra.mxu0 0.0
    %8749 = vmatprep.subr.mxu0 0.0
    %8750 = vmatpush2.msra.mxu0 0.0
    %8751 = vmatprep.subr.mxu0 0.0
    %8752 = vmatpush2.msra.mxu0 0.0
    %8753 = vmatprep.subr.mxu0 0.0
    %8754 = vmatpush2.msra.mxu0 0.0
    %8755 = vmatprep.subr.mxu0 0.0
    %8756 = vmatpush2.msra.mxu0 0.0
    %8757 = vmatprep.subr.mxu0 0.0
    %8758 = vmatpush2.msra.mxu0 0.0
    %8759 = vmatprep.subr.mxu0 0.0
    %8760 = vmatpush2.msra.mxu0 0.0
    %8761 = vmatprep.subr.mxu0 0.0
    %8762 = vmatpush2.msra.mxu0 0.0
    %8763 = vmatprep.subr.mxu0 0.0
    %8764 = vmatpush2.msra.mxu0 0.0
    %8765 = vmatprep.subr.mxu0 0.0
    %8766 = vmatpush2.msra.mxu0 0.0
    %8767 = vmatprep.subr.mxu0 0.0
    %8768 = vmatpush2.msra.mxu0 0.0
    %8769 = vmatprep.subr.mxu0 0.0
    %8770 = vmatpush2.msra.mxu0 0.0
    %8771 = vmatprep.subr.mxu0 0.0
    %8772 = vmatpush2.msra.mxu0 0.0
    %8773 = vmatprep.subr.mxu0 0.0
    %8774 = vmatpush2.msra.mxu0 0.0
    %8775 = vmatprep.subr.mxu0 0.0
    %8776 = vmatpush2.msra.mxu0 0.0
    %8777 = vmatprep.mubr.f32.mxu0 0.0
    %v8778 = vand.u32 %v7965, 4294901760
    %8779 = vmatmul.mubr.f32.gmra.mxu0 %v8778
    %v8780 = vpop.f32.mrf.mxu0
    %v8781 = vadd.f32 %v8660, %v8780
    %v8782 = vpop.f32.mrf.mxu0
    %8783 = vmatprep.mubr.f32.mxu0 0.0
    %v8784 = vand.u32 %v7968, 4294901760
    %8785 = vmatmul.mubr.f32.gmra.mxu0 %v8784
    %v8786 = vpop.f32.mrf.mxu0
    %v8787 = vadd.f32 %v8666, %v8786
    %v8788 = vpop.f32.mrf.mxu0
    %8789 = vmatprep.mubr.f32.mxu0 0.0
    %v8790 = vand.u32 %v7971, 4294901760
    %8791 = vmatmul.mubr.f32.gmra.mxu0 %v8790
    %v8792 = vpop.f32.mrf.mxu0
    %v8793 = vadd.f32 %v8672, %v8792
    %v8794 = vpop.f32.mrf.mxu0
    %8795 = vmatprep.mubr.f32.mxu0 0.0
    %v8796 = vand.u32 %v7974, 4294901760
    %8797 = vmatmul.mubr.f32.gmra.mxu0 %v8796
    %v8798 = vpop.f32.mrf.mxu0
    %v8799 = vadd.f32 %v8678, %v8798
    %v8800 = vpop.f32.mrf.mxu0
    %8801 = vmatprep.mubr.f32.mxu0 0.0
    %v8802 = vand.u32 %v7977, 4294901760
    %8803 = vmatmul.mubr.f32.gmra.mxu0 %v8802
    %v8804 = vpop.f32.mrf.mxu0
    %v8805 = vadd.f32 %v8684, %v8804
    %v8806 = vpop.f32.mrf.mxu0
    %8807 = vmatprep.mubr.f32.mxu0 0.0
    %v8808 = vand.u32 %v7980, 4294901760
    %8809 = vmatmul.mubr.f32.gmra.mxu0 %v8808
    %v8810 = vpop.f32.mrf.mxu0
    %v8811 = vadd.f32 %v8690, %v8810
    %v8812 = vpop.f32.mrf.mxu0
    %8813 = vmatprep.mubr.f32.mxu0 0.0
    %v8814 = vand.u32 %v7983, 4294901760
    %8815 = vmatmul.mubr.f32.gmra.mxu0 %v8814
    %v8816 = vpop.f32.mrf.mxu0
    %v8817 = vadd.f32 %v8696, %v8816
    %v8818 = vpop.f32.mrf.mxu0
    %8819 = vmatprep.mubr.f32.mxu0 0.0
    %v8820 = vand.u32 %v7986, 4294901760
    %8821 = vmatmul.mubr.f32.gmra.mxu0 %v8820
    %v8822 = vpop.f32.mrf.mxu0
    %v8823 = vadd.f32 %v8702, %v8822
    %v8824 = vpop.f32.mrf.mxu0
    %8825 = vdwg.mxu0
    %v8826 = vcombine.low %v8781, %v8805
    %v8827 = vcombine.high %v8781, %v8805
    %v8829 = vunpack.c.l.s4 1983009808
    %v8830 = vunpack.c.0.s8 %v8829
    %v8831 = vlaneseq
    %v8832 = vshrl.u32 %v8831, 7
    %v8833 = vsub.s32 %v8830, %v8832
    %v8834 = vrot.slane %v8826, %v8833
    %v8836 = vunpack.c.l.s4 1983009808
    %v8837 = vunpack.c.0.s8 %v8836
    %v8838 = vlaneseq
    %v8839 = vshrl.u32 %v8838, 7
    %v8840 = vsub.s32 %v8837, %v8839
    %v8841 = vrot.slane %v8827, %v8840
    %v8842 = vcombine.low %v8793, %v8817
    %v8843 = vcombine.high %v8793, %v8817
    %v8845 = vunpack.c.l.s4 1983009808
    %v8846 = vunpack.c.0.s8 %v8845
    %v8847 = vlaneseq
    %v8848 = vshrl.u32 %v8847, 7
    %v8849 = vsub.s32 %v8846, %v8848
    %v8850 = vrot.slane %v8842, %v8849
    %v8852 = vunpack.c.l.s4 1983009808
    %v8853 = vunpack.c.0.s8 %v8852
    %v8854 = vlaneseq
    %v8855 = vshrl.u32 %v8854, 7
    %v8856 = vsub.s32 %v8853, %v8855
    %v8857 = vrot.slane %v8843, %v8856
    %v8858 = vcombine.low %v8834, %v8850
    %v8859 = vcombine.high %v8834, %v8850
    %v8861 = vunpack.c.l.s4 1934713408
    %v8862 = vunpack.c.0.s8 %v8861
    %v8863 = vlaneseq
    %v8864 = vshrl.u32 %v8863, 7
    %v8865 = vsub.s32 %v8862, %v8864
    %v8866 = vrot.slane %v8858, %v8865
    %v8868 = vunpack.c.l.s4 1934713408
    %v8869 = vunpack.c.0.s8 %v8868
    %v8870 = vlaneseq
    %v8871 = vshrl.u32 %v8870, 7
    %v8872 = vsub.s32 %v8869, %v8871
    %v8873 = vrot.slane %v8859, %v8872
    %v8874 = vcombine.low %v8841, %v8857
    %v8875 = vcombine.high %v8841, %v8857
    %v8877 = vunpack.c.l.s4 1934713408
    %v8878 = vunpack.c.0.s8 %v8877
    %v8879 = vlaneseq
    %v8880 = vshrl.u32 %v8879, 7
    %v8881 = vsub.s32 %v8878, %v8880
    %v8882 = vrot.slane %v8874, %v8881
    %v8884 = vunpack.c.l.s4 1934713408
    %v8885 = vunpack.c.0.s8 %v8884
    %v8886 = vlaneseq
    %v8887 = vshrl.u32 %v8886, 7
    %v8888 = vsub.s32 %v8885, %v8887
    %v8889 = vrot.slane %v8875, %v8888
    %v8890 = vcombine.high %v8866, 0.0
    %v8891 = vcombine.high %v8873, 0.0
    %v8892 = vcombine.high %v8882, 0.0
    %v8893 = vcombine.high %v8889, 0.0
    %v8894 = vcombine.low %v8787, %v8811
    %v8895 = vcombine.high %v8787, %v8811
    %v8897 = vunpack.c.l.s4 1983009808
    %v8898 = vunpack.c.0.s8 %v8897
    %v8899 = vlaneseq
    %v8900 = vshrl.u32 %v8899, 7
    %v8901 = vsub.s32 %v8898, %v8900
    %v8902 = vrot.slane %v8894, %v8901
    %v8904 = vunpack.c.l.s4 1983009808
    %v8905 = vunpack.c.0.s8 %v8904
    %v8906 = vlaneseq
    %v8907 = vshrl.u32 %v8906, 7
    %v8908 = vsub.s32 %v8905, %v8907
    %v8909 = vrot.slane %v8895, %v8908
    %v8910 = vcombine.low %v8799, %v8823
    %v8911 = vcombine.high %v8799, %v8823
    %v8913 = vunpack.c.l.s4 1983009808
    %v8914 = vunpack.c.0.s8 %v8913
    %v8915 = vlaneseq
    %v8916 = vshrl.u32 %v8915, 7
    %v8917 = vsub.s32 %v8914, %v8916
    %v8918 = vrot.slane %v8910, %v8917
    %v8920 = vunpack.c.l.s4 1983009808
    %v8921 = vunpack.c.0.s8 %v8920
    %v8922 = vlaneseq
    %v8923 = vshrl.u32 %v8922, 7
    %v8924 = vsub.s32 %v8921, %v8923
    %v8925 = vrot.slane %v8911, %v8924
    %v8926 = vcombine.low %v8902, %v8918
    %v8927 = vcombine.high %v8902, %v8918
    %v8929 = vunpack.c.l.s4 1934713408
    %v8930 = vunpack.c.0.s8 %v8929
    %v8931 = vlaneseq
    %v8932 = vshrl.u32 %v8931, 7
    %v8933 = vsub.s32 %v8930, %v8932
    %v8934 = vrot.slane %v8926, %v8933
    %v8936 = vunpack.c.l.s4 1934713408
    %v8937 = vunpack.c.0.s8 %v8936
    %v8938 = vlaneseq
    %v8939 = vshrl.u32 %v8938, 7
    %v8940 = vsub.s32 %v8937, %v8939
    %v8941 = vrot.slane %v8927, %v8940
    %v8942 = vcombine.low %v8909, %v8925
    %v8943 = vcombine.high %v8909, %v8925
    %v8945 = vunpack.c.l.s4 1934713408
    %v8946 = vunpack.c.0.s8 %v8945
    %v8947 = vlaneseq
    %v8948 = vshrl.u32 %v8947, 7
    %v8949 = vsub.s32 %v8946, %v8948
    %v8950 = vrot.slane %v8942, %v8949
    %v8952 = vunpack.c.l.s4 1934713408
    %v8953 = vunpack.c.0.s8 %v8952
    %v8954 = vlaneseq
    %v8955 = vshrl.u32 %v8954, 7
    %v8956 = vsub.s32 %v8953, %v8955
    %v8957 = vrot.slane %v8943, %v8956
    %v8958 = vcombine.high %v8934, 0.0
    %v8959 = vcombine.high %v8941, 0.0
    %v8960 = vcombine.high %v8950, 0.0
    %v8961 = vcombine.high %v8957, 0.0
    %v8962 = vcombine.low %v8866, %v8873
    %v8964 = vunpack.c.l.s4 1983009808
    %v8965 = vunpack.c.0.s8 %v8964
    %v8966 = vlaneseq
    %v8967 = vshrl.u32 %v8966, 7
    %v8968 = vsub.s32 %v8965, %v8967
    %v8969 = vrot.slane %v8962, %v8968
    %v8970 = vcombine.low %v8890, %v8891
    %v8972 = vunpack.c.l.s4 1983009808
    %v8973 = vunpack.c.0.s8 %v8972
    %v8974 = vlaneseq
    %v8975 = vshrl.u32 %v8974, 7
    %v8976 = vsub.s32 %v8973, %v8975
    %v8977 = vrot.slane %v8970, %v8976
    %v8978 = vcombine.low %v8882, %v8889
    %v8980 = vunpack.c.l.s4 1983009808
    %v8981 = vunpack.c.0.s8 %v8980
    %v8982 = vlaneseq
    %v8983 = vshrl.u32 %v8982, 7
    %v8984 = vsub.s32 %v8981, %v8983
    %v8985 = vrot.slane %v8978, %v8984
    %v8986 = vcombine.low %v8892, %v8893
    %v8988 = vunpack.c.l.s4 1983009808
    %v8989 = vunpack.c.0.s8 %v8988
    %v8990 = vlaneseq
    %v8991 = vshrl.u32 %v8990, 7
    %v8992 = vsub.s32 %v8989, %v8991
    %v8993 = vrot.slane %v8986, %v8992
    %v8994 = vcombine.low %v8969, %v8977
    %v8995 = vcombine.high %v8969, %v8977
    %v8997 = vunpack.c.l.s4 1934713408
    %v8998 = vunpack.c.0.s8 %v8997
    %v8999 = vlaneseq
    %v9000 = vshrl.u32 %v8999, 7
    %v9001 = vsub.s32 %v8998, %v9000
    %v9002 = vrot.slane %v8994, %v9001
    %v9004 = vunpack.c.l.s4 1934713408
    %v9005 = vunpack.c.0.s8 %v9004
    %v9006 = vlaneseq
    %v9007 = vshrl.u32 %v9006, 7
    %v9008 = vsub.s32 %v9005, %v9007
    %v9009 = vrot.slane %v8995, %v9008
    %v9010 = vcombine.low %v8985, %v8993
    %v9011 = vcombine.high %v8985, %v8993
    %v9013 = vunpack.c.l.s4 1934713408
    %v9014 = vunpack.c.0.s8 %v9013
    %v9015 = vlaneseq
    %v9016 = vshrl.u32 %v9015, 7
    %v9017 = vsub.s32 %v9014, %v9016
    %v9018 = vrot.slane %v9010, %v9017
    %v9020 = vunpack.c.l.s4 1934713408
    %v9021 = vunpack.c.0.s8 %v9020
    %v9022 = vlaneseq
    %v9023 = vshrl.u32 %v9022, 7
    %v9024 = vsub.s32 %v9021, %v9023
    %v9025 = vrot.slane %v9011, %v9024
    %v9026 = vcombine.low %v9002, %v9018
    %v9027 = vcombine.high %v9002, %v9018
    %v9028 = vcombine.low %v9009, %v9025
    %v9029 = vcombine.high %v9009, %v9025
    %v9030 = vcombine.low %v8934, %v8941
    %v9032 = vunpack.c.l.s4 1983009808
    %v9033 = vunpack.c.0.s8 %v9032
    %v9034 = vlaneseq
    %v9035 = vshrl.u32 %v9034, 7
    %v9036 = vsub.s32 %v9033, %v9035
    %v9037 = vrot.slane %v9030, %v9036
    %v9038 = vcombine.low %v8958, %v8959
    %v9040 = vunpack.c.l.s4 1983009808
    %v9041 = vunpack.c.0.s8 %v9040
    %v9042 = vlaneseq
    %v9043 = vshrl.u32 %v9042, 7
    %v9044 = vsub.s32 %v9041, %v9043
    %v9045 = vrot.slane %v9038, %v9044
    %v9046 = vcombine.low %v8950, %v8957
    %v9048 = vunpack.c.l.s4 1983009808
    %v9049 = vunpack.c.0.s8 %v9048
    %v9050 = vlaneseq
    %v9051 = vshrl.u32 %v9050, 7
    %v9052 = vsub.s32 %v9049, %v9051
    %v9053 = vrot.slane %v9046, %v9052
    %v9054 = vcombine.low %v8960, %v8961
    %v9056 = vunpack.c.l.s4 1983009808
    %v9057 = vunpack.c.0.s8 %v9056
    %v9058 = vlaneseq
    %v9059 = vshrl.u32 %v9058, 7
    %v9060 = vsub.s32 %v9057, %v9059
    %v9061 = vrot.slane %v9054, %v9060
    %v9062 = vcombine.low %v9037, %v9045
    %v9063 = vcombine.high %v9037, %v9045
    %v9065 = vunpack.c.l.s4 1934713408
    %v9066 = vunpack.c.0.s8 %v9065
    %v9067 = vlaneseq
    %v9068 = vshrl.u32 %v9067, 7
    %v9069 = vsub.s32 %v9066, %v9068
    %v9070 = vrot.slane %v9062, %v9069
    %v9072 = vunpack.c.l.s4 1934713408
    %v9073 = vunpack.c.0.s8 %v9072
    %v9074 = vlaneseq
    %v9075 = vshrl.u32 %v9074, 7
    %v9076 = vsub.s32 %v9073, %v9075
    %v9077 = vrot.slane %v9063, %v9076
    %v9078 = vcombine.low %v9053, %v9061
    %v9079 = vcombine.high %v9053, %v9061
    %v9081 = vunpack.c.l.s4 1934713408
    %v9082 = vunpack.c.0.s8 %v9081
    %v9083 = vlaneseq
    %v9084 = vshrl.u32 %v9083, 7
    %v9085 = vsub.s32 %v9082, %v9084
    %v9086 = vrot.slane %v9078, %v9085
    %v9088 = vunpack.c.l.s4 1934713408
    %v9089 = vunpack.c.0.s8 %v9088
    %v9090 = vlaneseq
    %v9091 = vshrl.u32 %v9090, 7
    %v9092 = vsub.s32 %v9089, %v9091
    %v9093 = vrot.slane %v9079, %v9092
    %v9094 = vcombine.low %v9070, %v9086
    %v9095 = vcombine.high %v9070, %v9086
    %v9096 = vcombine.low %v9077, %v9093
    %v9097 = vcombine.high %v9077, %v9093
    %9100 = vrot.lane.b32.xlu0 %v9027, 8
    %v9101 = vpop.permute.xlu0 %9100
    %9102 = vrot.lane.b32.xlu0 %v9095, 8
    %v9103 = vpop.permute.xlu0 %9102
    %9108 = vrot.lane.b32.xlu0 %v9028, 16
    %v9109 = vpop.permute.xlu0 %9108
    %9110 = vrot.lane.b32.xlu0 %v9096, 16
    %v9111 = vpop.permute.xlu0 %9110
    %9116 = vrot.lane.b32.xlu0 %v9029, 24
    %v9117 = vpop.permute.xlu0 %9116
    %9118 = vrot.lane.b32.xlu0 %v9097, 24
    %v9119 = vpop.permute.xlu0 %9118
    %v9122 = vsel %vm1599, %v9026, %v9101
    %v9123 = vsel %vm1599, %v9094, %v9103
    %v9124 = vsel %vm3735, %v9122, %v9109
    %v9125 = vsel %vm3735, %v9123, %v9111
    %v9126 = vsel %vm3738, %v9124, %v9117
    %v9127 = vsel %vm3738, %v9125, %v9119
    %v9128 = vld [vmem:[%s5462 + $0x10] sm:$0xff]
    %v9129 = vld [vmem:[%s5462 + $0x38] sm:$0xff]
    %v9130 = vld [vmem:[%s5462 + $0x60] sm:$0xff]
    %v9131 = vld [vmem:[%s5462 + $0x88] sm:$0xff]
    %v9133 = vsel %vm32, %v9126, 0
    %v9136 = vsel %vm32, %v9127, 0
    %9138 = vmatprep.subr.mxu0 0.0
    %9139 = vmatpush1.msra.mxu0 0.0
    %9140 = vmatprep.subr.mxu0 0.0
    %9141 = vmatpush1.msra.mxu0 0.0
    %9142 = vmatprep.subr.mxu0 0.0
    %9143 = vmatpush1.msra.mxu0 0.0
    %9144 = vmatprep.subr.mxu0 0.0
    %9145 = vmatpush1.msra.mxu0 0.0
    %9146 = vmatprep.subr.mxu0 0.0
    %9147 = vmatpush1.msra.mxu0 0.0
    %9148 = vmatprep.subr.mxu0 0.0
    %9149 = vmatpush1.msra.mxu0 0.0
    %9150 = vmatprep.subr.mxu0 0.0
    %9151 = vmatpush1.msra.mxu0 0.0
    %9152 = vmatprep.subr.mxu0 0.0
    %9153 = vmatpush1.msra.mxu0 0.0
    %9154 = vmatprep.subr.mxu0 0.0
    %9155 = vmatpush1.msra.mxu0 0.0
    %9156 = vmatprep.subr.mxu0 0.0
    %9157 = vmatpush1.msra.mxu0 0.0
    %9158 = vmatprep.subr.mxu0 0.0
    %9159 = vmatpush1.msra.mxu0 0.0
    %9160 = vmatprep.subr.mxu0 0.0
    %9161 = vmatpush1.msra.mxu0 0.0
    %9162 = vmatprep.subr.mxu0 0.0
    %v9163 = vand.u32 %v9131, 4294901760
    %9164 = vmatpush1.msra.mxu0 %v9163
    %9165 = vmatprep.subr.mxu0 0.0
    %v9166 = vand.u32 %v9130, 4294901760
    %9167 = vmatpush1.msra.mxu0 %v9166
    %9168 = vmatprep.subr.mxu0 0.0
    %v9169 = vand.u32 %v9129, 4294901760
    %9170 = vmatpush1.msra.mxu0 %v9169
    %9171 = vmatprep.subr.mxu0 0.0
    %v9172 = vand.u32 %v9128, 4294901760
    %9173 = vmatpush1.msra.mxu0 %v9172
    %9174 = vmatprep.subr.mxu0 0.0
    %9175 = vmatpush2.msra.mxu0 0.0
    %9176 = vmatprep.subr.mxu0 0.0
    %9177 = vmatpush2.msra.mxu0 0.0
    %9178 = vmatprep.subr.mxu0 0.0
    %9179 = vmatpush2.msra.mxu0 0.0
    %9180 = vmatprep.subr.mxu0 0.0
    %9181 = vmatpush2.msra.mxu0 0.0
    %9182 = vmatprep.subr.mxu0 0.0
    %9183 = vmatpush2.msra.mxu0 0.0
    %9184 = vmatprep.subr.mxu0 0.0
    %9185 = vmatpush2.msra.mxu0 0.0
    %9186 = vmatprep.subr.mxu0 0.0
    %9187 = vmatpush2.msra.mxu0 0.0
    %9188 = vmatprep.subr.mxu0 0.0
    %9189 = vmatpush2.msra.mxu0 0.0
    %9190 = vmatprep.subr.mxu0 0.0
    %9191 = vmatpush2.msra.mxu0 0.0
    %9192 = vmatprep.subr.mxu0 0.0
    %9193 = vmatpush2.msra.mxu0 0.0
    %9194 = vmatprep.subr.mxu0 0.0
    %9195 = vmatpush2.msra.mxu0 0.0
    %9196 = vmatprep.subr.mxu0 0.0
    %9197 = vmatpush2.msra.mxu0 0.0
    %9198 = vmatprep.subr.mxu0 0.0
    %9199 = vmatpush2.msra.mxu0 0.0
    %9200 = vmatprep.subr.mxu0 0.0
    %9201 = vmatpush2.msra.mxu0 0.0
    %9202 = vmatprep.subr.mxu0 0.0
    %9203 = vmatpush2.msra.mxu0 0.0
    %9204 = vmatprep.subr.mxu0 0.0
    %9205 = vmatpush2.msra.mxu0 0.0
    %9206 = vmatprep.mubr.f32.mxu0 0.0
    %v9207 = vand.u32 %v9133, 4294901760
    %v9208 = vsub.f32 %v9133, %v9207
    %v9209 = vand.u32 %v9208, 4294901760
    %v9210 = vsub.f32 %v9208, %v9209
    %v9211 = vand.u32 %v9210, 4294901760
    %9212 = vmatmul.mubr.f32.gmra.mxu0 %v9211
    %v9213 = vpop.f32.mrf.mxu0
    %v9214 = vadd.f32 0.0, %v9213
    %v9215 = vpop.f32.mrf.mxu0
    %9216 = vmatprep.mubr.f32.mxu0 0.0
    %v9217 = vand.u32 %v9136, 4294901760
    %v9218 = vsub.f32 %v9136, %v9217
    %v9219 = vand.u32 %v9218, 4294901760
    %v9220 = vsub.f32 %v9218, %v9219
    %v9221 = vand.u32 %v9220, 4294901760
    %9222 = vmatmul.mubr.f32.gmra.mxu0 %v9221
    %v9223 = vpop.f32.mrf.mxu0
    %v9224 = vadd.f32 0.0, %v9223
    %v9225 = vpop.f32.mrf.mxu0
    %9226 = vdwg.mxu0
    %9227 = vmatprep.subr.mxu0 0.0
    %9228 = vmatpush1.msra.mxu0 0.0
    %9229 = vmatprep.subr.mxu0 0.0
    %9230 = vmatpush1.msra.mxu0 0.0
    %9231 = vmatprep.subr.mxu0 0.0
    %9232 = vmatpush1.msra.mxu0 0.0
    %9233 = vmatprep.subr.mxu0 0.0
    %9234 = vmatpush1.msra.mxu0 0.0
    %9235 = vmatprep.subr.mxu0 0.0
    %9236 = vmatpush1.msra.mxu0 0.0
    %9237 = vmatprep.subr.mxu0 0.0
    %9238 = vmatpush1.msra.mxu0 0.0
    %9239 = vmatprep.subr.mxu0 0.0
    %9240 = vmatpush1.msra.mxu0 0.0
    %9241 = vmatprep.subr.mxu0 0.0
    %9242 = vmatpush1.msra.mxu0 0.0
    %9243 = vmatprep.subr.mxu0 0.0
    %9244 = vmatpush1.msra.mxu0 0.0
    %9245 = vmatprep.subr.mxu0 0.0
    %9246 = vmatpush1.msra.mxu0 0.0
    %9247 = vmatprep.subr.mxu0 0.0
    %9248 = vmatpush1.msra.mxu0 0.0
    %9249 = vmatprep.subr.mxu0 0.0
    %9250 = vmatpush1.msra.mxu0 0.0
    %9251 = vmatprep.subr.mxu0 0.0
    %v9252 = vand.u32 %v9131, 4294901760
    %v9253 = vsub.f32 %v9131, %v9252
    %v9254 = vand.u32 %v9253, 4294901760
    %v9255 = vsub.f32 %v9253, %v9254
    %v9256 = vand.u32 %v9255, 4294901760
    %9257 = vmatpush1.msra.mxu0 %v9256
    %9258 = vmatprep.subr.mxu0 0.0
    %v9259 = vand.u32 %v9130, 4294901760
    %v9260 = vsub.f32 %v9130, %v9259
    %v9261 = vand.u32 %v9260, 4294901760
    %v9262 = vsub.f32 %v9260, %v9261
    %v9263 = vand.u32 %v9262, 4294901760
    %9264 = vmatpush1.msra.mxu0 %v9263
    %9265 = vmatprep.subr.mxu0 0.0
    %v9266 = vand.u32 %v9129, 4294901760
    %v9267 = vsub.f32 %v9129, %v9266
    %v9268 = vand.u32 %v9267, 4294901760
    %v9269 = vsub.f32 %v9267, %v9268
    %v9270 = vand.u32 %v9269, 4294901760
    %9271 = vmatpush1.msra.mxu0 %v9270
    %9272 = vmatprep.subr.mxu0 0.0
    %v9273 = vand.u32 %v9128, 4294901760
    %v9274 = vsub.f32 %v9128, %v9273
    %v9275 = vand.u32 %v9274, 4294901760
    %v9276 = vsub.f32 %v9274, %v9275
    %v9277 = vand.u32 %v9276, 4294901760
    %9278 = vmatpush1.msra.mxu0 %v9277
    %9279 = vmatprep.subr.mxu0 0.0
    %9280 = vmatpush2.msra.mxu0 0.0
    %9281 = vmatprep.subr.mxu0 0.0
    %9282 = vmatpush2.msra.mxu0 0.0
    %9283 = vmatprep.subr.mxu0 0.0
    %9284 = vmatpush2.msra.mxu0 0.0
    %9285 = vmatprep.subr.mxu0 0.0
    %9286 = vmatpush2.msra.mxu0 0.0
    %9287 = vmatprep.subr.mxu0 0.0
    %9288 = vmatpush2.msra.mxu0 0.0
    %9289 = vmatprep.subr.mxu0 0.0
    %9290 = vmatpush2.msra.mxu0 0.0
    %9291 = vmatprep.subr.mxu0 0.0
    %9292 = vmatpush2.msra.mxu0 0.0
    %9293 = vmatprep.subr.mxu0 0.0
    %9294 = vmatpush2.msra.mxu0 0.0
    %9295 = vmatprep.subr.mxu0 0.0
    %9296 = vmatpush2.msra.mxu0 0.0
    %9297 = vmatprep.subr.mxu0 0.0
    %9298 = vmatpush2.msra.mxu0 0.0
    %9299 = vmatprep.subr.mxu0 0.0
    %9300 = vmatpush2.msra.mxu0 0.0
    %9301 = vmatprep.subr.mxu0 0.0
    %9302 = vmatpush2.msra.mxu0 0.0
    %9303 = vmatprep.subr.mxu0 0.0
    %9304 = vmatpush2.msra.mxu0 0.0
    %9305 = vmatprep.subr.mxu0 0.0
    %9306 = vmatpush2.msra.mxu0 0.0
    %9307 = vmatprep.subr.mxu0 0.0
    %9308 = vmatpush2.msra.mxu0 0.0
    %9309 = vmatprep.subr.mxu0 0.0
    %9310 = vmatpush2.msra.mxu0 0.0
    %9311 = vmatprep.mubr.f32.mxu0 0.0
    %v9312 = vand.u32 %v9133, 4294901760
    %9313 = vmatmul.mubr.f32.gmra.mxu0 %v9312
    %v9314 = vpop.f32.mrf.mxu0
    %v9315 = vadd.f32 %v9214, %v9314
    %v9316 = vpop.f32.mrf.mxu0
    %9317 = vmatprep.mubr.f32.mxu0 0.0
    %v9318 = vand.u32 %v9136, 4294901760
    %9319 = vmatmul.mubr.f32.gmra.mxu0 %v9318
    %v9320 = vpop.f32.mrf.mxu0
    %v9321 = vadd.f32 %v9224, %v9320
    %v9322 = vpop.f32.mrf.mxu0
    %9323 = vdwg.mxu0
    %9324 = vmatprep.subr.mxu0 0.0
    %9325 = vmatpush1.msra.mxu0 0.0
    %9326 = vmatprep.subr.mxu0 0.0
    %9327 = vmatpush1.msra.mxu0 0.0
    %9328 = vmatprep.subr.mxu0 0.0
    %9329 = vmatpush1.msra.mxu0 0.0
    %9330 = vmatprep.subr.mxu0 0.0
    %9331 = vmatpush1.msra.mxu0 0.0
    %9332 = vmatprep.subr.mxu0 0.0
    %9333 = vmatpush1.msra.mxu0 0.0
    %9334 = vmatprep.subr.mxu0 0.0
    %9335 = vmatpush1.msra.mxu0 0.0
    %9336 = vmatprep.subr.mxu0 0.0
    %9337 = vmatpush1.msra.mxu0 0.0
    %9338 = vmatprep.subr.mxu0 0.0
    %9339 = vmatpush1.msra.mxu0 0.0
    %9340 = vmatprep.subr.mxu0 0.0
    %9341 = vmatpush1.msra.mxu0 0.0
    %9342 = vmatprep.subr.mxu0 0.0
    %9343 = vmatpush1.msra.mxu0 0.0
    %9344 = vmatprep.subr.mxu0 0.0
    %9345 = vmatpush1.msra.mxu0 0.0
    %9346 = vmatprep.subr.mxu0 0.0
    %9347 = vmatpush1.msra.mxu0 0.0
    %9348 = vmatprep.subr.mxu0 0.0
    %v9349 = vand.u32 %v9131, 4294901760
    %v9350 = vsub.f32 %v9131, %v9349
    %9351 = vmatpush1.msra.mxu0 %v9350
    %9352 = vmatprep.subr.mxu0 0.0
    %v9353 = vand.u32 %v9130, 4294901760
    %v9354 = vsub.f32 %v9130, %v9353
    %9355 = vmatpush1.msra.mxu0 %v9354
    %9356 = vmatprep.subr.mxu0 0.0
    %v9357 = vand.u32 %v9129, 4294901760
    %v9358 = vsub.f32 %v9129, %v9357
    %9359 = vmatpush1.msra.mxu0 %v9358
    %9360 = vmatprep.subr.mxu0 0.0
    %v9361 = vand.u32 %v9128, 4294901760
    %v9362 = vsub.f32 %v9128, %v9361
    %9363 = vmatpush1.msra.mxu0 %v9362
    %9364 = vmatprep.subr.mxu0 0.0
    %9365 = vmatpush2.msra.mxu0 0.0
    %9366 = vmatprep.subr.mxu0 0.0
    %9367 = vmatpush2.msra.mxu0 0.0
    %9368 = vmatprep.subr.mxu0 0.0
    %9369 = vmatpush2.msra.mxu0 0.0
    %9370 = vmatprep.subr.mxu0 0.0
    %9371 = vmatpush2.msra.mxu0 0.0
    %9372 = vmatprep.subr.mxu0 0.0
    %9373 = vmatpush2.msra.mxu0 0.0
    %9374 = vmatprep.subr.mxu0 0.0
    %9375 = vmatpush2.msra.mxu0 0.0
    %9376 = vmatprep.subr.mxu0 0.0
    %9377 = vmatpush2.msra.mxu0 0.0
    %9378 = vmatprep.subr.mxu0 0.0
    %9379 = vmatpush2.msra.mxu0 0.0
    %9380 = vmatprep.subr.mxu0 0.0
    %9381 = vmatpush2.msra.mxu0 0.0
    %9382 = vmatprep.subr.mxu0 0.0
    %9383 = vmatpush2.msra.mxu0 0.0
    %9384 = vmatprep.subr.mxu0 0.0
    %9385 = vmatpush2.msra.mxu0 0.0
    %9386 = vmatprep.subr.mxu0 0.0
    %9387 = vmatpush2.msra.mxu0 0.0
    %9388 = vmatprep.subr.mxu0 0.0
    %9389 = vmatpush2.msra.mxu0 0.0
    %9390 = vmatprep.subr.mxu0 0.0
    %9391 = vmatpush2.msra.mxu0 0.0
    %9392 = vmatprep.subr.mxu0 0.0
    %9393 = vmatpush2.msra.mxu0 0.0
    %9394 = vmatprep.subr.mxu0 0.0
    %9395 = vmatpush2.msra.mxu0 0.0
    %9396 = vmatprep.mubr.f32.mxu0 0.0
    %v9397 = vand.u32 %v9133, 4294901760
    %v9398 = vsub.f32 %v9133, %v9397
    %9399 = vmatmul.mubr.f32.gmra.mxu0 %v9398
    %v9400 = vpop.f32.mrf.mxu0
    %v9401 = vadd.f32 %v9315, %v9400
    %v9402 = vpop.f32.mrf.mxu0
    %9403 = vmatprep.mubr.f32.mxu0 0.0
    %v9404 = vand.u32 %v9136, 4294901760
    %v9405 = vsub.f32 %v9136, %v9404
    %9406 = vmatmul.mubr.f32.gmra.mxu0 %v9405
    %v9407 = vpop.f32.mrf.mxu0
    %v9408 = vadd.f32 %v9321, %v9407
    %v9409 = vpop.f32.mrf.mxu0
    %9410 = vdwg.mxu0
    %9411 = vmatprep.subr.mxu0 0.0
    %9412 = vmatpush1.msra.mxu0 0.0
    %9413 = vmatprep.subr.mxu0 0.0
    %9414 = vmatpush1.msra.mxu0 0.0
    %9415 = vmatprep.subr.mxu0 0.0
    %9416 = vmatpush1.msra.mxu0 0.0
    %9417 = vmatprep.subr.mxu0 0.0
    %9418 = vmatpush1.msra.mxu0 0.0
    %9419 = vmatprep.subr.mxu0 0.0
    %9420 = vmatpush1.msra.mxu0 0.0
    %9421 = vmatprep.subr.mxu0 0.0
    %9422 = vmatpush1.msra.mxu0 0.0
    %9423 = vmatprep.subr.mxu0 0.0
    %9424 = vmatpush1.msra.mxu0 0.0
    %9425 = vmatprep.subr.mxu0 0.0
    %9426 = vmatpush1.msra.mxu0 0.0
    %9427 = vmatprep.subr.mxu0 0.0
    %9428 = vmatpush1.msra.mxu0 0.0
    %9429 = vmatprep.subr.mxu0 0.0
    %9430 = vmatpush1.msra.mxu0 0.0
    %9431 = vmatprep.subr.mxu0 0.0
    %9432 = vmatpush1.msra.mxu0 0.0
    %9433 = vmatprep.subr.mxu0 0.0
    %9434 = vmatpush1.msra.mxu0 0.0
    %9435 = vmatprep.subr.mxu0 0.0
    %v9436 = vand.u32 %v9131, 4294901760
    %9437 = vmatpush1.msra.mxu0 %v9436
    %9438 = vmatprep.subr.mxu0 0.0
    %v9439 = vand.u32 %v9130, 4294901760
    %9440 = vmatpush1.msra.mxu0 %v9439
    %9441 = vmatprep.subr.mxu0 0.0
    %v9442 = vand.u32 %v9129, 4294901760
    %9443 = vmatpush1.msra.mxu0 %v9442
    %9444 = vmatprep.subr.mxu0 0.0
    %v9445 = vand.u32 %v9128, 4294901760
    %9446 = vmatpush1.msra.mxu0 %v9445
    %9447 = vmatprep.subr.mxu0 0.0
    %9448 = vmatpush2.msra.mxu0 0.0
    %9449 = vmatprep.subr.mxu0 0.0
    %9450 = vmatpush2.msra.mxu0 0.0
    %9451 = vmatprep.subr.mxu0 0.0
    %9452 = vmatpush2.msra.mxu0 0.0
    %9453 = vmatprep.subr.mxu0 0.0
    %9454 = vmatpush2.msra.mxu0 0.0
    %9455 = vmatprep.subr.mxu0 0.0
    %9456 = vmatpush2.msra.mxu0 0.0
    %9457 = vmatprep.subr.mxu0 0.0
    %9458 = vmatpush2.msra.mxu0 0.0
    %9459 = vmatprep.subr.mxu0 0.0
    %9460 = vmatpush2.msra.mxu0 0.0
    %9461 = vmatprep.subr.mxu0 0.0
    %9462 = vmatpush2.msra.mxu0 0.0
    %9463 = vmatprep.subr.mxu0 0.0
    %9464 = vmatpush2.msra.mxu0 0.0
    %9465 = vmatprep.subr.mxu0 0.0
    %9466 = vmatpush2.msra.mxu0 0.0
    %9467 = vmatprep.subr.mxu0 0.0
    %9468 = vmatpush2.msra.mxu0 0.0
    %9469 = vmatprep.subr.mxu0 0.0
    %9470 = vmatpush2.msra.mxu0 0.0
    %9471 = vmatprep.subr.mxu0 0.0
    %9472 = vmatpush2.msra.mxu0 0.0
    %9473 = vmatprep.subr.mxu0 0.0
    %9474 = vmatpush2.msra.mxu0 0.0
    %9475 = vmatprep.subr.mxu0 0.0
    %9476 = vmatpush2.msra.mxu0 0.0
    %9477 = vmatprep.subr.mxu0 0.0
    %9478 = vmatpush2.msra.mxu0 0.0
    %9479 = vmatprep.mubr.f32.mxu0 0.0
    %v9480 = vand.u32 %v9133, 4294901760
    %v9481 = vsub.f32 %v9133, %v9480
    %v9482 = vand.u32 %v9481, 4294901760
    %9483 = vmatmul.mubr.f32.gmra.mxu0 %v9482
    %v9484 = vpop.f32.mrf.mxu0
    %v9485 = vadd.f32 %v9401, %v9484
    %v9486 = vpop.f32.mrf.mxu0
    %9487 = vmatprep.mubr.f32.mxu0 0.0
    %v9488 = vand.u32 %v9136, 4294901760
    %v9489 = vsub.f32 %v9136, %v9488
    %v9490 = vand.u32 %v9489, 4294901760
    %9491 = vmatmul.mubr.f32.gmra.mxu0 %v9490
    %v9492 = vpop.f32.mrf.mxu0
    %v9493 = vadd.f32 %v9408, %v9492
    %v9494 = vpop.f32.mrf.mxu0
    %9495 = vdwg.mxu0
    %9496 = vmatprep.subr.mxu0 0.0
    %9497 = vmatpush1.msra.mxu0 0.0
    %9498 = vmatprep.subr.mxu0 0.0
    %9499 = vmatpush1.msra.mxu0 0.0
    %9500 = vmatprep.subr.mxu0 0.0
    %9501 = vmatpush1.msra.mxu0 0.0
    %9502 = vmatprep.subr.mxu0 0.0
    %9503 = vmatpush1.msra.mxu0 0.0
    %9504 = vmatprep.subr.mxu0 0.0
    %9505 = vmatpush1.msra.mxu0 0.0
    %9506 = vmatprep.subr.mxu0 0.0
    %9507 = vmatpush1.msra.mxu0 0.0
    %9508 = vmatprep.subr.mxu0 0.0
    %9509 = vmatpush1.msra.mxu0 0.0
    %9510 = vmatprep.subr.mxu0 0.0
    %9511 = vmatpush1.msra.mxu0 0.0
    %9512 = vmatprep.subr.mxu0 0.0
    %9513 = vmatpush1.msra.mxu0 0.0
    %9514 = vmatprep.subr.mxu0 0.0
    %9515 = vmatpush1.msra.mxu0 0.0
    %9516 = vmatprep.subr.mxu0 0.0
    %9517 = vmatpush1.msra.mxu0 0.0
    %9518 = vmatprep.subr.mxu0 0.0
    %9519 = vmatpush1.msra.mxu0 0.0
    %9520 = vmatprep.subr.mxu0 0.0
    %v9521 = vand.u32 %v9131, 4294901760
    %v9522 = vsub.f32 %v9131, %v9521
    %v9523 = vand.u32 %v9522, 4294901760
    %9524 = vmatpush1.msra.mxu0 %v9523
    %9525 = vmatprep.subr.mxu0 0.0
    %v9526 = vand.u32 %v9130, 4294901760
    %v9527 = vsub.f32 %v9130, %v9526
    %v9528 = vand.u32 %v9527, 4294901760
    %9529 = vmatpush1.msra.mxu0 %v9528
    %9530 = vmatprep.subr.mxu0 0.0
    %v9531 = vand.u32 %v9129, 4294901760
    %v9532 = vsub.f32 %v9129, %v9531
    %v9533 = vand.u32 %v9532, 4294901760
    %9534 = vmatpush1.msra.mxu0 %v9533
    %9535 = vmatprep.subr.mxu0 0.0
    %v9536 = vand.u32 %v9128, 4294901760
    %v9537 = vsub.f32 %v9128, %v9536
    %v9538 = vand.u32 %v9537, 4294901760
    %9539 = vmatpush1.msra.mxu0 %v9538
    %9540 = vmatprep.subr.mxu0 0.0
    %9541 = vmatpush2.msra.mxu0 0.0
    %9542 = vmatprep.subr.mxu0 0.0
    %9543 = vmatpush2.msra.mxu0 0.0
    %9544 = vmatprep.subr.mxu0 0.0
    %9545 = vmatpush2.msra.mxu0 0.0
    %9546 = vmatprep.subr.mxu0 0.0
    %9547 = vmatpush2.msra.mxu0 0.0
    %9548 = vmatprep.subr.mxu0 0.0
    %9549 = vmatpush2.msra.mxu0 0.0
    %9550 = vmatprep.subr.mxu0 0.0
    %9551 = vmatpush2.msra.mxu0 0.0
    %9552 = vmatprep.subr.mxu0 0.0
    %9553 = vmatpush2.msra.mxu0 0.0
    %9554 = vmatprep.subr.mxu0 0.0
    %9555 = vmatpush2.msra.mxu0 0.0
    %9556 = vmatprep.subr.mxu0 0.0
    %9557 = vmatpush2.msra.mxu0 0.0
    %9558 = vmatprep.subr.mxu0 0.0
    %9559 = vmatpush2.msra.mxu0 0.0
    %9560 = vmatprep.subr.mxu0 0.0
    %9561 = vmatpush2.msra.mxu0 0.0
    %9562 = vmatprep.subr.mxu0 0.0
    %9563 = vmatpush2.msra.mxu0 0.0
    %9564 = vmatprep.subr.mxu0 0.0
    %9565 = vmatpush2.msra.mxu0 0.0
    %9566 = vmatprep.subr.mxu0 0.0
    %9567 = vmatpush2.msra.mxu0 0.0
    %9568 = vmatprep.subr.mxu0 0.0
    %9569 = vmatpush2.msra.mxu0 0.0
    %9570 = vmatprep.subr.mxu0 0.0
    %9571 = vmatpush2.msra.mxu0 0.0
    %9572 = vmatprep.mubr.f32.mxu0 0.0
    %v9573 = vand.u32 %v9133, 4294901760
    %9574 = vmatmul.mubr.f32.gmra.mxu0 %v9573
    %v9575 = vpop.f32.mrf.mxu0
    %v9576 = vadd.f32 %v9485, %v9575
    %v9577 = vpop.f32.mrf.mxu0
    %9578 = vmatprep.mubr.f32.mxu0 0.0
    %v9579 = vand.u32 %v9136, 4294901760
    %9580 = vmatmul.mubr.f32.gmra.mxu0 %v9579
    %v9581 = vpop.f32.mrf.mxu0
    %v9582 = vadd.f32 %v9493, %v9581
    %v9583 = vpop.f32.mrf.mxu0
    %9584 = vdwg.mxu0
    %9585 = vmatprep.subr.mxu0 0.0
    %9586 = vmatpush1.msra.mxu0 0.0
    %9587 = vmatprep.subr.mxu0 0.0
    %9588 = vmatpush1.msra.mxu0 0.0
    %9589 = vmatprep.subr.mxu0 0.0
    %9590 = vmatpush1.msra.mxu0 0.0
    %9591 = vmatprep.subr.mxu0 0.0
    %9592 = vmatpush1.msra.mxu0 0.0
    %9593 = vmatprep.subr.mxu0 0.0
    %9594 = vmatpush1.msra.mxu0 0.0
    %9595 = vmatprep.subr.mxu0 0.0
    %9596 = vmatpush1.msra.mxu0 0.0
    %9597 = vmatprep.subr.mxu0 0.0
    %9598 = vmatpush1.msra.mxu0 0.0
    %9599 = vmatprep.subr.mxu0 0.0
    %9600 = vmatpush1.msra.mxu0 0.0
    %9601 = vmatprep.subr.mxu0 0.0
    %9602 = vmatpush1.msra.mxu0 0.0
    %9603 = vmatprep.subr.mxu0 0.0
    %9604 = vmatpush1.msra.mxu0 0.0
    %9605 = vmatprep.subr.mxu0 0.0
    %9606 = vmatpush1.msra.mxu0 0.0
    %9607 = vmatprep.subr.mxu0 0.0
    %9608 = vmatpush1.msra.mxu0 0.0
    %9609 = vmatprep.subr.mxu0 0.0
    %v9610 = vand.u32 %v9131, 4294901760
    %9611 = vmatpush1.msra.mxu0 %v9610
    %9612 = vmatprep.subr.mxu0 0.0
    %v9613 = vand.u32 %v9130, 4294901760
    %9614 = vmatpush1.msra.mxu0 %v9613
    %9615 = vmatprep.subr.mxu0 0.0
    %v9616 = vand.u32 %v9129, 4294901760
    %9617 = vmatpush1.msra.mxu0 %v9616
    %9618 = vmatprep.subr.mxu0 0.0
    %v9619 = vand.u32 %v9128, 4294901760
    %9620 = vmatpush1.msra.mxu0 %v9619
    %9621 = vmatprep.subr.mxu0 0.0
    %9622 = vmatpush2.msra.mxu0 0.0
    %9623 = vmatprep.subr.mxu0 0.0
    %9624 = vmatpush2.msra.mxu0 0.0
    %9625 = vmatprep.subr.mxu0 0.0
    %9626 = vmatpush2.msra.mxu0 0.0
    %9627 = vmatprep.subr.mxu0 0.0
    %9628 = vmatpush2.msra.mxu0 0.0
    %9629 = vmatprep.subr.mxu0 0.0
    %9630 = vmatpush2.msra.mxu0 0.0
    %9631 = vmatprep.subr.mxu0 0.0
    %9632 = vmatpush2.msra.mxu0 0.0
    %9633 = vmatprep.subr.mxu0 0.0
    %9634 = vmatpush2.msra.mxu0 0.0
    %9635 = vmatprep.subr.mxu0 0.0
    %9636 = vmatpush2.msra.mxu0 0.0
    %9637 = vmatprep.subr.mxu0 0.0
    %9638 = vmatpush2.msra.mxu0 0.0
    %9639 = vmatprep.subr.mxu0 0.0
    %9640 = vmatpush2.msra.mxu0 0.0
    %9641 = vmatprep.subr.mxu0 0.0
    %9642 = vmatpush2.msra.mxu0 0.0
    %9643 = vmatprep.subr.mxu0 0.0
    %9644 = vmatpush2.msra.mxu0 0.0
    %9645 = vmatprep.subr.mxu0 0.0
    %9646 = vmatpush2.msra.mxu0 0.0
    %9647 = vmatprep.subr.mxu0 0.0
    %9648 = vmatpush2.msra.mxu0 0.0
    %9649 = vmatprep.subr.mxu0 0.0
    %9650 = vmatpush2.msra.mxu0 0.0
    %9651 = vmatprep.subr.mxu0 0.0
    %9652 = vmatpush2.msra.mxu0 0.0
    %9653 = vmatprep.mubr.f32.mxu0 0.0
    %v9654 = vand.u32 %v9133, 4294901760
    %9655 = vmatmul.mubr.f32.gmra.mxu0 %v9654
    %v9656 = vpop.f32.mrf.mxu0
    %v9657 = vadd.f32 %v9576, %v9656
    %v9658 = vpop.f32.mrf.mxu0
    %9659 = vmatprep.mubr.f32.mxu0 0.0
    %v9660 = vand.u32 %v9136, 4294901760
    %9661 = vmatmul.mubr.f32.gmra.mxu0 %v9660
    %v9662 = vpop.f32.mrf.mxu0
    %v9663 = vadd.f32 %v9582, %v9662
    %v9664 = vpop.f32.mrf.mxu0
    %9665 = vdwg.mxu0
    %v9666 = vadd.f32 %v5428, %v9657
    %v9667 = vadd.f32 %v5429, %v9663
    %v9668 = vld [vmem:[%s5462 + $0xb0] ss:$0 sm:$0xff]
    %v9669 = vadd.f32 %v9666, %v9668
    %v9670 = vadd.f32 %v9667, %v9668
    %v9671 = vmul.f32 %v9669, %v9669
    %v9672 = vmul.f32 %v9670, %v9670
    %v9673 = vsel %vm32, %v9671, 0.0
    %9674 = vadd.xlane.f32.xlu0 %v9673
    %v9675 = vpop.xlane.xlu0 %9674
    %v9676 = vsel %vm32, %v9672, 0.0
    %9677 = vadd.xlane.f32.xlu0 %v9676
    %v9678 = vpop.xlane.xlu0 %9677
    %v9679 = vmul.f32 %v9675, %v39
    %v9680 = vmul.f32 %v9678, %v39
    %v9681 = vrsqrt.pop %v9679
    %v9682 = vmul.f32 %v9679, %v9681
    %vm9683 = vcmp.eq.f32.partialorder %v9679, inf
    %v9684 = vsel %vm9683, %v9679, %v9682
    %vm9685 = vcmp.eq.f32.partialorder %v9679, 0.0
    %v9686 = vand.u32 %v9679, 2147483648
    %v9687 = vsel %vm9685, %v9686, %v9684
    %v9688 = vrsqrt.pop %v9680
    %v9689 = vmul.f32 %v9680, %v9688
    %vm9690 = vcmp.eq.f32.partialorder %v9680, inf
    %v9691 = vsel %vm9690, %v9680, %v9689
    %vm9692 = vcmp.eq.f32.partialorder %v9680, 0.0
    %v9693 = vand.u32 %v9680, 2147483648
    %v9694 = vsel %vm9692, %v9693, %v9691
    %v9695 = vadd.f32 %v9687, 1e-06
    %v9696 = vadd.f32 %v9694, 1e-06
    %v9697 = vrcp.pop %v9695
    %v9698 = vmul.f32 1.0, %v9697
    %v9699 = vrcp.pop %v9696
    %v9700 = vmul.f32 1.0, %v9699
    %v9701 = vmul.f32 %v9669, %v9698
    %v9702 = vmul.f32 %v9670, %v9700
    %v9703 = vld [vmem:[%s5462 + $0x18] sm:$0xff]
    %v9704 = vld [vmem:[%s5462 + $0x40] sm:$0xff]
    %v9705 = vld [vmem:[%s5462 + $0x68] sm:$0xff]
    %v9706 = vld [vmem:[%s5462 + $0x90] sm:$0xff]
    %v9707 = vld [vmem:[%s5462 + $0xb8] ss:$0 sm:$0xff]
    %v9709 = vsel %vm32, %v9701, 0
    %v9712 = vsel %vm32, %v9702, 0
    %9714 = vmatprep.subr.mxu0 0.0
    %9715 = vmatpush1.msra.mxu0 0.0
    %9716 = vmatprep.subr.mxu0 0.0
    %9717 = vmatpush1.msra.mxu0 0.0
    %9718 = vmatprep.subr.mxu0 0.0
    %9719 = vmatpush1.msra.mxu0 0.0
    %9720 = vmatprep.subr.mxu0 0.0
    %9721 = vmatpush1.msra.mxu0 0.0
    %9722 = vmatprep.subr.mxu0 0.0
    %9723 = vmatpush1.msra.mxu0 0.0
    %9724 = vmatprep.subr.mxu0 0.0
    %9725 = vmatpush1.msra.mxu0 0.0
    %9726 = vmatprep.subr.mxu0 0.0
    %9727 = vmatpush1.msra.mxu0 0.0
    %9728 = vmatprep.subr.mxu0 0.0
    %9729 = vmatpush1.msra.mxu0 0.0
    %9730 = vmatprep.subr.mxu0 0.0
    %9731 = vmatpush1.msra.mxu0 0.0
    %9732 = vmatprep.subr.mxu0 0.0
    %9733 = vmatpush1.msra.mxu0 0.0
    %9734 = vmatprep.subr.mxu0 0.0
    %9735 = vmatpush1.msra.mxu0 0.0
    %9736 = vmatprep.subr.mxu0 0.0
    %9737 = vmatpush1.msra.mxu0 0.0
    %9738 = vmatprep.subr.mxu0 0.0
    %v9739 = vand.u32 %v9706, 4294901760
    %9740 = vmatpush1.msra.mxu0 %v9739
    %9741 = vmatprep.subr.mxu0 0.0
    %v9742 = vand.u32 %v9705, 4294901760
    %9743 = vmatpush1.msra.mxu0 %v9742
    %9744 = vmatprep.subr.mxu0 0.0
    %v9745 = vand.u32 %v9704, 4294901760
    %9746 = vmatpush1.msra.mxu0 %v9745
    %9747 = vmatprep.subr.mxu0 0.0
    %v9748 = vand.u32 %v9703, 4294901760
    %9749 = vmatpush1.msra.mxu0 %v9748
    %9750 = vmatprep.subr.mxu0 0.0
    %9751 = vmatpush2.msra.mxu0 0.0
    %9752 = vmatprep.subr.mxu0 0.0
    %9753 = vmatpush2.msra.mxu0 0.0
    %9754 = vmatprep.subr.mxu0 0.0
    %9755 = vmatpush2.msra.mxu0 0.0
    %9756 = vmatprep.subr.mxu0 0.0
    %9757 = vmatpush2.msra.mxu0 0.0
    %9758 = vmatprep.subr.mxu0 0.0
    %9759 = vmatpush2.msra.mxu0 0.0
    %9760 = vmatprep.subr.mxu0 0.0
    %9761 = vmatpush2.msra.mxu0 0.0
    %9762 = vmatprep.subr.mxu0 0.0
    %9763 = vmatpush2.msra.mxu0 0.0
    %9764 = vmatprep.subr.mxu0 0.0
    %9765 = vmatpush2.msra.mxu0 0.0
    %9766 = vmatprep.subr.mxu0 0.0
    %9767 = vmatpush2.msra.mxu0 0.0
    %9768 = vmatprep.subr.mxu0 0.0
    %9769 = vmatpush2.msra.mxu0 0.0
    %9770 = vmatprep.subr.mxu0 0.0
    %9771 = vmatpush2.msra.mxu0 0.0
    %9772 = vmatprep.subr.mxu0 0.0
    %9773 = vmatpush2.msra.mxu0 0.0
    %9774 = vmatprep.subr.mxu0 0.0
    %9775 = vmatpush2.msra.mxu0 0.0
    %9776 = vmatprep.subr.mxu0 0.0
    %9777 = vmatpush2.msra.mxu0 0.0
    %9778 = vmatprep.subr.mxu0 0.0
    %9779 = vmatpush2.msra.mxu0 0.0
    %9780 = vmatprep.subr.mxu0 0.0
    %9781 = vmatpush2.msra.mxu0 0.0
    %9782 = vmatprep.mubr.f32.mxu0 0.0
    %v9783 = vand.u32 %v9709, 4294901760
    %v9784 = vsub.f32 %v9709, %v9783
    %v9785 = vand.u32 %v9784, 4294901760
    %v9786 = vsub.f32 %v9784, %v9785
    %v9787 = vand.u32 %v9786, 4294901760
    %9788 = vmatmul.mubr.f32.gmra.mxu0 %v9787
    %v9789 = vpop.f32.mrf.mxu0
    %v9790 = vadd.f32 %v9707, %v9789
    %v9791 = vpop.f32.mrf.mxu0
    %9792 = vmatprep.mubr.f32.mxu0 0.0
    %v9793 = vand.u32 %v9712, 4294901760
    %v9794 = vsub.f32 %v9712, %v9793
    %v9795 = vand.u32 %v9794, 4294901760
    %v9796 = vsub.f32 %v9794, %v9795
    %v9797 = vand.u32 %v9796, 4294901760
    %9798 = vmatmul.mubr.f32.gmra.mxu0 %v9797
    %v9799 = vpop.f32.mrf.mxu0
    %v9800 = vadd.f32 %v9707, %v9799
    %v9801 = vpop.f32.mrf.mxu0
    %9802 = vdwg.mxu0
    %9803 = vmatprep.subr.mxu0 0.0
    %9804 = vmatpush1.msra.mxu0 0.0
    %9805 = vmatprep.subr.mxu0 0.0
    %9806 = vmatpush1.msra.mxu0 0.0
    %9807 = vmatprep.subr.mxu0 0.0
    %9808 = vmatpush1.msra.mxu0 0.0
    %9809 = vmatprep.subr.mxu0 0.0
    %9810 = vmatpush1.msra.mxu0 0.0
    %9811 = vmatprep.subr.mxu0 0.0
    %9812 = vmatpush1.msra.mxu0 0.0
    %9813 = vmatprep.subr.mxu0 0.0
    %9814 = vmatpush1.msra.mxu0 0.0
    %9815 = vmatprep.subr.mxu0 0.0
    %9816 = vmatpush1.msra.mxu0 0.0
    %9817 = vmatprep.subr.mxu0 0.0
    %9818 = vmatpush1.msra.mxu0 0.0
    %9819 = vmatprep.subr.mxu0 0.0
    %9820 = vmatpush1.msra.mxu0 0.0
    %9821 = vmatprep.subr.mxu0 0.0
    %9822 = vmatpush1.msra.mxu0 0.0
    %9823 = vmatprep.subr.mxu0 0.0
    %9824 = vmatpush1.msra.mxu0 0.0
    %9825 = vmatprep.subr.mxu0 0.0
    %9826 = vmatpush1.msra.mxu0 0.0
    %9827 = vmatprep.subr.mxu0 0.0
    %v9828 = vand.u32 %v9706, 4294901760
    %v9829 = vsub.f32 %v9706, %v9828
    %v9830 = vand.u32 %v9829, 4294901760
    %v9831 = vsub.f32 %v9829, %v9830
    %v9832 = vand.u32 %v9831, 4294901760
    %9833 = vmatpush1.msra.mxu0 %v9832
    %9834 = vmatprep.subr.mxu0 0.0
    %v9835 = vand.u32 %v9705, 4294901760
    %v9836 = vsub.f32 %v9705, %v9835
    %v9837 = vand.u32 %v9836, 4294901760
    %v9838 = vsub.f32 %v9836, %v9837
    %v9839 = vand.u32 %v9838, 4294901760
    %9840 = vmatpush1.msra.mxu0 %v9839
    %9841 = vmatprep.subr.mxu0 0.0
    %v9842 = vand.u32 %v9704, 4294901760
    %v9843 = vsub.f32 %v9704, %v9842
    %v9844 = vand.u32 %v9843, 4294901760
    %v9845 = vsub.f32 %v9843, %v9844
    %v9846 = vand.u32 %v9845, 4294901760
    %9847 = vmatpush1.msra.mxu0 %v9846
    %9848 = vmatprep.subr.mxu0 0.0
    %v9849 = vand.u32 %v9703, 4294901760
    %v9850 = vsub.f32 %v9703, %v9849
    %v9851 = vand.u32 %v9850, 4294901760
    %v9852 = vsub.f32 %v9850, %v9851
    %v9853 = vand.u32 %v9852, 4294901760
    %9854 = vmatpush1.msra.mxu0 %v9853
    %9855 = vmatprep.subr.mxu0 0.0
    %9856 = vmatpush2.msra.mxu0 0.0
    %9857 = vmatprep.subr.mxu0 0.0
    %9858 = vmatpush2.msra.mxu0 0.0
    %9859 = vmatprep.subr.mxu0 0.0
    %9860 = vmatpush2.msra.mxu0 0.0
    %9861 = vmatprep.subr.mxu0 0.0
    %9862 = vmatpush2.msra.mxu0 0.0
    %9863 = vmatprep.subr.mxu0 0.0
    %9864 = vmatpush2.msra.mxu0 0.0
    %9865 = vmatprep.subr.mxu0 0.0
    %9866 = vmatpush2.msra.mxu0 0.0
    %9867 = vmatprep.subr.mxu0 0.0
    %9868 = vmatpush2.msra.mxu0 0.0
    %9869 = vmatprep.subr.mxu0 0.0
    %9870 = vmatpush2.msra.mxu0 0.0
    %9871 = vmatprep.subr.mxu0 0.0
    %9872 = vmatpush2.msra.mxu0 0.0
    %9873 = vmatprep.subr.mxu0 0.0
    %9874 = vmatpush2.msra.mxu0 0.0
    %9875 = vmatprep.subr.mxu0 0.0
    %9876 = vmatpush2.msra.mxu0 0.0
    %9877 = vmatprep.subr.mxu0 0.0
    %9878 = vmatpush2.msra.mxu0 0.0
    %9879 = vmatprep.subr.mxu0 0.0
    %9880 = vmatpush2.msra.mxu0 0.0
    %9881 = vmatprep.subr.mxu0 0.0
    %9882 = vmatpush2.msra.mxu0 0.0
    %9883 = vmatprep.subr.mxu0 0.0
    %9884 = vmatpush2.msra.mxu0 0.0
    %9885 = vmatprep.subr.mxu0 0.0
    %9886 = vmatpush2.msra.mxu0 0.0
    %9887 = vmatprep.mubr.f32.mxu0 0.0
    %v9888 = vand.u32 %v9709, 4294901760
    %9889 = vmatmul.mubr.f32.gmra.mxu0 %v9888
    %v9890 = vpop.f32.mrf.mxu0
    %v9891 = vadd.f32 %v9790, %v9890
    %v9892 = vpop.f32.mrf.mxu0
    %9893 = vmatprep.mubr.f32.mxu0 0.0
    %v9894 = vand.u32 %v9712, 4294901760
    %9895 = vmatmul.mubr.f32.gmra.mxu0 %v9894
    %v9896 = vpop.f32.mrf.mxu0
    %v9897 = vadd.f32 %v9800, %v9896
    %v9898 = vpop.f32.mrf.mxu0
    %9899 = vdwg.mxu0
    %9900 = vmatprep.subr.mxu0 0.0
    %9901 = vmatpush1.msra.mxu0 0.0
    %9902 = vmatprep.subr.mxu0 0.0
    %9903 = vmatpush1.msra.mxu0 0.0
    %9904 = vmatprep.subr.mxu0 0.0
    %9905 = vmatpush1.msra.mxu0 0.0
    %9906 = vmatprep.subr.mxu0 0.0
    %9907 = vmatpush1.msra.mxu0 0.0
    %9908 = vmatprep.subr.mxu0 0.0
    %9909 = vmatpush1.msra.mxu0 0.0
    %9910 = vmatprep.subr.mxu0 0.0
    %9911 = vmatpush1.msra.mxu0 0.0
    %9912 = vmatprep.subr.mxu0 0.0
    %9913 = vmatpush1.msra.mxu0 0.0
    %9914 = vmatprep.subr.mxu0 0.0
    %9915 = vmatpush1.msra.mxu0 0.0
    %9916 = vmatprep.subr.mxu0 0.0
    %9917 = vmatpush1.msra.mxu0 0.0
    %9918 = vmatprep.subr.mxu0 0.0
    %9919 = vmatpush1.msra.mxu0 0.0
    %9920 = vmatprep.subr.mxu0 0.0
    %9921 = vmatpush1.msra.mxu0 0.0
    %9922 = vmatprep.subr.mxu0 0.0
    %9923 = vmatpush1.msra.mxu0 0.0
    %9924 = vmatprep.subr.mxu0 0.0
    %v9925 = vand.u32 %v9706, 4294901760
    %v9926 = vsub.f32 %v9706, %v9925
    %9927 = vmatpush1.msra.mxu0 %v9926
    %9928 = vmatprep.subr.mxu0 0.0
    %v9929 = vand.u32 %v9705, 4294901760
    %v9930 = vsub.f32 %v9705, %v9929
    %9931 = vmatpush1.msra.mxu0 %v9930
    %9932 = vmatprep.subr.mxu0 0.0
    %v9933 = vand.u32 %v9704, 4294901760
    %v9934 = vsub.f32 %v9704, %v9933
    %9935 = vmatpush1.msra.mxu0 %v9934
    %9936 = vmatprep.subr.mxu0 0.0
    %v9937 = vand.u32 %v9703, 4294901760
    %v9938 = vsub.f32 %v9703, %v9937
    %9939 = vmatpush1.msra.mxu0 %v9938
    %9940 = vmatprep.subr.mxu0 0.0
    %9941 = vmatpush2.msra.mxu0 0.0
    %9942 = vmatprep.subr.mxu0 0.0
    %9943 = vmatpush2.msra.mxu0 0.0
    %9944 = vmatprep.subr.mxu0 0.0
    %9945 = vmatpush2.msra.mxu0 0.0
    %9946 = vmatprep.subr.mxu0 0.0
    %9947 = vmatpush2.msra.mxu0 0.0
    %9948 = vmatprep.subr.mxu0 0.0
    %9949 = vmatpush2.msra.mxu0 0.0
    %9950 = vmatprep.subr.mxu0 0.0
    %9951 = vmatpush2.msra.mxu0 0.0
    %9952 = vmatprep.subr.mxu0 0.0
    %9953 = vmatpush2.msra.mxu0 0.0
    %9954 = vmatprep.subr.mxu0 0.0
    %9955 = vmatpush2.msra.mxu0 0.0
    %9956 = vmatprep.subr.mxu0 0.0
    %9957 = vmatpush2.msra.mxu0 0.0
    %9958 = vmatprep.subr.mxu0 0.0
    %9959 = vmatpush2.msra.mxu0 0.0
    %9960 = vmatprep.subr.mxu0 0.0
    %9961 = vmatpush2.msra.mxu0 0.0
    %9962 = vmatprep.subr.mxu0 0.0
    %9963 = vmatpush2.msra.mxu0 0.0
    %9964 = vmatprep.subr.mxu0 0.0
    %9965 = vmatpush2.msra.mxu0 0.0
    %9966 = vmatprep.subr.mxu0 0.0
    %9967 = vmatpush2.msra.mxu0 0.0
    %9968 = vmatprep.subr.mxu0 0.0
    %9969 = vmatpush2.msra.mxu0 0.0
    %9970 = vmatprep.subr.mxu0 0.0
    %9971 = vmatpush2.msra.mxu0 0.0
    %9972 = vmatprep.mubr.f32.mxu0 0.0
    %v9973 = vand.u32 %v9709, 4294901760
    %v9974 = vsub.f32 %v9709, %v9973
    %9975 = vmatmul.mubr.f32.gmra.mxu0 %v9974
    %v9976 = vpop.f32.mrf.mxu0
    %v9977 = vadd.f32 %v9891, %v9976
    %v9978 = vpop.f32.mrf.mxu0
    %9979 = vmatprep.mubr.f32.mxu0 0.0
    %v9980 = vand.u32 %v9712, 4294901760
    %v9981 = vsub.f32 %v9712, %v9980
    %9982 = vmatmul.mubr.f32.gmra.mxu0 %v9981
    %v9983 = vpop.f32.mrf.mxu0
    %v9984 = vadd.f32 %v9897, %v9983
    %v9985 = vpop.f32.mrf.mxu0
    %9986 = vdwg.mxu0
    %9987 = vmatprep.subr.mxu0 0.0
    %9988 = vmatpush1.msra.mxu0 0.0
    %9989 = vmatprep.subr.mxu0 0.0
    %9990 = vmatpush1.msra.mxu0 0.0
    %9991 = vmatprep.subr.mxu0 0.0
    %9992 = vmatpush1.msra.mxu0 0.0
    %9993 = vmatprep.subr.mxu0 0.0
    %9994 = vmatpush1.msra.mxu0 0.0
    %9995 = vmatprep.subr.mxu0 0.0
    %9996 = vmatpush1.msra.mxu0 0.0
    %9997 = vmatprep.subr.mxu0 0.0
    %9998 = vmatpush1.msra.mxu0 0.0
    %9999 = vmatprep.subr.mxu0 0.0
    %10000 = vmatpush1.msra.mxu0 0.0
    %10001 = vmatprep.subr.mxu0 0.0
    %10002 = vmatpush1.msra.mxu0 0.0
    %10003 = vmatprep.subr.mxu0 0.0
    %10004 = vmatpush1.msra.mxu0 0.0
    %10005 = vmatprep.subr.mxu0 0.0
    %10006 = vmatpush1.msra.mxu0 0.0
    %10007 = vmatprep.subr.mxu0 0.0
    %10008 = vmatpush1.msra.mxu0 0.0
    %10009 = vmatprep.subr.mxu0 0.0
    %10010 = vmatpush1.msra.mxu0 0.0
    %10011 = vmatprep.subr.mxu0 0.0
    %v10012 = vand.u32 %v9706, 4294901760
    %10013 = vmatpush1.msra.mxu0 %v10012
    %10014 = vmatprep.subr.mxu0 0.0
    %v10015 = vand.u32 %v9705, 4294901760
    %10016 = vmatpush1.msra.mxu0 %v10015
    %10017 = vmatprep.subr.mxu0 0.0
    %v10018 = vand.u32 %v9704, 4294901760
    %10019 = vmatpush1.msra.mxu0 %v10018
    %10020 = vmatprep.subr.mxu0 0.0
    %v10021 = vand.u32 %v9703, 4294901760
    %10022 = vmatpush1.msra.mxu0 %v10021
    %10023 = vmatprep.subr.mxu0 0.0
    %10024 = vmatpush2.msra.mxu0 0.0
    %10025 = vmatprep.subr.mxu0 0.0
    %10026 = vmatpush2.msra.mxu0 0.0
    %10027 = vmatprep.subr.mxu0 0.0
    %10028 = vmatpush2.msra.mxu0 0.0
    %10029 = vmatprep.subr.mxu0 0.0
    %10030 = vmatpush2.msra.mxu0 0.0
    %10031 = vmatprep.subr.mxu0 0.0
    %10032 = vmatpush2.msra.mxu0 0.0
    %10033 = vmatprep.subr.mxu0 0.0
    %10034 = vmatpush2.msra.mxu0 0.0
    %10035 = vmatprep.subr.mxu0 0.0
    %10036 = vmatpush2.msra.mxu0 0.0
    %10037 = vmatprep.subr.mxu0 0.0
    %10038 = vmatpush2.msra.mxu0 0.0
    %10039 = vmatprep.subr.mxu0 0.0
    %10040 = vmatpush2.msra.mxu0 0.0
    %10041 = vmatprep.subr.mxu0 0.0
    %10042 = vmatpush2.msra.mxu0 0.0
    %10043 = vmatprep.subr.mxu0 0.0
    %10044 = vmatpush2.msra.mxu0 0.0
    %10045 = vmatprep.subr.mxu0 0.0
    %10046 = vmatpush2.msra.mxu0 0.0
    %10047 = vmatprep.subr.mxu0 0.0
    %10048 = vmatpush2.msra.mxu0 0.0
    %10049 = vmatprep.subr.mxu0 0.0
    %10050 = vmatpush2.msra.mxu0 0.0
    %10051 = vmatprep.subr.mxu0 0.0
    %10052 = vmatpush2.msra.mxu0 0.0
    %10053 = vmatprep.subr.mxu0 0.0
    %10054 = vmatpush2.msra.mxu0 0.0
    %10055 = vmatprep.mubr.f32.mxu0 0.0
    %v10056 = vand.u32 %v9709, 4294901760
    %v10057 = vsub.f32 %v9709, %v10056
    %v10058 = vand.u32 %v10057, 4294901760
    %10059 = vmatmul.mubr.f32.gmra.mxu0 %v10058
    %v10060 = vpop.f32.mrf.mxu0
    %v10061 = vadd.f32 %v9977, %v10060
    %v10062 = vpop.f32.mrf.mxu0
    %10063 = vmatprep.mubr.f32.mxu0 0.0
    %v10064 = vand.u32 %v9712, 4294901760
    %v10065 = vsub.f32 %v9712, %v10064
    %v10066 = vand.u32 %v10065, 4294901760
    %10067 = vmatmul.mubr.f32.gmra.mxu0 %v10066
    %v10068 = vpop.f32.mrf.mxu0
    %v10069 = vadd.f32 %v9984, %v10068
    %v10070 = vpop.f32.mrf.mxu0
    %10071 = vdwg.mxu0
    %10072 = vmatprep.subr.mxu0 0.0
    %10073 = vmatpush1.msra.mxu0 0.0
    %10074 = vmatprep.subr.mxu0 0.0
    %10075 = vmatpush1.msra.mxu0 0.0
    %10076 = vmatprep.subr.mxu0 0.0
    %10077 = vmatpush1.msra.mxu0 0.0
    %10078 = vmatprep.subr.mxu0 0.0
    %10079 = vmatpush1.msra.mxu0 0.0
    %10080 = vmatprep.subr.mxu0 0.0
    %10081 = vmatpush1.msra.mxu0 0.0
    %10082 = vmatprep.subr.mxu0 0.0
    %10083 = vmatpush1.msra.mxu0 0.0
    %10084 = vmatprep.subr.mxu0 0.0
    %10085 = vmatpush1.msra.mxu0 0.0
    %10086 = vmatprep.subr.mxu0 0.0
    %10087 = vmatpush1.msra.mxu0 0.0
    %10088 = vmatprep.subr.mxu0 0.0
    %10089 = vmatpush1.msra.mxu0 0.0
    %10090 = vmatprep.subr.mxu0 0.0
    %10091 = vmatpush1.msra.mxu0 0.0
    %10092 = vmatprep.subr.mxu0 0.0
    %10093 = vmatpush1.msra.mxu0 0.0
    %10094 = vmatprep.subr.mxu0 0.0
    %10095 = vmatpush1.msra.mxu0 0.0
    %10096 = vmatprep.subr.mxu0 0.0
    %v10097 = vand.u32 %v9706, 4294901760
    %v10098 = vsub.f32 %v9706, %v10097
    %v10099 = vand.u32 %v10098, 4294901760
    %10100 = vmatpush1.msra.mxu0 %v10099
    %10101 = vmatprep.subr.mxu0 0.0
    %v10102 = vand.u32 %v9705, 4294901760
    %v10103 = vsub.f32 %v9705, %v10102
    %v10104 = vand.u32 %v10103, 4294901760
    %10105 = vmatpush1.msra.mxu0 %v10104
    %10106 = vmatprep.subr.mxu0 0.0
    %v10107 = vand.u32 %v9704, 4294901760
    %v10108 = vsub.f32 %v9704, %v10107
    %v10109 = vand.u32 %v10108, 4294901760
    %10110 = vmatpush1.msra.mxu0 %v10109
    %10111 = vmatprep.subr.mxu0 0.0
    %v10112 = vand.u32 %v9703, 4294901760
    %v10113 = vsub.f32 %v9703, %v10112
    %v10114 = vand.u32 %v10113, 4294901760
    %10115 = vmatpush1.msra.mxu0 %v10114
    %10116 = vmatprep.subr.mxu0 0.0
    %10117 = vmatpush2.msra.mxu0 0.0
    %10118 = vmatprep.subr.mxu0 0.0
    %10119 = vmatpush2.msra.mxu0 0.0
    %10120 = vmatprep.subr.mxu0 0.0
    %10121 = vmatpush2.msra.mxu0 0.0
    %10122 = vmatprep.subr.mxu0 0.0
    %10123 = vmatpush2.msra.mxu0 0.0
    %10124 = vmatprep.subr.mxu0 0.0
    %10125 = vmatpush2.msra.mxu0 0.0
    %10126 = vmatprep.subr.mxu0 0.0
    %10127 = vmatpush2.msra.mxu0 0.0
    %10128 = vmatprep.subr.mxu0 0.0
    %10129 = vmatpush2.msra.mxu0 0.0
    %10130 = vmatprep.subr.mxu0 0.0
    %10131 = vmatpush2.msra.mxu0 0.0
    %10132 = vmatprep.subr.mxu0 0.0
    %10133 = vmatpush2.msra.mxu0 0.0
    %10134 = vmatprep.subr.mxu0 0.0
    %10135 = vmatpush2.msra.mxu0 0.0
    %10136 = vmatprep.subr.mxu0 0.0
    %10137 = vmatpush2.msra.mxu0 0.0
    %10138 = vmatprep.subr.mxu0 0.0
    %10139 = vmatpush2.msra.mxu0 0.0
    %10140 = vmatprep.subr.mxu0 0.0
    %10141 = vmatpush2.msra.mxu0 0.0
    %10142 = vmatprep.subr.mxu0 0.0
    %10143 = vmatpush2.msra.mxu0 0.0
    %10144 = vmatprep.subr.mxu0 0.0
    %10145 = vmatpush2.msra.mxu0 0.0
    %10146 = vmatprep.subr.mxu0 0.0
    %10147 = vmatpush2.msra.mxu0 0.0
    %10148 = vmatprep.mubr.f32.mxu0 0.0
    %v10149 = vand.u32 %v9709, 4294901760
    %10150 = vmatmul.mubr.f32.gmra.mxu0 %v10149
    %v10151 = vpop.f32.mrf.mxu0
    %v10152 = vadd.f32 %v10061, %v10151
    %v10153 = vpop.f32.mrf.mxu0
    %10154 = vmatprep.mubr.f32.mxu0 0.0
    %v10155 = vand.u32 %v9712, 4294901760
    %10156 = vmatmul.mubr.f32.gmra.mxu0 %v10155
    %v10157 = vpop.f32.mrf.mxu0
    %v10158 = vadd.f32 %v10069, %v10157
    %v10159 = vpop.f32.mrf.mxu0
    %10160 = vdwg.mxu0
    %10161 = vmatprep.subr.mxu0 0.0
    %10162 = vmatpush1.msra.mxu0 0.0
    %10163 = vmatprep.subr.mxu0 0.0
    %10164 = vmatpush1.msra.mxu0 0.0
    %10165 = vmatprep.subr.mxu0 0.0
    %10166 = vmatpush1.msra.mxu0 0.0
    %10167 = vmatprep.subr.mxu0 0.0
    %10168 = vmatpush1.msra.mxu0 0.0
    %10169 = vmatprep.subr.mxu0 0.0
    %10170 = vmatpush1.msra.mxu0 0.0
    %10171 = vmatprep.subr.mxu0 0.0
    %10172 = vmatpush1.msra.mxu0 0.0
    %10173 = vmatprep.subr.mxu0 0.0
    %10174 = vmatpush1.msra.mxu0 0.0
    %10175 = vmatprep.subr.mxu0 0.0
    %10176 = vmatpush1.msra.mxu0 0.0
    %10177 = vmatprep.subr.mxu0 0.0
    %10178 = vmatpush1.msra.mxu0 0.0
    %10179 = vmatprep.subr.mxu0 0.0
    %10180 = vmatpush1.msra.mxu0 0.0
    %10181 = vmatprep.subr.mxu0 0.0
    %10182 = vmatpush1.msra.mxu0 0.0
    %10183 = vmatprep.subr.mxu0 0.0
    %10184 = vmatpush1.msra.mxu0 0.0
    %10185 = vmatprep.subr.mxu0 0.0
    %v10186 = vand.u32 %v9706, 4294901760
    %10187 = vmatpush1.msra.mxu0 %v10186
    %10188 = vmatprep.subr.mxu0 0.0
    %v10189 = vand.u32 %v9705, 4294901760
    %10190 = vmatpush1.msra.mxu0 %v10189
    %10191 = vmatprep.subr.mxu0 0.0
    %v10192 = vand.u32 %v9704, 4294901760
    %10193 = vmatpush1.msra.mxu0 %v10192
    %10194 = vmatprep.subr.mxu0 0.0
    %v10195 = vand.u32 %v9703, 4294901760
    %10196 = vmatpush1.msra.mxu0 %v10195
    %10197 = vmatprep.subr.mxu0 0.0
    %10198 = vmatpush2.msra.mxu0 0.0
    %10199 = vmatprep.subr.mxu0 0.0
    %10200 = vmatpush2.msra.mxu0 0.0
    %10201 = vmatprep.subr.mxu0 0.0
    %10202 = vmatpush2.msra.mxu0 0.0
    %10203 = vmatprep.subr.mxu0 0.0
    %10204 = vmatpush2.msra.mxu0 0.0
    %10205 = vmatprep.subr.mxu0 0.0
    %10206 = vmatpush2.msra.mxu0 0.0
    %10207 = vmatprep.subr.mxu0 0.0
    %10208 = vmatpush2.msra.mxu0 0.0
    %10209 = vmatprep.subr.mxu0 0.0
    %10210 = vmatpush2.msra.mxu0 0.0
    %10211 = vmatprep.subr.mxu0 0.0
    %10212 = vmatpush2.msra.mxu0 0.0
    %10213 = vmatprep.subr.mxu0 0.0
    %10214 = vmatpush2.msra.mxu0 0.0
    %10215 = vmatprep.subr.mxu0 0.0
    %10216 = vmatpush2.msra.mxu0 0.0
    %10217 = vmatprep.subr.mxu0 0.0
    %10218 = vmatpush2.msra.mxu0 0.0
    %10219 = vmatprep.subr.mxu0 0.0
    %10220 = vmatpush2.msra.mxu0 0.0
    %10221 = vmatprep.subr.mxu0 0.0
    %10222 = vmatpush2.msra.mxu0 0.0
    %10223 = vmatprep.subr.mxu0 0.0
    %10224 = vmatpush2.msra.mxu0 0.0
    %10225 = vmatprep.subr.mxu0 0.0
    %10226 = vmatpush2.msra.mxu0 0.0
    %10227 = vmatprep.subr.mxu0 0.0
    %10228 = vmatpush2.msra.mxu0 0.0
    %10229 = vmatprep.mubr.f32.mxu0 0.0
    %v10230 = vand.u32 %v9709, 4294901760
    %10231 = vmatmul.mubr.f32.gmra.mxu0 %v10230
    %v10232 = vpop.f32.mrf.mxu0
    %v10233 = vadd.f32 %v10152, %v10232
    %v10234 = vpop.f32.mrf.mxu0
    %10235 = vmatprep.mubr.f32.mxu0 0.0
    %v10236 = vand.u32 %v9712, 4294901760
    %10237 = vmatmul.mubr.f32.gmra.mxu0 %v10236
    %v10238 = vpop.f32.mrf.mxu0
    %v10239 = vadd.f32 %v10158, %v10238
    %v10240 = vpop.f32.mrf.mxu0
    %10241 = vdwg.mxu0
    %10244 = vrot.lane.b32.xlu0 %v10233, 96
    %v10245 = vpop.permute.xlu0 %10244
    %10246 = vrot.lane.b32.xlu0 %v10239, 96
    %v10247 = vpop.permute.xlu0 %10246
    %v10250 = vmul.f32 %v10233, %v10245
    %v10251 = vmul.f32 %v10239, %v10247
    %v10252 = vxor.u32 %v10233, 2147483648
    %v10253 = vxor.u32 %v10239, 2147483648
    %v10254 = vmul.f32 %v10252, 1.442695
    %v10255 = vpow.pop %v10254
    %v10256 = vmul.f32 %v10253, 1.442695
    %v10257 = vpow.pop %v10256
    %v10258 = vadd.f32 %v10255, 1.0
    %v10259 = vadd.f32 %v10257, 1.0
    %v10260 = vrcp.pop %v10258
    %v10261 = vmul.f32 1.0, %v10260
    %v10262 = vrcp.pop %v10259
    %v10263 = vmul.f32 1.0, %v10262
    %10266 = vrot.lane.b32.xlu0 %v10261, 96
    %v10267 = vpop.permute.xlu0 %10266
    %10268 = vrot.lane.b32.xlu0 %v10263, 96
    %v10269 = vpop.permute.xlu0 %10268
    %v10272 = vmul.f32 %v10250, %v10267
    %v10273 = vmul.f32 %v10251, %v10269
    %v10274 = vld [vmem:[%s5462 + $0x20] sm:$0xff]
    %v10275 = vld [vmem:[%s5462 + $0x48] sm:$0xff]
    %v10276 = vld [vmem:[%s5462 + $0x70] sm:$0xff]
    %v10277 = vld [vmem:[%s5462 + $0x98] sm:$0xff]
    %v10279 = vsel %vm32, %v10272, 0
    %v10282 = vsel %vm32, %v10273, 0
    %10284 = vmatprep.subr.mxu0 0.0
    %10285 = vmatpush1.msra.mxu0 0.0
    %10286 = vmatprep.subr.mxu0 0.0
    %10287 = vmatpush1.msra.mxu0 0.0
    %10288 = vmatprep.subr.mxu0 0.0
    %10289 = vmatpush1.msra.mxu0 0.0
    %10290 = vmatprep.subr.mxu0 0.0
    %10291 = vmatpush1.msra.mxu0 0.0
    %10292 = vmatprep.subr.mxu0 0.0
    %10293 = vmatpush1.msra.mxu0 0.0
    %10294 = vmatprep.subr.mxu0 0.0
    %10295 = vmatpush1.msra.mxu0 0.0
    %10296 = vmatprep.subr.mxu0 0.0
    %10297 = vmatpush1.msra.mxu0 0.0
    %10298 = vmatprep.subr.mxu0 0.0
    %10299 = vmatpush1.msra.mxu0 0.0
    %10300 = vmatprep.subr.mxu0 0.0
    %10301 = vmatpush1.msra.mxu0 0.0
    %10302 = vmatprep.subr.mxu0 0.0
    %10303 = vmatpush1.msra.mxu0 0.0
    %10304 = vmatprep.subr.mxu0 0.0
    %10305 = vmatpush1.msra.mxu0 0.0
    %10306 = vmatprep.subr.mxu0 0.0
    %10307 = vmatpush1.msra.mxu0 0.0
    %10308 = vmatprep.subr.mxu0 0.0
    %v10309 = vand.u32 %v10277, 4294901760
    %10310 = vmatpush1.msra.mxu0 %v10309
    %10311 = vmatprep.subr.mxu0 0.0
    %v10312 = vand.u32 %v10276, 4294901760
    %10313 = vmatpush1.msra.mxu0 %v10312
    %10314 = vmatprep.subr.mxu0 0.0
    %v10315 = vand.u32 %v10275, 4294901760
    %10316 = vmatpush1.msra.mxu0 %v10315
    %10317 = vmatprep.subr.mxu0 0.0
    %v10318 = vand.u32 %v10274, 4294901760
    %10319 = vmatpush1.msra.mxu0 %v10318
    %10320 = vmatprep.subr.mxu0 0.0
    %10321 = vmatpush2.msra.mxu0 0.0
    %10322 = vmatprep.subr.mxu0 0.0
    %10323 = vmatpush2.msra.mxu0 0.0
    %10324 = vmatprep.subr.mxu0 0.0
    %10325 = vmatpush2.msra.mxu0 0.0
    %10326 = vmatprep.subr.mxu0 0.0
    %10327 = vmatpush2.msra.mxu0 0.0
    %10328 = vmatprep.subr.mxu0 0.0
    %10329 = vmatpush2.msra.mxu0 0.0
    %10330 = vmatprep.subr.mxu0 0.0
    %10331 = vmatpush2.msra.mxu0 0.0
    %10332 = vmatprep.subr.mxu0 0.0
    %10333 = vmatpush2.msra.mxu0 0.0
    %10334 = vmatprep.subr.mxu0 0.0
    %10335 = vmatpush2.msra.mxu0 0.0
    %10336 = vmatprep.subr.mxu0 0.0
    %10337 = vmatpush2.msra.mxu0 0.0
    %10338 = vmatprep.subr.mxu0 0.0
    %10339 = vmatpush2.msra.mxu0 0.0
    %10340 = vmatprep.subr.mxu0 0.0
    %10341 = vmatpush2.msra.mxu0 0.0
    %10342 = vmatprep.subr.mxu0 0.0
    %10343 = vmatpush2.msra.mxu0 0.0
    %10344 = vmatprep.subr.mxu0 0.0
    %10345 = vmatpush2.msra.mxu0 0.0
    %10346 = vmatprep.subr.mxu0 0.0
    %10347 = vmatpush2.msra.mxu0 0.0
    %10348 = vmatprep.subr.mxu0 0.0
    %10349 = vmatpush2.msra.mxu0 0.0
    %10350 = vmatprep.subr.mxu0 0.0
    %10351 = vmatpush2.msra.mxu0 0.0
    %10352 = vmatprep.mubr.f32.mxu0 0.0
    %v10353 = vand.u32 %v10279, 4294901760
    %v10354 = vsub.f32 %v10279, %v10353
    %v10355 = vand.u32 %v10354, 4294901760
    %v10356 = vsub.f32 %v10354, %v10355
    %v10357 = vand.u32 %v10356, 4294901760
    %10358 = vmatmul.mubr.f32.gmra.mxu0 %v10357
    %v10359 = vpop.f32.mrf.mxu0
    %v10360 = vadd.f32 0.0, %v10359
    %v10361 = vpop.f32.mrf.mxu0
    %10362 = vmatprep.mubr.f32.mxu0 0.0
    %v10363 = vand.u32 %v10282, 4294901760
    %v10364 = vsub.f32 %v10282, %v10363
    %v10365 = vand.u32 %v10364, 4294901760
    %v10366 = vsub.f32 %v10364, %v10365
    %v10367 = vand.u32 %v10366, 4294901760
    %10368 = vmatmul.mubr.f32.gmra.mxu0 %v10367
    %v10369 = vpop.f32.mrf.mxu0
    %v10370 = vadd.f32 0.0, %v10369
    %v10371 = vpop.f32.mrf.mxu0
    %10372 = vdwg.mxu0
    %10373 = vmatprep.subr.mxu0 0.0
    %10374 = vmatpush1.msra.mxu0 0.0
    %10375 = vmatprep.subr.mxu0 0.0
    %10376 = vmatpush1.msra.mxu0 0.0
    %10377 = vmatprep.subr.mxu0 0.0
    %10378 = vmatpush1.msra.mxu0 0.0
    %10379 = vmatprep.subr.mxu0 0.0
    %10380 = vmatpush1.msra.mxu0 0.0
    %10381 = vmatprep.subr.mxu0 0.0
    %10382 = vmatpush1.msra.mxu0 0.0
    %10383 = vmatprep.subr.mxu0 0.0
    %10384 = vmatpush1.msra.mxu0 0.0
    %10385 = vmatprep.subr.mxu0 0.0
    %10386 = vmatpush1.msra.mxu0 0.0
    %10387 = vmatprep.subr.mxu0 0.0
    %10388 = vmatpush1.msra.mxu0 0.0
    %10389 = vmatprep.subr.mxu0 0.0
    %10390 = vmatpush1.msra.mxu0 0.0
    %10391 = vmatprep.subr.mxu0 0.0
    %10392 = vmatpush1.msra.mxu0 0.0
    %10393 = vmatprep.subr.mxu0 0.0
    %10394 = vmatpush1.msra.mxu0 0.0
    %10395 = vmatprep.subr.mxu0 0.0
    %10396 = vmatpush1.msra.mxu0 0.0
    %10397 = vmatprep.subr.mxu0 0.0
    %v10398 = vand.u32 %v10277, 4294901760
    %v10399 = vsub.f32 %v10277, %v10398
    %v10400 = vand.u32 %v10399, 4294901760
    %v10401 = vsub.f32 %v10399, %v10400
    %v10402 = vand.u32 %v10401, 4294901760
    %10403 = vmatpush1.msra.mxu0 %v10402
    %10404 = vmatprep.subr.mxu0 0.0
    %v10405 = vand.u32 %v10276, 4294901760
    %v10406 = vsub.f32 %v10276, %v10405
    %v10407 = vand.u32 %v10406, 4294901760
    %v10408 = vsub.f32 %v10406, %v10407
    %v10409 = vand.u32 %v10408, 4294901760
    %10410 = vmatpush1.msra.mxu0 %v10409
    %10411 = vmatprep.subr.mxu0 0.0
    %v10412 = vand.u32 %v10275, 4294901760
    %v10413 = vsub.f32 %v10275, %v10412
    %v10414 = vand.u32 %v10413, 4294901760
    %v10415 = vsub.f32 %v10413, %v10414
    %v10416 = vand.u32 %v10415, 4294901760
    %10417 = vmatpush1.msra.mxu0 %v10416
    %10418 = vmatprep.subr.mxu0 0.0
    %v10419 = vand.u32 %v10274, 4294901760
    %v10420 = vsub.f32 %v10274, %v10419
    %v10421 = vand.u32 %v10420, 4294901760
    %v10422 = vsub.f32 %v10420, %v10421
    %v10423 = vand.u32 %v10422, 4294901760
    %10424 = vmatpush1.msra.mxu0 %v10423
    %10425 = vmatprep.subr.mxu0 0.0
    %10426 = vmatpush2.msra.mxu0 0.0
    %10427 = vmatprep.subr.mxu0 0.0
    %10428 = vmatpush2.msra.mxu0 0.0
    %10429 = vmatprep.subr.mxu0 0.0
    %10430 = vmatpush2.msra.mxu0 0.0
    %10431 = vmatprep.subr.mxu0 0.0
    %10432 = vmatpush2.msra.mxu0 0.0
    %10433 = vmatprep.subr.mxu0 0.0
    %10434 = vmatpush2.msra.mxu0 0.0
    %10435 = vmatprep.subr.mxu0 0.0
    %10436 = vmatpush2.msra.mxu0 0.0
    %10437 = vmatprep.subr.mxu0 0.0
    %10438 = vmatpush2.msra.mxu0 0.0
    %10439 = vmatprep.subr.mxu0 0.0
    %10440 = vmatpush2.msra.mxu0 0.0
    %10441 = vmatprep.subr.mxu0 0.0
    %10442 = vmatpush2.msra.mxu0 0.0
    %10443 = vmatprep.subr.mxu0 0.0
    %10444 = vmatpush2.msra.mxu0 0.0
    %10445 = vmatprep.subr.mxu0 0.0
    %10446 = vmatpush2.msra.mxu0 0.0
    %10447 = vmatprep.subr.mxu0 0.0
    %10448 = vmatpush2.msra.mxu0 0.0
    %10449 = vmatprep.subr.mxu0 0.0
    %10450 = vmatpush2.msra.mxu0 0.0
    %10451 = vmatprep.subr.mxu0 0.0
    %10452 = vmatpush2.msra.mxu0 0.0
    %10453 = vmatprep.subr.mxu0 0.0
    %10454 = vmatpush2.msra.mxu0 0.0
    %10455 = vmatprep.subr.mxu0 0.0
    %10456 = vmatpush2.msra.mxu0 0.0
    %10457 = vmatprep.mubr.f32.mxu0 0.0
    %v10458 = vand.u32 %v10279, 4294901760
    %10459 = vmatmul.mubr.f32.gmra.mxu0 %v10458
    %v10460 = vpop.f32.mrf.mxu0
    %v10461 = vadd.f32 %v10360, %v10460
    %v10462 = vpop.f32.mrf.mxu0
    %10463 = vmatprep.mubr.f32.mxu0 0.0
    %v10464 = vand.u32 %v10282, 4294901760
    %10465 = vmatmul.mubr.f32.gmra.mxu0 %v10464
    %v10466 = vpop.f32.mrf.mxu0
    %v10467 = vadd.f32 %v10370, %v10466
    %v10468 = vpop.f32.mrf.mxu0
    %10469 = vdwg.mxu0
    %10470 = vmatprep.subr.mxu0 0.0
    %10471 = vmatpush1.msra.mxu0 0.0
    %10472 = vmatprep.subr.mxu0 0.0
    %10473 = vmatpush1.msra.mxu0 0.0
    %10474 = vmatprep.subr.mxu0 0.0
    %10475 = vmatpush1.msra.mxu0 0.0
    %10476 = vmatprep.subr.mxu0 0.0
    %10477 = vmatpush1.msra.mxu0 0.0
    %10478 = vmatprep.subr.mxu0 0.0
    %10479 = vmatpush1.msra.mxu0 0.0
    %10480 = vmatprep.subr.mxu0 0.0
    %10481 = vmatpush1.msra.mxu0 0.0
    %10482 = vmatprep.subr.mxu0 0.0
    %10483 = vmatpush1.msra.mxu0 0.0
    %10484 = vmatprep.subr.mxu0 0.0
    %10485 = vmatpush1.msra.mxu0 0.0
    %10486 = vmatprep.subr.mxu0 0.0
    %10487 = vmatpush1.msra.mxu0 0.0
    %10488 = vmatprep.subr.mxu0 0.0
    %10489 = vmatpush1.msra.mxu0 0.0
    %10490 = vmatprep.subr.mxu0 0.0
    %10491 = vmatpush1.msra.mxu0 0.0
    %10492 = vmatprep.subr.mxu0 0.0
    %10493 = vmatpush1.msra.mxu0 0.0
    %10494 = vmatprep.subr.mxu0 0.0
    %v10495 = vand.u32 %v10277, 4294901760
    %v10496 = vsub.f32 %v10277, %v10495
    %10497 = vmatpush1.msra.mxu0 %v10496
    %10498 = vmatprep.subr.mxu0 0.0
    %v10499 = vand.u32 %v10276, 4294901760
    %v10500 = vsub.f32 %v10276, %v10499
    %10501 = vmatpush1.msra.mxu0 %v10500
    %10502 = vmatprep.subr.mxu0 0.0
    %v10503 = vand.u32 %v10275, 4294901760
    %v10504 = vsub.f32 %v10275, %v10503
    %10505 = vmatpush1.msra.mxu0 %v10504
    %10506 = vmatprep.subr.mxu0 0.0
    %v10507 = vand.u32 %v10274, 4294901760
    %v10508 = vsub.f32 %v10274, %v10507
    %10509 = vmatpush1.msra.mxu0 %v10508
    %10510 = vmatprep.subr.mxu0 0.0
    %10511 = vmatpush2.msra.mxu0 0.0
    %10512 = vmatprep.subr.mxu0 0.0
    %10513 = vmatpush2.msra.mxu0 0.0
    %10514 = vmatprep.subr.mxu0 0.0
    %10515 = vmatpush2.msra.mxu0 0.0
    %10516 = vmatprep.subr.mxu0 0.0
    %10517 = vmatpush2.msra.mxu0 0.0
    %10518 = vmatprep.subr.mxu0 0.0
    %10519 = vmatpush2.msra.mxu0 0.0
    %10520 = vmatprep.subr.mxu0 0.0
    %10521 = vmatpush2.msra.mxu0 0.0
    %10522 = vmatprep.subr.mxu0 0.0
    %10523 = vmatpush2.msra.mxu0 0.0
    %10524 = vmatprep.subr.mxu0 0.0
    %10525 = vmatpush2.msra.mxu0 0.0
    %10526 = vmatprep.subr.mxu0 0.0
    %10527 = vmatpush2.msra.mxu0 0.0
    %10528 = vmatprep.subr.mxu0 0.0
    %10529 = vmatpush2.msra.mxu0 0.0
    %10530 = vmatprep.subr.mxu0 0.0
    %10531 = vmatpush2.msra.mxu0 0.0
    %10532 = vmatprep.subr.mxu0 0.0
    %10533 = vmatpush2.msra.mxu0 0.0
    %10534 = vmatprep.subr.mxu0 0.0
    %10535 = vmatpush2.msra.mxu0 0.0
    %10536 = vmatprep.subr.mxu0 0.0
    %10537 = vmatpush2.msra.mxu0 0.0
    %10538 = vmatprep.subr.mxu0 0.0
    %10539 = vmatpush2.msra.mxu0 0.0
    %10540 = vmatprep.subr.mxu0 0.0
    %10541 = vmatpush2.msra.mxu0 0.0
    %10542 = vmatprep.mubr.f32.mxu0 0.0
    %v10543 = vand.u32 %v10279, 4294901760
    %v10544 = vsub.f32 %v10279, %v10543
    %10545 = vmatmul.mubr.f32.gmra.mxu0 %v10544
    %v10546 = vpop.f32.mrf.mxu0
    %v10547 = vadd.f32 %v10461, %v10546
    %v10548 = vpop.f32.mrf.mxu0
    %10549 = vmatprep.mubr.f32.mxu0 0.0
    %v10550 = vand.u32 %v10282, 4294901760
    %v10551 = vsub.f32 %v10282, %v10550
    %10552 = vmatmul.mubr.f32.gmra.mxu0 %v10551
    %v10553 = vpop.f32.mrf.mxu0
    %v10554 = vadd.f32 %v10467, %v10553
    %v10555 = vpop.f32.mrf.mxu0
    %10556 = vdwg.mxu0
    %10557 = vmatprep.subr.mxu0 0.0
    %10558 = vmatpush1.msra.mxu0 0.0
    %10559 = vmatprep.subr.mxu0 0.0
    %10560 = vmatpush1.msra.mxu0 0.0
    %10561 = vmatprep.subr.mxu0 0.0
    %10562 = vmatpush1.msra.mxu0 0.0
    %10563 = vmatprep.subr.mxu0 0.0
    %10564 = vmatpush1.msra.mxu0 0.0
    %10565 = vmatprep.subr.mxu0 0.0
    %10566 = vmatpush1.msra.mxu0 0.0
    %10567 = vmatprep.subr.mxu0 0.0
    %10568 = vmatpush1.msra.mxu0 0.0
    %10569 = vmatprep.subr.mxu0 0.0
    %10570 = vmatpush1.msra.mxu0 0.0
    %10571 = vmatprep.subr.mxu0 0.0
    %10572 = vmatpush1.msra.mxu0 0.0
    %10573 = vmatprep.subr.mxu0 0.0
    %10574 = vmatpush1.msra.mxu0 0.0
    %10575 = vmatprep.subr.mxu0 0.0
    %10576 = vmatpush1.msra.mxu0 0.0
    %10577 = vmatprep.subr.mxu0 0.0
    %10578 = vmatpush1.msra.mxu0 0.0
    %10579 = vmatprep.subr.mxu0 0.0
    %10580 = vmatpush1.msra.mxu0 0.0
    %10581 = vmatprep.subr.mxu0 0.0
    %v10582 = vand.u32 %v10277, 4294901760
    %10583 = vmatpush1.msra.mxu0 %v10582
    %10584 = vmatprep.subr.mxu0 0.0
    %v10585 = vand.u32 %v10276, 4294901760
    %10586 = vmatpush1.msra.mxu0 %v10585
    %10587 = vmatprep.subr.mxu0 0.0
    %v10588 = vand.u32 %v10275, 4294901760
    %10589 = vmatpush1.msra.mxu0 %v10588
    %10590 = vmatprep.subr.mxu0 0.0
    %v10591 = vand.u32 %v10274, 4294901760
    %10592 = vmatpush1.msra.mxu0 %v10591
    %10593 = vmatprep.subr.mxu0 0.0
    %10594 = vmatpush2.msra.mxu0 0.0
    %10595 = vmatprep.subr.mxu0 0.0
    %10596 = vmatpush2.msra.mxu0 0.0
    %10597 = vmatprep.subr.mxu0 0.0
    %10598 = vmatpush2.msra.mxu0 0.0
    %10599 = vmatprep.subr.mxu0 0.0
    %10600 = vmatpush2.msra.mxu0 0.0
    %10601 = vmatprep.subr.mxu0 0.0
    %10602 = vmatpush2.msra.mxu0 0.0
    %10603 = vmatprep.subr.mxu0 0.0
    %10604 = vmatpush2.msra.mxu0 0.0
    %10605 = vmatprep.subr.mxu0 0.0
    %10606 = vmatpush2.msra.mxu0 0.0
    %10607 = vmatprep.subr.mxu0 0.0
    %10608 = vmatpush2.msra.mxu0 0.0
    %10609 = vmatprep.subr.mxu0 0.0
    %10610 = vmatpush2.msra.mxu0 0.0
    %10611 = vmatprep.subr.mxu0 0.0
    %10612 = vmatpush2.msra.mxu0 0.0
    %10613 = vmatprep.subr.mxu0 0.0
    %10614 = vmatpush2.msra.mxu0 0.0
    %10615 = vmatprep.subr.mxu0 0.0
    %10616 = vmatpush2.msra.mxu0 0.0
    %10617 = vmatprep.subr.mxu0 0.0
    %10618 = vmatpush2.msra.mxu0 0.0
    %10619 = vmatprep.subr.mxu0 0.0
    %10620 = vmatpush2.msra.mxu0 0.0
    %10621 = vmatprep.subr.mxu0 0.0
    %10622 = vmatpush2.msra.mxu0 0.0
    %10623 = vmatprep.subr.mxu0 0.0
    %10624 = vmatpush2.msra.mxu0 0.0
    %10625 = vmatprep.mubr.f32.mxu0 0.0
    %v10626 = vand.u32 %v10279, 4294901760
    %v10627 = vsub.f32 %v10279, %v10626
    %v10628 = vand.u32 %v10627, 4294901760
    %10629 = vmatmul.mubr.f32.gmra.mxu0 %v10628
    %v10630 = vpop.f32.mrf.mxu0
    %v10631 = vadd.f32 %v10547, %v10630
    %v10632 = vpop.f32.mrf.mxu0
    %10633 = vmatprep.mubr.f32.mxu0 0.0
    %v10634 = vand.u32 %v10282, 4294901760
    %v10635 = vsub.f32 %v10282, %v10634
    %v10636 = vand.u32 %v10635, 4294901760
    %10637 = vmatmul.mubr.f32.gmra.mxu0 %v10636
    %v10638 = vpop.f32.mrf.mxu0
    %v10639 = vadd.f32 %v10554, %v10638
    %v10640 = vpop.f32.mrf.mxu0
    %10641 = vdwg.mxu0
    %10642 = vmatprep.subr.mxu0 0.0
    %10643 = vmatpush1.msra.mxu0 0.0
    %10644 = vmatprep.subr.mxu0 0.0
    %10645 = vmatpush1.msra.mxu0 0.0
    %10646 = vmatprep.subr.mxu0 0.0
    %10647 = vmatpush1.msra.mxu0 0.0
    %10648 = vmatprep.subr.mxu0 0.0
    %10649 = vmatpush1.msra.mxu0 0.0
    %10650 = vmatprep.subr.mxu0 0.0
    %10651 = vmatpush1.msra.mxu0 0.0
    %10652 = vmatprep.subr.mxu0 0.0
    %10653 = vmatpush1.msra.mxu0 0.0
    %10654 = vmatprep.subr.mxu0 0.0
    %10655 = vmatpush1.msra.mxu0 0.0
    %10656 = vmatprep.subr.mxu0 0.0
    %10657 = vmatpush1.msra.mxu0 0.0
    %10658 = vmatprep.subr.mxu0 0.0
    %10659 = vmatpush1.msra.mxu0 0.0
    %10660 = vmatprep.subr.mxu0 0.0
    %10661 = vmatpush1.msra.mxu0 0.0
    %10662 = vmatprep.subr.mxu0 0.0
    %10663 = vmatpush1.msra.mxu0 0.0
    %10664 = vmatprep.subr.mxu0 0.0
    %10665 = vmatpush1.msra.mxu0 0.0
    %10666 = vmatprep.subr.mxu0 0.0
    %v10667 = vand.u32 %v10277, 4294901760
    %v10668 = vsub.f32 %v10277, %v10667
    %v10669 = vand.u32 %v10668, 4294901760
    %10670 = vmatpush1.msra.mxu0 %v10669
    %10671 = vmatprep.subr.mxu0 0.0
    %v10672 = vand.u32 %v10276, 4294901760
    %v10673 = vsub.f32 %v10276, %v10672
    %v10674 = vand.u32 %v10673, 4294901760
    %10675 = vmatpush1.msra.mxu0 %v10674
    %10676 = vmatprep.subr.mxu0 0.0
    %v10677 = vand.u32 %v10275, 4294901760
    %v10678 = vsub.f32 %v10275, %v10677
    %v10679 = vand.u32 %v10678, 4294901760
    %10680 = vmatpush1.msra.mxu0 %v10679
    %10681 = vmatprep.subr.mxu0 0.0
    %v10682 = vand.u32 %v10274, 4294901760
    %v10683 = vsub.f32 %v10274, %v10682
    %v10684 = vand.u32 %v10683, 4294901760
    %10685 = vmatpush1.msra.mxu0 %v10684
    %10686 = vmatprep.subr.mxu0 0.0
    %10687 = vmatpush2.msra.mxu0 0.0
    %10688 = vmatprep.subr.mxu0 0.0
    %10689 = vmatpush2.msra.mxu0 0.0
    %10690 = vmatprep.subr.mxu0 0.0
    %10691 = vmatpush2.msra.mxu0 0.0
    %10692 = vmatprep.subr.mxu0 0.0
    %10693 = vmatpush2.msra.mxu0 0.0
    %10694 = vmatprep.subr.mxu0 0.0
    %10695 = vmatpush2.msra.mxu0 0.0
    %10696 = vmatprep.subr.mxu0 0.0
    %10697 = vmatpush2.msra.mxu0 0.0
    %10698 = vmatprep.subr.mxu0 0.0
    %10699 = vmatpush2.msra.mxu0 0.0
    %10700 = vmatprep.subr.mxu0 0.0
    %10701 = vmatpush2.msra.mxu0 0.0
    %10702 = vmatprep.subr.mxu0 0.0
    %10703 = vmatpush2.msra.mxu0 0.0
    %10704 = vmatprep.subr.mxu0 0.0
    %10705 = vmatpush2.msra.mxu0 0.0
    %10706 = vmatprep.subr.mxu0 0.0
    %10707 = vmatpush2.msra.mxu0 0.0
    %10708 = vmatprep.subr.mxu0 0.0
    %10709 = vmatpush2.msra.mxu0 0.0
    %10710 = vmatprep.subr.mxu0 0.0
    %10711 = vmatpush2.msra.mxu0 0.0
    %10712 = vmatprep.subr.mxu0 0.0
    %10713 = vmatpush2.msra.mxu0 0.0
    %10714 = vmatprep.subr.mxu0 0.0
    %10715 = vmatpush2.msra.mxu0 0.0
    %10716 = vmatprep.subr.mxu0 0.0
    %10717 = vmatpush2.msra.mxu0 0.0
    %10718 = vmatprep.mubr.f32.mxu0 0.0
    %v10719 = vand.u32 %v10279, 4294901760
    %10720 = vmatmul.mubr.f32.gmra.mxu0 %v10719
    %v10721 = vpop.f32.mrf.mxu0
    %v10722 = vadd.f32 %v10631, %v10721
    %v10723 = vpop.f32.mrf.mxu0
    %10724 = vmatprep.mubr.f32.mxu0 0.0
    %v10725 = vand.u32 %v10282, 4294901760
    %10726 = vmatmul.mubr.f32.gmra.mxu0 %v10725
    %v10727 = vpop.f32.mrf.mxu0
    %v10728 = vadd.f32 %v10639, %v10727
    %v10729 = vpop.f32.mrf.mxu0
    %10730 = vdwg.mxu0
    %10731 = vmatprep.subr.mxu0 0.0
    %10732 = vmatpush1.msra.mxu0 0.0
    %10733 = vmatprep.subr.mxu0 0.0
    %10734 = vmatpush1.msra.mxu0 0.0
    %10735 = vmatprep.subr.mxu0 0.0
    %10736 = vmatpush1.msra.mxu0 0.0
    %10737 = vmatprep.subr.mxu0 0.0
    %10738 = vmatpush1.msra.mxu0 0.0
    %10739 = vmatprep.subr.mxu0 0.0
    %10740 = vmatpush1.msra.mxu0 0.0
    %10741 = vmatprep.subr.mxu0 0.0
    %10742 = vmatpush1.msra.mxu0 0.0
    %10743 = vmatprep.subr.mxu0 0.0
    %10744 = vmatpush1.msra.mxu0 0.0
    %10745 = vmatprep.subr.mxu0 0.0
    %10746 = vmatpush1.msra.mxu0 0.0
    %10747 = vmatprep.subr.mxu0 0.0
    %10748 = vmatpush1.msra.mxu0 0.0
    %10749 = vmatprep.subr.mxu0 0.0
    %10750 = vmatpush1.msra.mxu0 0.0
    %10751 = vmatprep.subr.mxu0 0.0
    %10752 = vmatpush1.msra.mxu0 0.0
    %10753 = vmatprep.subr.mxu0 0.0
    %10754 = vmatpush1.msra.mxu0 0.0
    %10755 = vmatprep.subr.mxu0 0.0
    %v10756 = vand.u32 %v10277, 4294901760
    %10757 = vmatpush1.msra.mxu0 %v10756
    %10758 = vmatprep.subr.mxu0 0.0
    %v10759 = vand.u32 %v10276, 4294901760
    %10760 = vmatpush1.msra.mxu0 %v10759
    %10761 = vmatprep.subr.mxu0 0.0
    %v10762 = vand.u32 %v10275, 4294901760
    %10763 = vmatpush1.msra.mxu0 %v10762
    %10764 = vmatprep.subr.mxu0 0.0
    %v10765 = vand.u32 %v10274, 4294901760
    %10766 = vmatpush1.msra.mxu0 %v10765
    %10767 = vmatprep.subr.mxu0 0.0
    %10768 = vmatpush2.msra.mxu0 0.0
    %10769 = vmatprep.subr.mxu0 0.0
    %10770 = vmatpush2.msra.mxu0 0.0
    %10771 = vmatprep.subr.mxu0 0.0
    %10772 = vmatpush2.msra.mxu0 0.0
    %10773 = vmatprep.subr.mxu0 0.0
    %10774 = vmatpush2.msra.mxu0 0.0
    %10775 = vmatprep.subr.mxu0 0.0
    %10776 = vmatpush2.msra.mxu0 0.0
    %10777 = vmatprep.subr.mxu0 0.0
    %10778 = vmatpush2.msra.mxu0 0.0
    %10779 = vmatprep.subr.mxu0 0.0
    %10780 = vmatpush2.msra.mxu0 0.0
    %10781 = vmatprep.subr.mxu0 0.0
    %10782 = vmatpush2.msra.mxu0 0.0
    %10783 = vmatprep.subr.mxu0 0.0
    %10784 = vmatpush2.msra.mxu0 0.0
    %10785 = vmatprep.subr.mxu0 0.0
    %10786 = vmatpush2.msra.mxu0 0.0
    %10787 = vmatprep.subr.mxu0 0.0
    %10788 = vmatpush2.msra.mxu0 0.0
    %10789 = vmatprep.subr.mxu0 0.0
    %10790 = vmatpush2.msra.mxu0 0.0
    %10791 = vmatprep.subr.mxu0 0.0
    %10792 = vmatpush2.msra.mxu0 0.0
    %10793 = vmatprep.subr.mxu0 0.0
    %10794 = vmatpush2.msra.mxu0 0.0
    %10795 = vmatprep.subr.mxu0 0.0
    %10796 = vmatpush2.msra.mxu0 0.0
    %10797 = vmatprep.subr.mxu0 0.0
    %10798 = vmatpush2.msra.mxu0 0.0
    %10799 = vmatprep.mubr.f32.mxu0 0.0
    %v10800 = vand.u32 %v10279, 4294901760
    %10801 = vmatmul.mubr.f32.gmra.mxu0 %v10800
    %v10802 = vpop.f32.mrf.mxu0
    %v10803 = vadd.f32 %v10722, %v10802
    %v10804 = vpop.f32.mrf.mxu0
    %10805 = vmatprep.mubr.f32.mxu0 0.0
    %v10806 = vand.u32 %v10282, 4294901760
    %10807 = vmatmul.mubr.f32.gmra.mxu0 %v10806
    %v10808 = vpop.f32.mrf.mxu0
    %v10809 = vadd.f32 %v10728, %v10808
    %v10810 = vpop.f32.mrf.mxu0
    %10811 = vdwg.mxu0
    %v10812 = vadd.f32 %v9669, %v10803
    %v10813 = vadd.f32 %v9670, %v10809
    %v10814 = vld [vmem:[%s5462 + $0xc0] ss:$0 sm:$0xff]
    %v10815 = vadd.f32 %v10812, %v10814
    %v10816 = vadd.f32 %v10813, %v10814
    %v10817 = vmul.f32 %v29, %v10815
    %v10818 = vmul.f32 %v29, %v10816
    %v10819 = vmul.f32 %v10815, %v10815
    %v10820 = vmul.f32 %v10816, %v10816
    %v10821 = vsel %vm32, %v10819, 0.0
    %10822 = vadd.xlane.f32.xlu0 %v10821
    %v10823 = vpop.xlane.xlu0 %10822
    %v10824 = vsel %vm32, %v10820, 0.0
    %10825 = vadd.xlane.f32.xlu0 %v10824
    %v10826 = vpop.xlane.xlu0 %10825
    %v10827 = vmul.f32 %v10823, %v39
    %v10828 = vmul.f32 %v10826, %v39
    %v10829 = vrsqrt.pop %v10827
    %v10830 = vmul.f32 %v10827, %v10829
    %vm10831 = vcmp.eq.f32.partialorder %v10827, inf
    %v10832 = vsel %vm10831, %v10827, %v10830
    %vm10833 = vcmp.eq.f32.partialorder %v10827, 0.0
    %v10834 = vand.u32 %v10827, 2147483648
    %v10835 = vsel %vm10833, %v10834, %v10832
    %v10836 = vrsqrt.pop %v10828
    %v10837 = vmul.f32 %v10828, %v10836
    %vm10838 = vcmp.eq.f32.partialorder %v10828, inf
    %v10839 = vsel %vm10838, %v10828, %v10837
    %vm10840 = vcmp.eq.f32.partialorder %v10828, 0.0
    %v10841 = vand.u32 %v10828, 2147483648
    %v10842 = vsel %vm10840, %v10841, %v10839
    %v10843 = vadd.f32 %v10835, 1e-06
    %v10844 = vadd.f32 %v10842, 1e-06
    %v10845 = vrcp.pop %v10843
    %v10846 = vmul.f32 1.0, %v10845
    %v10847 = vrcp.pop %v10844
    %v10848 = vmul.f32 1.0, %v10847
    %v10849 = vmul.f32 %v10817, %v10846
    %v10850 = vmul.f32 %v10818, %v10848
    %10851 = vst.msk [vmem:[#allocation2] sm:$0xff] %vm32, %v10849
    %10852 = vst.msk [vmem:[#allocation2 + $0x8] sm:$0xff] %vm32, %v10850
    // Predicated region
    $region14: #{tpu_custom_call.1} parent=1 // pred_check
      _
    $region15: #{tpu_custom_call.1} parent=1 // pred_check_branch
      %10854 = sbr.rel (0) target = $region17
    $region16: #{tpu_custom_call.1} parent=1 // pred_region
      %s10856 = ssub.s32 256, 256
      %10857 = vsyncadd [#allocation3], %s10856
      %s10858 = sshll.u32 [#allocation2], 4
      %s10859 = int_to_ptr.vmem [resolvable:$true] %s10858
      %10864 = dma.vmem_to_hbm [thread:$0]  %s10859, 256, %s3, [#allocation3], 128, 128, 8
    $region17: #{tpu_custom_call.1} parent=1 // pred_fallthru
      _
    // Predicated region
    $region18: #{tpu_custom_call.1} parent=1 // pred_check
      _
    $region19: #{tpu_custom_call.1} parent=1 // pred_check_branch
      %10866 = sbr.rel (0) target = $region21
    $region20: #{tpu_custom_call.1} parent=1 // pred_region
      %10867 = dma.done [#allocation3], 256
    $region21: #{tpu_custom_call.1} parent=1 // pred_fallthru
      _
    %10868 = vsyncpa [#allocation3], 1

</llo_original>
